<compile_context>
chip_gen: v7x
topology: tpu7x:2x2x1
jax: 0.10.0
libtpu: 0.0.40
codegen_flags: <defaults>
</compile_context>

<pallas_src>
import jax
import jax.numpy as jnp
from jax import lax
from jax.experimental import pallas as pl
from jax.experimental.pallas import tpu as pltpu

BN_EPS = 1e-5


def _bn_relu_packed(acc, gamma, beta, w, c):
    """Training-mode BatchNorm + ReLU on a lane-packed (rows, w*c) activation.

    acc   : (rows, w*c) f32 pre-activation, rows = N*H, lane l = w_idx*c + ch
    gamma : (1, c) f32 BN weight,  beta : (1, c) f32 BN bias

    Per-channel stats: reduce over rows (sublane reduce) and fold the w lane
    groups with static 64-lane slices; then one fused apply pass
    (acc*scale + shift).  No centered temp buffer is materialized.
    """
    n_samples = acc.shape[0] * w
    s1p = jnp.sum(acc, axis=0, keepdims=True)            # (1, w*c)
    s2p = jnp.sum(acc * acc, axis=0, keepdims=True)      # (1, w*c)
    s1 = jnp.zeros((1, c), jnp.float32)
    s2 = jnp.zeros((1, c), jnp.float32)
    for i in range(w):                                   # fold the w lane groups
        s1 = s1 + s1p[:, i * c:(i + 1) * c]
        s2 = s2 + s2p[:, i * c:(i + 1) * c]
    mean = s1 / n_samples
    var = jnp.maximum(s2 / n_samples - mean * mean, 0.0)
    scale = gamma * lax.rsqrt(var + BN_EPS)              # (1, c)
    shift = beta - mean * scale
    scale_t = jnp.concatenate([scale] * w, axis=-1)      # (1, w*c) lane-tiled
    shift_t = jnp.concatenate([shift] * w, axis=-1)
    return jnp.maximum(acc * scale_t + shift_t, 0.0)


def _fused_kernel(xin_ref, w1b_ref, g1_ref, be1_ref, w2b_ref, g2_ref, be2_ref,
                  o_ref, vp_ref):
    """conv3x3 -> BN -> ReLU -> conv3x3 -> BN -> ReLU, fully fused in VMEM.

    xin_ref : (N, H+2, W*Cin)    bf16  vertically padded, lane-packed input rows
    w1b_ref : (3, W*Cin, W*Cout) bf16  banded conv1 weights (one slab per dy)
    g1_ref, be1_ref : (1, Cout)  f32   BN1 gamma / beta
    w2b_ref : (3, W*Cout, W*Cout) bf16 banded conv2 weights (one slab per dy)
    g2_ref, be2_ref : (1, Cout)  f32   BN2 gamma / beta
    o_ref   : (N*H, W*Cout)      f32   lane-dense output slab
    vp_ref  : (N, H+2, W*Cout)   bf16  VMEM scratch (vertically padded layer-1 out)
    """
    N, Hp2, WC = vp_ref.shape
    H = Hp2 - 2
    NH = N * H
    Cout = g1_ref.shape[-1]
    W = WC // Cout
    WCin = xin_ref.shape[-1]

    # ---- layer 1: 3 banded dots (one per dy), bf16 operands, f32 accum -----
    acc1 = jnp.zeros((NH, WC), jnp.float32)
    for dy in range(3):
        rows = xin_ref[:, dy:dy + H, :].reshape(NH, WCin)
        acc1 = acc1 + jnp.dot(rows, w1b_ref[dy],
                              preferred_element_type=jnp.float32)
    y1 = _bn_relu_packed(acc1, g1_ref[...], be1_ref[...], W, Cout)

    # Vertical padding=1 in VMEM: zero only the two border rows (the interior
    # is fully rewritten); the intermediate is stored once as bf16.
    zrow = jnp.zeros((N, 1, WC), jnp.bfloat16)
    vp_ref[:, 0:1, :] = zrow
    vp_ref[:, H + 1:H + 2, :] = zrow
    vp_ref[:, 1:H + 1, :] = y1.astype(jnp.bfloat16).reshape(N, H, WC)

    # ---- layer 2: 3 banded dots, contraction depth K = W*Cout --------------
    acc2 = jnp.zeros((NH, WC), jnp.float32)
    for dy in range(3):
        rows = vp_ref[:, dy:dy + H, :].reshape(NH, WC)
        acc2 = acc2 + jnp.dot(rows, w2b_ref[dy],
                              preferred_element_type=jnp.float32)
    y2 = _bn_relu_packed(acc2, g2_ref[...], be2_ref[...], W, Cout)

    o_ref[...] = y2                      # lane-dense (last dim W*Cout) stores


def init_params(key, in_channels, out_channels=64):
    """Deterministic parameter init matching the PyTorch module's shapes."""
    k1, k2, k3, k4 = jax.random.split(key, 4)
    return {
        # conv1: (3, 3, Cin, Cout); conv2: (3, 3, Cout, Cout)   (HWIO)
        "w1": 0.1 * jax.random.normal(k1, (3, 3, in_channels, out_channels), jnp.float32),
        "b1": 0.01 * jax.random.normal(k2, (out_channels,), jnp.float32),
        "g1": jnp.ones((out_channels,), jnp.float32),      # BN weight init = 1
        "beta1": jnp.zeros((out_channels,), jnp.float32),  # BN bias init = 0
        "w2": 0.1 * jax.random.normal(k3, (3, 3, out_channels, out_channels), jnp.float32),
        "b2": 0.01 * jax.random.normal(k4, (out_channels,), jnp.float32),
        "g2": jnp.ones((out_channels,), jnp.float32),
        "beta2": jnp.zeros((out_channels,), jnp.float32),
    }


def _banded_weights(wk, w_extent):
    """Fold the horizontal taps (dx) and padding=1 into banded weight slabs.

    wk: (3, 3, cin, cout) HWIO.  Returns (3, W*cin, W*cout) bf16 where slab dy
    maps a lane-packed input row (w_in, cin) to a lane-packed output row
    (w_out, cout).  Block (w_in, w_out) carries tap dx = w_in - w_out + 1; the
    band truncation at the row edges implements the horizontal zero padding.
    """
    cin, cout = wk.shape[2], wk.shape[3]
    mats = []
    for dy in range(3):
        b = jnp.zeros((w_extent * cin, w_extent * cout), jnp.float32)
        for dx in range(3):
            shift = jnp.eye(w_extent, k=1 - dx, dtype=jnp.float32)  # w_in = w_out + dx - 1
            b = b + jnp.kron(shift, wk[dy, dx].astype(jnp.float32))
        mats.append(b)
    return jnp.stack(mats).astype(jnp.bfloat16)


def early_feature_extractor(x_nchw, params):
    """Forward pass matching the PyTorch module: NCHW in -> NCHW out."""
    x = jnp.transpose(x_nchw, (0, 2, 3, 1)).astype(jnp.float32)     # -> NHWC
    N, H, W, Cin = x.shape
    Cout = params["w1"].shape[-1]
    NH, WC = N * H, W * Cout

    # Vertically pre-padded, lane-packed input rows (built by XLA, not in-kernel).
    xin = jnp.pad(x, ((0, 0), (1, 1), (0, 0), (0, 0))).reshape(N, H + 2, W * Cin)
    xin = xin.astype(jnp.bfloat16)

    # Banded (shift x tap) weights; in practice these would be precomputed once.
    w1b = _banded_weights(params["w1"], W)             # (3, W*Cin,  W*Cout)
    w2b = _banded_weights(params["w2"], W)             # (3, W*Cout, W*Cout)

    g1 = params["g1"].reshape(1, Cout).astype(jnp.float32)
    be1 = params["beta1"].reshape(1, Cout).astype(jnp.float32)
    g2 = params["g2"].reshape(1, Cout).astype(jnp.float32)
    be2 = params["beta2"].reshape(1, Cout).astype(jnp.float32)
    # NOTE: params["b1"], params["b2"] (conv biases) are intentionally unused:
    # a per-channel constant bias is exactly cancelled by training-mode BN.

    flops = 2 * NH * (W * Cin) * WC * 3 + 2 * NH * WC * WC * 3
    bytes_accessed = (xin.size * 2 + w1b.size * 2 + w2b.size * 2
                      + 4 * Cout * 4 + NH * WC * 4)

    vmem = pl.BlockSpec(memory_space=pltpu.MemorySpace.VMEM)
    y = pl.pallas_call(
        _fused_kernel,
        out_shape=jax.ShapeDtypeStruct((NH, WC), jnp.float32),
        in_specs=[vmem] * 7,
        out_specs=vmem,
        scratch_shapes=[pltpu.VMEM((N, H + 2, WC), jnp.bfloat16)],
        compiler_params=pltpu.CompilerParams(vmem_limit_bytes=48 * 1024 * 1024),
        cost_estimate=pl.CostEstimate(flops=int(flops),
                                      transcendentals=2 * Cout,
                                      bytes_accessed=int(bytes_accessed)),
    )(xin, w1b, g1, be1, w2b, g2, be2)

    # Lane-dense (N*H, W*Cout) slab -> NCHW (wrapper-side layout plumbing).
    return jnp.transpose(y.reshape(N, H, W, Cout), (0, 3, 1, 2))


def _reference(x_nchw, params):
    """Pure-JAX f32 reference with the PyTorch (training-mode BN) semantics."""
    x = jnp.transpose(x_nchw, (0, 2, 3, 1)).astype(jnp.float32)

    def conv_bn_relu(h, wk, b, g, beta):
        y = lax.conv_general_dilated(
            h, wk, window_strides=(1, 1), padding=((1, 1), (1, 1)),
            dimension_numbers=("NHWC", "HWIO", "NHWC")) + b
        m = jnp.mean(y, axis=(0, 1, 2), keepdims=True)
        v = jnp.mean(jnp.square(y - m), axis=(0, 1, 2), keepdims=True)
        return jnp.maximum((y - m) * lax.rsqrt(v + BN_EPS) * g + beta, 0.0)

    h1 = conv_bn_relu(x, params["w1"], params["b1"], params["g1"], params["beta1"])
    h2 = conv_bn_relu(h1, params["w2"], params["b2"], params["g2"], params["beta2"])
    return jnp.transpose(h2, (0, 3, 1, 2))


if __name__ == "__main__":
    key = jax.random.PRNGKey(0)
    k_x, k_p = jax.random.split(key)

    batch, in_channels, H, W = 2, 4, 16, 16
    out_channels = 64

    x = jax.random.normal(k_x, (batch, in_channels, H, W), jnp.float32)
    params = init_params(k_p, in_channels, out_channels)

    fwd = jax.jit(early_feature_extractor)
    out = jax.block_until_ready(fwd(x, params))

    assert out.shape == (batch, out_channels, H, W), out.shape
    assert bool(jnp.all(jnp.isfinite(out))), "non-finite output"
    assert bool(jnp.all(out >= 0.0)), "ReLU violated"

    # f32 reference keeps the conv biases (they cancel under batch-stat BN);
    # tolerance covers the bf16 matmul operands in the kernel.
    ref = jax.block_until_ready(jax.jit(_reference)(x, params))
    max_err = float(jnp.max(jnp.abs(out - ref)))
    assert max_err < 0.25, f"mismatch vs f32 reference: max|diff|={max_err}"

    print("KERNEL_OK")
</pallas_src>

<mosaic_0001>
module attributes {stable_mosaic.version = 11 : i64} {
  func.func @_fused_kernel(%arg0: memref<2x18x64xbf16, #tpu.memory_space<vmem>>, %arg1: memref<3x64x1024xbf16, #tpu.memory_space<vmem>>, %arg2: memref<1x64xf32, #tpu.memory_space<vmem>>, %arg3: memref<1x64xf32, #tpu.memory_space<vmem>>, %arg4: memref<3x1024x1024xbf16, #tpu.memory_space<vmem>>, %arg5: memref<1x64xf32, #tpu.memory_space<vmem>>, %arg6: memref<1x64xf32, #tpu.memory_space<vmem>>, %arg7: memref<32x1024xf32, #tpu.memory_space<vmem>>, %arg8: memref<2x18x1024xbf16, #tpu.memory_space<vmem>>) attributes {dimension_semantics = [], scalar_prefetch = 0 : i64, scratch_operands = 1 : i64, tpu.core_type = #tpu.core_type<tc>} {
    %cst = arith.constant 0.000000e+00 : f32
    %0 = vector.broadcast %cst : f32 to vector<32x1024xf32>
    %c0 = arith.constant 0 : index
    %c0_0 = arith.constant 0 : index
    %c0_1 = arith.constant 0 : index
    %1 = vector.load %arg0[%c0, %c0_0, %c0_1] : memref<2x18x64xbf16, #tpu.memory_space<vmem>>, vector<2x16x64xbf16>
    %2 = vector.shape_cast %1 : vector<2x16x64xbf16> to vector<32x64xbf16>
    %c0_2 = arith.constant 0 : index
    %c0_3 = arith.constant 0 : index
    %c0_4 = arith.constant 0 : index
    %3 = vector.load %arg1[%c0_2, %c0_3, %c0_4] : memref<3x64x1024xbf16, #tpu.memory_space<vmem>>, vector<1x64x1024xbf16>
    %4 = vector.shape_cast %3 : vector<1x64x1024xbf16> to vector<64x1024xbf16>
    %cst_5 = arith.constant dense<0.000000e+00> : vector<32x1024xf32>
    %5 = tpu.matmul %2, %4, %cst_5 {dimension_numbers = #tpu.dot_dimension_numbers<[1], [0], [0], [1], [0, 0, 1, 1], [], []>} : vector<32x64xbf16>, vector<64x1024xbf16>, vector<32x1024xf32> -> vector<32x1024xf32>
    %6 = arith.addf %0, %5 : vector<32x1024xf32>
    %c0_6 = arith.constant 0 : index
    %c1 = arith.constant 1 : index
    %c0_7 = arith.constant 0 : index
    %7 = vector.load %arg0[%c0_6, %c1, %c0_7] : memref<2x18x64xbf16, #tpu.memory_space<vmem>>, vector<2x16x64xbf16>
    %8 = vector.shape_cast %7 : vector<2x16x64xbf16> to vector<32x64xbf16>
    %c1_8 = arith.constant 1 : index
    %c0_9 = arith.constant 0 : index
    %c0_10 = arith.constant 0 : index
    %9 = vector.load %arg1[%c1_8, %c0_9, %c0_10] : memref<3x64x1024xbf16, #tpu.memory_space<vmem>>, vector<1x64x1024xbf16>
    %10 = vector.shape_cast %9 : vector<1x64x1024xbf16> to vector<64x1024xbf16>
    %cst_11 = arith.constant dense<0.000000e+00> : vector<32x1024xf32>
    %11 = tpu.matmul %8, %10, %cst_11 {dimension_numbers = #tpu.dot_dimension_numbers<[1], [0], [0], [1], [0, 0, 1, 1], [], []>} : vector<32x64xbf16>, vector<64x1024xbf16>, vector<32x1024xf32> -> vector<32x1024xf32>
    %12 = arith.addf %6, %11 : vector<32x1024xf32>
    %c0_12 = arith.constant 0 : index
    %c2 = arith.constant 2 : index
    %c0_13 = arith.constant 0 : index
    %13 = vector.load %arg0[%c0_12, %c2, %c0_13] : memref<2x18x64xbf16, #tpu.memory_space<vmem>>, vector<2x16x64xbf16>
    %14 = vector.shape_cast %13 : vector<2x16x64xbf16> to vector<32x64xbf16>
    %c2_14 = arith.constant 2 : index
    %c0_15 = arith.constant 0 : index
    %c0_16 = arith.constant 0 : index
    %15 = vector.load %arg1[%c2_14, %c0_15, %c0_16] : memref<3x64x1024xbf16, #tpu.memory_space<vmem>>, vector<1x64x1024xbf16>
    %16 = vector.shape_cast %15 : vector<1x64x1024xbf16> to vector<64x1024xbf16>
    %cst_17 = arith.constant dense<0.000000e+00> : vector<32x1024xf32>
    %17 = tpu.matmul %14, %16, %cst_17 {dimension_numbers = #tpu.dot_dimension_numbers<[1], [0], [0], [1], [0, 0, 1, 1], [], []>} : vector<32x64xbf16>, vector<64x1024xbf16>, vector<32x1024xf32> -> vector<32x1024xf32>
    %18 = arith.addf %12, %17 : vector<32x1024xf32>
    %c0_18 = arith.constant 0 : index
    %c0_19 = arith.constant 0 : index
    %19 = vector.load %arg2[%c0_18, %c0_19] : memref<1x64xf32, #tpu.memory_space<vmem>>, vector<1x64xf32>
    %c0_20 = arith.constant 0 : index
    %c0_21 = arith.constant 0 : index
    %20 = vector.load %arg3[%c0_20, %c0_21] : memref<1x64xf32, #tpu.memory_space<vmem>>, vector<1x64xf32>
    %cst_22 = arith.constant dense<0.000000e+00> : vector<1024xf32>
    %21 = vector.multi_reduction <add>, %18, %cst_22 [0] : vector<32x1024xf32> to vector<1024xf32>
    %22 = vector.shape_cast %21 : vector<1024xf32> to vector<1x1024xf32>
    %23 = arith.mulf %18, %18 : vector<32x1024xf32>
    %cst_23 = arith.constant dense<0.000000e+00> : vector<1024xf32>
    %24 = vector.multi_reduction <add>, %23, %cst_23 [0] : vector<32x1024xf32> to vector<1024xf32>
    %25 = vector.shape_cast %24 : vector<1024xf32> to vector<1x1024xf32>
    %cst_24 = arith.constant 0.000000e+00 : f32
    %26 = vector.broadcast %cst_24 : f32 to vector<1x64xf32>
    %cst_25 = arith.constant 0.000000e+00 : f32
    %27 = vector.broadcast %cst_25 : f32 to vector<1x64xf32>
    %28 = vector.extract_strided_slice %22 {offsets = [0, 0], sizes = [1, 64], strides = [1, 1]} : vector<1x1024xf32> to vector<1x64xf32>
    %29 = arith.addf %26, %28 : vector<1x64xf32>
    %30 = vector.extract_strided_slice %25 {offsets = [0, 0], sizes = [1, 64], strides = [1, 1]} : vector<1x1024xf32> to vector<1x64xf32>
    %31 = arith.addf %27, %30 : vector<1x64xf32>
    %32 = vector.extract_strided_slice %22 {offsets = [0, 64], sizes = [1, 64], strides = [1, 1]} : vector<1x1024xf32> to vector<1x64xf32>
    %33 = arith.addf %29, %32 : vector<1x64xf32>
    %34 = vector.extract_strided_slice %25 {offsets = [0, 64], sizes = [1, 64], strides = [1, 1]} : vector<1x1024xf32> to vector<1x64xf32>
    %35 = arith.addf %31, %34 : vector<1x64xf32>
    %36 = vector.extract_strided_slice %22 {offsets = [0, 128], sizes = [1, 64], strides = [1, 1]} : vector<1x1024xf32> to vector<1x64xf32>
    %37 = arith.addf %33, %36 : vector<1x64xf32>
    %38 = vector.extract_strided_slice %25 {offsets = [0, 128], sizes = [1, 64], strides = [1, 1]} : vector<1x1024xf32> to vector<1x64xf32>
    %39 = arith.addf %35, %38 : vector<1x64xf32>
    %40 = vector.extract_strided_slice %22 {offsets = [0, 192], sizes = [1, 64], strides = [1, 1]} : vector<1x1024xf32> to vector<1x64xf32>
    %41 = arith.addf %37, %40 : vector<1x64xf32>
    %42 = vector.extract_strided_slice %25 {offsets = [0, 192], sizes = [1, 64], strides = [1, 1]} : vector<1x1024xf32> to vector<1x64xf32>
    %43 = arith.addf %39, %42 : vector<1x64xf32>
    %44 = vector.extract_strided_slice %22 {offsets = [0, 256], sizes = [1, 64], strides = [1, 1]} : vector<1x1024xf32> to vector<1x64xf32>
    %45 = arith.addf %41, %44 : vector<1x64xf32>
    %46 = vector.extract_strided_slice %25 {offsets = [0, 256], sizes = [1, 64], strides = [1, 1]} : vector<1x1024xf32> to vector<1x64xf32>
    %47 = arith.addf %43, %46 : vector<1x64xf32>
    %48 = vector.extract_strided_slice %22 {offsets = [0, 320], sizes = [1, 64], strides = [1, 1]} : vector<1x1024xf32> to vector<1x64xf32>
    %49 = arith.addf %45, %48 : vector<1x64xf32>
    %50 = vector.extract_strided_slice %25 {offsets = [0, 320], sizes = [1, 64], strides = [1, 1]} : vector<1x1024xf32> to vector<1x64xf32>
    %51 = arith.addf %47, %50 : vector<1x64xf32>
    %52 = vector.extract_strided_slice %22 {offsets = [0, 384], sizes = [1, 64], strides = [1, 1]} : vector<1x1024xf32> to vector<1x64xf32>
    %53 = arith.addf %49, %52 : vector<1x64xf32>
    %54 = vector.extract_strided_slice %25 {offsets = [0, 384], sizes = [1, 64], strides = [1, 1]} : vector<1x1024xf32> to vector<1x64xf32>
    %55 = arith.addf %51, %54 : vector<1x64xf32>
    %56 = vector.extract_strided_slice %22 {offsets = [0, 448], sizes = [1, 64], strides = [1, 1]} : vector<1x1024xf32> to vector<1x64xf32>
    %57 = arith.addf %53, %56 : vector<1x64xf32>
    %58 = vector.extract_strided_slice %25 {offsets = [0, 448], sizes = [1, 64], strides = [1, 1]} : vector<1x1024xf32> to vector<1x64xf32>
    %59 = arith.addf %55, %58 : vector<1x64xf32>
    %60 = vector.extract_strided_slice %22 {offsets = [0, 512], sizes = [1, 64], strides = [1, 1]} : vector<1x1024xf32> to vector<1x64xf32>
    %61 = arith.addf %57, %60 : vector<1x64xf32>
    %62 = vector.extract_strided_slice %25 {offsets = [0, 512], sizes = [1, 64], strides = [1, 1]} : vector<1x1024xf32> to vector<1x64xf32>
    %63 = arith.addf %59, %62 : vector<1x64xf32>
    %64 = vector.extract_strided_slice %22 {offsets = [0, 576], sizes = [1, 64], strides = [1, 1]} : vector<1x1024xf32> to vector<1x64xf32>
    %65 = arith.addf %61, %64 : vector<1x64xf32>
    %66 = vector.extract_strided_slice %25 {offsets = [0, 576], sizes = [1, 64], strides = [1, 1]} : vector<1x1024xf32> to vector<1x64xf32>
    %67 = arith.addf %63, %66 : vector<1x64xf32>
    %68 = vector.extract_strided_slice %22 {offsets = [0, 640], sizes = [1, 64], strides = [1, 1]} : vector<1x1024xf32> to vector<1x64xf32>
    %69 = arith.addf %65, %68 : vector<1x64xf32>
    %70 = vector.extract_strided_slice %25 {offsets = [0, 640], sizes = [1, 64], strides = [1, 1]} : vector<1x1024xf32> to vector<1x64xf32>
    %71 = arith.addf %67, %70 : vector<1x64xf32>
    %72 = vector.extract_strided_slice %22 {offsets = [0, 704], sizes = [1, 64], strides = [1, 1]} : vector<1x1024xf32> to vector<1x64xf32>
    %73 = arith.addf %69, %72 : vector<1x64xf32>
    %74 = vector.extract_strided_slice %25 {offsets = [0, 704], sizes = [1, 64], strides = [1, 1]} : vector<1x1024xf32> to vector<1x64xf32>
    %75 = arith.addf %71, %74 : vector<1x64xf32>
    %76 = vector.extract_strided_slice %22 {offsets = [0, 768], sizes = [1, 64], strides = [1, 1]} : vector<1x1024xf32> to vector<1x64xf32>
    %77 = arith.addf %73, %76 : vector<1x64xf32>
    %78 = vector.extract_strided_slice %25 {offsets = [0, 768], sizes = [1, 64], strides = [1, 1]} : vector<1x1024xf32> to vector<1x64xf32>
    %79 = arith.addf %75, %78 : vector<1x64xf32>
    %80 = vector.extract_strided_slice %22 {offsets = [0, 832], sizes = [1, 64], strides = [1, 1]} : vector<1x1024xf32> to vector<1x64xf32>
    %81 = arith.addf %77, %80 : vector<1x64xf32>
    %82 = vector.extract_strided_slice %25 {offsets = [0, 832], sizes = [1, 64], strides = [1, 1]} : vector<1x1024xf32> to vector<1x64xf32>
    %83 = arith.addf %79, %82 : vector<1x64xf32>
    %84 = vector.extract_strided_slice %22 {offsets = [0, 896], sizes = [1, 64], strides = [1, 1]} : vector<1x1024xf32> to vector<1x64xf32>
    %85 = arith.addf %81, %84 : vector<1x64xf32>
    %86 = vector.extract_strided_slice %25 {offsets = [0, 896], sizes = [1, 64], strides = [1, 1]} : vector<1x1024xf32> to vector<1x64xf32>
    %87 = arith.addf %83, %86 : vector<1x64xf32>
    %88 = vector.extract_strided_slice %22 {offsets = [0, 960], sizes = [1, 64], strides = [1, 1]} : vector<1x1024xf32> to vector<1x64xf32>
    %89 = arith.addf %85, %88 : vector<1x64xf32>
    %90 = vector.extract_strided_slice %25 {offsets = [0, 960], sizes = [1, 64], strides = [1, 1]} : vector<1x1024xf32> to vector<1x64xf32>
    %91 = arith.addf %87, %90 : vector<1x64xf32>
    %cst_26 = arith.constant 5.120000e+02 : f32
    %92 = vector.broadcast %cst_26 : f32 to vector<1x64xf32>
    %93 = arith.divf %89, %92 : vector<1x64xf32>
    %cst_27 = arith.constant 5.120000e+02 : f32
    %94 = vector.broadcast %cst_27 : f32 to vector<1x64xf32>
    %95 = arith.divf %91, %94 : vector<1x64xf32>
    %96 = arith.mulf %93, %93 : vector<1x64xf32>
    %97 = arith.subf %95, %96 : vector<1x64xf32>
    %cst_28 = arith.constant 0.000000e+00 : f32
    %98 = vector.broadcast %cst_28 : f32 to vector<1x64xf32>
    %99 = arith.maximumf %97, %98 : vector<1x64xf32>
    %cst_29 = arith.constant 9.99999974E-6 : f32
    %100 = vector.broadcast %cst_29 : f32 to vector<1x64xf32>
    %101 = arith.addf %99, %100 : vector<1x64xf32>
    %102 = math.rsqrt %101 : vector<1x64xf32>
    %103 = arith.mulf %19, %102 : vector<1x64xf32>
    %104 = arith.mulf %93, %103 : vector<1x64xf32>
    %105 = arith.subf %20, %104 : vector<1x64xf32>
    %106 = tpu.concatenate %103, %103, %103, %103, %103, %103, %103, %103, %103, %103, %103, %103, %103, %103, %103, %103 in 1 : vector<1x64xf32>, vector<1x64xf32>, vector<1x64xf32>, vector<1x64xf32>, vector<1x64xf32>, vector<1x64xf32>, vector<1x64xf32>, vector<1x64xf32>, vector<1x64xf32>, vector<1x64xf32>, vector<1x64xf32>, vector<1x64xf32>, vector<1x64xf32>, vector<1x64xf32>, vector<1x64xf32>, vector<1x64xf32> -> vector<1x1024xf32>
    %107 = tpu.concatenate %105, %105, %105, %105, %105, %105, %105, %105, %105, %105, %105, %105, %105, %105, %105, %105 in 1 : vector<1x64xf32>, vector<1x64xf32>, vector<1x64xf32>, vector<1x64xf32>, vector<1x64xf32>, vector<1x64xf32>, vector<1x64xf32>, vector<1x64xf32>, vector<1x64xf32>, vector<1x64xf32>, vector<1x64xf32>, vector<1x64xf32>, vector<1x64xf32>, vector<1x64xf32>, vector<1x64xf32>, vector<1x64xf32> -> vector<1x1024xf32>
    %108 = vector.broadcast %106 : vector<1x1024xf32> to vector<32x1024xf32>
    %109 = arith.mulf %18, %108 : vector<32x1024xf32>
    %110 = vector.broadcast %107 : vector<1x1024xf32> to vector<32x1024xf32>
    %111 = arith.addf %109, %110 : vector<32x1024xf32>
    %cst_30 = arith.constant 0.000000e+00 : f32
    %112 = vector.broadcast %cst_30 : f32 to vector<32x1024xf32>
    %113 = arith.maximumf %111, %112 : vector<32x1024xf32>
    %cst_31 = arith.constant 0.000000e+00 : bf16
    %114 = vector.broadcast %cst_31 : bf16 to vector<2x1x1024xbf16>
    %c0_32 = arith.constant 0 : index
    %c0_33 = arith.constant 0 : index
    %c0_34 = arith.constant 0 : index
    %115 = vector.load %arg8[%c0_32, %c0_33, %c0_34] : memref<2x18x1024xbf16, #tpu.memory_space<vmem>>, vector<2x1x1024xbf16>
    tpu.vector_store %arg8[%c0_32, %c0_33, %c0_34], %114 {strides = array<i32>} : memref<2x18x1024xbf16, #tpu.memory_space<vmem>>, vector<2x1x1024xbf16>,
    %c0_35 = arith.constant 0 : index
    %c17 = arith.constant 17 : index
    %c0_36 = arith.constant 0 : index
    %116 = vector.load %arg8[%c0_35, %c17, %c0_36] : memref<2x18x1024xbf16, #tpu.memory_space<vmem>>, vector<2x1x1024xbf16>
    tpu.vector_store %arg8[%c0_35, %c17, %c0_36], %114 {strides = array<i32>} : memref<2x18x1024xbf16, #tpu.memory_space<vmem>>, vector<2x1x1024xbf16>,
    %117 = arith.truncf %113 : vector<32x1024xf32> to vector<32x1024xbf16>
    %118 = vector.shape_cast %117 : vector<32x1024xbf16> to vector<2x16x1024xbf16>
    %c0_37 = arith.constant 0 : index
    %c1_38 = arith.constant 1 : index
    %c0_39 = arith.constant 0 : index
    %119 = vector.load %arg8[%c0_37, %c1_38, %c0_39] : memref<2x18x1024xbf16, #tpu.memory_space<vmem>>, vector<2x16x1024xbf16>
    tpu.vector_store %arg8[%c0_37, %c1_38, %c0_39], %118 {strides = array<i32>} : memref<2x18x1024xbf16, #tpu.memory_space<vmem>>, vector<2x16x1024xbf16>,
    %cst_40 = arith.constant 0.000000e+00 : f32
    %120 = vector.broadcast %cst_40 : f32 to vector<32x1024xf32>
    %c0_41 = arith.constant 0 : index
    %c0_42 = arith.constant 0 : index
    %c0_43 = arith.constant 0 : index
    %121 = vector.load %arg8[%c0_41, %c0_42, %c0_43] : memref<2x18x1024xbf16, #tpu.memory_space<vmem>>, vector<2x16x1024xbf16>
    %122 = vector.shape_cast %121 : vector<2x16x1024xbf16> to vector<32x1024xbf16>
    %c0_44 = arith.constant 0 : index
    %c0_45 = arith.constant 0 : index
    %c0_46 = arith.constant 0 : index
    %123 = vector.load %arg4[%c0_44, %c0_45, %c0_46] : memref<3x1024x1024xbf16, #tpu.memory_space<vmem>>, vector<1x1024x1024xbf16>
    %124 = vector.shape_cast %123 : vector<1x1024x1024xbf16> to vector<1024x1024xbf16>
    %cst_47 = arith.constant dense<0.000000e+00> : vector<32x1024xf32>
    %125 = tpu.matmul %122, %124, %cst_47 {dimension_numbers = #tpu.dot_dimension_numbers<[1], [0], [0], [1], [0, 0, 1, 1], [], []>} : vector<32x1024xbf16>, vector<1024x1024xbf16>, vector<32x1024xf32> -> vector<32x1024xf32>
    %126 = arith.addf %120, %125 : vector<32x1024xf32>
    %c0_48 = arith.constant 0 : index
    %c1_49 = arith.constant 1 : index
    %c0_50 = arith.constant 0 : index
    %127 = vector.load %arg8[%c0_48, %c1_49, %c0_50] : memref<2x18x1024xbf16, #tpu.memory_space<vmem>>, vector<2x16x1024xbf16>
    %128 = vector.shape_cast %127 : vector<2x16x1024xbf16> to vector<32x1024xbf16>
    %c1_51 = arith.constant 1 : index
    %c0_52 = arith.constant 0 : index
    %c0_53 = arith.constant 0 : index
    %129 = vector.load %arg4[%c1_51, %c0_52, %c0_53] : memref<3x1024x1024xbf16, #tpu.memory_space<vmem>>, vector<1x1024x1024xbf16>
    %130 = vector.shape_cast %129 : vector<1x1024x1024xbf16> to vector<1024x1024xbf16>
    %cst_54 = arith.constant dense<0.000000e+00> : vector<32x1024xf32>
    %131 = tpu.matmul %128, %130, %cst_54 {dimension_numbers = #tpu.dot_dimension_numbers<[1], [0], [0], [1], [0, 0, 1, 1], [], []>} : vector<32x1024xbf16>, vector<1024x1024xbf16>, vector<32x1024xf32> -> vector<32x1024xf32>
    %132 = arith.addf %126, %131 : vector<32x1024xf32>
    %c0_55 = arith.constant 0 : index
    %c2_56 = arith.constant 2 : index
    %c0_57 = arith.constant 0 : index
    %133 = vector.load %arg8[%c0_55, %c2_56, %c0_57] : memref<2x18x1024xbf16, #tpu.memory_space<vmem>>, vector<2x16x1024xbf16>
    %134 = vector.shape_cast %133 : vector<2x16x1024xbf16> to vector<32x1024xbf16>
    %c2_58 = arith.constant 2 : index
    %c0_59 = arith.constant 0 : index
    %c0_60 = arith.constant 0 : index
    %135 = vector.load %arg4[%c2_58, %c0_59, %c0_60] : memref<3x1024x1024xbf16, #tpu.memory_space<vmem>>, vector<1x1024x1024xbf16>
    %136 = vector.shape_cast %135 : vector<1x1024x1024xbf16> to vector<1024x1024xbf16>
    %cst_61 = arith.constant dense<0.000000e+00> : vector<32x1024xf32>
    %137 = tpu.matmul %134, %136, %cst_61 {dimension_numbers = #tpu.dot_dimension_numbers<[1], [0], [0], [1], [0, 0, 1, 1], [], []>} : vector<32x1024xbf16>, vector<1024x1024xbf16>, vector<32x1024xf32> -> vector<32x1024xf32>
    %138 = arith.addf %132, %137 : vector<32x1024xf32>
    %c0_62 = arith.constant 0 : index
    %c0_63 = arith.constant 0 : index
    %139 = vector.load %arg5[%c0_62, %c0_63] : memref<1x64xf32, #tpu.memory_space<vmem>>, vector<1x64xf32>
    %c0_64 = arith.constant 0 : index
    %c0_65 = arith.constant 0 : index
    %140 = vector.load %arg6[%c0_64, %c0_65] : memref<1x64xf32, #tpu.memory_space<vmem>>, vector<1x64xf32>
    %cst_66 = arith.constant dense<0.000000e+00> : vector<1024xf32>
    %141 = vector.multi_reduction <add>, %138, %cst_66 [0] : vector<32x1024xf32> to vector<1024xf32>
    %142 = vector.shape_cast %141 : vector<1024xf32> to vector<1x1024xf32>
    %143 = arith.mulf %138, %138 : vector<32x1024xf32>
    %cst_67 = arith.constant dense<0.000000e+00> : vector<1024xf32>
    %144 = vector.multi_reduction <add>, %143, %cst_67 [0] : vector<32x1024xf32> to vector<1024xf32>
    %145 = vector.shape_cast %144 : vector<1024xf32> to vector<1x1024xf32>
    %cst_68 = arith.constant 0.000000e+00 : f32
    %146 = vector.broadcast %cst_68 : f32 to vector<1x64xf32>
    %cst_69 = arith.constant 0.000000e+00 : f32
    %147 = vector.broadcast %cst_69 : f32 to vector<1x64xf32>
    %148 = vector.extract_strided_slice %142 {offsets = [0, 0], sizes = [1, 64], strides = [1, 1]} : vector<1x1024xf32> to vector<1x64xf32>
    %149 = arith.addf %146, %148 : vector<1x64xf32>
    %150 = vector.extract_strided_slice %145 {offsets = [0, 0], sizes = [1, 64], strides = [1, 1]} : vector<1x1024xf32> to vector<1x64xf32>
    %151 = arith.addf %147, %150 : vector<1x64xf32>
    %152 = vector.extract_strided_slice %142 {offsets = [0, 64], sizes = [1, 64], strides = [1, 1]} : vector<1x1024xf32> to vector<1x64xf32>
    %153 = arith.addf %149, %152 : vector<1x64xf32>
    %154 = vector.extract_strided_slice %145 {offsets = [0, 64], sizes = [1, 64], strides = [1, 1]} : vector<1x1024xf32> to vector<1x64xf32>
    %155 = arith.addf %151, %154 : vector<1x64xf32>
    %156 = vector.extract_strided_slice %142 {offsets = [0, 128], sizes = [1, 64], strides = [1, 1]} : vector<1x1024xf32> to vector<1x64xf32>
    %157 = arith.addf %153, %156 : vector<1x64xf32>
    %158 = vector.extract_strided_slice %145 {offsets = [0, 128], sizes = [1, 64], strides = [1, 1]} : vector<1x1024xf32> to vector<1x64xf32>
    %159 = arith.addf %155, %158 : vector<1x64xf32>
    %160 = vector.extract_strided_slice %142 {offsets = [0, 192], sizes = [1, 64], strides = [1, 1]} : vector<1x1024xf32> to vector<1x64xf32>
    %161 = arith.addf %157, %160 : vector<1x64xf32>
    %162 = vector.extract_strided_slice %145 {offsets = [0, 192], sizes = [1, 64], strides = [1, 1]} : vector<1x1024xf32> to vector<1x64xf32>
    %163 = arith.addf %159, %162 : vector<1x64xf32>
    %164 = vector.extract_strided_slice %142 {offsets = [0, 256], sizes = [1, 64], strides = [1, 1]} : vector<1x1024xf32> to vector<1x64xf32>
    %165 = arith.addf %161, %164 : vector<1x64xf32>
    %166 = vector.extract_strided_slice %145 {offsets = [0, 256], sizes = [1, 64], strides = [1, 1]} : vector<1x1024xf32> to vector<1x64xf32>
    %167 = arith.addf %163, %166 : vector<1x64xf32>
    %168 = vector.extract_strided_slice %142 {offsets = [0, 320], sizes = [1, 64], strides = [1, 1]} : vector<1x1024xf32> to vector<1x64xf32>
    %169 = arith.addf %165, %168 : vector<1x64xf32>
    %170 = vector.extract_strided_slice %145 {offsets = [0, 320], sizes = [1, 64], strides = [1, 1]} : vector<1x1024xf32> to vector<1x64xf32>
    %171 = arith.addf %167, %170 : vector<1x64xf32>
    %172 = vector.extract_strided_slice %142 {offsets = [0, 384], sizes = [1, 64], strides = [1, 1]} : vector<1x1024xf32> to vector<1x64xf32>
    %173 = arith.addf %169, %172 : vector<1x64xf32>
    %174 = vector.extract_strided_slice %145 {offsets = [0, 384], sizes = [1, 64], strides = [1, 1]} : vector<1x1024xf32> to vector<1x64xf32>
    %175 = arith.addf %171, %174 : vector<1x64xf32>
    %176 = vector.extract_strided_slice %142 {offsets = [0, 448], sizes = [1, 64], strides = [1, 1]} : vector<1x1024xf32> to vector<1x64xf32>
    %177 = arith.addf %173, %176 : vector<1x64xf32>
    %178 = vector.extract_strided_slice %145 {offsets = [0, 448], sizes = [1, 64], strides = [1, 1]} : vector<1x1024xf32> to vector<1x64xf32>
    %179 = arith.addf %175, %178 : vector<1x64xf32>
    %180 = vector.extract_strided_slice %142 {offsets = [0, 512], sizes = [1, 64], strides = [1, 1]} : vector<1x1024xf32> to vector<1x64xf32>
    %181 = arith.addf %177, %180 : vector<1x64xf32>
    %182 = vector.extract_strided_slice %145 {offsets = [0, 512], sizes = [1, 64], strides = [1, 1]} : vector<1x1024xf32> to vector<1x64xf32>
    %183 = arith.addf %179, %182 : vector<1x64xf32>
    %184 = vector.extract_strided_slice %142 {offsets = [0, 576], sizes = [1, 64], strides = [1, 1]} : vector<1x1024xf32> to vector<1x64xf32>
    %185 = arith.addf %181, %184 : vector<1x64xf32>
    %186 = vector.extract_strided_slice %145 {offsets = [0, 576], sizes = [1, 64], strides = [1, 1]} : vector<1x1024xf32> to vector<1x64xf32>
    %187 = arith.addf %183, %186 : vector<1x64xf32>
    %188 = vector.extract_strided_slice %142 {offsets = [0, 640], sizes = [1, 64], strides = [1, 1]} : vector<1x1024xf32> to vector<1x64xf32>
    %189 = arith.addf %185, %188 : vector<1x64xf32>
    %190 = vector.extract_strided_slice %145 {offsets = [0, 640], sizes = [1, 64], strides = [1, 1]} : vector<1x1024xf32> to vector<1x64xf32>
    %191 = arith.addf %187, %190 : vector<1x64xf32>
    %192 = vector.extract_strided_slice %142 {offsets = [0, 704], sizes = [1, 64], strides = [1, 1]} : vector<1x1024xf32> to vector<1x64xf32>
    %193 = arith.addf %189, %192 : vector<1x64xf32>
    %194 = vector.extract_strided_slice %145 {offsets = [0, 704], sizes = [1, 64], strides = [1, 1]} : vector<1x1024xf32> to vector<1x64xf32>
    %195 = arith.addf %191, %194 : vector<1x64xf32>
    %196 = vector.extract_strided_slice %142 {offsets = [0, 768], sizes = [1, 64], strides = [1, 1]} : vector<1x1024xf32> to vector<1x64xf32>
    %197 = arith.addf %193, %196 : vector<1x64xf32>
    %198 = vector.extract_strided_slice %145 {offsets = [0, 768], sizes = [1, 64], strides = [1, 1]} : vector<1x1024xf32> to vector<1x64xf32>
    %199 = arith.addf %195, %198 : vector<1x64xf32>
    %200 = vector.extract_strided_slice %142 {offsets = [0, 832], sizes = [1, 64], strides = [1, 1]} : vector<1x1024xf32> to vector<1x64xf32>
    %201 = arith.addf %197, %200 : vector<1x64xf32>
    %202 = vector.extract_strided_slice %145 {offsets = [0, 832], sizes = [1, 64], strides = [1, 1]} : vector<1x1024xf32> to vector<1x64xf32>
    %203 = arith.addf %199, %202 : vector<1x64xf32>
    %204 = vector.extract_strided_slice %142 {offsets = [0, 896], sizes = [1, 64], strides = [1, 1]} : vector<1x1024xf32> to vector<1x64xf32>
    %205 = arith.addf %201, %204 : vector<1x64xf32>
    %206 = vector.extract_strided_slice %145 {offsets = [0, 896], sizes = [1, 64], strides = [1, 1]} : vector<1x1024xf32> to vector<1x64xf32>
    %207 = arith.addf %203, %206 : vector<1x64xf32>
    %208 = vector.extract_strided_slice %142 {offsets = [0, 960], sizes = [1, 64], strides = [1, 1]} : vector<1x1024xf32> to vector<1x64xf32>
    %209 = arith.addf %205, %208 : vector<1x64xf32>
    %210 = vector.extract_strided_slice %145 {offsets = [0, 960], sizes = [1, 64], strides = [1, 1]} : vector<1x1024xf32> to vector<1x64xf32>
    %211 = arith.addf %207, %210 : vector<1x64xf32>
    %cst_70 = arith.constant 5.120000e+02 : f32
    %212 = vector.broadcast %cst_70 : f32 to vector<1x64xf32>
    %213 = arith.divf %209, %212 : vector<1x64xf32>
    %cst_71 = arith.constant 5.120000e+02 : f32
    %214 = vector.broadcast %cst_71 : f32 to vector<1x64xf32>
    %215 = arith.divf %211, %214 : vector<1x64xf32>
    %216 = arith.mulf %213, %213 : vector<1x64xf32>
    %217 = arith.subf %215, %216 : vector<1x64xf32>
    %cst_72 = arith.constant 0.000000e+00 : f32
    %218 = vector.broadcast %cst_72 : f32 to vector<1x64xf32>
    %219 = arith.maximumf %217, %218 : vector<1x64xf32>
    %cst_73 = arith.constant 9.99999974E-6 : f32
    %220 = vector.broadcast %cst_73 : f32 to vector<1x64xf32>
    %221 = arith.addf %219, %220 : vector<1x64xf32>
    %222 = math.rsqrt %221 : vector<1x64xf32>
    %223 = arith.mulf %139, %222 : vector<1x64xf32>
    %224 = arith.mulf %213, %223 : vector<1x64xf32>
    %225 = arith.subf %140, %224 : vector<1x64xf32>
    %226 = tpu.concatenate %223, %223, %223, %223, %223, %223, %223, %223, %223, %223, %223, %223, %223, %223, %223, %223 in 1 : vector<1x64xf32>, vector<1x64xf32>, vector<1x64xf32>, vector<1x64xf32>, vector<1x64xf32>, vector<1x64xf32>, vector<1x64xf32>, vector<1x64xf32>, vector<1x64xf32>, vector<1x64xf32>, vector<1x64xf32>, vector<1x64xf32>, vector<1x64xf32>, vector<1x64xf32>, vector<1x64xf32>, vector<1x64xf32> -> vector<1x1024xf32>
    %227 = tpu.concatenate %225, %225, %225, %225, %225, %225, %225, %225, %225, %225, %225, %225, %225, %225, %225, %225 in 1 : vector<1x64xf32>, vector<1x64xf32>, vector<1x64xf32>, vector<1x64xf32>, vector<1x64xf32>, vector<1x64xf32>, vector<1x64xf32>, vector<1x64xf32>, vector<1x64xf32>, vector<1x64xf32>, vector<1x64xf32>, vector<1x64xf32>, vector<1x64xf32>, vector<1x64xf32>, vector<1x64xf32>, vector<1x64xf32> -> vector<1x1024xf32>
    %228 = vector.broadcast %226 : vector<1x1024xf32> to vector<32x1024xf32>
    %229 = arith.mulf %138, %228 : vector<32x1024xf32>
    %230 = vector.broadcast %227 : vector<1x1024xf32> to vector<32x1024xf32>
    %231 = arith.addf %229, %230 : vector<32x1024xf32>
    %cst_74 = arith.constant 0.000000e+00 : f32
    %232 = vector.broadcast %cst_74 : f32 to vector<32x1024xf32>
    %233 = arith.maximumf %231, %232 : vector<32x1024xf32>
    %c0_75 = arith.constant 0 : index
    %c0_76 = arith.constant 0 : index
    %234 = vector.load %arg7[%c0_75, %c0_76] : memref<32x1024xf32, #tpu.memory_space<vmem>>, vector<32x1024xf32>
    tpu.vector_store %arg7[%c0_75, %c0_76], %233 {strides = array<i32>} : memref<32x1024xf32, #tpu.memory_space<vmem>>, vector<32x1024xf32>,
    return
  }
}

</mosaic_0001>

<llo_original>
// kernel: early_feature_extractor.1
$region0: #{early_feature_extractor.1}
  #allocation0 [shape = 'u32[]', space=smem, size = 0x4, offset = 0x4, fixed_abs, tag = 'smem constant byte address 0x4 - core index']
  #allocation1 [shape = 'u32[144,128]{1,0:T(1,128)}', space=vmem, size = 0x12000, scoped, tag = 'internal scratch']
  #allocation2 [shape = 'bf16[2,18,1024]{2,1,0:T(8,128)(2,1)}', space=vmem, size = 0x18000, scoped, tag = 'scratch operand']
  %s0 = inlined_call_operand.vmem [shape: bf16[2,18,64], index: 0, kind: input, shape index: {}]
  %s1 = inlined_call_operand.vmem [shape: bf16[3,64,1024], index: 1, kind: input, shape index: {}]
  %s2 = inlined_call_operand.vmem [shape: f32[1,64], index: 2, kind: input, shape index: {}]
  %s3 = inlined_call_operand.vmem [shape: f32[1,64], index: 3, kind: input, shape index: {}]
  %s4 = inlined_call_operand.vmem [shape: bf16[3,1024,1024], index: 4, kind: input, shape index: {}]
  %s5 = inlined_call_operand.vmem [shape: f32[1,64], index: 5, kind: input, shape index: {}]
  %s6 = inlined_call_operand.vmem [shape: f32[1,64], index: 6, kind: input, shape index: {}]
  %s7 = inlined_call_operand.vmem [shape: f32[32,1024], index: 7, kind: output, shape index: {}]
  %s8 = sld [smem:[#allocation0]]
  $region38: #{early_feature_extractor.1} parent=0
    _
  %s10 = ssub.s32 1, %s8
  %s11 = scalar_select 0, %s10, %s8
  // Predicated region
  $region2: #{early_feature_extractor.1} parent=0 // pred_check
    _
  $region3: #{early_feature_extractor.1} parent=0 // pred_check_branch
    %13 = sbr.rel (0) target = $region5
  $region4: #{early_feature_extractor.1} parent=0 // pred_region
    _
  $region5: #{early_feature_extractor.1} parent=0 // pred_fallthru
    _
  // Predicated region
  $region6: #{early_feature_extractor.1} parent=0 // pred_check
    _
  $region7: #{early_feature_extractor.1} parent=0 // pred_check_branch
    %15 = sbr.rel (0) target = $region9
  $region8: #{early_feature_extractor.1} parent=0 // pred_region
    _
  $region9: #{early_feature_extractor.1} parent=0 // pred_fallthru
    _
  // Predicated region
  $region10: #{early_feature_extractor.1} parent=0 // pred_check
    _
  $region11: #{early_feature_extractor.1} parent=0 // pred_check_branch
    %17 = sbr.rel (0) target = $region13
  $region12: #{early_feature_extractor.1} parent=0 // pred_region
    _
  $region13: #{early_feature_extractor.1} parent=0 // pred_fallthru
    _
  // Predicated region
  $region14: #{early_feature_extractor.1} parent=0 // pred_check
    _
  $region15: #{early_feature_extractor.1} parent=0 // pred_check_branch
    %19 = sbr.rel (0) target = $region17
  $region16: #{early_feature_extractor.1} parent=0 // pred_region
    _
  $region17: #{early_feature_extractor.1} parent=0 // pred_fallthru
    _
  // Predicated region
  $region18: #{early_feature_extractor.1} parent=0 // pred_check
    _
  $region19: #{early_feature_extractor.1} parent=0 // pred_check_branch
    %21 = sbr.rel (0) target = $region21
  $region20: #{early_feature_extractor.1} parent=0 // pred_region
    _
  $region21: #{early_feature_extractor.1} parent=0 // pred_fallthru
    _
  // Predicated region
  $region22: #{early_feature_extractor.1} parent=0 // pred_check
    _
  $region23: #{early_feature_extractor.1} parent=0 // pred_check_branch
    %23 = sbr.rel (0) target = $region25
  $region24: #{early_feature_extractor.1} parent=0 // pred_region
    _
  $region25: #{early_feature_extractor.1} parent=0 // pred_fallthru
    _
  // Predicated region
  $region26: #{early_feature_extractor.1} parent=0 // pred_check
    _
  $region27: #{early_feature_extractor.1} parent=0 // pred_check_branch
    %25 = sbr.rel (0) target = $region29
  $region28: #{early_feature_extractor.1} parent=0 // pred_region
    _
  $region29: #{early_feature_extractor.1} parent=0 // pred_fallthru
    _
  %v27 = vld [vmem:[%s0] sm:$0xf]
  %v28 = vld [vmem:[%s0 + $0x4] sm:$0xf]
  %v29 = vld [vmem:[%s0 + $0xc] sm:$0xf]
  %v30 = vld [vmem:[%s0 + $0x10] sm:$0xf]
  %v31 = vld [vmem:[%s1] sm:$0xff]
  %v32 = vld [vmem:[%s1 + $0x8] sm:$0xff]
  %v33 = vld [vmem:[%s1 + $0x10] sm:$0xff]
  %v34 = vld [vmem:[%s1 + $0x18] sm:$0xff]
  %v35 = vld [vmem:[%s1 + $0x20] sm:$0xff]
  %v36 = vld [vmem:[%s1 + $0x28] sm:$0xff]
  %v37 = vld [vmem:[%s1 + $0x30] sm:$0xff]
  %v38 = vld [vmem:[%s1 + $0x38] sm:$0xff]
  %v39 = vld [vmem:[%s1 + $0x40] sm:$0xff]
  %v40 = vld [vmem:[%s1 + $0x48] sm:$0xff]
  %v41 = vld [vmem:[%s1 + $0x50] sm:$0xff]
  %v42 = vld [vmem:[%s1 + $0x58] sm:$0xff]
  %v43 = vld [vmem:[%s1 + $0x60] sm:$0xff]
  %v44 = vld [vmem:[%s1 + $0x68] sm:$0xff]
  %v45 = vld [vmem:[%s1 + $0x70] sm:$0xff]
  %v46 = vld [vmem:[%s1 + $0x78] sm:$0xff]
  %v47 = vld [vmem:[%s1 + $0x80] sm:$0xff]
  %v48 = vld [vmem:[%s1 + $0x88] sm:$0xff]
  %v49 = vld [vmem:[%s1 + $0x90] sm:$0xff]
  %v50 = vld [vmem:[%s1 + $0x98] sm:$0xff]
  %v51 = vld [vmem:[%s1 + $0xa0] sm:$0xff]
  %v52 = vld [vmem:[%s1 + $0xa8] sm:$0xff]
  %v53 = vld [vmem:[%s1 + $0xb0] sm:$0xff]
  %v54 = vld [vmem:[%s1 + $0xb8] sm:$0xff]
  %v55 = vld [vmem:[%s1 + $0xc0] sm:$0xff]
  %v56 = vld [vmem:[%s1 + $0xc8] sm:$0xff]
  %v57 = vld [vmem:[%s1 + $0xd0] sm:$0xff]
  %v58 = vld [vmem:[%s1 + $0xd8] sm:$0xff]
  %v59 = vld [vmem:[%s1 + $0xe0] sm:$0xff]
  %v60 = vld [vmem:[%s1 + $0xe8] sm:$0xff]
  %v61 = vld [vmem:[%s1 + $0xf0] sm:$0xff]
  %v62 = vld [vmem:[%s1 + $0xf8] sm:$0xff]
  %v63 = vld [vmem:[%s0 + $0x8] sm:$0x1]
  %v64 = vld [vmem:[%s0 + $0x14] sm:$0x1]
  %vm65 = vsmask.f32 3328
  %vm66 = vsmask.f32 7440
  %vm67 = vmor %vm65, %vm66
  %v69 = vshrl.u32 %v27, 16
  %v71 = vrot.slane %v69, 4
  %v72 = vshll.u32 %v27, 16
  %v74 = vrot.slane %v72, 5
  %v75 = vor.u32 %v71, %v74
  %v76 = vrot.slane %v75, 4
  %v78 = vshll.u32 %v28, 16
  %v80 = vrot.slane %v78, 5
  %v81 = vsel %vm67, %v76, %v80
  %v82 = vshrl.u32 %v28, 16
  %v84 = vrot.slane %v82, 4
  %v85 = vor.u32 %v84, %v80
  %v86 = vrot.slane %v85, 4
  %v88 = vshll.u32 %v63, 16
  %v90 = vrot.slane %v88, 5
  %v91 = vsel %vm67, %v86, %v90
  %v93 = vshrl.u32 %v29, 16
  %v95 = vrot.slane %v93, 4
  %v96 = vshll.u32 %v29, 16
  %v98 = vrot.slane %v96, 5
  %v99 = vor.u32 %v95, %v98
  %v100 = vrot.slane %v99, 4
  %v102 = vshll.u32 %v30, 16
  %v104 = vrot.slane %v102, 5
  %v105 = vsel %vm67, %v100, %v104
  %v106 = vshrl.u32 %v30, 16
  %v108 = vrot.slane %v106, 4
  %v109 = vor.u32 %v108, %v104
  %v110 = vrot.slane %v109, 4
  %v112 = vshll.u32 %v64, 16
  %v114 = vrot.slane %v112, 5
  %v115 = vsel %vm67, %v110, %v114
  %s116 = scalar_lea.vmem %s1, 256
  %v117 = vld [vmem:[%s116] sm:$0xff]
  %v118 = vld [vmem:[%s116 + $0x8] sm:$0xff]
  %v119 = vld [vmem:[%s116 + $0x10] sm:$0xff]
  %v120 = vld [vmem:[%s116 + $0x18] sm:$0xff]
  %v121 = vld [vmem:[%s116 + $0x20] sm:$0xff]
  %v122 = vld [vmem:[%s116 + $0x28] sm:$0xff]
  %v123 = vld [vmem:[%s116 + $0x30] sm:$0xff]
  %v124 = vld [vmem:[%s116 + $0x38] sm:$0xff]
  %v125 = vld [vmem:[%s116 + $0x40] sm:$0xff]
  %v126 = vld [vmem:[%s116 + $0x48] sm:$0xff]
  %v127 = vld [vmem:[%s116 + $0x50] sm:$0xff]
  %v128 = vld [vmem:[%s116 + $0x58] sm:$0xff]
  %v129 = vld [vmem:[%s116 + $0x60] sm:$0xff]
  %v130 = vld [vmem:[%s116 + $0x68] sm:$0xff]
  %v131 = vld [vmem:[%s116 + $0x70] sm:$0xff]
  %v132 = vld [vmem:[%s116 + $0x78] sm:$0xff]
  %v133 = vld [vmem:[%s116 + $0x80] sm:$0xff]
  %v134 = vld [vmem:[%s116 + $0x88] sm:$0xff]
  %v135 = vld [vmem:[%s116 + $0x90] sm:$0xff]
  %v136 = vld [vmem:[%s116 + $0x98] sm:$0xff]
  %v137 = vld [vmem:[%s116 + $0xa0] sm:$0xff]
  %v138 = vld [vmem:[%s116 + $0xa8] sm:$0xff]
  %v139 = vld [vmem:[%s116 + $0xb0] sm:$0xff]
  %v140 = vld [vmem:[%s116 + $0xb8] sm:$0xff]
  %v141 = vld [vmem:[%s116 + $0xc0] sm:$0xff]
  %v142 = vld [vmem:[%s116 + $0xc8] sm:$0xff]
  %v143 = vld [vmem:[%s116 + $0xd0] sm:$0xff]
  %v144 = vld [vmem:[%s116 + $0xd8] sm:$0xff]
  %v145 = vld [vmem:[%s116 + $0xe0] sm:$0xff]
  %v146 = vld [vmem:[%s116 + $0xe8] sm:$0xff]
  %v147 = vld [vmem:[%s116 + $0xf0] sm:$0xff]
  %v148 = vld [vmem:[%s116 + $0xf8] sm:$0xff]
  %v149 = vunpack.c.l.b16 %v81
  %v150 = vunpack.c.l.b16 %v91
  %v151 = vunpack.c.l.b16 %v105
  %v152 = vunpack.c.l.b16 %v115
  %v153 = vpack.c.b16 %v150, %v149
  %v154 = vpack.c.b16 %v152, %v151
  %v187 = vunpack.c.l.b16 %v117
  %v188 = vunpack.c.h.b16 %v117
  %v189 = vunpack.c.l.b16 %v118
  %v190 = vunpack.c.h.b16 %v118
  %v191 = vunpack.c.l.b16 %v119
  %v192 = vunpack.c.h.b16 %v119
  %v193 = vunpack.c.l.b16 %v120
  %v194 = vunpack.c.h.b16 %v120
  %v195 = vunpack.c.l.b16 %v121
  %v196 = vunpack.c.h.b16 %v121
  %v197 = vunpack.c.l.b16 %v122
  %v198 = vunpack.c.h.b16 %v122
  %v199 = vunpack.c.l.b16 %v123
  %v200 = vunpack.c.h.b16 %v123
  %v201 = vunpack.c.l.b16 %v124
  %v202 = vunpack.c.h.b16 %v124
  %v203 = vunpack.c.l.b16 %v125
  %v204 = vunpack.c.h.b16 %v125
  %v205 = vunpack.c.l.b16 %v126
  %v206 = vunpack.c.h.b16 %v126
  %v207 = vunpack.c.l.b16 %v127
  %v208 = vunpack.c.h.b16 %v127
  %v209 = vunpack.c.l.b16 %v128
  %v210 = vunpack.c.h.b16 %v128
  %v211 = vunpack.c.l.b16 %v129
  %v212 = vunpack.c.h.b16 %v129
  %v213 = vunpack.c.l.b16 %v130
  %v214 = vunpack.c.h.b16 %v130
  %v215 = vunpack.c.l.b16 %v131
  %v216 = vunpack.c.h.b16 %v131
  %v217 = vunpack.c.l.b16 %v132
  %v218 = vunpack.c.h.b16 %v132
  %v219 = vunpack.c.l.b16 %v133
  %v220 = vunpack.c.h.b16 %v133
  %v221 = vunpack.c.l.b16 %v134
  %v222 = vunpack.c.h.b16 %v134
  %v223 = vunpack.c.l.b16 %v135
  %v224 = vunpack.c.h.b16 %v135
  %v225 = vunpack.c.l.b16 %v136
  %v226 = vunpack.c.h.b16 %v136
  %v227 = vunpack.c.l.b16 %v137
  %v228 = vunpack.c.h.b16 %v137
  %v229 = vunpack.c.l.b16 %v138
  %v230 = vunpack.c.h.b16 %v138
  %v231 = vunpack.c.l.b16 %v139
  %v232 = vunpack.c.h.b16 %v139
  %v233 = vunpack.c.l.b16 %v140
  %v234 = vunpack.c.h.b16 %v140
  %v235 = vunpack.c.l.b16 %v141
  %v236 = vunpack.c.h.b16 %v141
  %v237 = vunpack.c.l.b16 %v142
  %v238 = vunpack.c.h.b16 %v142
  %v239 = vunpack.c.l.b16 %v143
  %v240 = vunpack.c.h.b16 %v143
  %v241 = vunpack.c.l.b16 %v144
  %v242 = vunpack.c.h.b16 %v144
  %v243 = vunpack.c.l.b16 %v145
  %v244 = vunpack.c.h.b16 %v145
  %v245 = vunpack.c.l.b16 %v146
  %v246 = vunpack.c.h.b16 %v146
  %v247 = vunpack.c.l.b16 %v147
  %v248 = vunpack.c.h.b16 %v147
  %v249 = vunpack.c.l.b16 %v148
  %v250 = vunpack.c.h.b16 %v148
  %v251 = vpack.c.b16 %v195, %v187
  %v252 = vpack.c.b16 %v196, %v188
  %v253 = vpack.c.b16 %v197, %v189
  %v254 = vpack.c.b16 %v198, %v190
  %v255 = vpack.c.b16 %v199, %v191
  %v256 = vpack.c.b16 %v200, %v192
  %v257 = vpack.c.b16 %v201, %v193
  %v258 = vpack.c.b16 %v202, %v194
  %v259 = vpack.c.b16 %v211, %v203
  %v260 = vpack.c.b16 %v212, %v204
  %v261 = vpack.c.b16 %v213, %v205
  %v262 = vpack.c.b16 %v214, %v206
  %v263 = vpack.c.b16 %v215, %v207
  %v264 = vpack.c.b16 %v216, %v208
  %v265 = vpack.c.b16 %v217, %v209
  %v266 = vpack.c.b16 %v218, %v210
  %v267 = vpack.c.b16 %v227, %v219
  %v268 = vpack.c.b16 %v228, %v220
  %v269 = vpack.c.b16 %v229, %v221
  %v270 = vpack.c.b16 %v230, %v222
  %v271 = vpack.c.b16 %v231, %v223
  %v272 = vpack.c.b16 %v232, %v224
  %v273 = vpack.c.b16 %v233, %v225
  %v274 = vpack.c.b16 %v234, %v226
  %v275 = vpack.c.b16 %v243, %v235
  %v276 = vpack.c.b16 %v244, %v236
  %v277 = vpack.c.b16 %v245, %v237
  %v278 = vpack.c.b16 %v246, %v238
  %v279 = vpack.c.b16 %v247, %v239
  %v280 = vpack.c.b16 %v248, %v240
  %v281 = vpack.c.b16 %v249, %v241
  %v282 = vpack.c.b16 %v250, %v242
  %vm315 = vcmask 523264
  %v317 = vsel %vm315, %v153, 0
  %v320 = vsel %vm315, %v154, 0
  %322 = vmatprep.subr.bf16.mxu0 %v252
  %323 = vmatpush1.bf16.msra.mxu0 %v251
  %324 = vmatprep.subr.bf16.mxu0 %v260
  %325 = vmatpush1.bf16.msra.mxu0 %v259
  %326 = vmatprep.subr.bf16.mxu0 %v268
  %327 = vmatpush1.bf16.msra.mxu0 %v267
  %328 = vmatprep.subr.bf16.mxu0 %v276
  %329 = vmatpush1.bf16.msra.mxu0 %v275
  %330 = vmatprep.subr.bf16.mxu0 0
  %331 = vmatpush1.bf16.msra.mxu0 0
  %332 = vmatprep.subr.bf16.mxu0 0
  %333 = vmatpush1.bf16.msra.mxu0 0
  %334 = vmatprep.subr.bf16.mxu0 0
  %335 = vmatpush1.bf16.msra.mxu0 0
  %336 = vmatprep.subr.bf16.mxu0 0
  %337 = vmatpush1.bf16.msra.mxu0 0
  %338 = vmatprep.subr.bf16.mxu0 0
  %339 = vmatpush1.bf16.msra.mxu0 0
  %340 = vmatprep.subr.bf16.mxu0 0
  %341 = vmatpush1.bf16.msra.mxu0 0
  %342 = vmatprep.subr.bf16.mxu0 0
  %343 = vmatpush1.bf16.msra.mxu0 0
  %344 = vmatprep.subr.bf16.mxu0 0
  %345 = vmatpush1.bf16.msra.mxu0 0
  %346 = vmatprep.subr.bf16.mxu0 0
  %347 = vmatpush1.bf16.msra.mxu0 0
  %348 = vmatprep.subr.bf16.mxu0 0
  %349 = vmatpush1.bf16.msra.mxu0 0
  %350 = vmatprep.subr.bf16.mxu0 0
  %351 = vmatpush1.bf16.msra.mxu0 0
  %352 = vmatprep.subr.bf16.mxu0 0
  %353 = vmatpush1.bf16.msra.mxu0 0
  %354 = vmatprep.mubr.bf16.mxu0 0
  %355 = vmatmul.mubr.bf16.gmra.mrb[0].mxu0 %v317
  %v356 = vpop.f32.mrb[0].mxu0
  %v357 = vadd.f32 0.0, %v356
  %v358 = vpop.f32.mrb[0].mxu0
  %v359 = vadd.f32 0.0, %v358
  %v360 = vpop.f32.mrb[0].mxu0
  %v361 = vadd.f32 0.0, %v360
  %v362 = vpop.f32.mrb[0].mxu0
  %v363 = vadd.f32 0.0, %v362
  %364 = vmatprep.mubr.bf16.mxu0 0
  %365 = vmatmul.mubr.bf16.gmra.mrb[0].mxu0 %v320
  %v366 = vpop.f32.mrb[0].mxu0
  %v367 = vadd.f32 0.0, %v366
  %v368 = vpop.f32.mrb[0].mxu0
  %v369 = vadd.f32 0.0, %v368
  %v370 = vpop.f32.mrb[0].mxu0
  %v371 = vadd.f32 0.0, %v370
  %v372 = vpop.f32.mrb[0].mxu0
  %v373 = vadd.f32 0.0, %v372
  %374 = vdwg.mxu0
  %375 = vmatprep.subr.bf16.mxu0 %v254
  %376 = vmatpush1.bf16.msra.mxu0 %v253
  %377 = vmatprep.subr.bf16.mxu0 %v262
  %378 = vmatpush1.bf16.msra.mxu0 %v261
  %379 = vmatprep.subr.bf16.mxu0 %v270
  %380 = vmatpush1.bf16.msra.mxu0 %v269
  %381 = vmatprep.subr.bf16.mxu0 %v278
  %382 = vmatpush1.bf16.msra.mxu0 %v277
  %383 = vmatprep.subr.bf16.mxu0 0
  %384 = vmatpush1.bf16.msra.mxu0 0
  %385 = vmatprep.subr.bf16.mxu0 0
  %386 = vmatpush1.bf16.msra.mxu0 0
  %387 = vmatprep.subr.bf16.mxu0 0
  %388 = vmatpush1.bf16.msra.mxu0 0
  %389 = vmatprep.subr.bf16.mxu0 0
  %390 = vmatpush1.bf16.msra.mxu0 0
  %391 = vmatprep.subr.bf16.mxu0 0
  %392 = vmatpush1.bf16.msra.mxu0 0
  %393 = vmatprep.subr.bf16.mxu0 0
  %394 = vmatpush1.bf16.msra.mxu0 0
  %395 = vmatprep.subr.bf16.mxu0 0
  %396 = vmatpush1.bf16.msra.mxu0 0
  %397 = vmatprep.subr.bf16.mxu0 0
  %398 = vmatpush1.bf16.msra.mxu0 0
  %399 = vmatprep.subr.bf16.mxu0 0
  %400 = vmatpush1.bf16.msra.mxu0 0
  %401 = vmatprep.subr.bf16.mxu0 0
  %402 = vmatpush1.bf16.msra.mxu0 0
  %403 = vmatprep.subr.bf16.mxu0 0
  %404 = vmatpush1.bf16.msra.mxu0 0
  %405 = vmatprep.subr.bf16.mxu0 0
  %406 = vmatpush1.bf16.msra.mxu0 0
  %407 = vmatprep.mubr.bf16.mxu0 0
  %408 = vmatmul.mubr.bf16.gmra.mrb[0].mxu0 %v317
  %v409 = vpop.f32.mrb[0].mxu0
  %v410 = vadd.f32 0.0, %v409
  %v411 = vpop.f32.mrb[0].mxu0
  %v412 = vadd.f32 0.0, %v411
  %v413 = vpop.f32.mrb[0].mxu0
  %v414 = vadd.f32 0.0, %v413
  %v415 = vpop.f32.mrb[0].mxu0
  %v416 = vadd.f32 0.0, %v415
  %417 = vmatprep.mubr.bf16.mxu0 0
  %418 = vmatmul.mubr.bf16.gmra.mrb[0].mxu0 %v320
  %v419 = vpop.f32.mrb[0].mxu0
  %v420 = vadd.f32 0.0, %v419
  %v421 = vpop.f32.mrb[0].mxu0
  %v422 = vadd.f32 0.0, %v421
  %v423 = vpop.f32.mrb[0].mxu0
  %v424 = vadd.f32 0.0, %v423
  %v425 = vpop.f32.mrb[0].mxu0
  %v426 = vadd.f32 0.0, %v425
  %427 = vdwg.mxu0
  %428 = vmatprep.subr.bf16.mxu0 %v256
  %429 = vmatpush1.bf16.msra.mxu0 %v255
  %430 = vmatprep.subr.bf16.mxu0 %v264
  %431 = vmatpush1.bf16.msra.mxu0 %v263
  %432 = vmatprep.subr.bf16.mxu0 %v272
  %433 = vmatpush1.bf16.msra.mxu0 %v271
  %434 = vmatprep.subr.bf16.mxu0 %v280
  %435 = vmatpush1.bf16.msra.mxu0 %v279
  %436 = vmatprep.subr.bf16.mxu0 0
  %437 = vmatpush1.bf16.msra.mxu0 0
  %438 = vmatprep.subr.bf16.mxu0 0
  %439 = vmatpush1.bf16.msra.mxu0 0
  %440 = vmatprep.subr.bf16.mxu0 0
  %441 = vmatpush1.bf16.msra.mxu0 0
  %442 = vmatprep.subr.bf16.mxu0 0
  %443 = vmatpush1.bf16.msra.mxu0 0
  %444 = vmatprep.subr.bf16.mxu0 0
  %445 = vmatpush1.bf16.msra.mxu0 0
  %446 = vmatprep.subr.bf16.mxu0 0
  %447 = vmatpush1.bf16.msra.mxu0 0
  %448 = vmatprep.subr.bf16.mxu0 0
  %449 = vmatpush1.bf16.msra.mxu0 0
  %450 = vmatprep.subr.bf16.mxu0 0
  %451 = vmatpush1.bf16.msra.mxu0 0
  %452 = vmatprep.subr.bf16.mxu0 0
  %453 = vmatpush1.bf16.msra.mxu0 0
  %454 = vmatprep.subr.bf16.mxu0 0
  %455 = vmatpush1.bf16.msra.mxu0 0
  %456 = vmatprep.subr.bf16.mxu0 0
  %457 = vmatpush1.bf16.msra.mxu0 0
  %458 = vmatprep.subr.bf16.mxu0 0
  %459 = vmatpush1.bf16.msra.mxu0 0
  %460 = vmatprep.mubr.bf16.mxu0 0
  %461 = vmatmul.mubr.bf16.gmra.mrb[0].mxu0 %v317
  %v462 = vpop.f32.mrb[0].mxu0
  %v463 = vadd.f32 0.0, %v462
  %v464 = vpop.f32.mrb[0].mxu0
  %v465 = vadd.f32 0.0, %v464
  %v466 = vpop.f32.mrb[0].mxu0
  %v467 = vadd.f32 0.0, %v466
  %v468 = vpop.f32.mrb[0].mxu0
  %v469 = vadd.f32 0.0, %v468
  %470 = vmatprep.mubr.bf16.mxu0 0
  %471 = vmatmul.mubr.bf16.gmra.mrb[0].mxu0 %v320
  %v472 = vpop.f32.mrb[0].mxu0
  %v473 = vadd.f32 0.0, %v472
  %v474 = vpop.f32.mrb[0].mxu0
  %v475 = vadd.f32 0.0, %v474
  %v476 = vpop.f32.mrb[0].mxu0
  %v477 = vadd.f32 0.0, %v476
  %v478 = vpop.f32.mrb[0].mxu0
  %v479 = vadd.f32 0.0, %v478
  %480 = vdwg.mxu0
  %481 = vmatprep.subr.bf16.mxu0 %v258
  %482 = vmatpush1.bf16.msra.mxu0 %v257
  %483 = vmatprep.subr.bf16.mxu0 %v266
  %484 = vmatpush1.bf16.msra.mxu0 %v265
  %485 = vmatprep.subr.bf16.mxu0 %v274
  %486 = vmatpush1.bf16.msra.mxu0 %v273
  %487 = vmatprep.subr.bf16.mxu0 %v282
  %488 = vmatpush1.bf16.msra.mxu0 %v281
  %489 = vmatprep.subr.bf16.mxu0 0
  %490 = vmatpush1.bf16.msra.mxu0 0
  %491 = vmatprep.subr.bf16.mxu0 0
  %492 = vmatpush1.bf16.msra.mxu0 0
  %493 = vmatprep.subr.bf16.mxu0 0
  %494 = vmatpush1.bf16.msra.mxu0 0
  %495 = vmatprep.subr.bf16.mxu0 0
  %496 = vmatpush1.bf16.msra.mxu0 0
  %497 = vmatprep.subr.bf16.mxu0 0
  %498 = vmatpush1.bf16.msra.mxu0 0
  %499 = vmatprep.subr.bf16.mxu0 0
  %500 = vmatpush1.bf16.msra.mxu0 0
  %501 = vmatprep.subr.bf16.mxu0 0
  %502 = vmatpush1.bf16.msra.mxu0 0
  %503 = vmatprep.subr.bf16.mxu0 0
  %504 = vmatpush1.bf16.msra.mxu0 0
  %505 = vmatprep.subr.bf16.mxu0 0
  %506 = vmatpush1.bf16.msra.mxu0 0
  %507 = vmatprep.subr.bf16.mxu0 0
  %508 = vmatpush1.bf16.msra.mxu0 0
  %509 = vmatprep.subr.bf16.mxu0 0
  %510 = vmatpush1.bf16.msra.mxu0 0
  %511 = vmatprep.subr.bf16.mxu0 0
  %512 = vmatpush1.bf16.msra.mxu0 0
  %513 = vmatprep.mubr.bf16.mxu0 0
  %514 = vmatmul.mubr.bf16.gmra.mrb[0].mxu0 %v317
  %v515 = vpop.f32.mrb[0].mxu0
  %v516 = vadd.f32 0.0, %v515
  %v517 = vpop.f32.mrb[0].mxu0
  %v518 = vadd.f32 0.0, %v517
  %v519 = vpop.f32.mrb[0].mxu0
  %v520 = vadd.f32 0.0, %v519
  %v521 = vpop.f32.mrb[0].mxu0
  %v522 = vadd.f32 0.0, %v521
  %523 = vmatprep.mubr.bf16.mxu0 0
  %524 = vmatmul.mubr.bf16.gmra.mrb[0].mxu0 %v320
  %v525 = vpop.f32.mrb[0].mxu0
  %v526 = vadd.f32 0.0, %v525
  %v527 = vpop.f32.mrb[0].mxu0
  %v528 = vadd.f32 0.0, %v527
  %v529 = vpop.f32.mrb[0].mxu0
  %v530 = vadd.f32 0.0, %v529
  %v531 = vpop.f32.mrb[0].mxu0
  %v532 = vadd.f32 0.0, %v531
  %533 = vdwg.mxu0
  %v538 = vunpack.c.l.b16 %v27
  %v539 = vunpack.c.l.b16 %v28
  %v540 = vunpack.c.l.b16 %v29
  %v541 = vunpack.c.l.b16 %v30
  %v542 = vpack.c.b16 %v539, %v538
  %v543 = vpack.c.b16 %v541, %v540
  %v576 = vunpack.c.l.b16 %v31
  %v577 = vunpack.c.h.b16 %v31
  %v578 = vunpack.c.l.b16 %v32
  %v579 = vunpack.c.h.b16 %v32
  %v580 = vunpack.c.l.b16 %v33
  %v581 = vunpack.c.h.b16 %v33
  %v582 = vunpack.c.l.b16 %v34
  %v583 = vunpack.c.h.b16 %v34
  %v584 = vunpack.c.l.b16 %v35
  %v585 = vunpack.c.h.b16 %v35
  %v586 = vunpack.c.l.b16 %v36
  %v587 = vunpack.c.h.b16 %v36
  %v588 = vunpack.c.l.b16 %v37
  %v589 = vunpack.c.h.b16 %v37
  %v590 = vunpack.c.l.b16 %v38
  %v591 = vunpack.c.h.b16 %v38
  %v592 = vunpack.c.l.b16 %v39
  %v593 = vunpack.c.h.b16 %v39
  %v594 = vunpack.c.l.b16 %v40
  %v595 = vunpack.c.h.b16 %v40
  %v596 = vunpack.c.l.b16 %v41
  %v597 = vunpack.c.h.b16 %v41
  %v598 = vunpack.c.l.b16 %v42
  %v599 = vunpack.c.h.b16 %v42
  %v600 = vunpack.c.l.b16 %v43
  %v601 = vunpack.c.h.b16 %v43
  %v602 = vunpack.c.l.b16 %v44
  %v603 = vunpack.c.h.b16 %v44
  %v604 = vunpack.c.l.b16 %v45
  %v605 = vunpack.c.h.b16 %v45
  %v606 = vunpack.c.l.b16 %v46
  %v607 = vunpack.c.h.b16 %v46
  %v608 = vunpack.c.l.b16 %v47
  %v609 = vunpack.c.h.b16 %v47
  %v610 = vunpack.c.l.b16 %v48
  %v611 = vunpack.c.h.b16 %v48
  %v612 = vunpack.c.l.b16 %v49
  %v613 = vunpack.c.h.b16 %v49
  %v614 = vunpack.c.l.b16 %v50
  %v615 = vunpack.c.h.b16 %v50
  %v616 = vunpack.c.l.b16 %v51
  %v617 = vunpack.c.h.b16 %v51
  %v618 = vunpack.c.l.b16 %v52
  %v619 = vunpack.c.h.b16 %v52
  %v620 = vunpack.c.l.b16 %v53
  %v621 = vunpack.c.h.b16 %v53
  %v622 = vunpack.c.l.b16 %v54
  %v623 = vunpack.c.h.b16 %v54
  %v624 = vunpack.c.l.b16 %v55
  %v625 = vunpack.c.h.b16 %v55
  %v626 = vunpack.c.l.b16 %v56
  %v627 = vunpack.c.h.b16 %v56
  %v628 = vunpack.c.l.b16 %v57
  %v629 = vunpack.c.h.b16 %v57
  %v630 = vunpack.c.l.b16 %v58
  %v631 = vunpack.c.h.b16 %v58
  %v632 = vunpack.c.l.b16 %v59
  %v633 = vunpack.c.h.b16 %v59
  %v634 = vunpack.c.l.b16 %v60
  %v635 = vunpack.c.h.b16 %v60
  %v636 = vunpack.c.l.b16 %v61
  %v637 = vunpack.c.h.b16 %v61
  %v638 = vunpack.c.l.b16 %v62
  %v639 = vunpack.c.h.b16 %v62
  %v640 = vpack.c.b16 %v584, %v576
  %v641 = vpack.c.b16 %v585, %v577
  %v642 = vpack.c.b16 %v586, %v578
  %v643 = vpack.c.b16 %v587, %v579
  %v644 = vpack.c.b16 %v588, %v580
  %v645 = vpack.c.b16 %v589, %v581
  %v646 = vpack.c.b16 %v590, %v582
  %v647 = vpack.c.b16 %v591, %v583
  %v648 = vpack.c.b16 %v600, %v592
  %v649 = vpack.c.b16 %v601, %v593
  %v650 = vpack.c.b16 %v602, %v594
  %v651 = vpack.c.b16 %v603, %v595
  %v652 = vpack.c.b16 %v604, %v596
  %v653 = vpack.c.b16 %v605, %v597
  %v654 = vpack.c.b16 %v606, %v598
  %v655 = vpack.c.b16 %v607, %v599
  %v656 = vpack.c.b16 %v616, %v608
  %v657 = vpack.c.b16 %v617, %v609
  %v658 = vpack.c.b16 %v618, %v610
  %v659 = vpack.c.b16 %v619, %v611
  %v660 = vpack.c.b16 %v620, %v612
  %v661 = vpack.c.b16 %v621, %v613
  %v662 = vpack.c.b16 %v622, %v614
  %v663 = vpack.c.b16 %v623, %v615
  %v664 = vpack.c.b16 %v632, %v624
  %v665 = vpack.c.b16 %v633, %v625
  %v666 = vpack.c.b16 %v634, %v626
  %v667 = vpack.c.b16 %v635, %v627
  %v668 = vpack.c.b16 %v636, %v628
  %v669 = vpack.c.b16 %v637, %v629
  %v670 = vpack.c.b16 %v638, %v630
  %v671 = vpack.c.b16 %v639, %v631
  %v705 = vsel %vm315, %v542, 0
  %v708 = vsel %vm315, %v543, 0
  %710 = vmatprep.subr.bf16.mxu0 %v641
  %711 = vmatpush1.bf16.msra.mxu0 %v640
  %712 = vmatprep.subr.bf16.mxu0 %v649
  %713 = vmatpush1.bf16.msra.mxu0 %v648
  %714 = vmatprep.subr.bf16.mxu0 %v657
  %715 = vmatpush1.bf16.msra.mxu0 %v656
  %716 = vmatprep.subr.bf16.mxu0 %v665
  %717 = vmatpush1.bf16.msra.mxu0 %v664
  %718 = vmatprep.subr.bf16.mxu0 0
  %719 = vmatpush1.bf16.msra.mxu0 0
  %720 = vmatprep.subr.bf16.mxu0 0
  %721 = vmatpush1.bf16.msra.mxu0 0
  %722 = vmatprep.subr.bf16.mxu0 0
  %723 = vmatpush1.bf16.msra.mxu0 0
  %724 = vmatprep.subr.bf16.mxu0 0
  %725 = vmatpush1.bf16.msra.mxu0 0
  %726 = vmatprep.subr.bf16.mxu0 0
  %727 = vmatpush1.bf16.msra.mxu0 0
  %728 = vmatprep.subr.bf16.mxu0 0
  %729 = vmatpush1.bf16.msra.mxu0 0
  %730 = vmatprep.subr.bf16.mxu0 0
  %731 = vmatpush1.bf16.msra.mxu0 0
  %732 = vmatprep.subr.bf16.mxu0 0
  %733 = vmatpush1.bf16.msra.mxu0 0
  %734 = vmatprep.subr.bf16.mxu0 0
  %735 = vmatpush1.bf16.msra.mxu0 0
  %736 = vmatprep.subr.bf16.mxu0 0
  %737 = vmatpush1.bf16.msra.mxu0 0
  %738 = vmatprep.subr.bf16.mxu0 0
  %739 = vmatpush1.bf16.msra.mxu0 0
  %740 = vmatprep.subr.bf16.mxu0 0
  %741 = vmatpush1.bf16.msra.mxu0 0
  %742 = vmatprep.mubr.bf16.mxu0 0
  %743 = vmatmul.mubr.bf16.gmra.mrb[0].mxu0 %v705
  %v744 = vpop.f32.mrb[0].mxu0
  %v745 = vadd.f32 %v357, %v744
  %v746 = vpop.f32.mrb[0].mxu0
  %v747 = vadd.f32 %v359, %v746
  %v748 = vpop.f32.mrb[0].mxu0
  %v749 = vadd.f32 %v361, %v748
  %v750 = vpop.f32.mrb[0].mxu0
  %v751 = vadd.f32 %v363, %v750
  %752 = vmatprep.mubr.bf16.mxu0 0
  %753 = vmatmul.mubr.bf16.gmra.mrb[0].mxu0 %v708
  %v754 = vpop.f32.mrb[0].mxu0
  %v755 = vadd.f32 %v367, %v754
  %v756 = vpop.f32.mrb[0].mxu0
  %v757 = vadd.f32 %v369, %v756
  %v758 = vpop.f32.mrb[0].mxu0
  %v759 = vadd.f32 %v371, %v758
  %v760 = vpop.f32.mrb[0].mxu0
  %v761 = vadd.f32 %v373, %v760
  %762 = vdwg.mxu0
  %763 = vmatprep.subr.bf16.mxu0 %v643
  %764 = vmatpush1.bf16.msra.mxu0 %v642
  %765 = vmatprep.subr.bf16.mxu0 %v651
  %766 = vmatpush1.bf16.msra.mxu0 %v650
  %767 = vmatprep.subr.bf16.mxu0 %v659
  %768 = vmatpush1.bf16.msra.mxu0 %v658
  %769 = vmatprep.subr.bf16.mxu0 %v667
  %770 = vmatpush1.bf16.msra.mxu0 %v666
  %771 = vmatprep.subr.bf16.mxu0 0
  %772 = vmatpush1.bf16.msra.mxu0 0
  %773 = vmatprep.subr.bf16.mxu0 0
  %774 = vmatpush1.bf16.msra.mxu0 0
  %775 = vmatprep.subr.bf16.mxu0 0
  %776 = vmatpush1.bf16.msra.mxu0 0
  %777 = vmatprep.subr.bf16.mxu0 0
  %778 = vmatpush1.bf16.msra.mxu0 0
  %779 = vmatprep.subr.bf16.mxu0 0
  %780 = vmatpush1.bf16.msra.mxu0 0
  %781 = vmatprep.subr.bf16.mxu0 0
  %782 = vmatpush1.bf16.msra.mxu0 0
  %783 = vmatprep.subr.bf16.mxu0 0
  %784 = vmatpush1.bf16.msra.mxu0 0
  %785 = vmatprep.subr.bf16.mxu0 0
  %786 = vmatpush1.bf16.msra.mxu0 0
  %787 = vmatprep.subr.bf16.mxu0 0
  %788 = vmatpush1.bf16.msra.mxu0 0
  %789 = vmatprep.subr.bf16.mxu0 0
  %790 = vmatpush1.bf16.msra.mxu0 0
  %791 = vmatprep.subr.bf16.mxu0 0
  %792 = vmatpush1.bf16.msra.mxu0 0
  %793 = vmatprep.subr.bf16.mxu0 0
  %794 = vmatpush1.bf16.msra.mxu0 0
  %795 = vmatprep.mubr.bf16.mxu0 0
  %796 = vmatmul.mubr.bf16.gmra.mrb[0].mxu0 %v705
  %v797 = vpop.f32.mrb[0].mxu0
  %v798 = vadd.f32 %v410, %v797
  %v799 = vpop.f32.mrb[0].mxu0
  %v800 = vadd.f32 %v412, %v799
  %v801 = vpop.f32.mrb[0].mxu0
  %v802 = vadd.f32 %v414, %v801
  %v803 = vpop.f32.mrb[0].mxu0
  %v804 = vadd.f32 %v416, %v803
  %805 = vmatprep.mubr.bf16.mxu0 0
  %806 = vmatmul.mubr.bf16.gmra.mrb[0].mxu0 %v708
  %v807 = vpop.f32.mrb[0].mxu0
  %v808 = vadd.f32 %v420, %v807
  %v809 = vpop.f32.mrb[0].mxu0
  %v810 = vadd.f32 %v422, %v809
  %v811 = vpop.f32.mrb[0].mxu0
  %v812 = vadd.f32 %v424, %v811
  %v813 = vpop.f32.mrb[0].mxu0
  %v814 = vadd.f32 %v426, %v813
  %815 = vdwg.mxu0
  %816 = vmatprep.subr.bf16.mxu0 %v645
  %817 = vmatpush1.bf16.msra.mxu0 %v644
  %818 = vmatprep.subr.bf16.mxu0 %v653
  %819 = vmatpush1.bf16.msra.mxu0 %v652
  %820 = vmatprep.subr.bf16.mxu0 %v661
  %821 = vmatpush1.bf16.msra.mxu0 %v660
  %822 = vmatprep.subr.bf16.mxu0 %v669
  %823 = vmatpush1.bf16.msra.mxu0 %v668
  %824 = vmatprep.subr.bf16.mxu0 0
  %825 = vmatpush1.bf16.msra.mxu0 0
  %826 = vmatprep.subr.bf16.mxu0 0
  %827 = vmatpush1.bf16.msra.mxu0 0
  %828 = vmatprep.subr.bf16.mxu0 0
  %829 = vmatpush1.bf16.msra.mxu0 0
  %830 = vmatprep.subr.bf16.mxu0 0
  %831 = vmatpush1.bf16.msra.mxu0 0
  %832 = vmatprep.subr.bf16.mxu0 0
  %833 = vmatpush1.bf16.msra.mxu0 0
  %834 = vmatprep.subr.bf16.mxu0 0
  %835 = vmatpush1.bf16.msra.mxu0 0
  %836 = vmatprep.subr.bf16.mxu0 0
  %837 = vmatpush1.bf16.msra.mxu0 0
  %838 = vmatprep.subr.bf16.mxu0 0
  %839 = vmatpush1.bf16.msra.mxu0 0
  %840 = vmatprep.subr.bf16.mxu0 0
  %841 = vmatpush1.bf16.msra.mxu0 0
  %842 = vmatprep.subr.bf16.mxu0 0
  %843 = vmatpush1.bf16.msra.mxu0 0
  %844 = vmatprep.subr.bf16.mxu0 0
  %845 = vmatpush1.bf16.msra.mxu0 0
  %846 = vmatprep.subr.bf16.mxu0 0
  %847 = vmatpush1.bf16.msra.mxu0 0
  %848 = vmatprep.mubr.bf16.mxu0 0
  %849 = vmatmul.mubr.bf16.gmra.mrb[0].mxu0 %v705
  %v850 = vpop.f32.mrb[0].mxu0
  %v851 = vadd.f32 %v463, %v850
  %v852 = vpop.f32.mrb[0].mxu0
  %v853 = vadd.f32 %v465, %v852
  %v854 = vpop.f32.mrb[0].mxu0
  %v855 = vadd.f32 %v467, %v854
  %v856 = vpop.f32.mrb[0].mxu0
  %v857 = vadd.f32 %v469, %v856
  %858 = vmatprep.mubr.bf16.mxu0 0
  %859 = vmatmul.mubr.bf16.gmra.mrb[0].mxu0 %v708
  %v860 = vpop.f32.mrb[0].mxu0
  %v861 = vadd.f32 %v473, %v860
  %v862 = vpop.f32.mrb[0].mxu0
  %v863 = vadd.f32 %v475, %v862
  %v864 = vpop.f32.mrb[0].mxu0
  %v865 = vadd.f32 %v477, %v864
  %v866 = vpop.f32.mrb[0].mxu0
  %v867 = vadd.f32 %v479, %v866
  %868 = vdwg.mxu0
  %869 = vmatprep.subr.bf16.mxu0 %v647
  %870 = vmatpush1.bf16.msra.mxu0 %v646
  %871 = vmatprep.subr.bf16.mxu0 %v655
  %872 = vmatpush1.bf16.msra.mxu0 %v654
  %873 = vmatprep.subr.bf16.mxu0 %v663
  %874 = vmatpush1.bf16.msra.mxu0 %v662
  %875 = vmatprep.subr.bf16.mxu0 %v671
  %876 = vmatpush1.bf16.msra.mxu0 %v670
  %877 = vmatprep.subr.bf16.mxu0 0
  %878 = vmatpush1.bf16.msra.mxu0 0
  %879 = vmatprep.subr.bf16.mxu0 0
  %880 = vmatpush1.bf16.msra.mxu0 0
  %881 = vmatprep.subr.bf16.mxu0 0
  %882 = vmatpush1.bf16.msra.mxu0 0
  %883 = vmatprep.subr.bf16.mxu0 0
  %884 = vmatpush1.bf16.msra.mxu0 0
  %885 = vmatprep.subr.bf16.mxu0 0
  %886 = vmatpush1.bf16.msra.mxu0 0
  %887 = vmatprep.subr.bf16.mxu0 0
  %888 = vmatpush1.bf16.msra.mxu0 0
  %889 = vmatprep.subr.bf16.mxu0 0
  %890 = vmatpush1.bf16.msra.mxu0 0
  %891 = vmatprep.subr.bf16.mxu0 0
  %892 = vmatpush1.bf16.msra.mxu0 0
  %893 = vmatprep.subr.bf16.mxu0 0
  %894 = vmatpush1.bf16.msra.mxu0 0
  %895 = vmatprep.subr.bf16.mxu0 0
  %896 = vmatpush1.bf16.msra.mxu0 0
  %897 = vmatprep.subr.bf16.mxu0 0
  %898 = vmatpush1.bf16.msra.mxu0 0
  %899 = vmatprep.subr.bf16.mxu0 0
  %900 = vmatpush1.bf16.msra.mxu0 0
  %901 = vmatprep.mubr.bf16.mxu0 0
  %902 = vmatmul.mubr.bf16.gmra.mrb[0].mxu0 %v705
  %v903 = vpop.f32.mrb[0].mxu0
  %v904 = vadd.f32 %v516, %v903
  %v905 = vpop.f32.mrb[0].mxu0
  %v906 = vadd.f32 %v518, %v905
  %v907 = vpop.f32.mrb[0].mxu0
  %v908 = vadd.f32 %v520, %v907
  %v909 = vpop.f32.mrb[0].mxu0
  %v910 = vadd.f32 %v522, %v909
  %911 = vmatprep.mubr.bf16.mxu0 0
  %912 = vmatmul.mubr.bf16.gmra.mrb[0].mxu0 %v708
  %v913 = vpop.f32.mrb[0].mxu0
  %v914 = vadd.f32 %v526, %v913
  %v915 = vpop.f32.mrb[0].mxu0
  %v916 = vadd.f32 %v528, %v915
  %v917 = vpop.f32.mrb[0].mxu0
  %v918 = vadd.f32 %v530, %v917
  %v919 = vpop.f32.mrb[0].mxu0
  %v920 = vadd.f32 %v532, %v919
  %921 = vdwg.mxu0
  %v922 = vld [vmem:[%s0] sm:$0xe]
  %v923 = vld [vmem:[%s0 + $0xc] sm:$0xe]
  %vm928 = vcmask 1042432
  %vm929 = vcmask 1046532
  %vm930 = vmor %vm928, %vm929
  %v931 = vrot.slane %v922, 5
  %v932 = vrot.slane %v931, 4
  %v933 = vrot.slane %v28, 5
  %v934 = vsel %vm930, %v932, %v933
  %v935 = vrot.slane %v933, 4
  %v936 = vrot.slane %v63, 5
  %v937 = vsel %vm930, %v935, %v936
  %v938 = vrot.slane %v923, 5
  %v939 = vrot.slane %v938, 4
  %v940 = vrot.slane %v30, 5
  %v941 = vsel %vm930, %v939, %v940
  %v942 = vrot.slane %v940, 4
  %v943 = vrot.slane %v64, 5
  %v944 = vsel %vm930, %v942, %v943
  %s945 = scalar_lea.vmem %s1, 512
  %v946 = vld [vmem:[%s945] sm:$0xff]
  %v947 = vld [vmem:[%s945 + $0x8] sm:$0xff]
  %v948 = vld [vmem:[%s945 + $0x10] sm:$0xff]
  %v949 = vld [vmem:[%s945 + $0x18] sm:$0xff]
  %v950 = vld [vmem:[%s945 + $0x20] sm:$0xff]
  %v951 = vld [vmem:[%s945 + $0x28] sm:$0xff]
  %v952 = vld [vmem:[%s945 + $0x30] sm:$0xff]
  %v953 = vld [vmem:[%s945 + $0x38] sm:$0xff]
  %v954 = vld [vmem:[%s945 + $0x40] sm:$0xff]
  %v955 = vld [vmem:[%s945 + $0x48] sm:$0xff]
  %v956 = vld [vmem:[%s945 + $0x50] sm:$0xff]
  %v957 = vld [vmem:[%s945 + $0x58] sm:$0xff]
  %v958 = vld [vmem:[%s945 + $0x60] sm:$0xff]
  %v959 = vld [vmem:[%s945 + $0x68] sm:$0xff]
  %v960 = vld [vmem:[%s945 + $0x70] sm:$0xff]
  %v961 = vld [vmem:[%s945 + $0x78] sm:$0xff]
  %v962 = vld [vmem:[%s945 + $0x80] sm:$0xff]
  %v963 = vld [vmem:[%s945 + $0x88] sm:$0xff]
  %v964 = vld [vmem:[%s945 + $0x90] sm:$0xff]
  %v965 = vld [vmem:[%s945 + $0x98] sm:$0xff]
  %v966 = vld [vmem:[%s945 + $0xa0] sm:$0xff]
  %v967 = vld [vmem:[%s945 + $0xa8] sm:$0xff]
  %v968 = vld [vmem:[%s945 + $0xb0] sm:$0xff]
  %v969 = vld [vmem:[%s945 + $0xb8] sm:$0xff]
  %v970 = vld [vmem:[%s945 + $0xc0] sm:$0xff]
  %v971 = vld [vmem:[%s945 + $0xc8] sm:$0xff]
  %v972 = vld [vmem:[%s945 + $0xd0] sm:$0xff]
  %v973 = vld [vmem:[%s945 + $0xd8] sm:$0xff]
  %v974 = vld [vmem:[%s945 + $0xe0] sm:$0xff]
  %v975 = vld [vmem:[%s945 + $0xe8] sm:$0xff]
  %v976 = vld [vmem:[%s945 + $0xf0] sm:$0xff]
  %v977 = vld [vmem:[%s945 + $0xf8] sm:$0xff]
  %v978 = vunpack.c.l.b16 %v934
  %v979 = vunpack.c.l.b16 %v937
  %v980 = vunpack.c.l.b16 %v941
  %v981 = vunpack.c.l.b16 %v944
  %v982 = vpack.c.b16 %v979, %v978
  %v983 = vpack.c.b16 %v981, %v980
  %v1016 = vunpack.c.l.b16 %v946
  %v1017 = vunpack.c.h.b16 %v946
  %v1018 = vunpack.c.l.b16 %v947
  %v1019 = vunpack.c.h.b16 %v947
  %v1020 = vunpack.c.l.b16 %v948
  %v1021 = vunpack.c.h.b16 %v948
  %v1022 = vunpack.c.l.b16 %v949
  %v1023 = vunpack.c.h.b16 %v949
  %v1024 = vunpack.c.l.b16 %v950
  %v1025 = vunpack.c.h.b16 %v950
  %v1026 = vunpack.c.l.b16 %v951
  %v1027 = vunpack.c.h.b16 %v951
  %v1028 = vunpack.c.l.b16 %v952
  %v1029 = vunpack.c.h.b16 %v952
  %v1030 = vunpack.c.l.b16 %v953
  %v1031 = vunpack.c.h.b16 %v953
  %v1032 = vunpack.c.l.b16 %v954
  %v1033 = vunpack.c.h.b16 %v954
  %v1034 = vunpack.c.l.b16 %v955
  %v1035 = vunpack.c.h.b16 %v955
  %v1036 = vunpack.c.l.b16 %v956
  %v1037 = vunpack.c.h.b16 %v956
  %v1038 = vunpack.c.l.b16 %v957
  %v1039 = vunpack.c.h.b16 %v957
  %v1040 = vunpack.c.l.b16 %v958
  %v1041 = vunpack.c.h.b16 %v958
  %v1042 = vunpack.c.l.b16 %v959
  %v1043 = vunpack.c.h.b16 %v959
  %v1044 = vunpack.c.l.b16 %v960
  %v1045 = vunpack.c.h.b16 %v960
  %v1046 = vunpack.c.l.b16 %v961
  %v1047 = vunpack.c.h.b16 %v961
  %v1048 = vunpack.c.l.b16 %v962
  %v1049 = vunpack.c.h.b16 %v962
  %v1050 = vunpack.c.l.b16 %v963
  %v1051 = vunpack.c.h.b16 %v963
  %v1052 = vunpack.c.l.b16 %v964
  %v1053 = vunpack.c.h.b16 %v964
  %v1054 = vunpack.c.l.b16 %v965
  %v1055 = vunpack.c.h.b16 %v965
  %v1056 = vunpack.c.l.b16 %v966
  %v1057 = vunpack.c.h.b16 %v966
  %v1058 = vunpack.c.l.b16 %v967
  %v1059 = vunpack.c.h.b16 %v967
  %v1060 = vunpack.c.l.b16 %v968
  %v1061 = vunpack.c.h.b16 %v968
  %v1062 = vunpack.c.l.b16 %v969
  %v1063 = vunpack.c.h.b16 %v969
  %v1064 = vunpack.c.l.b16 %v970
  %v1065 = vunpack.c.h.b16 %v970
  %v1066 = vunpack.c.l.b16 %v971
  %v1067 = vunpack.c.h.b16 %v971
  %v1068 = vunpack.c.l.b16 %v972
  %v1069 = vunpack.c.h.b16 %v972
  %v1070 = vunpack.c.l.b16 %v973
  %v1071 = vunpack.c.h.b16 %v973
  %v1072 = vunpack.c.l.b16 %v974
  %v1073 = vunpack.c.h.b16 %v974
  %v1074 = vunpack.c.l.b16 %v975
  %v1075 = vunpack.c.h.b16 %v975
  %v1076 = vunpack.c.l.b16 %v976
  %v1077 = vunpack.c.h.b16 %v976
  %v1078 = vunpack.c.l.b16 %v977
  %v1079 = vunpack.c.h.b16 %v977
  %v1080 = vpack.c.b16 %v1024, %v1016
  %v1081 = vpack.c.b16 %v1025, %v1017
  %v1082 = vpack.c.b16 %v1026, %v1018
  %v1083 = vpack.c.b16 %v1027, %v1019
  %v1084 = vpack.c.b16 %v1028, %v1020
  %v1085 = vpack.c.b16 %v1029, %v1021
  %v1086 = vpack.c.b16 %v1030, %v1022
  %v1087 = vpack.c.b16 %v1031, %v1023
  %v1088 = vpack.c.b16 %v1040, %v1032
  %v1089 = vpack.c.b16 %v1041, %v1033
  %v1090 = vpack.c.b16 %v1042, %v1034
  %v1091 = vpack.c.b16 %v1043, %v1035
  %v1092 = vpack.c.b16 %v1044, %v1036
  %v1093 = vpack.c.b16 %v1045, %v1037
  %v1094 = vpack.c.b16 %v1046, %v1038
  %v1095 = vpack.c.b16 %v1047, %v1039
  %v1096 = vpack.c.b16 %v1056, %v1048
  %v1097 = vpack.c.b16 %v1057, %v1049
  %v1098 = vpack.c.b16 %v1058, %v1050
  %v1099 = vpack.c.b16 %v1059, %v1051
  %v1100 = vpack.c.b16 %v1060, %v1052
  %v1101 = vpack.c.b16 %v1061, %v1053
  %v1102 = vpack.c.b16 %v1062, %v1054
  %v1103 = vpack.c.b16 %v1063, %v1055
  %v1104 = vpack.c.b16 %v1072, %v1064
  %v1105 = vpack.c.b16 %v1073, %v1065
  %v1106 = vpack.c.b16 %v1074, %v1066
  %v1107 = vpack.c.b16 %v1075, %v1067
  %v1108 = vpack.c.b16 %v1076, %v1068
  %v1109 = vpack.c.b16 %v1077, %v1069
  %v1110 = vpack.c.b16 %v1078, %v1070
  %v1111 = vpack.c.b16 %v1079, %v1071
  %v1145 = vsel %vm315, %v982, 0
  %v1148 = vsel %vm315, %v983, 0
  %1150 = vmatprep.subr.bf16.mxu0 %v1081
  %1151 = vmatpush1.bf16.msra.mxu0 %v1080
  %1152 = vmatprep.subr.bf16.mxu0 %v1089
  %1153 = vmatpush1.bf16.msra.mxu0 %v1088
  %1154 = vmatprep.subr.bf16.mxu0 %v1097
  %1155 = vmatpush1.bf16.msra.mxu0 %v1096
  %1156 = vmatprep.subr.bf16.mxu0 %v1105
  %1157 = vmatpush1.bf16.msra.mxu0 %v1104
  %1158 = vmatprep.subr.bf16.mxu0 0
  %1159 = vmatpush1.bf16.msra.mxu0 0
  %1160 = vmatprep.subr.bf16.mxu0 0
  %1161 = vmatpush1.bf16.msra.mxu0 0
  %1162 = vmatprep.subr.bf16.mxu0 0
  %1163 = vmatpush1.bf16.msra.mxu0 0
  %1164 = vmatprep.subr.bf16.mxu0 0
  %1165 = vmatpush1.bf16.msra.mxu0 0
  %1166 = vmatprep.subr.bf16.mxu0 0
  %1167 = vmatpush1.bf16.msra.mxu0 0
  %1168 = vmatprep.subr.bf16.mxu0 0
  %1169 = vmatpush1.bf16.msra.mxu0 0
  %1170 = vmatprep.subr.bf16.mxu0 0
  %1171 = vmatpush1.bf16.msra.mxu0 0
  %1172 = vmatprep.subr.bf16.mxu0 0
  %1173 = vmatpush1.bf16.msra.mxu0 0
  %1174 = vmatprep.subr.bf16.mxu0 0
  %1175 = vmatpush1.bf16.msra.mxu0 0
  %1176 = vmatprep.subr.bf16.mxu0 0
  %1177 = vmatpush1.bf16.msra.mxu0 0
  %1178 = vmatprep.subr.bf16.mxu0 0
  %1179 = vmatpush1.bf16.msra.mxu0 0
  %1180 = vmatprep.subr.bf16.mxu0 0
  %1181 = vmatpush1.bf16.msra.mxu0 0
  %1182 = vmatprep.mubr.bf16.mxu0 0
  %1183 = vmatmul.mubr.bf16.gmra.mrb[0].mxu0 %v1145
  %v1184 = vpop.f32.mrb[0].mxu0
  %v1185 = vadd.f32 0.0, %v1184
  %v1186 = vpop.f32.mrb[0].mxu0
  %v1187 = vadd.f32 0.0, %v1186
  %v1188 = vpop.f32.mrb[0].mxu0
  %v1189 = vadd.f32 0.0, %v1188
  %v1190 = vpop.f32.mrb[0].mxu0
  %v1191 = vadd.f32 0.0, %v1190
  %1192 = vmatprep.mubr.bf16.mxu0 0
  %1193 = vmatmul.mubr.bf16.gmra.mrb[0].mxu0 %v1148
  %v1194 = vpop.f32.mrb[0].mxu0
  %v1195 = vadd.f32 0.0, %v1194
  %v1196 = vpop.f32.mrb[0].mxu0
  %v1197 = vadd.f32 0.0, %v1196
  %v1198 = vpop.f32.mrb[0].mxu0
  %v1199 = vadd.f32 0.0, %v1198
  %v1200 = vpop.f32.mrb[0].mxu0
  %v1201 = vadd.f32 0.0, %v1200
  %1202 = vdwg.mxu0
  %1203 = vmatprep.subr.bf16.mxu0 %v1083
  %1204 = vmatpush1.bf16.msra.mxu0 %v1082
  %1205 = vmatprep.subr.bf16.mxu0 %v1091
  %1206 = vmatpush1.bf16.msra.mxu0 %v1090
  %1207 = vmatprep.subr.bf16.mxu0 %v1099
  %1208 = vmatpush1.bf16.msra.mxu0 %v1098
  %1209 = vmatprep.subr.bf16.mxu0 %v1107
  %1210 = vmatpush1.bf16.msra.mxu0 %v1106
  %1211 = vmatprep.subr.bf16.mxu0 0
  %1212 = vmatpush1.bf16.msra.mxu0 0
  %1213 = vmatprep.subr.bf16.mxu0 0
  %1214 = vmatpush1.bf16.msra.mxu0 0
  %1215 = vmatprep.subr.bf16.mxu0 0
  %1216 = vmatpush1.bf16.msra.mxu0 0
  %1217 = vmatprep.subr.bf16.mxu0 0
  %1218 = vmatpush1.bf16.msra.mxu0 0
  %1219 = vmatprep.subr.bf16.mxu0 0
  %1220 = vmatpush1.bf16.msra.mxu0 0
  %1221 = vmatprep.subr.bf16.mxu0 0
  %1222 = vmatpush1.bf16.msra.mxu0 0
  %1223 = vmatprep.subr.bf16.mxu0 0
  %1224 = vmatpush1.bf16.msra.mxu0 0
  %1225 = vmatprep.subr.bf16.mxu0 0
  %1226 = vmatpush1.bf16.msra.mxu0 0
  %1227 = vmatprep.subr.bf16.mxu0 0
  %1228 = vmatpush1.bf16.msra.mxu0 0
  %1229 = vmatprep.subr.bf16.mxu0 0
  %1230 = vmatpush1.bf16.msra.mxu0 0
  %1231 = vmatprep.subr.bf16.mxu0 0
  %1232 = vmatpush1.bf16.msra.mxu0 0
  %1233 = vmatprep.subr.bf16.mxu0 0
  %1234 = vmatpush1.bf16.msra.mxu0 0
  %1235 = vmatprep.mubr.bf16.mxu0 0
  %1236 = vmatmul.mubr.bf16.gmra.mrb[0].mxu0 %v1145
  %v1237 = vpop.f32.mrb[0].mxu0
  %v1238 = vadd.f32 0.0, %v1237
  %v1239 = vpop.f32.mrb[0].mxu0
  %v1240 = vadd.f32 0.0, %v1239
  %v1241 = vpop.f32.mrb[0].mxu0
  %v1242 = vadd.f32 0.0, %v1241
  %v1243 = vpop.f32.mrb[0].mxu0
  %v1244 = vadd.f32 0.0, %v1243
  %1245 = vmatprep.mubr.bf16.mxu0 0
  %1246 = vmatmul.mubr.bf16.gmra.mrb[0].mxu0 %v1148
  %v1247 = vpop.f32.mrb[0].mxu0
  %v1248 = vadd.f32 0.0, %v1247
  %v1249 = vpop.f32.mrb[0].mxu0
  %v1250 = vadd.f32 0.0, %v1249
  %v1251 = vpop.f32.mrb[0].mxu0
  %v1252 = vadd.f32 0.0, %v1251
  %v1253 = vpop.f32.mrb[0].mxu0
  %v1254 = vadd.f32 0.0, %v1253
  %1255 = vdwg.mxu0
  %1256 = vmatprep.subr.bf16.mxu0 %v1085
  %1257 = vmatpush1.bf16.msra.mxu0 %v1084
  %1258 = vmatprep.subr.bf16.mxu0 %v1093
  %1259 = vmatpush1.bf16.msra.mxu0 %v1092
  %1260 = vmatprep.subr.bf16.mxu0 %v1101
  %1261 = vmatpush1.bf16.msra.mxu0 %v1100
  %1262 = vmatprep.subr.bf16.mxu0 %v1109
  %1263 = vmatpush1.bf16.msra.mxu0 %v1108
  %1264 = vmatprep.subr.bf16.mxu0 0
  %1265 = vmatpush1.bf16.msra.mxu0 0
  %1266 = vmatprep.subr.bf16.mxu0 0
  %1267 = vmatpush1.bf16.msra.mxu0 0
  %1268 = vmatprep.subr.bf16.mxu0 0
  %1269 = vmatpush1.bf16.msra.mxu0 0
  %1270 = vmatprep.subr.bf16.mxu0 0
  %1271 = vmatpush1.bf16.msra.mxu0 0
  %1272 = vmatprep.subr.bf16.mxu0 0
  %1273 = vmatpush1.bf16.msra.mxu0 0
  %1274 = vmatprep.subr.bf16.mxu0 0
  %1275 = vmatpush1.bf16.msra.mxu0 0
  %1276 = vmatprep.subr.bf16.mxu0 0
  %1277 = vmatpush1.bf16.msra.mxu0 0
  %1278 = vmatprep.subr.bf16.mxu0 0
  %1279 = vmatpush1.bf16.msra.mxu0 0
  %1280 = vmatprep.subr.bf16.mxu0 0
  %1281 = vmatpush1.bf16.msra.mxu0 0
  %1282 = vmatprep.subr.bf16.mxu0 0
  %1283 = vmatpush1.bf16.msra.mxu0 0
  %1284 = vmatprep.subr.bf16.mxu0 0
  %1285 = vmatpush1.bf16.msra.mxu0 0
  %1286 = vmatprep.subr.bf16.mxu0 0
  %1287 = vmatpush1.bf16.msra.mxu0 0
  %1288 = vmatprep.mubr.bf16.mxu0 0
  %1289 = vmatmul.mubr.bf16.gmra.mrb[0].mxu0 %v1145
  %v1290 = vpop.f32.mrb[0].mxu0
  %v1291 = vadd.f32 0.0, %v1290
  %v1292 = vpop.f32.mrb[0].mxu0
  %v1293 = vadd.f32 0.0, %v1292
  %v1294 = vpop.f32.mrb[0].mxu0
  %v1295 = vadd.f32 0.0, %v1294
  %v1296 = vpop.f32.mrb[0].mxu0
  %v1297 = vadd.f32 0.0, %v1296
  %1298 = vmatprep.mubr.bf16.mxu0 0
  %1299 = vmatmul.mubr.bf16.gmra.mrb[0].mxu0 %v1148
  %v1300 = vpop.f32.mrb[0].mxu0
  %v1301 = vadd.f32 0.0, %v1300
  %v1302 = vpop.f32.mrb[0].mxu0
  %v1303 = vadd.f32 0.0, %v1302
  %v1304 = vpop.f32.mrb[0].mxu0
  %v1305 = vadd.f32 0.0, %v1304
  %v1306 = vpop.f32.mrb[0].mxu0
  %v1307 = vadd.f32 0.0, %v1306
  %1308 = vdwg.mxu0
  %1309 = vmatprep.subr.bf16.mxu0 %v1087
  %1310 = vmatpush1.bf16.msra.mxu0 %v1086
  %1311 = vmatprep.subr.bf16.mxu0 %v1095
  %1312 = vmatpush1.bf16.msra.mxu0 %v1094
  %1313 = vmatprep.subr.bf16.mxu0 %v1103
  %1314 = vmatpush1.bf16.msra.mxu0 %v1102
  %1315 = vmatprep.subr.bf16.mxu0 %v1111
  %1316 = vmatpush1.bf16.msra.mxu0 %v1110
  %1317 = vmatprep.subr.bf16.mxu0 0
  %1318 = vmatpush1.bf16.msra.mxu0 0
  %1319 = vmatprep.subr.bf16.mxu0 0
  %1320 = vmatpush1.bf16.msra.mxu0 0
  %1321 = vmatprep.subr.bf16.mxu0 0
  %1322 = vmatpush1.bf16.msra.mxu0 0
  %1323 = vmatprep.subr.bf16.mxu0 0
  %1324 = vmatpush1.bf16.msra.mxu0 0
  %1325 = vmatprep.subr.bf16.mxu0 0
  %1326 = vmatpush1.bf16.msra.mxu0 0
  %1327 = vmatprep.subr.bf16.mxu0 0
  %1328 = vmatpush1.bf16.msra.mxu0 0
  %1329 = vmatprep.subr.bf16.mxu0 0
  %1330 = vmatpush1.bf16.msra.mxu0 0
  %1331 = vmatprep.subr.bf16.mxu0 0
  %1332 = vmatpush1.bf16.msra.mxu0 0
  %1333 = vmatprep.subr.bf16.mxu0 0
  %1334 = vmatpush1.bf16.msra.mxu0 0
  %1335 = vmatprep.subr.bf16.mxu0 0
  %1336 = vmatpush1.bf16.msra.mxu0 0
  %1337 = vmatprep.subr.bf16.mxu0 0
  %1338 = vmatpush1.bf16.msra.mxu0 0
  %1339 = vmatprep.subr.bf16.mxu0 0
  %1340 = vmatpush1.bf16.msra.mxu0 0
  %1341 = vmatprep.mubr.bf16.mxu0 0
  %1342 = vmatmul.mubr.bf16.gmra.mrb[0].mxu0 %v1145
  %v1343 = vpop.f32.mrb[0].mxu0
  %v1344 = vadd.f32 0.0, %v1343
  %v1345 = vpop.f32.mrb[0].mxu0
  %v1346 = vadd.f32 0.0, %v1345
  %v1347 = vpop.f32.mrb[0].mxu0
  %v1348 = vadd.f32 0.0, %v1347
  %v1349 = vpop.f32.mrb[0].mxu0
  %v1350 = vadd.f32 0.0, %v1349
  %1351 = vmatprep.mubr.bf16.mxu0 0
  %1352 = vmatmul.mubr.bf16.gmra.mrb[0].mxu0 %v1148
  %v1353 = vpop.f32.mrb[0].mxu0
  %v1354 = vadd.f32 0.0, %v1353
  %v1355 = vpop.f32.mrb[0].mxu0
  %v1356 = vadd.f32 0.0, %v1355
  %v1357 = vpop.f32.mrb[0].mxu0
  %v1358 = vadd.f32 0.0, %v1357
  %v1359 = vpop.f32.mrb[0].mxu0
  %v1360 = vadd.f32 0.0, %v1359
  %1361 = vdwg.mxu0
  %v1362 = vadd.f32 %v745, %v1185
  %v1363 = vadd.f32 %v747, %v1187
  %v1364 = vadd.f32 %v798, %v1238
  %v1365 = vadd.f32 %v800, %v1240
  %v1366 = vadd.f32 %v851, %v1291
  %v1367 = vadd.f32 %v853, %v1293
  %v1368 = vadd.f32 %v904, %v1344
  %v1369 = vadd.f32 %v906, %v1346
  %v1370 = vadd.f32 %v749, %v1189
  %v1371 = vadd.f32 %v751, %v1191
  %v1372 = vadd.f32 %v802, %v1242
  %v1373 = vadd.f32 %v804, %v1244
  %v1374 = vadd.f32 %v855, %v1295
  %v1375 = vadd.f32 %v857, %v1297
  %v1376 = vadd.f32 %v908, %v1348
  %v1377 = vadd.f32 %v910, %v1350
  %v1378 = vadd.f32 %v755, %v1195
  %v1379 = vadd.f32 %v757, %v1197
  %v1380 = vadd.f32 %v808, %v1248
  %v1381 = vadd.f32 %v810, %v1250
  %v1382 = vadd.f32 %v861, %v1301
  %v1383 = vadd.f32 %v863, %v1303
  %v1384 = vadd.f32 %v914, %v1354
  %v1385 = vadd.f32 %v916, %v1356
  %v1386 = vadd.f32 %v759, %v1199
  %v1387 = vadd.f32 %v761, %v1201
  %v1388 = vadd.f32 %v812, %v1252
  %v1389 = vadd.f32 %v814, %v1254
  %v1390 = vadd.f32 %v865, %v1305
  %v1391 = vadd.f32 %v867, %v1307
  %v1392 = vadd.f32 %v918, %v1358
  %v1393 = vadd.f32 %v920, %v1360
  %v1394 = vld [vmem:[%s2] sm:$0x1]
  %v1395 = vld [vmem:[%s3] sm:$0x1]
  %v1396 = vadd.f32 %v1362, %v1370
  %v1397 = vadd.f32 %v1396, %v1378
  %v1398 = vadd.f32 %v1397, %v1386
  %v1399 = vrot.slane %v1398, 4
  %v1400 = vadd.f32 %v1398, %v1399
  %v1401 = vrot.slane %v1400, 2
  %v1402 = vadd.f32 %v1400, %v1401
  %v1403 = vrot.slane %v1402, 1
  %v1404 = vadd.f32 %v1402, %v1403
  %v1405 = vadd.f32 %v1363, %v1371
  %v1406 = vadd.f32 %v1405, %v1379
  %v1407 = vadd.f32 %v1406, %v1387
  %v1408 = vrot.slane %v1407, 4
  %v1409 = vadd.f32 %v1407, %v1408
  %v1410 = vrot.slane %v1409, 2
  %v1411 = vadd.f32 %v1409, %v1410
  %v1412 = vrot.slane %v1411, 1
  %v1413 = vadd.f32 %v1411, %v1412
  %v1414 = vadd.f32 %v1364, %v1372
  %v1415 = vadd.f32 %v1414, %v1380
  %v1416 = vadd.f32 %v1415, %v1388
  %v1417 = vrot.slane %v1416, 4
  %v1418 = vadd.f32 %v1416, %v1417
  %v1419 = vrot.slane %v1418, 2
  %v1420 = vadd.f32 %v1418, %v1419
  %v1421 = vrot.slane %v1420, 1
  %v1422 = vadd.f32 %v1420, %v1421
  %v1423 = vadd.f32 %v1365, %v1373
  %v1424 = vadd.f32 %v1423, %v1381
  %v1425 = vadd.f32 %v1424, %v1389
  %v1426 = vrot.slane %v1425, 4
  %v1427 = vadd.f32 %v1425, %v1426
  %v1428 = vrot.slane %v1427, 2
  %v1429 = vadd.f32 %v1427, %v1428
  %v1430 = vrot.slane %v1429, 1
  %v1431 = vadd.f32 %v1429, %v1430
  %v1432 = vadd.f32 %v1366, %v1374
  %v1433 = vadd.f32 %v1432, %v1382
  %v1434 = vadd.f32 %v1433, %v1390
  %v1435 = vrot.slane %v1434, 4
  %v1436 = vadd.f32 %v1434, %v1435
  %v1437 = vrot.slane %v1436, 2
  %v1438 = vadd.f32 %v1436, %v1437
  %v1439 = vrot.slane %v1438, 1
  %v1440 = vadd.f32 %v1438, %v1439
  %v1441 = vadd.f32 %v1367, %v1375
  %v1442 = vadd.f32 %v1441, %v1383
  %v1443 = vadd.f32 %v1442, %v1391
  %v1444 = vrot.slane %v1443, 4
  %v1445 = vadd.f32 %v1443, %v1444
  %v1446 = vrot.slane %v1445, 2
  %v1447 = vadd.f32 %v1445, %v1446
  %v1448 = vrot.slane %v1447, 1
  %v1449 = vadd.f32 %v1447, %v1448
  %v1450 = vadd.f32 %v1368, %v1376
  %v1451 = vadd.f32 %v1450, %v1384
  %v1452 = vadd.f32 %v1451, %v1392
  %v1453 = vrot.slane %v1452, 4
  %v1454 = vadd.f32 %v1452, %v1453
  %v1455 = vrot.slane %v1454, 2
  %v1456 = vadd.f32 %v1454, %v1455
  %v1457 = vrot.slane %v1456, 1
  %v1458 = vadd.f32 %v1456, %v1457
  %v1459 = vadd.f32 %v1369, %v1377
  %v1460 = vadd.f32 %v1459, %v1385
  %v1461 = vadd.f32 %v1460, %v1393
  %v1462 = vrot.slane %v1461, 4
  %v1463 = vadd.f32 %v1461, %v1462
  %v1464 = vrot.slane %v1463, 2
  %v1465 = vadd.f32 %v1463, %v1464
  %v1466 = vrot.slane %v1465, 1
  %v1467 = vadd.f32 %v1465, %v1466
  %v1468 = vmul.f32 %v1362, %v1362
  %v1469 = vmul.f32 %v1363, %v1363
  %v1470 = vmul.f32 %v1364, %v1364
  %v1471 = vmul.f32 %v1365, %v1365
  %v1472 = vmul.f32 %v1366, %v1366
  %v1473 = vmul.f32 %v1367, %v1367
  %v1474 = vmul.f32 %v1368, %v1368
  %v1475 = vmul.f32 %v1369, %v1369
  %v1476 = vmul.f32 %v1370, %v1370
  %v1477 = vmul.f32 %v1371, %v1371
  %v1478 = vmul.f32 %v1372, %v1372
  %v1479 = vmul.f32 %v1373, %v1373
  %v1480 = vmul.f32 %v1374, %v1374
  %v1481 = vmul.f32 %v1375, %v1375
  %v1482 = vmul.f32 %v1376, %v1376
  %v1483 = vmul.f32 %v1377, %v1377
  %v1484 = vmul.f32 %v1378, %v1378
  %v1485 = vmul.f32 %v1379, %v1379
  %v1486 = vmul.f32 %v1380, %v1380
  %v1487 = vmul.f32 %v1381, %v1381
  %v1488 = vmul.f32 %v1382, %v1382
  %v1489 = vmul.f32 %v1383, %v1383
  %v1490 = vmul.f32 %v1384, %v1384
  %v1491 = vmul.f32 %v1385, %v1385
  %v1492 = vmul.f32 %v1386, %v1386
  %v1493 = vmul.f32 %v1387, %v1387
  %v1494 = vmul.f32 %v1388, %v1388
  %v1495 = vmul.f32 %v1389, %v1389
  %v1496 = vmul.f32 %v1390, %v1390
  %v1497 = vmul.f32 %v1391, %v1391
  %v1498 = vmul.f32 %v1392, %v1392
  %v1499 = vmul.f32 %v1393, %v1393
  %v1500 = vadd.f32 %v1468, %v1476
  %v1501 = vadd.f32 %v1500, %v1484
  %v1502 = vadd.f32 %v1501, %v1492
  %v1503 = vrot.slane %v1502, 4
  %v1504 = vadd.f32 %v1502, %v1503
  %v1505 = vrot.slane %v1504, 2
  %v1506 = vadd.f32 %v1504, %v1505
  %v1507 = vrot.slane %v1506, 1
  %v1508 = vadd.f32 %v1506, %v1507
  %v1509 = vadd.f32 %v1469, %v1477
  %v1510 = vadd.f32 %v1509, %v1485
  %v1511 = vadd.f32 %v1510, %v1493
  %v1512 = vrot.slane %v1511, 4
  %v1513 = vadd.f32 %v1511, %v1512
  %v1514 = vrot.slane %v1513, 2
  %v1515 = vadd.f32 %v1513, %v1514
  %v1516 = vrot.slane %v1515, 1
  %v1517 = vadd.f32 %v1515, %v1516
  %v1518 = vadd.f32 %v1470, %v1478
  %v1519 = vadd.f32 %v1518, %v1486
  %v1520 = vadd.f32 %v1519, %v1494
  %v1521 = vrot.slane %v1520, 4
  %v1522 = vadd.f32 %v1520, %v1521
  %v1523 = vrot.slane %v1522, 2
  %v1524 = vadd.f32 %v1522, %v1523
  %v1525 = vrot.slane %v1524, 1
  %v1526 = vadd.f32 %v1524, %v1525
  %v1527 = vadd.f32 %v1471, %v1479
  %v1528 = vadd.f32 %v1527, %v1487
  %v1529 = vadd.f32 %v1528, %v1495
  %v1530 = vrot.slane %v1529, 4
  %v1531 = vadd.f32 %v1529, %v1530
  %v1532 = vrot.slane %v1531, 2
  %v1533 = vadd.f32 %v1531, %v1532
  %v1534 = vrot.slane %v1533, 1
  %v1535 = vadd.f32 %v1533, %v1534
  %v1536 = vadd.f32 %v1472, %v1480
  %v1537 = vadd.f32 %v1536, %v1488
  %v1538 = vadd.f32 %v1537, %v1496
  %v1539 = vrot.slane %v1538, 4
  %v1540 = vadd.f32 %v1538, %v1539
  %v1541 = vrot.slane %v1540, 2
  %v1542 = vadd.f32 %v1540, %v1541
  %v1543 = vrot.slane %v1542, 1
  %v1544 = vadd.f32 %v1542, %v1543
  %v1545 = vadd.f32 %v1473, %v1481
  %v1546 = vadd.f32 %v1545, %v1489
  %v1547 = vadd.f32 %v1546, %v1497
  %v1548 = vrot.slane %v1547, 4
  %v1549 = vadd.f32 %v1547, %v1548
  %v1550 = vrot.slane %v1549, 2
  %v1551 = vadd.f32 %v1549, %v1550
  %v1552 = vrot.slane %v1551, 1
  %v1553 = vadd.f32 %v1551, %v1552
  %v1554 = vadd.f32 %v1474, %v1482
  %v1555 = vadd.f32 %v1554, %v1490
  %v1556 = vadd.f32 %v1555, %v1498
  %v1557 = vrot.slane %v1556, 4
  %v1558 = vadd.f32 %v1556, %v1557
  %v1559 = vrot.slane %v1558, 2
  %v1560 = vadd.f32 %v1558, %v1559
  %v1561 = vrot.slane %v1560, 1
  %v1562 = vadd.f32 %v1560, %v1561
  %v1563 = vadd.f32 %v1475, %v1483
  %v1564 = vadd.f32 %v1563, %v1491
  %v1565 = vadd.f32 %v1564, %v1499
  %v1566 = vrot.slane %v1565, 4
  %v1567 = vadd.f32 %v1565, %v1566
  %v1568 = vrot.slane %v1567, 2
  %v1569 = vadd.f32 %v1567, %v1568
  %v1570 = vrot.slane %v1569, 1
  %v1571 = vadd.f32 %v1569, %v1570
  %v1572 = vadd.f32 %v1404, 0.0
  %v1573 = vadd.f32 %v1508, 0.0
  %1575 = vrot.lane.b32.xlu0 %v1404, 64
  %v1576 = vpop.permute.xlu0 %1575
  %v1578 = vadd.f32 %v1572, %v1576
  %1580 = vrot.lane.b32.xlu0 %v1508, 64
  %v1581 = vpop.permute.xlu0 %1580
  %v1583 = vadd.f32 %v1573, %v1581
  %v1584 = vadd.f32 %v1578, %v1413
  %v1585 = vadd.f32 %v1583, %v1517
  %1587 = vrot.lane.b32.xlu0 %v1413, 64
  %v1588 = vpop.permute.xlu0 %1587
  %v1590 = vadd.f32 %v1584, %v1588
  %1592 = vrot.lane.b32.xlu0 %v1517, 64
  %v1593 = vpop.permute.xlu0 %1592
  %v1595 = vadd.f32 %v1585, %v1593
  %v1596 = vadd.f32 %v1590, %v1422
  %v1597 = vadd.f32 %v1595, %v1526
  %1599 = vrot.lane.b32.xlu0 %v1422, 64
  %v1600 = vpop.permute.xlu0 %1599
  %v1602 = vadd.f32 %v1596, %v1600
  %1604 = vrot.lane.b32.xlu0 %v1526, 64
  %v1605 = vpop.permute.xlu0 %1604
  %v1607 = vadd.f32 %v1597, %v1605
  %v1608 = vadd.f32 %v1602, %v1431
  %v1609 = vadd.f32 %v1607, %v1535
  %1611 = vrot.lane.b32.xlu0 %v1431, 64
  %v1612 = vpop.permute.xlu0 %1611
  %v1614 = vadd.f32 %v1608, %v1612
  %1616 = vrot.lane.b32.xlu0 %v1535, 64
  %v1617 = vpop.permute.xlu0 %1616
  %v1619 = vadd.f32 %v1609, %v1617
  %v1620 = vadd.f32 %v1614, %v1440
  %v1621 = vadd.f32 %v1619, %v1544
  %1623 = vrot.lane.b32.xlu0 %v1440, 64
  %v1624 = vpop.permute.xlu0 %1623
  %v1626 = vadd.f32 %v1620, %v1624
  %1628 = vrot.lane.b32.xlu0 %v1544, 64
  %v1629 = vpop.permute.xlu0 %1628
  %v1631 = vadd.f32 %v1621, %v1629
  %v1632 = vadd.f32 %v1626, %v1449
  %v1633 = vadd.f32 %v1631, %v1553
  %1635 = vrot.lane.b32.xlu0 %v1449, 64
  %v1636 = vpop.permute.xlu0 %1635
  %v1638 = vadd.f32 %v1632, %v1636
  %1640 = vrot.lane.b32.xlu0 %v1553, 64
  %v1641 = vpop.permute.xlu0 %1640
  %v1643 = vadd.f32 %v1633, %v1641
  %v1644 = vadd.f32 %v1638, %v1458
  %v1645 = vadd.f32 %v1643, %v1562
  %1647 = vrot.lane.b32.xlu0 %v1458, 64
  %v1648 = vpop.permute.xlu0 %1647
  %v1650 = vadd.f32 %v1644, %v1648
  %1652 = vrot.lane.b32.xlu0 %v1562, 64
  %v1653 = vpop.permute.xlu0 %1652
  %v1655 = vadd.f32 %v1645, %v1653
  %v1656 = vadd.f32 %v1650, %v1467
  %v1657 = vadd.f32 %v1655, %v1571
  %1659 = vrot.lane.b32.xlu0 %v1467, 64
  %v1660 = vpop.permute.xlu0 %1659
  %v1662 = vadd.f32 %v1656, %v1660
  %1664 = vrot.lane.b32.xlu0 %v1571, 64
  %v1665 = vpop.permute.xlu0 %1664
  %v1667 = vadd.f32 %v1657, %v1665
  %v1668 = vrcp.pop 512.0
  %v1669 = vmul.f32 %v1662, %v1668
  %v1670 = vmul.f32 %v1667, %v1668
  %v1671 = vmul.f32 %v1669, %v1669
  %v1672 = vsub.f32 %v1670, %v1671
  %v1673 = vmax.f32 %v1672, 0.0
  %v1674 = vadd.f32 %v1673, 1e-05
  %v1675 = vrsqrt.pop %v1674
  %v1676 = vmul.f32 %v1394, %v1675
  %v1677 = vmul.f32 %v1669, %v1676
  %v1678 = vsub.f32 %v1395, %v1677
  %v1680 = vlaneseq
  %v1681 = vshrl.u32 %v1680, 7
  %v1682 = vsub.s32 0, %v1681
  %v1683 = vrot.slane %v1676, %v1682
  %1684 = vrot.lane.b32.xlu0 %v1683, 64
  %v1685 = vpop.permute.xlu0 %1684
  %v1687 = vsel %vm315, %v1676, %v1685
  %v1689 = vlaneseq
  %v1690 = vshrl.u32 %v1689, 7
  %v1691 = vsub.s32 0, %v1690
  %v1692 = vrot.slane %v1678, %v1691
  %1693 = vrot.lane.b32.xlu0 %v1692, 64
  %v1694 = vpop.permute.xlu0 %1693
  %v1696 = vsel %vm315, %v1678, %v1694
  %v1697 = vlaneseq
  %v1698 = vshrl.u32 %v1697, 7
  %v1699 = vsub.s32 0, %v1698
  %v1700 = vrot.slane %v1687, %v1699
  %v1701 = vmul.f32 %v1362, %v1700
  %v1702 = vmul.f32 %v1363, %v1700
  %v1703 = vmul.f32 %v1364, %v1700
  %v1704 = vmul.f32 %v1365, %v1700
  %v1705 = vmul.f32 %v1366, %v1700
  %v1706 = vmul.f32 %v1367, %v1700
  %v1707 = vmul.f32 %v1368, %v1700
  %v1708 = vmul.f32 %v1369, %v1700
  %v1709 = vmul.f32 %v1370, %v1700
  %v1710 = vmul.f32 %v1371, %v1700
  %v1711 = vmul.f32 %v1372, %v1700
  %v1712 = vmul.f32 %v1373, %v1700
  %v1713 = vmul.f32 %v1374, %v1700
  %v1714 = vmul.f32 %v1375, %v1700
  %v1715 = vmul.f32 %v1376, %v1700
  %v1716 = vmul.f32 %v1377, %v1700
  %v1717 = vmul.f32 %v1378, %v1700
  %v1718 = vmul.f32 %v1379, %v1700
  %v1719 = vmul.f32 %v1380, %v1700
  %v1720 = vmul.f32 %v1381, %v1700
  %v1721 = vmul.f32 %v1382, %v1700
  %v1722 = vmul.f32 %v1383, %v1700
  %v1723 = vmul.f32 %v1384, %v1700
  %v1724 = vmul.f32 %v1385, %v1700
  %v1725 = vmul.f32 %v1386, %v1700
  %v1726 = vmul.f32 %v1387, %v1700
  %v1727 = vmul.f32 %v1388, %v1700
  %v1728 = vmul.f32 %v1389, %v1700
  %v1729 = vmul.f32 %v1390, %v1700
  %v1730 = vmul.f32 %v1391, %v1700
  %v1731 = vmul.f32 %v1392, %v1700
  %v1732 = vmul.f32 %v1393, %v1700
  %v1733 = vlaneseq
  %v1734 = vshrl.u32 %v1733, 7
  %v1735 = vsub.s32 0, %v1734
  %v1736 = vrot.slane %v1696, %v1735
  %v1737 = vadd.f32 %v1701, %v1736
  %v1738 = vadd.f32 %v1702, %v1736
  %v1739 = vadd.f32 %v1703, %v1736
  %v1740 = vadd.f32 %v1704, %v1736
  %v1741 = vadd.f32 %v1705, %v1736
  %v1742 = vadd.f32 %v1706, %v1736
  %v1743 = vadd.f32 %v1707, %v1736
  %v1744 = vadd.f32 %v1708, %v1736
  %v1745 = vadd.f32 %v1709, %v1736
  %v1746 = vadd.f32 %v1710, %v1736
  %v1747 = vadd.f32 %v1711, %v1736
  %v1748 = vadd.f32 %v1712, %v1736
  %v1749 = vadd.f32 %v1713, %v1736
  %v1750 = vadd.f32 %v1714, %v1736
  %v1751 = vadd.f32 %v1715, %v1736
  %v1752 = vadd.f32 %v1716, %v1736
  %v1753 = vadd.f32 %v1717, %v1736
  %v1754 = vadd.f32 %v1718, %v1736
  %v1755 = vadd.f32 %v1719, %v1736
  %v1756 = vadd.f32 %v1720, %v1736
  %v1757 = vadd.f32 %v1721, %v1736
  %v1758 = vadd.f32 %v1722, %v1736
  %v1759 = vadd.f32 %v1723, %v1736
  %v1760 = vadd.f32 %v1724, %v1736
  %v1761 = vadd.f32 %v1725, %v1736
  %v1762 = vadd.f32 %v1726, %v1736
  %v1763 = vadd.f32 %v1727, %v1736
  %v1764 = vadd.f32 %v1728, %v1736
  %v1765 = vadd.f32 %v1729, %v1736
  %v1766 = vadd.f32 %v1730, %v1736
  %v1767 = vadd.f32 %v1731, %v1736
  %v1768 = vadd.f32 %v1732, %v1736
  %v1769 = vmax.f32 %v1737, 0.0
  %v1770 = vmax.f32 %v1738, 0.0
  %v1771 = vmax.f32 %v1739, 0.0
  %v1772 = vmax.f32 %v1740, 0.0
  %v1773 = vmax.f32 %v1741, 0.0
  %v1774 = vmax.f32 %v1742, 0.0
  %v1775 = vmax.f32 %v1743, 0.0
  %v1776 = vmax.f32 %v1744, 0.0
  %v1777 = vmax.f32 %v1745, 0.0
  %v1778 = vmax.f32 %v1746, 0.0
  %v1779 = vmax.f32 %v1747, 0.0
  %v1780 = vmax.f32 %v1748, 0.0
  %v1781 = vmax.f32 %v1749, 0.0
  %v1782 = vmax.f32 %v1750, 0.0
  %v1783 = vmax.f32 %v1751, 0.0
  %v1784 = vmax.f32 %v1752, 0.0
  %v1785 = vmax.f32 %v1753, 0.0
  %v1786 = vmax.f32 %v1754, 0.0
  %v1787 = vmax.f32 %v1755, 0.0
  %v1788 = vmax.f32 %v1756, 0.0
  %v1789 = vmax.f32 %v1757, 0.0
  %v1790 = vmax.f32 %v1758, 0.0
  %v1791 = vmax.f32 %v1759, 0.0
  %v1792 = vmax.f32 %v1760, 0.0
  %v1793 = vmax.f32 %v1761, 0.0
  %v1794 = vmax.f32 %v1762, 0.0
  %v1795 = vmax.f32 %v1763, 0.0
  %v1796 = vmax.f32 %v1764, 0.0
  %v1797 = vmax.f32 %v1765, 0.0
  %v1798 = vmax.f32 %v1766, 0.0
  %v1799 = vmax.f32 %v1767, 0.0
  %v1800 = vmax.f32 %v1768, 0.0
  %vm1801 = vcmask 1040384
  %vm1802 = vsmask.f32 256
  %vm1803 = vmand %vm1801, %vm1802
  %vm1804 = vcmask 1044484
  %vm1805 = vsmask.f32 4352
  %vm1806 = vmand %vm1804, %vm1805
  %vm1807 = vmor %vm1806, %vm1803
  %v1808 = vld [vmem:[#allocation2] sm:$0x11]
  %v1809 = vsel %vm1807, 0, %v1808
  %1810 = vst [vmem:[#allocation2] sm:$0x11] %v1809
  %v1811 = vld [vmem:[#allocation2 + $0x8] sm:$0x11]
  %v1812 = vsel %vm1807, 0, %v1811
  %1813 = vst [vmem:[#allocation2 + $0x8] sm:$0x11] %v1812
  %v1814 = vld [vmem:[#allocation2 + $0x10] sm:$0x11]
  %v1815 = vsel %vm1807, 0, %v1814
  %1816 = vst [vmem:[#allocation2 + $0x10] sm:$0x11] %v1815
  %v1817 = vld [vmem:[#allocation2 + $0x18] sm:$0x11]
  %v1818 = vsel %vm1807, 0, %v1817
  %1819 = vst [vmem:[#allocation2 + $0x18] sm:$0x11] %v1818
  %v1820 = vld [vmem:[#allocation2 + $0x60] sm:$0x11]
  %v1821 = vsel %vm1807, 0, %v1820
  %1822 = vst [vmem:[#allocation2 + $0x60] sm:$0x11] %v1821
  %v1823 = vld [vmem:[#allocation2 + $0x68] sm:$0x11]
  %v1824 = vsel %vm1807, 0, %v1823
  %1825 = vst [vmem:[#allocation2 + $0x68] sm:$0x11] %v1824
  %v1826 = vld [vmem:[#allocation2 + $0x70] sm:$0x11]
  %v1827 = vsel %vm1807, 0, %v1826
  %1828 = vst [vmem:[#allocation2 + $0x70] sm:$0x11] %v1827
  %v1829 = vld [vmem:[#allocation2 + $0x78] sm:$0x11]
  %v1830 = vsel %vm1807, 0, %v1829
  %1831 = vst [vmem:[#allocation2 + $0x78] sm:$0x11] %v1830
  %vm1832 = vsmask.f32 7938
  %vm1833 = vmand %vm1801, %vm1832
  %vm1834 = vsmask.f32 7954
  %vm1835 = vmand %vm1804, %vm1834
  %vm1836 = vmor %vm1835, %vm1833
  %v1837 = vld [vmem:[#allocation2 + $0x40] sm:$0x11]
  %v1838 = vsel %vm1836, 0, %v1837
  %1839 = vst [vmem:[#allocation2 + $0x40] sm:$0x11] %v1838
  %v1840 = vld [vmem:[#allocation2 + $0x48] sm:$0x11]
  %v1841 = vsel %vm1836, 0, %v1840
  %1842 = vst [vmem:[#allocation2 + $0x48] sm:$0x11] %v1841
  %v1843 = vld [vmem:[#allocation2 + $0x50] sm:$0x11]
  %v1844 = vsel %vm1836, 0, %v1843
  %1845 = vst [vmem:[#allocation2 + $0x50] sm:$0x11] %v1844
  %v1846 = vld [vmem:[#allocation2 + $0x58] sm:$0x11]
  %v1847 = vsel %vm1836, 0, %v1846
  %1848 = vst [vmem:[#allocation2 + $0x58] sm:$0x11] %v1847
  %v1849 = vld [vmem:[#allocation2 + $0xa0] sm:$0x11]
  %v1850 = vsel %vm1836, 0, %v1849
  %1851 = vst [vmem:[#allocation2 + $0xa0] sm:$0x11] %v1850
  %v1852 = vld [vmem:[#allocation2 + $0xa8] sm:$0x11]
  %v1853 = vsel %vm1836, 0, %v1852
  %1854 = vst [vmem:[#allocation2 + $0xa8] sm:$0x11] %v1853
  %v1855 = vld [vmem:[#allocation2 + $0xb0] sm:$0x11]
  %v1856 = vsel %vm1836, 0, %v1855
  %1857 = vst [vmem:[#allocation2 + $0xb0] sm:$0x11] %v1856
  %v1858 = vld [vmem:[#allocation2 + $0xb8] sm:$0x11]
  %v1859 = vsel %vm1836, 0, %v1858
  %1860 = vst [vmem:[#allocation2 + $0xb8] sm:$0x11] %v1859
  %v1861 = vpack.c.bf16 %v1777, %v1769
  %v1862 = vpack.c.bf16 %v1778, %v1770
  %v1863 = vpack.c.bf16 %v1779, %v1771
  %v1864 = vpack.c.bf16 %v1780, %v1772
  %v1865 = vpack.c.bf16 %v1781, %v1773
  %v1866 = vpack.c.bf16 %v1782, %v1774
  %v1867 = vpack.c.bf16 %v1783, %v1775
  %v1868 = vpack.c.bf16 %v1784, %v1776
  %v1869 = vpack.c.bf16 %v1793, %v1785
  %v1870 = vpack.c.bf16 %v1794, %v1786
  %v1871 = vpack.c.bf16 %v1795, %v1787
  %v1872 = vpack.c.bf16 %v1796, %v1788
  %v1873 = vpack.c.bf16 %v1797, %v1789
  %v1874 = vpack.c.bf16 %v1798, %v1790
  %v1875 = vpack.c.bf16 %v1799, %v1791
  %v1876 = vpack.c.bf16 %v1800, %v1792
  %v1893 = vunpack.c.l.b16 %v1861
  %v1894 = vunpack.c.l.b16 %v1862
  %v1895 = vunpack.c.l.b16 %v1863
  %v1896 = vunpack.c.l.b16 %v1864
  %v1897 = vunpack.c.l.b16 %v1865
  %v1898 = vunpack.c.l.b16 %v1866
  %v1899 = vunpack.c.l.b16 %v1867
  %v1900 = vunpack.c.l.b16 %v1868
  %v1901 = vunpack.c.h.b16 %v1861
  %v1902 = vunpack.c.h.b16 %v1862
  %v1903 = vunpack.c.h.b16 %v1863
  %v1904 = vunpack.c.h.b16 %v1864
  %v1905 = vunpack.c.h.b16 %v1865
  %v1906 = vunpack.c.h.b16 %v1866
  %v1907 = vunpack.c.h.b16 %v1867
  %v1908 = vunpack.c.h.b16 %v1868
  %v1909 = vunpack.c.l.b16 %v1869
  %v1910 = vunpack.c.l.b16 %v1870
  %v1911 = vunpack.c.l.b16 %v1871
  %v1912 = vunpack.c.l.b16 %v1872
  %v1913 = vunpack.c.l.b16 %v1873
  %v1914 = vunpack.c.l.b16 %v1874
  %v1915 = vunpack.c.l.b16 %v1875
  %v1916 = vunpack.c.l.b16 %v1876
  %v1917 = vunpack.c.h.b16 %v1869
  %v1918 = vunpack.c.h.b16 %v1870
  %v1919 = vunpack.c.h.b16 %v1871
  %v1920 = vunpack.c.h.b16 %v1872
  %v1921 = vunpack.c.h.b16 %v1873
  %v1922 = vunpack.c.h.b16 %v1874
  %v1923 = vunpack.c.h.b16 %v1875
  %v1924 = vunpack.c.h.b16 %v1876
  %v1925 = vpack.c.b16 %v1894, %v1893
  %v1926 = vpack.c.b16 %v1896, %v1895
  %v1927 = vpack.c.b16 %v1898, %v1897
  %v1928 = vpack.c.b16 %v1900, %v1899
  %v1929 = vpack.c.b16 %v1902, %v1901
  %v1930 = vpack.c.b16 %v1904, %v1903
  %v1931 = vpack.c.b16 %v1906, %v1905
  %v1932 = vpack.c.b16 %v1908, %v1907
  %v1933 = vpack.c.b16 %v1910, %v1909
  %v1934 = vpack.c.b16 %v1912, %v1911
  %v1935 = vpack.c.b16 %v1914, %v1913
  %v1936 = vpack.c.b16 %v1916, %v1915
  %v1937 = vpack.c.b16 %v1918, %v1917
  %v1938 = vpack.c.b16 %v1920, %v1919
  %v1939 = vpack.c.b16 %v1922, %v1921
  %v1940 = vpack.c.b16 %v1924, %v1923
  %vm1941 = vsmask.f32 4368
  %vm1942 = vmor %vm1802, %vm1941
  %v1944 = vshrl.u32 %v1925, 16
  %v1946 = vrot.slane %v1944, 7
  %v1947 = vshll.u32 %v1925, 16
  %v1949 = vor.u32 %v1946, %v1947
  %v1951 = vshrl.u32 %v1926, 16
  %v1953 = vrot.slane %v1951, 7
  %v1954 = vshll.u32 %v1926, 16
  %v1956 = vor.u32 %v1953, %v1954
  %v1958 = vshrl.u32 %v1927, 16
  %v1960 = vrot.slane %v1958, 7
  %v1961 = vshll.u32 %v1927, 16
  %v1963 = vor.u32 %v1960, %v1961
  %v1965 = vshrl.u32 %v1928, 16
  %v1967 = vrot.slane %v1965, 7
  %v1968 = vshll.u32 %v1928, 16
  %v1970 = vor.u32 %v1967, %v1968
  %v1971 = vrot.slane %v1946, 4
  %v1973 = vshrl.u32 %v1929, 16
  %v1975 = vrot.slane %v1973, 7
  %v1976 = vshll.u32 %v1929, 16
  %v1978 = vor.u32 %v1975, %v1976
  %v1979 = vsel %vm1942, %v1971, %v1978
  %v1980 = vrot.slane %v1953, 4
  %v1982 = vshrl.u32 %v1930, 16
  %v1984 = vrot.slane %v1982, 7
  %v1985 = vshll.u32 %v1930, 16
  %v1987 = vor.u32 %v1984, %v1985
  %v1988 = vsel %vm1942, %v1980, %v1987
  %v1989 = vrot.slane %v1960, 4
  %v1991 = vshrl.u32 %v1931, 16
  %v1993 = vrot.slane %v1991, 7
  %v1994 = vshll.u32 %v1931, 16
  %v1996 = vor.u32 %v1993, %v1994
  %v1997 = vsel %vm1942, %v1989, %v1996
  %v1998 = vrot.slane %v1967, 4
  %v2000 = vshrl.u32 %v1932, 16
  %v2002 = vrot.slane %v2000, 7
  %v2003 = vshll.u32 %v1932, 16
  %v2005 = vor.u32 %v2002, %v2003
  %v2006 = vsel %vm1942, %v1998, %v2005
  %v2007 = vrot.slane %v1975, 4
  %v2008 = vrot.slane %v1984, 4
  %v2009 = vrot.slane %v1993, 4
  %v2010 = vrot.slane %v2002, 4
  %v2012 = vshrl.u32 %v1933, 16
  %v2014 = vrot.slane %v2012, 7
  %v2015 = vshll.u32 %v1933, 16
  %v2017 = vor.u32 %v2014, %v2015
  %v2019 = vshrl.u32 %v1934, 16
  %v2021 = vrot.slane %v2019, 7
  %v2022 = vshll.u32 %v1934, 16
  %v2024 = vor.u32 %v2021, %v2022
  %v2026 = vshrl.u32 %v1935, 16
  %v2028 = vrot.slane %v2026, 7
  %v2029 = vshll.u32 %v1935, 16
  %v2031 = vor.u32 %v2028, %v2029
  %v2033 = vshrl.u32 %v1936, 16
  %v2035 = vrot.slane %v2033, 7
  %v2036 = vshll.u32 %v1936, 16
  %v2038 = vor.u32 %v2035, %v2036
  %v2039 = vrot.slane %v2014, 4
  %v2041 = vshrl.u32 %v1937, 16
  %v2043 = vrot.slane %v2041, 7
  %v2044 = vshll.u32 %v1937, 16
  %v2046 = vor.u32 %v2043, %v2044
  %v2047 = vsel %vm1942, %v2039, %v2046
  %v2048 = vrot.slane %v2021, 4
  %v2050 = vshrl.u32 %v1938, 16
  %v2052 = vrot.slane %v2050, 7
  %v2053 = vshll.u32 %v1938, 16
  %v2055 = vor.u32 %v2052, %v2053
  %v2056 = vsel %vm1942, %v2048, %v2055
  %v2057 = vrot.slane %v2028, 4
  %v2059 = vshrl.u32 %v1939, 16
  %v2061 = vrot.slane %v2059, 7
  %v2062 = vshll.u32 %v1939, 16
  %v2064 = vor.u32 %v2061, %v2062
  %v2065 = vsel %vm1942, %v2057, %v2064
  %v2066 = vrot.slane %v2035, 4
  %v2068 = vshrl.u32 %v1940, 16
  %v2070 = vrot.slane %v2068, 7
  %v2071 = vshll.u32 %v1940, 16
  %v2073 = vor.u32 %v2070, %v2071
  %v2074 = vsel %vm1942, %v2066, %v2073
  %v2075 = vrot.slane %v2043, 4
  %v2076 = vrot.slane %v2052, 4
  %v2077 = vrot.slane %v2061, 4
  %v2078 = vrot.slane %v2070, 4
  %vm2103 = vcmask 1043456
  %vm2104 = vmand %vm2103, %vm1832
  %vm2105 = vcmask 1047556
  %vm2106 = vmand %vm2105, %vm1834
  %vm2107 = vmor %vm2106, %vm2104
  %v2108 = vld [vmem:[#allocation2] sm:$0xff]
  %v2109 = vsel %vm2107, %v1949, %v2108
  %2110 = vst [vmem:[#allocation2] sm:$0xff] %v2109
  %v2111 = vld [vmem:[#allocation2 + $0x8] sm:$0xff]
  %v2112 = vsel %vm2107, %v1956, %v2111
  %2113 = vst [vmem:[#allocation2 + $0x8] sm:$0xff] %v2112
  %v2114 = vld [vmem:[#allocation2 + $0x10] sm:$0xff]
  %v2115 = vsel %vm2107, %v1963, %v2114
  %2116 = vst [vmem:[#allocation2 + $0x10] sm:$0xff] %v2115
  %v2117 = vld [vmem:[#allocation2 + $0x18] sm:$0xff]
  %v2118 = vsel %vm2107, %v1970, %v2117
  %2119 = vst [vmem:[#allocation2 + $0x18] sm:$0xff] %v2118
  %2120 = vst [vmem:[#allocation2 + $0x20] sm:$0xff] %v1979
  %2121 = vst [vmem:[#allocation2 + $0x28] sm:$0xff] %v1988
  %2122 = vst [vmem:[#allocation2 + $0x30] sm:$0xff] %v1997
  %2123 = vst [vmem:[#allocation2 + $0x38] sm:$0xff] %v2006
  %v2124 = vld [vmem:[#allocation2 + $0x40] sm:$0x11]
  %v2125 = vsel %vm1807, %v2007, %v2124
  %2126 = vst [vmem:[#allocation2 + $0x40] sm:$0x11] %v2125
  %v2127 = vld [vmem:[#allocation2 + $0x48] sm:$0x11]
  %v2128 = vsel %vm1807, %v2008, %v2127
  %2129 = vst [vmem:[#allocation2 + $0x48] sm:$0x11] %v2128
  %v2130 = vld [vmem:[#allocation2 + $0x50] sm:$0x11]
  %v2131 = vsel %vm1807, %v2009, %v2130
  %2132 = vst [vmem:[#allocation2 + $0x50] sm:$0x11] %v2131
  %v2133 = vld [vmem:[#allocation2 + $0x58] sm:$0x11]
  %v2134 = vsel %vm1807, %v2010, %v2133
  %2135 = vst [vmem:[#allocation2 + $0x58] sm:$0x11] %v2134
  %v2136 = vld [vmem:[#allocation2 + $0x60] sm:$0xff]
  %v2137 = vsel %vm2107, %v2017, %v2136
  %2138 = vst [vmem:[#allocation2 + $0x60] sm:$0xff] %v2137
  %v2139 = vld [vmem:[#allocation2 + $0x68] sm:$0xff]
  %v2140 = vsel %vm2107, %v2024, %v2139
  %2141 = vst [vmem:[#allocation2 + $0x68] sm:$0xff] %v2140
  %v2142 = vld [vmem:[#allocation2 + $0x70] sm:$0xff]
  %v2143 = vsel %vm2107, %v2031, %v2142
  %2144 = vst [vmem:[#allocation2 + $0x70] sm:$0xff] %v2143
  %v2145 = vld [vmem:[#allocation2 + $0x78] sm:$0xff]
  %v2146 = vsel %vm2107, %v2038, %v2145
  %2147 = vst [vmem:[#allocation2 + $0x78] sm:$0xff] %v2146
  %2148 = vst [vmem:[#allocation2 + $0x80] sm:$0xff] %v2047
  %2149 = vst [vmem:[#allocation2 + $0x88] sm:$0xff] %v2056
  %2150 = vst [vmem:[#allocation2 + $0x90] sm:$0xff] %v2065
  %2151 = vst [vmem:[#allocation2 + $0x98] sm:$0xff] %v2074
  %v2152 = vld [vmem:[#allocation2 + $0xa0] sm:$0x11]
  %v2153 = vsel %vm1807, %v2075, %v2152
  %2154 = vst [vmem:[#allocation2 + $0xa0] sm:$0x11] %v2153
  %v2155 = vld [vmem:[#allocation2 + $0xa8] sm:$0x11]
  %v2156 = vsel %vm1807, %v2076, %v2155
  %2157 = vst [vmem:[#allocation2 + $0xa8] sm:$0x11] %v2156
  %v2158 = vld [vmem:[#allocation2 + $0xb0] sm:$0x11]
  %v2159 = vsel %vm1807, %v2077, %v2158
  %2160 = vst [vmem:[#allocation2 + $0xb0] sm:$0x11] %v2159
  %v2161 = vld [vmem:[#allocation2 + $0xb8] sm:$0x11]
  %v2162 = vsel %vm1807, %v2078, %v2161
  %2163 = vst [vmem:[#allocation2 + $0xb8] sm:$0x11] %v2162
  %v2164 = vld [vmem:[#allocation2] sm:$0xff]
  %v2165 = vld [vmem:[#allocation2 + $0x8] sm:$0xff]
  %v2166 = vld [vmem:[#allocation2 + $0x10] sm:$0xff]
  %v2167 = vld [vmem:[#allocation2 + $0x18] sm:$0xff]
  %v2168 = vld [vmem:[#allocation2 + $0x20] sm:$0xff]
  %v2169 = vld [vmem:[#allocation2 + $0x28] sm:$0xff]
  %v2170 = vld [vmem:[#allocation2 + $0x30] sm:$0xff]
  %v2171 = vld [vmem:[#allocation2 + $0x38] sm:$0xff]
  %v2172 = vld [vmem:[#allocation2 + $0x60] sm:$0xff]
  %v2173 = vld [vmem:[#allocation2 + $0x68] sm:$0xff]
  %v2174 = vld [vmem:[#allocation2 + $0x70] sm:$0xff]
  %v2175 = vld [vmem:[#allocation2 + $0x78] sm:$0xff]
  %v2176 = vld [vmem:[#allocation2 + $0x80] sm:$0xff]
  %v2177 = vld [vmem:[#allocation2 + $0x88] sm:$0xff]
  %v2178 = vld [vmem:[#allocation2 + $0x90] sm:$0xff]
  %v2179 = vld [vmem:[#allocation2 + $0x98] sm:$0xff]
  %v2180 = vld [vmem:[%s4] sm:$0xff]
  %v2181 = vld [vmem:[%s4 + $0x8] sm:$0xff]
  %v2182 = vld [vmem:[%s4 + $0x10] sm:$0xff]
  %v2183 = vld [vmem:[%s4 + $0x18] sm:$0xff]
  %v2184 = vld [vmem:[%s4 + $0x20] sm:$0xff]
  %v2185 = vld [vmem:[%s4 + $0x28] sm:$0xff]
  %v2186 = vld [vmem:[%s4 + $0x30] sm:$0xff]
  %v2187 = vld [vmem:[%s4 + $0x38] sm:$0xff]
  %v2188 = vld [vmem:[%s4 + $0x40] sm:$0xff]
  %v2189 = vld [vmem:[%s4 + $0x48] sm:$0xff]
  %v2190 = vld [vmem:[%s4 + $0x50] sm:$0xff]
  %v2191 = vld [vmem:[%s4 + $0x58] sm:$0xff]
  %v2192 = vld [vmem:[%s4 + $0x60] sm:$0xff]
  %v2193 = vld [vmem:[%s4 + $0x68] sm:$0xff]
  %v2194 = vld [vmem:[%s4 + $0x70] sm:$0xff]
  %v2195 = vld [vmem:[%s4 + $0x78] sm:$0xff]
  %v2196 = vld [vmem:[%s4 + $0x80] sm:$0xff]
  %v2197 = vld [vmem:[%s4 + $0x88] sm:$0xff]
  %v2198 = vld [vmem:[%s4 + $0x90] sm:$0xff]
  %v2199 = vld [vmem:[%s4 + $0x98] sm:$0xff]
  %v2200 = vld [vmem:[%s4 + $0xa0] sm:$0xff]
  %v2201 = vld [vmem:[%s4 + $0xa8] sm:$0xff]
  %v2202 = vld [vmem:[%s4 + $0xb0] sm:$0xff]
  %v2203 = vld [vmem:[%s4 + $0xb8] sm:$0xff]
  %v2204 = vld [vmem:[%s4 + $0xc0] sm:$0xff]
  %v2205 = vld [vmem:[%s4 + $0xc8] sm:$0xff]
  %v2206 = vld [vmem:[%s4 + $0xd0] sm:$0xff]
  %v2207 = vld [vmem:[%s4 + $0xd8] sm:$0xff]
  %v2208 = vld [vmem:[%s4 + $0xe0] sm:$0xff]
  %v2209 = vld [vmem:[%s4 + $0xe8] sm:$0xff]
  %v2210 = vld [vmem:[%s4 + $0xf0] sm:$0xff]
  %v2211 = vld [vmem:[%s4 + $0xf8] sm:$0xff]
  %v2212 = vld [vmem:[%s4 + $0x100] sm:$0xff]
  %v2213 = vld [vmem:[%s4 + $0x108] sm:$0xff]
  %v2214 = vld [vmem:[%s4 + $0x110] sm:$0xff]
  %v2215 = vld [vmem:[%s4 + $0x118] sm:$0xff]
  %v2216 = vld [vmem:[%s4 + $0x120] sm:$0xff]
  %v2217 = vld [vmem:[%s4 + $0x128] sm:$0xff]
  %v2218 = vld [vmem:[%s4 + $0x130] sm:$0xff]
  %v2219 = vld [vmem:[%s4 + $0x138] sm:$0xff]
  %v2220 = vld [vmem:[%s4 + $0x140] sm:$0xff]
  %v2221 = vld [vmem:[%s4 + $0x148] sm:$0xff]
  %v2222 = vld [vmem:[%s4 + $0x150] sm:$0xff]
  %v2223 = vld [vmem:[%s4 + $0x158] sm:$0xff]
  %v2224 = vld [vmem:[%s4 + $0x160] sm:$0xff]
  %v2225 = vld [vmem:[%s4 + $0x168] sm:$0xff]
  %v2226 = vld [vmem:[%s4 + $0x170] sm:$0xff]
  %v2227 = vld [vmem:[%s4 + $0x178] sm:$0xff]
  %v2228 = vld [vmem:[%s4 + $0x180] sm:$0xff]
  %v2229 = vld [vmem:[%s4 + $0x188] sm:$0xff]
  %v2230 = vld [vmem:[%s4 + $0x190] sm:$0xff]
  %v2231 = vld [vmem:[%s4 + $0x198] sm:$0xff]
  %v2232 = vld [vmem:[%s4 + $0x1a0] sm:$0xff]
  %v2233 = vld [vmem:[%s4 + $0x1a8] sm:$0xff]
  %v2234 = vld [vmem:[%s4 + $0x1b0] sm:$0xff]
  %v2235 = vld [vmem:[%s4 + $0x1b8] sm:$0xff]
  %v2236 = vld [vmem:[%s4 + $0x1c0] sm:$0xff]
  %v2237 = vld [vmem:[%s4 + $0x1c8] sm:$0xff]
  %v2238 = vld [vmem:[%s4 + $0x1d0] sm:$0xff]
  %v2239 = vld [vmem:[%s4 + $0x1d8] sm:$0xff]
  %v2240 = vld [vmem:[%s4 + $0x1e0] sm:$0xff]
  %v2241 = vld [vmem:[%s4 + $0x1e8] sm:$0xff]
  %v2242 = vld [vmem:[%s4 + $0x1f0] sm:$0xff]
  %v2243 = vld [vmem:[%s4 + $0x1f8] sm:$0xff]
  %v2244 = vld [vmem:[%s4 + $0x200] sm:$0xff]
  %v2245 = vld [vmem:[%s4 + $0x208] sm:$0xff]
  %v2246 = vld [vmem:[%s4 + $0x210] sm:$0xff]
  %v2247 = vld [vmem:[%s4 + $0x218] sm:$0xff]
  %v2248 = vld [vmem:[%s4 + $0x220] sm:$0xff]
  %v2249 = vld [vmem:[%s4 + $0x228] sm:$0xff]
  %v2250 = vld [vmem:[%s4 + $0x230] sm:$0xff]
  %v2251 = vld [vmem:[%s4 + $0x238] sm:$0xff]
  %v2252 = vld [vmem:[%s4 + $0x240] sm:$0xff]
  %v2253 = vld [vmem:[%s4 + $0x248] sm:$0xff]
  %v2254 = vld [vmem:[%s4 + $0x250] sm:$0xff]
  %v2255 = vld [vmem:[%s4 + $0x258] sm:$0xff]
  %v2256 = vld [vmem:[%s4 + $0x260] sm:$0xff]
  %v2257 = vld [vmem:[%s4 + $0x268] sm:$0xff]
  %v2258 = vld [vmem:[%s4 + $0x270] sm:$0xff]
  %v2259 = vld [vmem:[%s4 + $0x278] sm:$0xff]
  %v2260 = vld [vmem:[%s4 + $0x280] sm:$0xff]
  %v2261 = vld [vmem:[%s4 + $0x288] sm:$0xff]
  %v2262 = vld [vmem:[%s4 + $0x290] sm:$0xff]
  %v2263 = vld [vmem:[%s4 + $0x298] sm:$0xff]
  %v2264 = vld [vmem:[%s4 + $0x2a0] sm:$0xff]
  %v2265 = vld [vmem:[%s4 + $0x2a8] sm:$0xff]
  %v2266 = vld [vmem:[%s4 + $0x2b0] sm:$0xff]
  %v2267 = vld [vmem:[%s4 + $0x2b8] sm:$0xff]
  %v2268 = vld [vmem:[%s4 + $0x2c0] sm:$0xff]
  %v2269 = vld [vmem:[%s4 + $0x2c8] sm:$0xff]
  %v2270 = vld [vmem:[%s4 + $0x2d0] sm:$0xff]
  %v2271 = vld [vmem:[%s4 + $0x2d8] sm:$0xff]
  %v2272 = vld [vmem:[%s4 + $0x2e0] sm:$0xff]
  %v2273 = vld [vmem:[%s4 + $0x2e8] sm:$0xff]
  %v2274 = vld [vmem:[%s4 + $0x2f0] sm:$0xff]
  %v2275 = vld [vmem:[%s4 + $0x2f8] sm:$0xff]
  %v2276 = vld [vmem:[%s4 + $0x300] sm:$0xff]
  %v2277 = vld [vmem:[%s4 + $0x308] sm:$0xff]
  %v2278 = vld [vmem:[%s4 + $0x310] sm:$0xff]
  %v2279 = vld [vmem:[%s4 + $0x318] sm:$0xff]
  %v2280 = vld [vmem:[%s4 + $0x320] sm:$0xff]
  %v2281 = vld [vmem:[%s4 + $0x328] sm:$0xff]
  %v2282 = vld [vmem:[%s4 + $0x330] sm:$0xff]
  %v2283 = vld [vmem:[%s4 + $0x338] sm:$0xff]
  %v2284 = vld [vmem:[%s4 + $0x340] sm:$0xff]
  %v2285 = vld [vmem:[%s4 + $0x348] sm:$0xff]
  %v2286 = vld [vmem:[%s4 + $0x350] sm:$0xff]
  %v2287 = vld [vmem:[%s4 + $0x358] sm:$0xff]
  %v2288 = vld [vmem:[%s4 + $0x360] sm:$0xff]
  %v2289 = vld [vmem:[%s4 + $0x368] sm:$0xff]
  %v2290 = vld [vmem:[%s4 + $0x370] sm:$0xff]
  %v2291 = vld [vmem:[%s4 + $0x378] sm:$0xff]
  %v2292 = vld [vmem:[%s4 + $0x380] sm:$0xff]
  %v2293 = vld [vmem:[%s4 + $0x388] sm:$0xff]
  %v2294 = vld [vmem:[%s4 + $0x390] sm:$0xff]
  %v2295 = vld [vmem:[%s4 + $0x398] sm:$0xff]
  %v2296 = vld [vmem:[%s4 + $0x3a0] sm:$0xff]
  %v2297 = vld [vmem:[%s4 + $0x3a8] sm:$0xff]
  %v2298 = vld [vmem:[%s4 + $0x3b0] sm:$0xff]
  %v2299 = vld [vmem:[%s4 + $0x3b8] sm:$0xff]
  %v2300 = vld [vmem:[%s4 + $0x3c0] sm:$0xff]
  %v2301 = vld [vmem:[%s4 + $0x3c8] sm:$0xff]
  %v2302 = vld [vmem:[%s4 + $0x3d0] sm:$0xff]
  %v2303 = vld [vmem:[%s4 + $0x3d8] sm:$0xff]
  %v2304 = vld [vmem:[%s4 + $0x3e0] sm:$0xff]
  %v2305 = vld [vmem:[%s4 + $0x3e8] sm:$0xff]
  %v2306 = vld [vmem:[%s4 + $0x3f0] sm:$0xff]
  %v2307 = vld [vmem:[%s4 + $0x3f8] sm:$0xff]
  %v2308 = vld [vmem:[%s4 + $0x400] sm:$0xff]
  %v2309 = vld [vmem:[%s4 + $0x408] sm:$0xff]
  %v2310 = vld [vmem:[%s4 + $0x410] sm:$0xff]
  %v2311 = vld [vmem:[%s4 + $0x418] sm:$0xff]
  %v2312 = vld [vmem:[%s4 + $0x420] sm:$0xff]
  %v2313 = vld [vmem:[%s4 + $0x428] sm:$0xff]
  %v2314 = vld [vmem:[%s4 + $0x430] sm:$0xff]
  %v2315 = vld [vmem:[%s4 + $0x438] sm:$0xff]
  %v2316 = vld [vmem:[%s4 + $0x440] sm:$0xff]
  %v2317 = vld [vmem:[%s4 + $0x448] sm:$0xff]
  %v2318 = vld [vmem:[%s4 + $0x450] sm:$0xff]
  %v2319 = vld [vmem:[%s4 + $0x458] sm:$0xff]
  %v2320 = vld [vmem:[%s4 + $0x460] sm:$0xff]
  %v2321 = vld [vmem:[%s4 + $0x468] sm:$0xff]
  %v2322 = vld [vmem:[%s4 + $0x470] sm:$0xff]
  %v2323 = vld [vmem:[%s4 + $0x478] sm:$0xff]
  %v2324 = vld [vmem:[%s4 + $0x480] sm:$0xff]
  %v2325 = vld [vmem:[%s4 + $0x488] sm:$0xff]
  %v2326 = vld [vmem:[%s4 + $0x490] sm:$0xff]
  %v2327 = vld [vmem:[%s4 + $0x498] sm:$0xff]
  %v2328 = vld [vmem:[%s4 + $0x4a0] sm:$0xff]
  %v2329 = vld [vmem:[%s4 + $0x4a8] sm:$0xff]
  %v2330 = vld [vmem:[%s4 + $0x4b0] sm:$0xff]
  %v2331 = vld [vmem:[%s4 + $0x4b8] sm:$0xff]
  %v2332 = vld [vmem:[%s4 + $0x4c0] sm:$0xff]
  %v2333 = vld [vmem:[%s4 + $0x4c8] sm:$0xff]
  %v2334 = vld [vmem:[%s4 + $0x4d0] sm:$0xff]
  %v2335 = vld [vmem:[%s4 + $0x4d8] sm:$0xff]
  %v2336 = vld [vmem:[%s4 + $0x4e0] sm:$0xff]
  %v2337 = vld [vmem:[%s4 + $0x4e8] sm:$0xff]
  %v2338 = vld [vmem:[%s4 + $0x4f0] sm:$0xff]
  %v2339 = vld [vmem:[%s4 + $0x4f8] sm:$0xff]
  %v2340 = vld [vmem:[%s4 + $0x500] sm:$0xff]
  %v2341 = vld [vmem:[%s4 + $0x508] sm:$0xff]
  %v2342 = vld [vmem:[%s4 + $0x510] sm:$0xff]
  %v2343 = vld [vmem:[%s4 + $0x518] sm:$0xff]
  %v2344 = vld [vmem:[%s4 + $0x520] sm:$0xff]
  %v2345 = vld [vmem:[%s4 + $0x528] sm:$0xff]
  %v2346 = vld [vmem:[%s4 + $0x530] sm:$0xff]
  %v2347 = vld [vmem:[%s4 + $0x538] sm:$0xff]
  %v2348 = vld [vmem:[%s4 + $0x540] sm:$0xff]
  %v2349 = vld [vmem:[%s4 + $0x548] sm:$0xff]
  %v2350 = vld [vmem:[%s4 + $0x550] sm:$0xff]
  %v2351 = vld [vmem:[%s4 + $0x558] sm:$0xff]
  %v2352 = vld [vmem:[%s4 + $0x560] sm:$0xff]
  %v2353 = vld [vmem:[%s4 + $0x568] sm:$0xff]
  %v2354 = vld [vmem:[%s4 + $0x570] sm:$0xff]
  %v2355 = vld [vmem:[%s4 + $0x578] sm:$0xff]
  %v2356 = vld [vmem:[%s4 + $0x580] sm:$0xff]
  %v2357 = vld [vmem:[%s4 + $0x588] sm:$0xff]
  %v2358 = vld [vmem:[%s4 + $0x590] sm:$0xff]
  %v2359 = vld [vmem:[%s4 + $0x598] sm:$0xff]
  %v2360 = vld [vmem:[%s4 + $0x5a0] sm:$0xff]
  %v2361 = vld [vmem:[%s4 + $0x5a8] sm:$0xff]
  %v2362 = vld [vmem:[%s4 + $0x5b0] sm:$0xff]
  %v2363 = vld [vmem:[%s4 + $0x5b8] sm:$0xff]
  %v2364 = vld [vmem:[%s4 + $0x5c0] sm:$0xff]
  %v2365 = vld [vmem:[%s4 + $0x5c8] sm:$0xff]
  %v2366 = vld [vmem:[%s4 + $0x5d0] sm:$0xff]
  %v2367 = vld [vmem:[%s4 + $0x5d8] sm:$0xff]
  %v2368 = vld [vmem:[%s4 + $0x5e0] sm:$0xff]
  %v2369 = vld [vmem:[%s4 + $0x5e8] sm:$0xff]
  %v2370 = vld [vmem:[%s4 + $0x5f0] sm:$0xff]
  %v2371 = vld [vmem:[%s4 + $0x5f8] sm:$0xff]
  %v2372 = vld [vmem:[%s4 + $0x600] sm:$0xff]
  %v2373 = vld [vmem:[%s4 + $0x608] sm:$0xff]
  %v2374 = vld [vmem:[%s4 + $0x610] sm:$0xff]
  %v2375 = vld [vmem:[%s4 + $0x618] sm:$0xff]
  %v2376 = vld [vmem:[%s4 + $0x620] sm:$0xff]
  %v2377 = vld [vmem:[%s4 + $0x628] sm:$0xff]
  %v2378 = vld [vmem:[%s4 + $0x630] sm:$0xff]
  %v2379 = vld [vmem:[%s4 + $0x638] sm:$0xff]
  %v2380 = vld [vmem:[%s4 + $0x640] sm:$0xff]
  %v2381 = vld [vmem:[%s4 + $0x648] sm:$0xff]
  %v2382 = vld [vmem:[%s4 + $0x650] sm:$0xff]
  %v2383 = vld [vmem:[%s4 + $0x658] sm:$0xff]
  %v2384 = vld [vmem:[%s4 + $0x660] sm:$0xff]
  %v2385 = vld [vmem:[%s4 + $0x668] sm:$0xff]
  %v2386 = vld [vmem:[%s4 + $0x670] sm:$0xff]
  %v2387 = vld [vmem:[%s4 + $0x678] sm:$0xff]
  %v2388 = vld [vmem:[%s4 + $0x680] sm:$0xff]
  %v2389 = vld [vmem:[%s4 + $0x688] sm:$0xff]
  %v2390 = vld [vmem:[%s4 + $0x690] sm:$0xff]
  %v2391 = vld [vmem:[%s4 + $0x698] sm:$0xff]
  %v2392 = vld [vmem:[%s4 + $0x6a0] sm:$0xff]
  %v2393 = vld [vmem:[%s4 + $0x6a8] sm:$0xff]
  %v2394 = vld [vmem:[%s4 + $0x6b0] sm:$0xff]
  %v2395 = vld [vmem:[%s4 + $0x6b8] sm:$0xff]
  %v2396 = vld [vmem:[%s4 + $0x6c0] sm:$0xff]
  %v2397 = vld [vmem:[%s4 + $0x6c8] sm:$0xff]
  %v2398 = vld [vmem:[%s4 + $0x6d0] sm:$0xff]
  %v2399 = vld [vmem:[%s4 + $0x6d8] sm:$0xff]
  %v2400 = vld [vmem:[%s4 + $0x6e0] sm:$0xff]
  %v2401 = vld [vmem:[%s4 + $0x6e8] sm:$0xff]
  %v2402 = vld [vmem:[%s4 + $0x6f0] sm:$0xff]
  %v2403 = vld [vmem:[%s4 + $0x6f8] sm:$0xff]
  %v2404 = vld [vmem:[%s4 + $0x700] sm:$0xff]
  %v2405 = vld [vmem:[%s4 + $0x708] sm:$0xff]
  %v2406 = vld [vmem:[%s4 + $0x710] sm:$0xff]
  %v2407 = vld [vmem:[%s4 + $0x718] sm:$0xff]
  %v2408 = vld [vmem:[%s4 + $0x720] sm:$0xff]
  %v2409 = vld [vmem:[%s4 + $0x728] sm:$0xff]
  %v2410 = vld [vmem:[%s4 + $0x730] sm:$0xff]
  %v2411 = vld [vmem:[%s4 + $0x738] sm:$0xff]
  %v2412 = vld [vmem:[%s4 + $0x740] sm:$0xff]
  %v2413 = vld [vmem:[%s4 + $0x748] sm:$0xff]
  %v2414 = vld [vmem:[%s4 + $0x750] sm:$0xff]
  %v2415 = vld [vmem:[%s4 + $0x758] sm:$0xff]
  %v2416 = vld [vmem:[%s4 + $0x760] sm:$0xff]
  %v2417 = vld [vmem:[%s4 + $0x768] sm:$0xff]
  %v2418 = vld [vmem:[%s4 + $0x770] sm:$0xff]
  %v2419 = vld [vmem:[%s4 + $0x778] sm:$0xff]
  %v2420 = vld [vmem:[%s4 + $0x780] sm:$0xff]
  %v2421 = vld [vmem:[%s4 + $0x788] sm:$0xff]
  %v2422 = vld [vmem:[%s4 + $0x790] sm:$0xff]
  %v2423 = vld [vmem:[%s4 + $0x798] sm:$0xff]
  %v2424 = vld [vmem:[%s4 + $0x7a0] sm:$0xff]
  %v2425 = vld [vmem:[%s4 + $0x7a8] sm:$0xff]
  %v2426 = vld [vmem:[%s4 + $0x7b0] sm:$0xff]
  %v2427 = vld [vmem:[%s4 + $0x7b8] sm:$0xff]
  %v2428 = vld [vmem:[%s4 + $0x7c0] sm:$0xff]
  %v2429 = vld [vmem:[%s4 + $0x7c8] sm:$0xff]
  %v2430 = vld [vmem:[%s4 + $0x7d0] sm:$0xff]
  %v2431 = vld [vmem:[%s4 + $0x7d8] sm:$0xff]
  %v2432 = vld [vmem:[%s4 + $0x7e0] sm:$0xff]
  %v2433 = vld [vmem:[%s4 + $0x7e8] sm:$0xff]
  %v2434 = vld [vmem:[%s4 + $0x7f0] sm:$0xff]
  %v2435 = vld [vmem:[%s4 + $0x7f8] sm:$0xff]
  %v2436 = vld [vmem:[%s4 + $0x800] sm:$0xff]
  %v2437 = vld [vmem:[%s4 + $0x808] sm:$0xff]
  %v2438 = vld [vmem:[%s4 + $0x810] sm:$0xff]
  %v2439 = vld [vmem:[%s4 + $0x818] sm:$0xff]
  %v2440 = vld [vmem:[%s4 + $0x820] sm:$0xff]
  %v2441 = vld [vmem:[%s4 + $0x828] sm:$0xff]
  %v2442 = vld [vmem:[%s4 + $0x830] sm:$0xff]
  %v2443 = vld [vmem:[%s4 + $0x838] sm:$0xff]
  %v2444 = vld [vmem:[%s4 + $0x840] sm:$0xff]
  %v2445 = vld [vmem:[%s4 + $0x848] sm:$0xff]
  %v2446 = vld [vmem:[%s4 + $0x850] sm:$0xff]
  %v2447 = vld [vmem:[%s4 + $0x858] sm:$0xff]
  %v2448 = vld [vmem:[%s4 + $0x860] sm:$0xff]
  %v2449 = vld [vmem:[%s4 + $0x868] sm:$0xff]
  %v2450 = vld [vmem:[%s4 + $0x870] sm:$0xff]
  %v2451 = vld [vmem:[%s4 + $0x878] sm:$0xff]
  %v2452 = vld [vmem:[%s4 + $0x880] sm:$0xff]
  %v2453 = vld [vmem:[%s4 + $0x888] sm:$0xff]
  %v2454 = vld [vmem:[%s4 + $0x890] sm:$0xff]
  %v2455 = vld [vmem:[%s4 + $0x898] sm:$0xff]
  %v2456 = vld [vmem:[%s4 + $0x8a0] sm:$0xff]
  %v2457 = vld [vmem:[%s4 + $0x8a8] sm:$0xff]
  %v2458 = vld [vmem:[%s4 + $0x8b0] sm:$0xff]
  %v2459 = vld [vmem:[%s4 + $0x8b8] sm:$0xff]
  %v2460 = vld [vmem:[%s4 + $0x8c0] sm:$0xff]
  %v2461 = vld [vmem:[%s4 + $0x8c8] sm:$0xff]
  %v2462 = vld [vmem:[%s4 + $0x8d0] sm:$0xff]
  %v2463 = vld [vmem:[%s4 + $0x8d8] sm:$0xff]
  %v2464 = vld [vmem:[%s4 + $0x8e0] sm:$0xff]
  %v2465 = vld [vmem:[%s4 + $0x8e8] sm:$0xff]
  %v2466 = vld [vmem:[%s4 + $0x8f0] sm:$0xff]
  %v2467 = vld [vmem:[%s4 + $0x8f8] sm:$0xff]
  %v2468 = vld [vmem:[%s4 + $0x900] sm:$0xff]
  %v2469 = vld [vmem:[%s4 + $0x908] sm:$0xff]
  %v2470 = vld [vmem:[%s4 + $0x910] sm:$0xff]
  %v2471 = vld [vmem:[%s4 + $0x918] sm:$0xff]
  %v2472 = vld [vmem:[%s4 + $0x920] sm:$0xff]
  %v2473 = vld [vmem:[%s4 + $0x928] sm:$0xff]
  %v2474 = vld [vmem:[%s4 + $0x930] sm:$0xff]
  %v2475 = vld [vmem:[%s4 + $0x938] sm:$0xff]
  %v2476 = vld [vmem:[%s4 + $0x940] sm:$0xff]
  %v2477 = vld [vmem:[%s4 + $0x948] sm:$0xff]
  %v2478 = vld [vmem:[%s4 + $0x950] sm:$0xff]
  %v2479 = vld [vmem:[%s4 + $0x958] sm:$0xff]
  %v2480 = vld [vmem:[%s4 + $0x960] sm:$0xff]
  %v2481 = vld [vmem:[%s4 + $0x968] sm:$0xff]
  %v2482 = vld [vmem:[%s4 + $0x970] sm:$0xff]
  %v2483 = vld [vmem:[%s4 + $0x978] sm:$0xff]
  %v2484 = vld [vmem:[%s4 + $0x980] sm:$0xff]
  %v2485 = vld [vmem:[%s4 + $0x988] sm:$0xff]
  %v2486 = vld [vmem:[%s4 + $0x990] sm:$0xff]
  %v2487 = vld [vmem:[%s4 + $0x998] sm:$0xff]
  %v2488 = vld [vmem:[%s4 + $0x9a0] sm:$0xff]
  %v2489 = vld [vmem:[%s4 + $0x9a8] sm:$0xff]
  %v2490 = vld [vmem:[%s4 + $0x9b0] sm:$0xff]
  %v2491 = vld [vmem:[%s4 + $0x9b8] sm:$0xff]
  %v2492 = vld [vmem:[%s4 + $0x9c0] sm:$0xff]
  %v2493 = vld [vmem:[%s4 + $0x9c8] sm:$0xff]
  %v2494 = vld [vmem:[%s4 + $0x9d0] sm:$0xff]
  %v2495 = vld [vmem:[%s4 + $0x9d8] sm:$0xff]
  %v2496 = vld [vmem:[%s4 + $0x9e0] sm:$0xff]
  %v2497 = vld [vmem:[%s4 + $0x9e8] sm:$0xff]
  %v2498 = vld [vmem:[%s4 + $0x9f0] sm:$0xff]
  %v2499 = vld [vmem:[%s4 + $0x9f8] sm:$0xff]
  %v2500 = vld [vmem:[%s4 + $0xa00] sm:$0xff]
  %v2501 = vld [vmem:[%s4 + $0xa08] sm:$0xff]
  %v2502 = vld [vmem:[%s4 + $0xa10] sm:$0xff]
  %v2503 = vld [vmem:[%s4 + $0xa18] sm:$0xff]
  %v2504 = vld [vmem:[%s4 + $0xa20] sm:$0xff]
  %v2505 = vld [vmem:[%s4 + $0xa28] sm:$0xff]
  %v2506 = vld [vmem:[%s4 + $0xa30] sm:$0xff]
  %v2507 = vld [vmem:[%s4 + $0xa38] sm:$0xff]
  %v2508 = vld [vmem:[%s4 + $0xa40] sm:$0xff]
  %v2509 = vld [vmem:[%s4 + $0xa48] sm:$0xff]
  %v2510 = vld [vmem:[%s4 + $0xa50] sm:$0xff]
  %v2511 = vld [vmem:[%s4 + $0xa58] sm:$0xff]
  %v2512 = vld [vmem:[%s4 + $0xa60] sm:$0xff]
  %v2513 = vld [vmem:[%s4 + $0xa68] sm:$0xff]
  %v2514 = vld [vmem:[%s4 + $0xa70] sm:$0xff]
  %v2515 = vld [vmem:[%s4 + $0xa78] sm:$0xff]
  %v2516 = vld [vmem:[%s4 + $0xa80] sm:$0xff]
  %v2517 = vld [vmem:[%s4 + $0xa88] sm:$0xff]
  %v2518 = vld [vmem:[%s4 + $0xa90] sm:$0xff]
  %v2519 = vld [vmem:[%s4 + $0xa98] sm:$0xff]
  %v2520 = vld [vmem:[%s4 + $0xaa0] sm:$0xff]
  %v2521 = vld [vmem:[%s4 + $0xaa8] sm:$0xff]
  %v2522 = vld [vmem:[%s4 + $0xab0] sm:$0xff]
  %v2523 = vld [vmem:[%s4 + $0xab8] sm:$0xff]
  %v2524 = vld [vmem:[%s4 + $0xac0] sm:$0xff]
  %v2525 = vld [vmem:[%s4 + $0xac8] sm:$0xff]
  %v2526 = vld [vmem:[%s4 + $0xad0] sm:$0xff]
  %v2527 = vld [vmem:[%s4 + $0xad8] sm:$0xff]
  %v2528 = vld [vmem:[%s4 + $0xae0] sm:$0xff]
  %v2529 = vld [vmem:[%s4 + $0xae8] sm:$0xff]
  %v2530 = vld [vmem:[%s4 + $0xaf0] sm:$0xff]
  %v2531 = vld [vmem:[%s4 + $0xaf8] sm:$0xff]
  %v2532 = vld [vmem:[%s4 + $0xb00] sm:$0xff]
  %v2533 = vld [vmem:[%s4 + $0xb08] sm:$0xff]
  %v2534 = vld [vmem:[%s4 + $0xb10] sm:$0xff]
  %v2535 = vld [vmem:[%s4 + $0xb18] sm:$0xff]
  %v2536 = vld [vmem:[%s4 + $0xb20] sm:$0xff]
  %v2537 = vld [vmem:[%s4 + $0xb28] sm:$0xff]
  %v2538 = vld [vmem:[%s4 + $0xb30] sm:$0xff]
  %v2539 = vld [vmem:[%s4 + $0xb38] sm:$0xff]
  %v2540 = vld [vmem:[%s4 + $0xb40] sm:$0xff]
  %v2541 = vld [vmem:[%s4 + $0xb48] sm:$0xff]
  %v2542 = vld [vmem:[%s4 + $0xb50] sm:$0xff]
  %v2543 = vld [vmem:[%s4 + $0xb58] sm:$0xff]
  %v2544 = vld [vmem:[%s4 + $0xb60] sm:$0xff]
  %v2545 = vld [vmem:[%s4 + $0xb68] sm:$0xff]
  %v2546 = vld [vmem:[%s4 + $0xb70] sm:$0xff]
  %v2547 = vld [vmem:[%s4 + $0xb78] sm:$0xff]
  %v2548 = vld [vmem:[%s4 + $0xb80] sm:$0xff]
  %v2549 = vld [vmem:[%s4 + $0xb88] sm:$0xff]
  %v2550 = vld [vmem:[%s4 + $0xb90] sm:$0xff]
  %v2551 = vld [vmem:[%s4 + $0xb98] sm:$0xff]
  %v2552 = vld [vmem:[%s4 + $0xba0] sm:$0xff]
  %v2553 = vld [vmem:[%s4 + $0xba8] sm:$0xff]
  %v2554 = vld [vmem:[%s4 + $0xbb0] sm:$0xff]
  %v2555 = vld [vmem:[%s4 + $0xbb8] sm:$0xff]
  %v2556 = vld [vmem:[%s4 + $0xbc0] sm:$0xff]
  %v2557 = vld [vmem:[%s4 + $0xbc8] sm:$0xff]
  %v2558 = vld [vmem:[%s4 + $0xbd0] sm:$0xff]
  %v2559 = vld [vmem:[%s4 + $0xbd8] sm:$0xff]
  %v2560 = vld [vmem:[%s4 + $0xbe0] sm:$0xff]
  %v2561 = vld [vmem:[%s4 + $0xbe8] sm:$0xff]
  %v2562 = vld [vmem:[%s4 + $0xbf0] sm:$0xff]
  %v2563 = vld [vmem:[%s4 + $0xbf8] sm:$0xff]
  %v2564 = vld [vmem:[%s4 + $0xc00] sm:$0xff]
  %v2565 = vld [vmem:[%s4 + $0xc08] sm:$0xff]
  %v2566 = vld [vmem:[%s4 + $0xc10] sm:$0xff]
  %v2567 = vld [vmem:[%s4 + $0xc18] sm:$0xff]
  %v2568 = vld [vmem:[%s4 + $0xc20] sm:$0xff]
  %v2569 = vld [vmem:[%s4 + $0xc28] sm:$0xff]
  %v2570 = vld [vmem:[%s4 + $0xc30] sm:$0xff]
  %v2571 = vld [vmem:[%s4 + $0xc38] sm:$0xff]
  %v2572 = vld [vmem:[%s4 + $0xc40] sm:$0xff]
  %v2573 = vld [vmem:[%s4 + $0xc48] sm:$0xff]
  %v2574 = vld [vmem:[%s4 + $0xc50] sm:$0xff]
  %v2575 = vld [vmem:[%s4 + $0xc58] sm:$0xff]
  %v2576 = vld [vmem:[%s4 + $0xc60] sm:$0xff]
  %v2577 = vld [vmem:[%s4 + $0xc68] sm:$0xff]
  %v2578 = vld [vmem:[%s4 + $0xc70] sm:$0xff]
  %v2579 = vld [vmem:[%s4 + $0xc78] sm:$0xff]
  %v2580 = vld [vmem:[%s4 + $0xc80] sm:$0xff]
  %v2581 = vld [vmem:[%s4 + $0xc88] sm:$0xff]
  %v2582 = vld [vmem:[%s4 + $0xc90] sm:$0xff]
  %v2583 = vld [vmem:[%s4 + $0xc98] sm:$0xff]
  %v2584 = vld [vmem:[%s4 + $0xca0] sm:$0xff]
  %v2585 = vld [vmem:[%s4 + $0xca8] sm:$0xff]
  %v2586 = vld [vmem:[%s4 + $0xcb0] sm:$0xff]
  %v2587 = vld [vmem:[%s4 + $0xcb8] sm:$0xff]
  %v2588 = vld [vmem:[%s4 + $0xcc0] sm:$0xff]
  %v2589 = vld [vmem:[%s4 + $0xcc8] sm:$0xff]
  %v2590 = vld [vmem:[%s4 + $0xcd0] sm:$0xff]
  %v2591 = vld [vmem:[%s4 + $0xcd8] sm:$0xff]
  %v2592 = vld [vmem:[%s4 + $0xce0] sm:$0xff]
  %v2593 = vld [vmem:[%s4 + $0xce8] sm:$0xff]
  %v2594 = vld [vmem:[%s4 + $0xcf0] sm:$0xff]
  %v2595 = vld [vmem:[%s4 + $0xcf8] sm:$0xff]
  %v2596 = vld [vmem:[%s4 + $0xd00] sm:$0xff]
  %v2597 = vld [vmem:[%s4 + $0xd08] sm:$0xff]
  %v2598 = vld [vmem:[%s4 + $0xd10] sm:$0xff]
  %v2599 = vld [vmem:[%s4 + $0xd18] sm:$0xff]
  %v2600 = vld [vmem:[%s4 + $0xd20] sm:$0xff]
  %v2601 = vld [vmem:[%s4 + $0xd28] sm:$0xff]
  %v2602 = vld [vmem:[%s4 + $0xd30] sm:$0xff]
  %v2603 = vld [vmem:[%s4 + $0xd38] sm:$0xff]
  %v2604 = vld [vmem:[%s4 + $0xd40] sm:$0xff]
  %v2605 = vld [vmem:[%s4 + $0xd48] sm:$0xff]
  %v2606 = vld [vmem:[%s4 + $0xd50] sm:$0xff]
  %v2607 = vld [vmem:[%s4 + $0xd58] sm:$0xff]
  %v2608 = vld [vmem:[%s4 + $0xd60] sm:$0xff]
  %v2609 = vld [vmem:[%s4 + $0xd68] sm:$0xff]
  %v2610 = vld [vmem:[%s4 + $0xd70] sm:$0xff]
  %v2611 = vld [vmem:[%s4 + $0xd78] sm:$0xff]
  %v2612 = vld [vmem:[%s4 + $0xd80] sm:$0xff]
  %v2613 = vld [vmem:[%s4 + $0xd88] sm:$0xff]
  %v2614 = vld [vmem:[%s4 + $0xd90] sm:$0xff]
  %v2615 = vld [vmem:[%s4 + $0xd98] sm:$0xff]
  %v2616 = vld [vmem:[%s4 + $0xda0] sm:$0xff]
  %v2617 = vld [vmem:[%s4 + $0xda8] sm:$0xff]
  %v2618 = vld [vmem:[%s4 + $0xdb0] sm:$0xff]
  %v2619 = vld [vmem:[%s4 + $0xdb8] sm:$0xff]
  %v2620 = vld [vmem:[%s4 + $0xdc0] sm:$0xff]
  %v2621 = vld [vmem:[%s4 + $0xdc8] sm:$0xff]
  %v2622 = vld [vmem:[%s4 + $0xdd0] sm:$0xff]
  %v2623 = vld [vmem:[%s4 + $0xdd8] sm:$0xff]
  %v2624 = vld [vmem:[%s4 + $0xde0] sm:$0xff]
  %v2625 = vld [vmem:[%s4 + $0xde8] sm:$0xff]
  %v2626 = vld [vmem:[%s4 + $0xdf0] sm:$0xff]
  %v2627 = vld [vmem:[%s4 + $0xdf8] sm:$0xff]
  %v2628 = vld [vmem:[%s4 + $0xe00] sm:$0xff]
  %v2629 = vld [vmem:[%s4 + $0xe08] sm:$0xff]
  %v2630 = vld [vmem:[%s4 + $0xe10] sm:$0xff]
  %v2631 = vld [vmem:[%s4 + $0xe18] sm:$0xff]
  %v2632 = vld [vmem:[%s4 + $0xe20] sm:$0xff]
  %v2633 = vld [vmem:[%s4 + $0xe28] sm:$0xff]
  %v2634 = vld [vmem:[%s4 + $0xe30] sm:$0xff]
  %v2635 = vld [vmem:[%s4 + $0xe38] sm:$0xff]
  %v2636 = vld [vmem:[%s4 + $0xe40] sm:$0xff]
  %v2637 = vld [vmem:[%s4 + $0xe48] sm:$0xff]
  %v2638 = vld [vmem:[%s4 + $0xe50] sm:$0xff]
  %v2639 = vld [vmem:[%s4 + $0xe58] sm:$0xff]
  %v2640 = vld [vmem:[%s4 + $0xe60] sm:$0xff]
  %v2641 = vld [vmem:[%s4 + $0xe68] sm:$0xff]
  %v2642 = vld [vmem:[%s4 + $0xe70] sm:$0xff]
  %v2643 = vld [vmem:[%s4 + $0xe78] sm:$0xff]
  %v2644 = vld [vmem:[%s4 + $0xe80] sm:$0xff]
  %v2645 = vld [vmem:[%s4 + $0xe88] sm:$0xff]
  %v2646 = vld [vmem:[%s4 + $0xe90] sm:$0xff]
  %v2647 = vld [vmem:[%s4 + $0xe98] sm:$0xff]
  %v2648 = vld [vmem:[%s4 + $0xea0] sm:$0xff]
  %v2649 = vld [vmem:[%s4 + $0xea8] sm:$0xff]
  %v2650 = vld [vmem:[%s4 + $0xeb0] sm:$0xff]
  %v2651 = vld [vmem:[%s4 + $0xeb8] sm:$0xff]
  %v2652 = vld [vmem:[%s4 + $0xec0] sm:$0xff]
  %v2653 = vld [vmem:[%s4 + $0xec8] sm:$0xff]
  %v2654 = vld [vmem:[%s4 + $0xed0] sm:$0xff]
  %v2655 = vld [vmem:[%s4 + $0xed8] sm:$0xff]
  %v2656 = vld [vmem:[%s4 + $0xee0] sm:$0xff]
  %v2657 = vld [vmem:[%s4 + $0xee8] sm:$0xff]
  %v2658 = vld [vmem:[%s4 + $0xef0] sm:$0xff]
  %v2659 = vld [vmem:[%s4 + $0xef8] sm:$0xff]
  %v2660 = vld [vmem:[%s4 + $0xf00] sm:$0xff]
  %v2661 = vld [vmem:[%s4 + $0xf08] sm:$0xff]
  %v2662 = vld [vmem:[%s4 + $0xf10] sm:$0xff]
  %v2663 = vld [vmem:[%s4 + $0xf18] sm:$0xff]
  %v2664 = vld [vmem:[%s4 + $0xf20] sm:$0xff]
  %v2665 = vld [vmem:[%s4 + $0xf28] sm:$0xff]
  %v2666 = vld [vmem:[%s4 + $0xf30] sm:$0xff]
  %v2667 = vld [vmem:[%s4 + $0xf38] sm:$0xff]
  %v2668 = vld [vmem:[%s4 + $0xf40] sm:$0xff]
  %v2669 = vld [vmem:[%s4 + $0xf48] sm:$0xff]
  %v2670 = vld [vmem:[%s4 + $0xf50] sm:$0xff]
  %v2671 = vld [vmem:[%s4 + $0xf58] sm:$0xff]
  %v2672 = vld [vmem:[%s4 + $0xf60] sm:$0xff]
  %v2673 = vld [vmem:[%s4 + $0xf68] sm:$0xff]
  %v2674 = vld [vmem:[%s4 + $0xf70] sm:$0xff]
  %v2675 = vld [vmem:[%s4 + $0xf78] sm:$0xff]
  %v2676 = vld [vmem:[%s4 + $0xf80] sm:$0xff]
  %v2677 = vld [vmem:[%s4 + $0xf88] sm:$0xff]
  %v2678 = vld [vmem:[%s4 + $0xf90] sm:$0xff]
  %v2679 = vld [vmem:[%s4 + $0xf98] sm:$0xff]
  %v2680 = vld [vmem:[%s4 + $0xfa0] sm:$0xff]
  %v2681 = vld [vmem:[%s4 + $0xfa8] sm:$0xff]
  %v2682 = vld [vmem:[%s4 + $0xfb0] sm:$0xff]
  %v2683 = vld [vmem:[%s4 + $0xfb8] sm:$0xff]
  %v2684 = vld [vmem:[%s4 + $0xfc0] sm:$0xff]
  %v2685 = vld [vmem:[%s4 + $0xfc8] sm:$0xff]
  %v2686 = vld [vmem:[%s4 + $0xfd0] sm:$0xff]
  %v2687 = vld [vmem:[%s4 + $0xfd8] sm:$0xff]
  %v2688 = vld [vmem:[%s4 + $0xfe0] sm:$0xff]
  %v2689 = vld [vmem:[%s4 + $0xfe8] sm:$0xff]
  %v2690 = vld [vmem:[%s4 + $0xff0] sm:$0xff]
  %v2691 = vld [vmem:[%s4 + $0xff8] sm:$0xff]
  %v2692 = vld [vmem:[#allocation2 + $0x40] sm:$0x11]
  %v2693 = vld [vmem:[#allocation2 + $0x48] sm:$0x11]
  %v2694 = vld [vmem:[#allocation2 + $0x50] sm:$0x11]
  %v2695 = vld [vmem:[#allocation2 + $0x58] sm:$0x11]
  %v2696 = vld [vmem:[#allocation2 + $0xa0] sm:$0x11]
  %v2697 = vld [vmem:[#allocation2 + $0xa8] sm:$0x11]
  %v2698 = vld [vmem:[#allocation2 + $0xb0] sm:$0x11]
  %v2699 = vld [vmem:[#allocation2 + $0xb8] sm:$0x11]
  %v2701 = vshrl.u32 %v2164, 16
  %v2703 = vrot.slane %v2701, 4
  %v2704 = vshll.u32 %v2164, 16
  %v2706 = vrot.slane %v2704, 5
  %v2707 = vor.u32 %v2703, %v2706
  %v2708 = vrot.slane %v2707, 4
  %v2710 = vshll.u32 %v2168, 16
  %v2712 = vrot.slane %v2710, 5
  %v2713 = vsel %vm67, %v2708, %v2712
  %v2715 = vshrl.u32 %v2165, 16
  %v2717 = vrot.slane %v2715, 4
  %v2718 = vshll.u32 %v2165, 16
  %v2720 = vrot.slane %v2718, 5
  %v2721 = vor.u32 %v2717, %v2720
  %v2722 = vrot.slane %v2721, 4
  %v2724 = vshll.u32 %v2169, 16
  %v2726 = vrot.slane %v2724, 5
  %v2727 = vsel %vm67, %v2722, %v2726
  %v2729 = vshrl.u32 %v2166, 16
  %v2731 = vrot.slane %v2729, 4
  %v2732 = vshll.u32 %v2166, 16
  %v2734 = vrot.slane %v2732, 5
  %v2735 = vor.u32 %v2731, %v2734
  %v2736 = vrot.slane %v2735, 4
  %v2738 = vshll.u32 %v2170, 16
  %v2740 = vrot.slane %v2738, 5
  %v2741 = vsel %vm67, %v2736, %v2740
  %v2743 = vshrl.u32 %v2167, 16
  %v2745 = vrot.slane %v2743, 4
  %v2746 = vshll.u32 %v2167, 16
  %v2748 = vrot.slane %v2746, 5
  %v2749 = vor.u32 %v2745, %v2748
  %v2750 = vrot.slane %v2749, 4
  %v2752 = vshll.u32 %v2171, 16
  %v2754 = vrot.slane %v2752, 5
  %v2755 = vsel %vm67, %v2750, %v2754
  %v2756 = vshrl.u32 %v2168, 16
  %v2758 = vrot.slane %v2756, 4
  %v2759 = vor.u32 %v2758, %v2712
  %v2760 = vrot.slane %v2759, 4
  %v2762 = vshll.u32 %v2692, 16
  %v2764 = vrot.slane %v2762, 5
  %v2765 = vsel %vm67, %v2760, %v2764
  %v2766 = vshrl.u32 %v2169, 16
  %v2768 = vrot.slane %v2766, 4
  %v2769 = vor.u32 %v2768, %v2726
  %v2770 = vrot.slane %v2769, 4
  %v2772 = vshll.u32 %v2693, 16
  %v2774 = vrot.slane %v2772, 5
  %v2775 = vsel %vm67, %v2770, %v2774
  %v2776 = vshrl.u32 %v2170, 16
  %v2778 = vrot.slane %v2776, 4
  %v2779 = vor.u32 %v2778, %v2740
  %v2780 = vrot.slane %v2779, 4
  %v2782 = vshll.u32 %v2694, 16
  %v2784 = vrot.slane %v2782, 5
  %v2785 = vsel %vm67, %v2780, %v2784
  %v2786 = vshrl.u32 %v2171, 16
  %v2788 = vrot.slane %v2786, 4
  %v2789 = vor.u32 %v2788, %v2754
  %v2790 = vrot.slane %v2789, 4
  %v2792 = vshll.u32 %v2695, 16
  %v2794 = vrot.slane %v2792, 5
  %v2795 = vsel %vm67, %v2790, %v2794
  %v2797 = vshrl.u32 %v2172, 16
  %v2799 = vrot.slane %v2797, 4
  %v2800 = vshll.u32 %v2172, 16
  %v2802 = vrot.slane %v2800, 5
  %v2803 = vor.u32 %v2799, %v2802
  %v2804 = vrot.slane %v2803, 4
  %v2806 = vshll.u32 %v2176, 16
  %v2808 = vrot.slane %v2806, 5
  %v2809 = vsel %vm67, %v2804, %v2808
  %v2811 = vshrl.u32 %v2173, 16
  %v2813 = vrot.slane %v2811, 4
  %v2814 = vshll.u32 %v2173, 16
  %v2816 = vrot.slane %v2814, 5
  %v2817 = vor.u32 %v2813, %v2816
  %v2818 = vrot.slane %v2817, 4
  %v2820 = vshll.u32 %v2177, 16
  %v2822 = vrot.slane %v2820, 5
  %v2823 = vsel %vm67, %v2818, %v2822
  %v2825 = vshrl.u32 %v2174, 16
  %v2827 = vrot.slane %v2825, 4
  %v2828 = vshll.u32 %v2174, 16
  %v2830 = vrot.slane %v2828, 5
  %v2831 = vor.u32 %v2827, %v2830
  %v2832 = vrot.slane %v2831, 4
  %v2834 = vshll.u32 %v2178, 16
  %v2836 = vrot.slane %v2834, 5
  %v2837 = vsel %vm67, %v2832, %v2836
  %v2839 = vshrl.u32 %v2175, 16
  %v2841 = vrot.slane %v2839, 4
  %v2842 = vshll.u32 %v2175, 16
  %v2844 = vrot.slane %v2842, 5
  %v2845 = vor.u32 %v2841, %v2844
  %v2846 = vrot.slane %v2845, 4
  %v2848 = vshll.u32 %v2179, 16
  %v2850 = vrot.slane %v2848, 5
  %v2851 = vsel %vm67, %v2846, %v2850
  %v2852 = vshrl.u32 %v2176, 16
  %v2854 = vrot.slane %v2852, 4
  %v2855 = vor.u32 %v2854, %v2808
  %v2856 = vrot.slane %v2855, 4
  %v2858 = vshll.u32 %v2696, 16
  %v2860 = vrot.slane %v2858, 5
  %v2861 = vsel %vm67, %v2856, %v2860
  %v2862 = vshrl.u32 %v2177, 16
  %v2864 = vrot.slane %v2862, 4
  %v2865 = vor.u32 %v2864, %v2822
  %v2866 = vrot.slane %v2865, 4
  %v2868 = vshll.u32 %v2697, 16
  %v2870 = vrot.slane %v2868, 5
  %v2871 = vsel %vm67, %v2866, %v2870
  %v2872 = vshrl.u32 %v2178, 16
  %v2874 = vrot.slane %v2872, 4
  %v2875 = vor.u32 %v2874, %v2836
  %v2876 = vrot.slane %v2875, 4
  %v2878 = vshll.u32 %v2698, 16
  %v2880 = vrot.slane %v2878, 5
  %v2881 = vsel %vm67, %v2876, %v2880
  %v2882 = vshrl.u32 %v2179, 16
  %v2884 = vrot.slane %v2882, 4
  %v2885 = vor.u32 %v2884, %v2850
  %v2886 = vrot.slane %v2885, 4
  %v2888 = vshll.u32 %v2699, 16
  %v2890 = vrot.slane %v2888, 5
  %v2891 = vsel %vm67, %v2886, %v2890
  %s2892 = scalar_lea.vmem %s4, 4096
  %v2893 = vld [vmem:[%s2892] sm:$0xff]
  %v2894 = vld [vmem:[%s2892 + $0x8] sm:$0xff]
  %v2895 = vld [vmem:[%s2892 + $0x10] sm:$0xff]
  %v2896 = vld [vmem:[%s2892 + $0x18] sm:$0xff]
  %v2897 = vld [vmem:[%s2892 + $0x20] sm:$0xff]
  %v2898 = vld [vmem:[%s2892 + $0x28] sm:$0xff]
  %v2899 = vld [vmem:[%s2892 + $0x30] sm:$0xff]
  %v2900 = vld [vmem:[%s2892 + $0x38] sm:$0xff]
  %v2901 = vld [vmem:[%s2892 + $0x40] sm:$0xff]
  %v2902 = vld [vmem:[%s2892 + $0x48] sm:$0xff]
  %v2903 = vld [vmem:[%s2892 + $0x50] sm:$0xff]
  %v2904 = vld [vmem:[%s2892 + $0x58] sm:$0xff]
  %v2905 = vld [vmem:[%s2892 + $0x60] sm:$0xff]
  %v2906 = vld [vmem:[%s2892 + $0x68] sm:$0xff]
  %v2907 = vld [vmem:[%s2892 + $0x70] sm:$0xff]
  %v2908 = vld [vmem:[%s2892 + $0x78] sm:$0xff]
  %v2909 = vld [vmem:[%s2892 + $0x80] sm:$0xff]
  %v2910 = vld [vmem:[%s2892 + $0x88] sm:$0xff]
  %v2911 = vld [vmem:[%s2892 + $0x90] sm:$0xff]
  %v2912 = vld [vmem:[%s2892 + $0x98] sm:$0xff]
  %v2913 = vld [vmem:[%s2892 + $0xa0] sm:$0xff]
  %v2914 = vld [vmem:[%s2892 + $0xa8] sm:$0xff]
  %v2915 = vld [vmem:[%s2892 + $0xb0] sm:$0xff]
  %v2916 = vld [vmem:[%s2892 + $0xb8] sm:$0xff]
  %v2917 = vld [vmem:[%s2892 + $0xc0] sm:$0xff]
  %v2918 = vld [vmem:[%s2892 + $0xc8] sm:$0xff]
  %v2919 = vld [vmem:[%s2892 + $0xd0] sm:$0xff]
  %v2920 = vld [vmem:[%s2892 + $0xd8] sm:$0xff]
  %v2921 = vld [vmem:[%s2892 + $0xe0] sm:$0xff]
  %v2922 = vld [vmem:[%s2892 + $0xe8] sm:$0xff]
  %v2923 = vld [vmem:[%s2892 + $0xf0] sm:$0xff]
  %v2924 = vld [vmem:[%s2892 + $0xf8] sm:$0xff]
  %v2925 = vld [vmem:[%s2892 + $0x100] sm:$0xff]
  %v2926 = vld [vmem:[%s2892 + $0x108] sm:$0xff]
  %v2927 = vld [vmem:[%s2892 + $0x110] sm:$0xff]
  %v2928 = vld [vmem:[%s2892 + $0x118] sm:$0xff]
  %v2929 = vld [vmem:[%s2892 + $0x120] sm:$0xff]
  %v2930 = vld [vmem:[%s2892 + $0x128] sm:$0xff]
  %v2931 = vld [vmem:[%s2892 + $0x130] sm:$0xff]
  %v2932 = vld [vmem:[%s2892 + $0x138] sm:$0xff]
  %v2933 = vld [vmem:[%s2892 + $0x140] sm:$0xff]
  %v2934 = vld [vmem:[%s2892 + $0x148] sm:$0xff]
  %v2935 = vld [vmem:[%s2892 + $0x150] sm:$0xff]
  %v2936 = vld [vmem:[%s2892 + $0x158] sm:$0xff]
  %v2937 = vld [vmem:[%s2892 + $0x160] sm:$0xff]
  %v2938 = vld [vmem:[%s2892 + $0x168] sm:$0xff]
  %v2939 = vld [vmem:[%s2892 + $0x170] sm:$0xff]
  %v2940 = vld [vmem:[%s2892 + $0x178] sm:$0xff]
  %v2941 = vld [vmem:[%s2892 + $0x180] sm:$0xff]
  %v2942 = vld [vmem:[%s2892 + $0x188] sm:$0xff]
  %v2943 = vld [vmem:[%s2892 + $0x190] sm:$0xff]
  %v2944 = vld [vmem:[%s2892 + $0x198] sm:$0xff]
  %v2945 = vld [vmem:[%s2892 + $0x1a0] sm:$0xff]
  %v2946 = vld [vmem:[%s2892 + $0x1a8] sm:$0xff]
  %v2947 = vld [vmem:[%s2892 + $0x1b0] sm:$0xff]
  %v2948 = vld [vmem:[%s2892 + $0x1b8] sm:$0xff]
  %v2949 = vld [vmem:[%s2892 + $0x1c0] sm:$0xff]
  %v2950 = vld [vmem:[%s2892 + $0x1c8] sm:$0xff]
  %v2951 = vld [vmem:[%s2892 + $0x1d0] sm:$0xff]
  %v2952 = vld [vmem:[%s2892 + $0x1d8] sm:$0xff]
  %v2953 = vld [vmem:[%s2892 + $0x1e0] sm:$0xff]
  %v2954 = vld [vmem:[%s2892 + $0x1e8] sm:$0xff]
  %v2955 = vld [vmem:[%s2892 + $0x1f0] sm:$0xff]
  %v2956 = vld [vmem:[%s2892 + $0x1f8] sm:$0xff]
  %v2957 = vld [vmem:[%s2892 + $0x200] sm:$0xff]
  %v2958 = vld [vmem:[%s2892 + $0x208] sm:$0xff]
  %v2959 = vld [vmem:[%s2892 + $0x210] sm:$0xff]
  %v2960 = vld [vmem:[%s2892 + $0x218] sm:$0xff]
  %v2961 = vld [vmem:[%s2892 + $0x220] sm:$0xff]
  %v2962 = vld [vmem:[%s2892 + $0x228] sm:$0xff]
  %v2963 = vld [vmem:[%s2892 + $0x230] sm:$0xff]
  %v2964 = vld [vmem:[%s2892 + $0x238] sm:$0xff]
  %v2965 = vld [vmem:[%s2892 + $0x240] sm:$0xff]
  %v2966 = vld [vmem:[%s2892 + $0x248] sm:$0xff]
  %v2967 = vld [vmem:[%s2892 + $0x250] sm:$0xff]
  %v2968 = vld [vmem:[%s2892 + $0x258] sm:$0xff]
  %v2969 = vld [vmem:[%s2892 + $0x260] sm:$0xff]
  %v2970 = vld [vmem:[%s2892 + $0x268] sm:$0xff]
  %v2971 = vld [vmem:[%s2892 + $0x270] sm:$0xff]
  %v2972 = vld [vmem:[%s2892 + $0x278] sm:$0xff]
  %v2973 = vld [vmem:[%s2892 + $0x280] sm:$0xff]
  %v2974 = vld [vmem:[%s2892 + $0x288] sm:$0xff]
  %v2975 = vld [vmem:[%s2892 + $0x290] sm:$0xff]
  %v2976 = vld [vmem:[%s2892 + $0x298] sm:$0xff]
  %v2977 = vld [vmem:[%s2892 + $0x2a0] sm:$0xff]
  %v2978 = vld [vmem:[%s2892 + $0x2a8] sm:$0xff]
  %v2979 = vld [vmem:[%s2892 + $0x2b0] sm:$0xff]
  %v2980 = vld [vmem:[%s2892 + $0x2b8] sm:$0xff]
  %v2981 = vld [vmem:[%s2892 + $0x2c0] sm:$0xff]
  %v2982 = vld [vmem:[%s2892 + $0x2c8] sm:$0xff]
  %v2983 = vld [vmem:[%s2892 + $0x2d0] sm:$0xff]
  %v2984 = vld [vmem:[%s2892 + $0x2d8] sm:$0xff]
  %v2985 = vld [vmem:[%s2892 + $0x2e0] sm:$0xff]
  %v2986 = vld [vmem:[%s2892 + $0x2e8] sm:$0xff]
  %v2987 = vld [vmem:[%s2892 + $0x2f0] sm:$0xff]
  %v2988 = vld [vmem:[%s2892 + $0x2f8] sm:$0xff]
  %v2989 = vld [vmem:[%s2892 + $0x300] sm:$0xff]
  %v2990 = vld [vmem:[%s2892 + $0x308] sm:$0xff]
  %v2991 = vld [vmem:[%s2892 + $0x310] sm:$0xff]
  %v2992 = vld [vmem:[%s2892 + $0x318] sm:$0xff]
  %v2993 = vld [vmem:[%s2892 + $0x320] sm:$0xff]
  %v2994 = vld [vmem:[%s2892 + $0x328] sm:$0xff]
  %v2995 = vld [vmem:[%s2892 + $0x330] sm:$0xff]
  %v2996 = vld [vmem:[%s2892 + $0x338] sm:$0xff]
  %v2997 = vld [vmem:[%s2892 + $0x340] sm:$0xff]
  %v2998 = vld [vmem:[%s2892 + $0x348] sm:$0xff]
  %v2999 = vld [vmem:[%s2892 + $0x350] sm:$0xff]
  %v3000 = vld [vmem:[%s2892 + $0x358] sm:$0xff]
  %v3001 = vld [vmem:[%s2892 + $0x360] sm:$0xff]
  %v3002 = vld [vmem:[%s2892 + $0x368] sm:$0xff]
  %v3003 = vld [vmem:[%s2892 + $0x370] sm:$0xff]
  %v3004 = vld [vmem:[%s2892 + $0x378] sm:$0xff]
  %v3005 = vld [vmem:[%s2892 + $0x380] sm:$0xff]
  %v3006 = vld [vmem:[%s2892 + $0x388] sm:$0xff]
  %v3007 = vld [vmem:[%s2892 + $0x390] sm:$0xff]
  %v3008 = vld [vmem:[%s2892 + $0x398] sm:$0xff]
  %v3009 = vld [vmem:[%s2892 + $0x3a0] sm:$0xff]
  %v3010 = vld [vmem:[%s2892 + $0x3a8] sm:$0xff]
  %v3011 = vld [vmem:[%s2892 + $0x3b0] sm:$0xff]
  %v3012 = vld [vmem:[%s2892 + $0x3b8] sm:$0xff]
  %v3013 = vld [vmem:[%s2892 + $0x3c0] sm:$0xff]
  %v3014 = vld [vmem:[%s2892 + $0x3c8] sm:$0xff]
  %v3015 = vld [vmem:[%s2892 + $0x3d0] sm:$0xff]
  %v3016 = vld [vmem:[%s2892 + $0x3d8] sm:$0xff]
  %v3017 = vld [vmem:[%s2892 + $0x3e0] sm:$0xff]
  %v3018 = vld [vmem:[%s2892 + $0x3e8] sm:$0xff]
  %v3019 = vld [vmem:[%s2892 + $0x3f0] sm:$0xff]
  %v3020 = vld [vmem:[%s2892 + $0x3f8] sm:$0xff]
  %v3021 = vld [vmem:[%s2892 + $0x400] sm:$0xff]
  %v3022 = vld [vmem:[%s2892 + $0x408] sm:$0xff]
  %v3023 = vld [vmem:[%s2892 + $0x410] sm:$0xff]
  %v3024 = vld [vmem:[%s2892 + $0x418] sm:$0xff]
  %v3025 = vld [vmem:[%s2892 + $0x420] sm:$0xff]
  %v3026 = vld [vmem:[%s2892 + $0x428] sm:$0xff]
  %v3027 = vld [vmem:[%s2892 + $0x430] sm:$0xff]
  %v3028 = vld [vmem:[%s2892 + $0x438] sm:$0xff]
  %v3029 = vld [vmem:[%s2892 + $0x440] sm:$0xff]
  %v3030 = vld [vmem:[%s2892 + $0x448] sm:$0xff]
  %v3031 = vld [vmem:[%s2892 + $0x450] sm:$0xff]
  %v3032 = vld [vmem:[%s2892 + $0x458] sm:$0xff]
  %v3033 = vld [vmem:[%s2892 + $0x460] sm:$0xff]
  %v3034 = vld [vmem:[%s2892 + $0x468] sm:$0xff]
  %v3035 = vld [vmem:[%s2892 + $0x470] sm:$0xff]
  %v3036 = vld [vmem:[%s2892 + $0x478] sm:$0xff]
  %v3037 = vld [vmem:[%s2892 + $0x480] sm:$0xff]
  %v3038 = vld [vmem:[%s2892 + $0x488] sm:$0xff]
  %v3039 = vld [vmem:[%s2892 + $0x490] sm:$0xff]
  %v3040 = vld [vmem:[%s2892 + $0x498] sm:$0xff]
  %v3041 = vld [vmem:[%s2892 + $0x4a0] sm:$0xff]
  %v3042 = vld [vmem:[%s2892 + $0x4a8] sm:$0xff]
  %v3043 = vld [vmem:[%s2892 + $0x4b0] sm:$0xff]
  %v3044 = vld [vmem:[%s2892 + $0x4b8] sm:$0xff]
  %v3045 = vld [vmem:[%s2892 + $0x4c0] sm:$0xff]
  %v3046 = vld [vmem:[%s2892 + $0x4c8] sm:$0xff]
  %v3047 = vld [vmem:[%s2892 + $0x4d0] sm:$0xff]
  %v3048 = vld [vmem:[%s2892 + $0x4d8] sm:$0xff]
  %v3049 = vld [vmem:[%s2892 + $0x4e0] sm:$0xff]
  %v3050 = vld [vmem:[%s2892 + $0x4e8] sm:$0xff]
  %v3051 = vld [vmem:[%s2892 + $0x4f0] sm:$0xff]
  %v3052 = vld [vmem:[%s2892 + $0x4f8] sm:$0xff]
  %v3053 = vld [vmem:[%s2892 + $0x500] sm:$0xff]
  %v3054 = vld [vmem:[%s2892 + $0x508] sm:$0xff]
  %v3055 = vld [vmem:[%s2892 + $0x510] sm:$0xff]
  %v3056 = vld [vmem:[%s2892 + $0x518] sm:$0xff]
  %v3057 = vld [vmem:[%s2892 + $0x520] sm:$0xff]
  %v3058 = vld [vmem:[%s2892 + $0x528] sm:$0xff]
  %v3059 = vld [vmem:[%s2892 + $0x530] sm:$0xff]
  %v3060 = vld [vmem:[%s2892 + $0x538] sm:$0xff]
  %v3061 = vld [vmem:[%s2892 + $0x540] sm:$0xff]
  %v3062 = vld [vmem:[%s2892 + $0x548] sm:$0xff]
  %v3063 = vld [vmem:[%s2892 + $0x550] sm:$0xff]
  %v3064 = vld [vmem:[%s2892 + $0x558] sm:$0xff]
  %v3065 = vld [vmem:[%s2892 + $0x560] sm:$0xff]
  %v3066 = vld [vmem:[%s2892 + $0x568] sm:$0xff]
  %v3067 = vld [vmem:[%s2892 + $0x570] sm:$0xff]
  %v3068 = vld [vmem:[%s2892 + $0x578] sm:$0xff]
  %v3069 = vld [vmem:[%s2892 + $0x580] sm:$0xff]
  %v3070 = vld [vmem:[%s2892 + $0x588] sm:$0xff]
  %v3071 = vld [vmem:[%s2892 + $0x590] sm:$0xff]
  %v3072 = vld [vmem:[%s2892 + $0x598] sm:$0xff]
  %v3073 = vld [vmem:[%s2892 + $0x5a0] sm:$0xff]
  %v3074 = vld [vmem:[%s2892 + $0x5a8] sm:$0xff]
  %v3075 = vld [vmem:[%s2892 + $0x5b0] sm:$0xff]
  %v3076 = vld [vmem:[%s2892 + $0x5b8] sm:$0xff]
  %v3077 = vld [vmem:[%s2892 + $0x5c0] sm:$0xff]
  %v3078 = vld [vmem:[%s2892 + $0x5c8] sm:$0xff]
  %v3079 = vld [vmem:[%s2892 + $0x5d0] sm:$0xff]
  %v3080 = vld [vmem:[%s2892 + $0x5d8] sm:$0xff]
  %v3081 = vld [vmem:[%s2892 + $0x5e0] sm:$0xff]
  %v3082 = vld [vmem:[%s2892 + $0x5e8] sm:$0xff]
  %v3083 = vld [vmem:[%s2892 + $0x5f0] sm:$0xff]
  %v3084 = vld [vmem:[%s2892 + $0x5f8] sm:$0xff]
  %v3085 = vld [vmem:[%s2892 + $0x600] sm:$0xff]
  %v3086 = vld [vmem:[%s2892 + $0x608] sm:$0xff]
  %v3087 = vld [vmem:[%s2892 + $0x610] sm:$0xff]
  %v3088 = vld [vmem:[%s2892 + $0x618] sm:$0xff]
  %v3089 = vld [vmem:[%s2892 + $0x620] sm:$0xff]
  %v3090 = vld [vmem:[%s2892 + $0x628] sm:$0xff]
  %v3091 = vld [vmem:[%s2892 + $0x630] sm:$0xff]
  %v3092 = vld [vmem:[%s2892 + $0x638] sm:$0xff]
  %v3093 = vld [vmem:[%s2892 + $0x640] sm:$0xff]
  %v3094 = vld [vmem:[%s2892 + $0x648] sm:$0xff]
  %v3095 = vld [vmem:[%s2892 + $0x650] sm:$0xff]
  %v3096 = vld [vmem:[%s2892 + $0x658] sm:$0xff]
  %v3097 = vld [vmem:[%s2892 + $0x660] sm:$0xff]
  %v3098 = vld [vmem:[%s2892 + $0x668] sm:$0xff]
  %v3099 = vld [vmem:[%s2892 + $0x670] sm:$0xff]
  %v3100 = vld [vmem:[%s2892 + $0x678] sm:$0xff]
  %v3101 = vld [vmem:[%s2892 + $0x680] sm:$0xff]
  %v3102 = vld [vmem:[%s2892 + $0x688] sm:$0xff]
  %v3103 = vld [vmem:[%s2892 + $0x690] sm:$0xff]
  %v3104 = vld [vmem:[%s2892 + $0x698] sm:$0xff]
  %v3105 = vld [vmem:[%s2892 + $0x6a0] sm:$0xff]
  %v3106 = vld [vmem:[%s2892 + $0x6a8] sm:$0xff]
  %v3107 = vld [vmem:[%s2892 + $0x6b0] sm:$0xff]
  %v3108 = vld [vmem:[%s2892 + $0x6b8] sm:$0xff]
  %v3109 = vld [vmem:[%s2892 + $0x6c0] sm:$0xff]
  %v3110 = vld [vmem:[%s2892 + $0x6c8] sm:$0xff]
  %v3111 = vld [vmem:[%s2892 + $0x6d0] sm:$0xff]
  %v3112 = vld [vmem:[%s2892 + $0x6d8] sm:$0xff]
  %v3113 = vld [vmem:[%s2892 + $0x6e0] sm:$0xff]
  %v3114 = vld [vmem:[%s2892 + $0x6e8] sm:$0xff]
  %v3115 = vld [vmem:[%s2892 + $0x6f0] sm:$0xff]
  %v3116 = vld [vmem:[%s2892 + $0x6f8] sm:$0xff]
  %v3117 = vld [vmem:[%s2892 + $0x700] sm:$0xff]
  %v3118 = vld [vmem:[%s2892 + $0x708] sm:$0xff]
  %v3119 = vld [vmem:[%s2892 + $0x710] sm:$0xff]
  %v3120 = vld [vmem:[%s2892 + $0x718] sm:$0xff]
  %v3121 = vld [vmem:[%s2892 + $0x720] sm:$0xff]
  %v3122 = vld [vmem:[%s2892 + $0x728] sm:$0xff]
  %v3123 = vld [vmem:[%s2892 + $0x730] sm:$0xff]
  %v3124 = vld [vmem:[%s2892 + $0x738] sm:$0xff]
  %v3125 = vld [vmem:[%s2892 + $0x740] sm:$0xff]
  %v3126 = vld [vmem:[%s2892 + $0x748] sm:$0xff]
  %v3127 = vld [vmem:[%s2892 + $0x750] sm:$0xff]
  %v3128 = vld [vmem:[%s2892 + $0x758] sm:$0xff]
  %v3129 = vld [vmem:[%s2892 + $0x760] sm:$0xff]
  %v3130 = vld [vmem:[%s2892 + $0x768] sm:$0xff]
  %v3131 = vld [vmem:[%s2892 + $0x770] sm:$0xff]
  %v3132 = vld [vmem:[%s2892 + $0x778] sm:$0xff]
  %v3133 = vld [vmem:[%s2892 + $0x780] sm:$0xff]
  %v3134 = vld [vmem:[%s2892 + $0x788] sm:$0xff]
  %v3135 = vld [vmem:[%s2892 + $0x790] sm:$0xff]
  %v3136 = vld [vmem:[%s2892 + $0x798] sm:$0xff]
  %v3137 = vld [vmem:[%s2892 + $0x7a0] sm:$0xff]
  %v3138 = vld [vmem:[%s2892 + $0x7a8] sm:$0xff]
  %v3139 = vld [vmem:[%s2892 + $0x7b0] sm:$0xff]
  %v3140 = vld [vmem:[%s2892 + $0x7b8] sm:$0xff]
  %v3141 = vld [vmem:[%s2892 + $0x7c0] sm:$0xff]
  %v3142 = vld [vmem:[%s2892 + $0x7c8] sm:$0xff]
  %v3143 = vld [vmem:[%s2892 + $0x7d0] sm:$0xff]
  %v3144 = vld [vmem:[%s2892 + $0x7d8] sm:$0xff]
  %v3145 = vld [vmem:[%s2892 + $0x7e0] sm:$0xff]
  %v3146 = vld [vmem:[%s2892 + $0x7e8] sm:$0xff]
  %v3147 = vld [vmem:[%s2892 + $0x7f0] sm:$0xff]
  %v3148 = vld [vmem:[%s2892 + $0x7f8] sm:$0xff]
  %v3149 = vld [vmem:[%s2892 + $0x800] sm:$0xff]
  %v3150 = vld [vmem:[%s2892 + $0x808] sm:$0xff]
  %v3151 = vld [vmem:[%s2892 + $0x810] sm:$0xff]
  %v3152 = vld [vmem:[%s2892 + $0x818] sm:$0xff]
  %v3153 = vld [vmem:[%s2892 + $0x820] sm:$0xff]
  %v3154 = vld [vmem:[%s2892 + $0x828] sm:$0xff]
  %v3155 = vld [vmem:[%s2892 + $0x830] sm:$0xff]
  %v3156 = vld [vmem:[%s2892 + $0x838] sm:$0xff]
  %v3157 = vld [vmem:[%s2892 + $0x840] sm:$0xff]
  %v3158 = vld [vmem:[%s2892 + $0x848] sm:$0xff]
  %v3159 = vld [vmem:[%s2892 + $0x850] sm:$0xff]
  %v3160 = vld [vmem:[%s2892 + $0x858] sm:$0xff]
  %v3161 = vld [vmem:[%s2892 + $0x860] sm:$0xff]
  %v3162 = vld [vmem:[%s2892 + $0x868] sm:$0xff]
  %v3163 = vld [vmem:[%s2892 + $0x870] sm:$0xff]
  %v3164 = vld [vmem:[%s2892 + $0x878] sm:$0xff]
  %v3165 = vld [vmem:[%s2892 + $0x880] sm:$0xff]
  %v3166 = vld [vmem:[%s2892 + $0x888] sm:$0xff]
  %v3167 = vld [vmem:[%s2892 + $0x890] sm:$0xff]
  %v3168 = vld [vmem:[%s2892 + $0x898] sm:$0xff]
  %v3169 = vld [vmem:[%s2892 + $0x8a0] sm:$0xff]
  %v3170 = vld [vmem:[%s2892 + $0x8a8] sm:$0xff]
  %v3171 = vld [vmem:[%s2892 + $0x8b0] sm:$0xff]
  %v3172 = vld [vmem:[%s2892 + $0x8b8] sm:$0xff]
  %v3173 = vld [vmem:[%s2892 + $0x8c0] sm:$0xff]
  %v3174 = vld [vmem:[%s2892 + $0x8c8] sm:$0xff]
  %v3175 = vld [vmem:[%s2892 + $0x8d0] sm:$0xff]
  %v3176 = vld [vmem:[%s2892 + $0x8d8] sm:$0xff]
  %v3177 = vld [vmem:[%s2892 + $0x8e0] sm:$0xff]
  %v3178 = vld [vmem:[%s2892 + $0x8e8] sm:$0xff]
  %v3179 = vld [vmem:[%s2892 + $0x8f0] sm:$0xff]
  %v3180 = vld [vmem:[%s2892 + $0x8f8] sm:$0xff]
  %v3181 = vld [vmem:[%s2892 + $0x900] sm:$0xff]
  %v3182 = vld [vmem:[%s2892 + $0x908] sm:$0xff]
  %v3183 = vld [vmem:[%s2892 + $0x910] sm:$0xff]
  %v3184 = vld [vmem:[%s2892 + $0x918] sm:$0xff]
  %v3185 = vld [vmem:[%s2892 + $0x920] sm:$0xff]
  %v3186 = vld [vmem:[%s2892 + $0x928] sm:$0xff]
  %v3187 = vld [vmem:[%s2892 + $0x930] sm:$0xff]
  %v3188 = vld [vmem:[%s2892 + $0x938] sm:$0xff]
  %v3189 = vld [vmem:[%s2892 + $0x940] sm:$0xff]
  %v3190 = vld [vmem:[%s2892 + $0x948] sm:$0xff]
  %v3191 = vld [vmem:[%s2892 + $0x950] sm:$0xff]
  %v3192 = vld [vmem:[%s2892 + $0x958] sm:$0xff]
  %v3193 = vld [vmem:[%s2892 + $0x960] sm:$0xff]
  %v3194 = vld [vmem:[%s2892 + $0x968] sm:$0xff]
  %v3195 = vld [vmem:[%s2892 + $0x970] sm:$0xff]
  %v3196 = vld [vmem:[%s2892 + $0x978] sm:$0xff]
  %v3197 = vld [vmem:[%s2892 + $0x980] sm:$0xff]
  %v3198 = vld [vmem:[%s2892 + $0x988] sm:$0xff]
  %v3199 = vld [vmem:[%s2892 + $0x990] sm:$0xff]
  %v3200 = vld [vmem:[%s2892 + $0x998] sm:$0xff]
  %v3201 = vld [vmem:[%s2892 + $0x9a0] sm:$0xff]
  %v3202 = vld [vmem:[%s2892 + $0x9a8] sm:$0xff]
  %v3203 = vld [vmem:[%s2892 + $0x9b0] sm:$0xff]
  %v3204 = vld [vmem:[%s2892 + $0x9b8] sm:$0xff]
  %v3205 = vld [vmem:[%s2892 + $0x9c0] sm:$0xff]
  %v3206 = vld [vmem:[%s2892 + $0x9c8] sm:$0xff]
  %v3207 = vld [vmem:[%s2892 + $0x9d0] sm:$0xff]
  %v3208 = vld [vmem:[%s2892 + $0x9d8] sm:$0xff]
  %v3209 = vld [vmem:[%s2892 + $0x9e0] sm:$0xff]
  %v3210 = vld [vmem:[%s2892 + $0x9e8] sm:$0xff]
  %v3211 = vld [vmem:[%s2892 + $0x9f0] sm:$0xff]
  %v3212 = vld [vmem:[%s2892 + $0x9f8] sm:$0xff]
  %v3213 = vld [vmem:[%s2892 + $0xa00] sm:$0xff]
  %v3214 = vld [vmem:[%s2892 + $0xa08] sm:$0xff]
  %v3215 = vld [vmem:[%s2892 + $0xa10] sm:$0xff]
  %v3216 = vld [vmem:[%s2892 + $0xa18] sm:$0xff]
  %v3217 = vld [vmem:[%s2892 + $0xa20] sm:$0xff]
  %v3218 = vld [vmem:[%s2892 + $0xa28] sm:$0xff]
  %v3219 = vld [vmem:[%s2892 + $0xa30] sm:$0xff]
  %v3220 = vld [vmem:[%s2892 + $0xa38] sm:$0xff]
  %v3221 = vld [vmem:[%s2892 + $0xa40] sm:$0xff]
  %v3222 = vld [vmem:[%s2892 + $0xa48] sm:$0xff]
  %v3223 = vld [vmem:[%s2892 + $0xa50] sm:$0xff]
  %v3224 = vld [vmem:[%s2892 + $0xa58] sm:$0xff]
  %v3225 = vld [vmem:[%s2892 + $0xa60] sm:$0xff]
  %v3226 = vld [vmem:[%s2892 + $0xa68] sm:$0xff]
  %v3227 = vld [vmem:[%s2892 + $0xa70] sm:$0xff]
  %v3228 = vld [vmem:[%s2892 + $0xa78] sm:$0xff]
  %v3229 = vld [vmem:[%s2892 + $0xa80] sm:$0xff]
  %v3230 = vld [vmem:[%s2892 + $0xa88] sm:$0xff]
  %v3231 = vld [vmem:[%s2892 + $0xa90] sm:$0xff]
  %v3232 = vld [vmem:[%s2892 + $0xa98] sm:$0xff]
  %v3233 = vld [vmem:[%s2892 + $0xaa0] sm:$0xff]
  %v3234 = vld [vmem:[%s2892 + $0xaa8] sm:$0xff]
  %v3235 = vld [vmem:[%s2892 + $0xab0] sm:$0xff]
  %v3236 = vld [vmem:[%s2892 + $0xab8] sm:$0xff]
  %v3237 = vld [vmem:[%s2892 + $0xac0] sm:$0xff]
  %v3238 = vld [vmem:[%s2892 + $0xac8] sm:$0xff]
  %v3239 = vld [vmem:[%s2892 + $0xad0] sm:$0xff]
  %v3240 = vld [vmem:[%s2892 + $0xad8] sm:$0xff]
  %v3241 = vld [vmem:[%s2892 + $0xae0] sm:$0xff]
  %v3242 = vld [vmem:[%s2892 + $0xae8] sm:$0xff]
  %v3243 = vld [vmem:[%s2892 + $0xaf0] sm:$0xff]
  %v3244 = vld [vmem:[%s2892 + $0xaf8] sm:$0xff]
  %v3245 = vld [vmem:[%s2892 + $0xb00] sm:$0xff]
  %v3246 = vld [vmem:[%s2892 + $0xb08] sm:$0xff]
  %v3247 = vld [vmem:[%s2892 + $0xb10] sm:$0xff]
  %v3248 = vld [vmem:[%s2892 + $0xb18] sm:$0xff]
  %v3249 = vld [vmem:[%s2892 + $0xb20] sm:$0xff]
  %v3250 = vld [vmem:[%s2892 + $0xb28] sm:$0xff]
  %v3251 = vld [vmem:[%s2892 + $0xb30] sm:$0xff]
  %v3252 = vld [vmem:[%s2892 + $0xb38] sm:$0xff]
  %v3253 = vld [vmem:[%s2892 + $0xb40] sm:$0xff]
  %v3254 = vld [vmem:[%s2892 + $0xb48] sm:$0xff]
  %v3255 = vld [vmem:[%s2892 + $0xb50] sm:$0xff]
  %v3256 = vld [vmem:[%s2892 + $0xb58] sm:$0xff]
  %v3257 = vld [vmem:[%s2892 + $0xb60] sm:$0xff]
  %v3258 = vld [vmem:[%s2892 + $0xb68] sm:$0xff]
  %v3259 = vld [vmem:[%s2892 + $0xb70] sm:$0xff]
  %v3260 = vld [vmem:[%s2892 + $0xb78] sm:$0xff]
  %v3261 = vld [vmem:[%s2892 + $0xb80] sm:$0xff]
  %v3262 = vld [vmem:[%s2892 + $0xb88] sm:$0xff]
  %v3263 = vld [vmem:[%s2892 + $0xb90] sm:$0xff]
  %v3264 = vld [vmem:[%s2892 + $0xb98] sm:$0xff]
  %v3265 = vld [vmem:[%s2892 + $0xba0] sm:$0xff]
  %v3266 = vld [vmem:[%s2892 + $0xba8] sm:$0xff]
  %v3267 = vld [vmem:[%s2892 + $0xbb0] sm:$0xff]
  %v3268 = vld [vmem:[%s2892 + $0xbb8] sm:$0xff]
  %v3269 = vld [vmem:[%s2892 + $0xbc0] sm:$0xff]
  %v3270 = vld [vmem:[%s2892 + $0xbc8] sm:$0xff]
  %v3271 = vld [vmem:[%s2892 + $0xbd0] sm:$0xff]
  %v3272 = vld [vmem:[%s2892 + $0xbd8] sm:$0xff]
  %v3273 = vld [vmem:[%s2892 + $0xbe0] sm:$0xff]
  %v3274 = vld [vmem:[%s2892 + $0xbe8] sm:$0xff]
  %v3275 = vld [vmem:[%s2892 + $0xbf0] sm:$0xff]
  %v3276 = vld [vmem:[%s2892 + $0xbf8] sm:$0xff]
  %v3277 = vld [vmem:[%s2892 + $0xc00] sm:$0xff]
  %v3278 = vld [vmem:[%s2892 + $0xc08] sm:$0xff]
  %v3279 = vld [vmem:[%s2892 + $0xc10] sm:$0xff]
  %v3280 = vld [vmem:[%s2892 + $0xc18] sm:$0xff]
  %v3281 = vld [vmem:[%s2892 + $0xc20] sm:$0xff]
  %v3282 = vld [vmem:[%s2892 + $0xc28] sm:$0xff]
  %v3283 = vld [vmem:[%s2892 + $0xc30] sm:$0xff]
  %v3284 = vld [vmem:[%s2892 + $0xc38] sm:$0xff]
  %v3285 = vld [vmem:[%s2892 + $0xc40] sm:$0xff]
  %v3286 = vld [vmem:[%s2892 + $0xc48] sm:$0xff]
  %v3287 = vld [vmem:[%s2892 + $0xc50] sm:$0xff]
  %v3288 = vld [vmem:[%s2892 + $0xc58] sm:$0xff]
  %v3289 = vld [vmem:[%s2892 + $0xc60] sm:$0xff]
  %v3290 = vld [vmem:[%s2892 + $0xc68] sm:$0xff]
  %v3291 = vld [vmem:[%s2892 + $0xc70] sm:$0xff]
  %v3292 = vld [vmem:[%s2892 + $0xc78] sm:$0xff]
  %v3293 = vld [vmem:[%s2892 + $0xc80] sm:$0xff]
  %v3294 = vld [vmem:[%s2892 + $0xc88] sm:$0xff]
  %v3295 = vld [vmem:[%s2892 + $0xc90] sm:$0xff]
  %v3296 = vld [vmem:[%s2892 + $0xc98] sm:$0xff]
  %v3297 = vld [vmem:[%s2892 + $0xca0] sm:$0xff]
  %v3298 = vld [vmem:[%s2892 + $0xca8] sm:$0xff]
  %v3299 = vld [vmem:[%s2892 + $0xcb0] sm:$0xff]
  %v3300 = vld [vmem:[%s2892 + $0xcb8] sm:$0xff]
  %v3301 = vld [vmem:[%s2892 + $0xcc0] sm:$0xff]
  %v3302 = vld [vmem:[%s2892 + $0xcc8] sm:$0xff]
  %v3303 = vld [vmem:[%s2892 + $0xcd0] sm:$0xff]
  %v3304 = vld [vmem:[%s2892 + $0xcd8] sm:$0xff]
  %v3305 = vld [vmem:[%s2892 + $0xce0] sm:$0xff]
  %v3306 = vld [vmem:[%s2892 + $0xce8] sm:$0xff]
  %v3307 = vld [vmem:[%s2892 + $0xcf0] sm:$0xff]
  %v3308 = vld [vmem:[%s2892 + $0xcf8] sm:$0xff]
  %v3309 = vld [vmem:[%s2892 + $0xd00] sm:$0xff]
  %v3310 = vld [vmem:[%s2892 + $0xd08] sm:$0xff]
  %v3311 = vld [vmem:[%s2892 + $0xd10] sm:$0xff]
  %v3312 = vld [vmem:[%s2892 + $0xd18] sm:$0xff]
  %v3313 = vld [vmem:[%s2892 + $0xd20] sm:$0xff]
  %v3314 = vld [vmem:[%s2892 + $0xd28] sm:$0xff]
  %v3315 = vld [vmem:[%s2892 + $0xd30] sm:$0xff]
  %v3316 = vld [vmem:[%s2892 + $0xd38] sm:$0xff]
  %v3317 = vld [vmem:[%s2892 + $0xd40] sm:$0xff]
  %v3318 = vld [vmem:[%s2892 + $0xd48] sm:$0xff]
  %v3319 = vld [vmem:[%s2892 + $0xd50] sm:$0xff]
  %v3320 = vld [vmem:[%s2892 + $0xd58] sm:$0xff]
  %v3321 = vld [vmem:[%s2892 + $0xd60] sm:$0xff]
  %v3322 = vld [vmem:[%s2892 + $0xd68] sm:$0xff]
  %v3323 = vld [vmem:[%s2892 + $0xd70] sm:$0xff]
  %v3324 = vld [vmem:[%s2892 + $0xd78] sm:$0xff]
  %v3325 = vld [vmem:[%s2892 + $0xd80] sm:$0xff]
  %v3326 = vld [vmem:[%s2892 + $0xd88] sm:$0xff]
  %v3327 = vld [vmem:[%s2892 + $0xd90] sm:$0xff]
  %v3328 = vld [vmem:[%s2892 + $0xd98] sm:$0xff]
  %v3329 = vld [vmem:[%s2892 + $0xda0] sm:$0xff]
  %v3330 = vld [vmem:[%s2892 + $0xda8] sm:$0xff]
  %v3331 = vld [vmem:[%s2892 + $0xdb0] sm:$0xff]
  %v3332 = vld [vmem:[%s2892 + $0xdb8] sm:$0xff]
  %v3333 = vld [vmem:[%s2892 + $0xdc0] sm:$0xff]
  %v3334 = vld [vmem:[%s2892 + $0xdc8] sm:$0xff]
  %v3335 = vld [vmem:[%s2892 + $0xdd0] sm:$0xff]
  %v3336 = vld [vmem:[%s2892 + $0xdd8] sm:$0xff]
  %v3337 = vld [vmem:[%s2892 + $0xde0] sm:$0xff]
  %v3338 = vld [vmem:[%s2892 + $0xde8] sm:$0xff]
  %v3339 = vld [vmem:[%s2892 + $0xdf0] sm:$0xff]
  %v3340 = vld [vmem:[%s2892 + $0xdf8] sm:$0xff]
  %v3341 = vld [vmem:[%s2892 + $0xe00] sm:$0xff]
  %v3342 = vld [vmem:[%s2892 + $0xe08] sm:$0xff]
  %v3343 = vld [vmem:[%s2892 + $0xe10] sm:$0xff]
  %v3344 = vld [vmem:[%s2892 + $0xe18] sm:$0xff]
  %v3345 = vld [vmem:[%s2892 + $0xe20] sm:$0xff]
  %v3346 = vld [vmem:[%s2892 + $0xe28] sm:$0xff]
  %v3347 = vld [vmem:[%s2892 + $0xe30] sm:$0xff]
  %v3348 = vld [vmem:[%s2892 + $0xe38] sm:$0xff]
  %v3349 = vld [vmem:[%s2892 + $0xe40] sm:$0xff]
  %v3350 = vld [vmem:[%s2892 + $0xe48] sm:$0xff]
  %v3351 = vld [vmem:[%s2892 + $0xe50] sm:$0xff]
  %v3352 = vld [vmem:[%s2892 + $0xe58] sm:$0xff]
  %v3353 = vld [vmem:[%s2892 + $0xe60] sm:$0xff]
  %v3354 = vld [vmem:[%s2892 + $0xe68] sm:$0xff]
  %v3355 = vld [vmem:[%s2892 + $0xe70] sm:$0xff]
  %v3356 = vld [vmem:[%s2892 + $0xe78] sm:$0xff]
  %v3357 = vld [vmem:[%s2892 + $0xe80] sm:$0xff]
  %v3358 = vld [vmem:[%s2892 + $0xe88] sm:$0xff]
  %v3359 = vld [vmem:[%s2892 + $0xe90] sm:$0xff]
  %v3360 = vld [vmem:[%s2892 + $0xe98] sm:$0xff]
  %v3361 = vld [vmem:[%s2892 + $0xea0] sm:$0xff]
  %v3362 = vld [vmem:[%s2892 + $0xea8] sm:$0xff]
  %v3363 = vld [vmem:[%s2892 + $0xeb0] sm:$0xff]
  %v3364 = vld [vmem:[%s2892 + $0xeb8] sm:$0xff]
  %v3365 = vld [vmem:[%s2892 + $0xec0] sm:$0xff]
  %v3366 = vld [vmem:[%s2892 + $0xec8] sm:$0xff]
  %v3367 = vld [vmem:[%s2892 + $0xed0] sm:$0xff]
  %v3368 = vld [vmem:[%s2892 + $0xed8] sm:$0xff]
  %v3369 = vld [vmem:[%s2892 + $0xee0] sm:$0xff]
  %v3370 = vld [vmem:[%s2892 + $0xee8] sm:$0xff]
  %v3371 = vld [vmem:[%s2892 + $0xef0] sm:$0xff]
  %v3372 = vld [vmem:[%s2892 + $0xef8] sm:$0xff]
  %v3373 = vld [vmem:[%s2892 + $0xf00] sm:$0xff]
  %v3374 = vld [vmem:[%s2892 + $0xf08] sm:$0xff]
  %v3375 = vld [vmem:[%s2892 + $0xf10] sm:$0xff]
  %v3376 = vld [vmem:[%s2892 + $0xf18] sm:$0xff]
  %v3377 = vld [vmem:[%s2892 + $0xf20] sm:$0xff]
  %v3378 = vld [vmem:[%s2892 + $0xf28] sm:$0xff]
  %v3379 = vld [vmem:[%s2892 + $0xf30] sm:$0xff]
  %v3380 = vld [vmem:[%s2892 + $0xf38] sm:$0xff]
  %v3381 = vld [vmem:[%s2892 + $0xf40] sm:$0xff]
  %v3382 = vld [vmem:[%s2892 + $0xf48] sm:$0xff]
  %v3383 = vld [vmem:[%s2892 + $0xf50] sm:$0xff]
  %v3384 = vld [vmem:[%s2892 + $0xf58] sm:$0xff]
  %v3385 = vld [vmem:[%s2892 + $0xf60] sm:$0xff]
  %v3386 = vld [vmem:[%s2892 + $0xf68] sm:$0xff]
  %v3387 = vld [vmem:[%s2892 + $0xf70] sm:$0xff]
  %v3388 = vld [vmem:[%s2892 + $0xf78] sm:$0xff]
  %v3389 = vld [vmem:[%s2892 + $0xf80] sm:$0xff]
  %v3390 = vld [vmem:[%s2892 + $0xf88] sm:$0xff]
  %v3391 = vld [vmem:[%s2892 + $0xf90] sm:$0xff]
  %v3392 = vld [vmem:[%s2892 + $0xf98] sm:$0xff]
  %v3393 = vld [vmem:[%s2892 + $0xfa0] sm:$0xff]
  %v3394 = vld [vmem:[%s2892 + $0xfa8] sm:$0xff]
  %v3395 = vld [vmem:[%s2892 + $0xfb0] sm:$0xff]
  %v3396 = vld [vmem:[%s2892 + $0xfb8] sm:$0xff]
  %v3397 = vld [vmem:[%s2892 + $0xfc0] sm:$0xff]
  %v3398 = vld [vmem:[%s2892 + $0xfc8] sm:$0xff]
  %v3399 = vld [vmem:[%s2892 + $0xfd0] sm:$0xff]
  %v3400 = vld [vmem:[%s2892 + $0xfd8] sm:$0xff]
  %v3401 = vld [vmem:[%s2892 + $0xfe0] sm:$0xff]
  %v3402 = vld [vmem:[%s2892 + $0xfe8] sm:$0xff]
  %v3403 = vld [vmem:[%s2892 + $0xff0] sm:$0xff]
  %v3404 = vld [vmem:[%s2892 + $0xff8] sm:$0xff]
  %v3405 = vunpack.c.l.b16 %v2713
  %v3406 = vunpack.c.h.b16 %v2713
  %v3407 = vunpack.c.l.b16 %v2727
  %v3408 = vunpack.c.h.b16 %v2727
  %v3409 = vunpack.c.l.b16 %v2741
  %v3410 = vunpack.c.h.b16 %v2741
  %v3411 = vunpack.c.l.b16 %v2755
  %v3412 = vunpack.c.h.b16 %v2755
  %v3413 = vunpack.c.l.b16 %v2765
  %v3414 = vunpack.c.h.b16 %v2765
  %v3415 = vunpack.c.l.b16 %v2775
  %v3416 = vunpack.c.h.b16 %v2775
  %v3417 = vunpack.c.l.b16 %v2785
  %v3418 = vunpack.c.h.b16 %v2785
  %v3419 = vunpack.c.l.b16 %v2795
  %v3420 = vunpack.c.h.b16 %v2795
  %v3421 = vunpack.c.l.b16 %v2809
  %v3422 = vunpack.c.h.b16 %v2809
  %v3423 = vunpack.c.l.b16 %v2823
  %v3424 = vunpack.c.h.b16 %v2823
  %v3425 = vunpack.c.l.b16 %v2837
  %v3426 = vunpack.c.h.b16 %v2837
  %v3427 = vunpack.c.l.b16 %v2851
  %v3428 = vunpack.c.h.b16 %v2851
  %v3429 = vunpack.c.l.b16 %v2861
  %v3430 = vunpack.c.h.b16 %v2861
  %v3431 = vunpack.c.l.b16 %v2871
  %v3432 = vunpack.c.h.b16 %v2871
  %v3433 = vunpack.c.l.b16 %v2881
  %v3434 = vunpack.c.h.b16 %v2881
  %v3435 = vunpack.c.l.b16 %v2891
  %v3436 = vunpack.c.h.b16 %v2891
  %v3437 = vpack.c.b16 %v3413, %v3405
  %v3438 = vpack.c.b16 %v3414, %v3406
  %v3439 = vpack.c.b16 %v3415, %v3407
  %v3440 = vpack.c.b16 %v3416, %v3408
  %v3441 = vpack.c.b16 %v3417, %v3409
  %v3442 = vpack.c.b16 %v3418, %v3410
  %v3443 = vpack.c.b16 %v3419, %v3411
  %v3444 = vpack.c.b16 %v3420, %v3412
  %v3445 = vpack.c.b16 %v3429, %v3421
  %v3446 = vpack.c.b16 %v3430, %v3422
  %v3447 = vpack.c.b16 %v3431, %v3423
  %v3448 = vpack.c.b16 %v3432, %v3424
  %v3449 = vpack.c.b16 %v3433, %v3425
  %v3450 = vpack.c.b16 %v3434, %v3426
  %v3451 = vpack.c.b16 %v3435, %v3427
  %v3452 = vpack.c.b16 %v3436, %v3428
  %v3981 = vunpack.c.l.b16 %v2893
  %v3982 = vunpack.c.h.b16 %v2893
  %v3983 = vunpack.c.l.b16 %v2894
  %v3984 = vunpack.c.h.b16 %v2894
  %v3985 = vunpack.c.l.b16 %v2895
  %v3986 = vunpack.c.h.b16 %v2895
  %v3987 = vunpack.c.l.b16 %v2896
  %v3988 = vunpack.c.h.b16 %v2896
  %v3989 = vunpack.c.l.b16 %v2897
  %v3990 = vunpack.c.h.b16 %v2897
  %v3991 = vunpack.c.l.b16 %v2898
  %v3992 = vunpack.c.h.b16 %v2898
  %v3993 = vunpack.c.l.b16 %v2899
  %v3994 = vunpack.c.h.b16 %v2899
  %v3995 = vunpack.c.l.b16 %v2900
  %v3996 = vunpack.c.h.b16 %v2900
  %v3997 = vunpack.c.l.b16 %v2901
  %v3998 = vunpack.c.h.b16 %v2901
  %v3999 = vunpack.c.l.b16 %v2902
  %v4000 = vunpack.c.h.b16 %v2902
  %v4001 = vunpack.c.l.b16 %v2903
  %v4002 = vunpack.c.h.b16 %v2903
  %v4003 = vunpack.c.l.b16 %v2904
  %v4004 = vunpack.c.h.b16 %v2904
  %v4005 = vunpack.c.l.b16 %v2905
  %v4006 = vunpack.c.h.b16 %v2905
  %v4007 = vunpack.c.l.b16 %v2906
  %v4008 = vunpack.c.h.b16 %v2906
  %v4009 = vunpack.c.l.b16 %v2907
  %v4010 = vunpack.c.h.b16 %v2907
  %v4011 = vunpack.c.l.b16 %v2908
  %v4012 = vunpack.c.h.b16 %v2908
  %v4013 = vunpack.c.l.b16 %v2909
  %v4014 = vunpack.c.h.b16 %v2909
  %v4015 = vunpack.c.l.b16 %v2910
  %v4016 = vunpack.c.h.b16 %v2910
  %v4017 = vunpack.c.l.b16 %v2911
  %v4018 = vunpack.c.h.b16 %v2911
  %v4019 = vunpack.c.l.b16 %v2912
  %v4020 = vunpack.c.h.b16 %v2912
  %v4021 = vunpack.c.l.b16 %v2913
  %v4022 = vunpack.c.h.b16 %v2913
  %v4023 = vunpack.c.l.b16 %v2914
  %v4024 = vunpack.c.h.b16 %v2914
  %v4025 = vunpack.c.l.b16 %v2915
  %v4026 = vunpack.c.h.b16 %v2915
  %v4027 = vunpack.c.l.b16 %v2916
  %v4028 = vunpack.c.h.b16 %v2916
  %v4029 = vunpack.c.l.b16 %v2917
  %v4030 = vunpack.c.h.b16 %v2917
  %v4031 = vunpack.c.l.b16 %v2918
  %v4032 = vunpack.c.h.b16 %v2918
  %v4033 = vunpack.c.l.b16 %v2919
  %v4034 = vunpack.c.h.b16 %v2919
  %v4035 = vunpack.c.l.b16 %v2920
  %v4036 = vunpack.c.h.b16 %v2920
  %v4037 = vunpack.c.l.b16 %v2921
  %v4038 = vunpack.c.h.b16 %v2921
  %v4039 = vunpack.c.l.b16 %v2922
  %v4040 = vunpack.c.h.b16 %v2922
  %v4041 = vunpack.c.l.b16 %v2923
  %v4042 = vunpack.c.h.b16 %v2923
  %v4043 = vunpack.c.l.b16 %v2924
  %v4044 = vunpack.c.h.b16 %v2924
  %v4045 = vunpack.c.l.b16 %v2925
  %v4046 = vunpack.c.h.b16 %v2925
  %v4047 = vunpack.c.l.b16 %v2926
  %v4048 = vunpack.c.h.b16 %v2926
  %v4049 = vunpack.c.l.b16 %v2927
  %v4050 = vunpack.c.h.b16 %v2927
  %v4051 = vunpack.c.l.b16 %v2928
  %v4052 = vunpack.c.h.b16 %v2928
  %v4053 = vunpack.c.l.b16 %v2929
  %v4054 = vunpack.c.h.b16 %v2929
  %v4055 = vunpack.c.l.b16 %v2930
  %v4056 = vunpack.c.h.b16 %v2930
  %v4057 = vunpack.c.l.b16 %v2931
  %v4058 = vunpack.c.h.b16 %v2931
  %v4059 = vunpack.c.l.b16 %v2932
  %v4060 = vunpack.c.h.b16 %v2932
  %v4061 = vunpack.c.l.b16 %v2933
  %v4062 = vunpack.c.h.b16 %v2933
  %v4063 = vunpack.c.l.b16 %v2934
  %v4064 = vunpack.c.h.b16 %v2934
  %v4065 = vunpack.c.l.b16 %v2935
  %v4066 = vunpack.c.h.b16 %v2935
  %v4067 = vunpack.c.l.b16 %v2936
  %v4068 = vunpack.c.h.b16 %v2936
  %v4069 = vunpack.c.l.b16 %v2937
  %v4070 = vunpack.c.h.b16 %v2937
  %v4071 = vunpack.c.l.b16 %v2938
  %v4072 = vunpack.c.h.b16 %v2938
  %v4073 = vunpack.c.l.b16 %v2939
  %v4074 = vunpack.c.h.b16 %v2939
  %v4075 = vunpack.c.l.b16 %v2940
  %v4076 = vunpack.c.h.b16 %v2940
  %v4077 = vunpack.c.l.b16 %v2941
  %v4078 = vunpack.c.h.b16 %v2941
  %v4079 = vunpack.c.l.b16 %v2942
  %v4080 = vunpack.c.h.b16 %v2942
  %v4081 = vunpack.c.l.b16 %v2943
  %v4082 = vunpack.c.h.b16 %v2943
  %v4083 = vunpack.c.l.b16 %v2944
  %v4084 = vunpack.c.h.b16 %v2944
  %v4085 = vunpack.c.l.b16 %v2945
  %v4086 = vunpack.c.h.b16 %v2945
  %v4087 = vunpack.c.l.b16 %v2946
  %v4088 = vunpack.c.h.b16 %v2946
  %v4089 = vunpack.c.l.b16 %v2947
  %v4090 = vunpack.c.h.b16 %v2947
  %v4091 = vunpack.c.l.b16 %v2948
  %v4092 = vunpack.c.h.b16 %v2948
  %v4093 = vunpack.c.l.b16 %v2949
  %v4094 = vunpack.c.h.b16 %v2949
  %v4095 = vunpack.c.l.b16 %v2950
  %v4096 = vunpack.c.h.b16 %v2950
  %v4097 = vunpack.c.l.b16 %v2951
  %v4098 = vunpack.c.h.b16 %v2951
  %v4099 = vunpack.c.l.b16 %v2952
  %v4100 = vunpack.c.h.b16 %v2952
  %v4101 = vunpack.c.l.b16 %v2953
  %v4102 = vunpack.c.h.b16 %v2953
  %v4103 = vunpack.c.l.b16 %v2954
  %v4104 = vunpack.c.h.b16 %v2954
  %v4105 = vunpack.c.l.b16 %v2955
  %v4106 = vunpack.c.h.b16 %v2955
  %v4107 = vunpack.c.l.b16 %v2956
  %v4108 = vunpack.c.h.b16 %v2956
  %v4109 = vunpack.c.l.b16 %v2957
  %v4110 = vunpack.c.h.b16 %v2957
  %v4111 = vunpack.c.l.b16 %v2958
  %v4112 = vunpack.c.h.b16 %v2958
  %v4113 = vunpack.c.l.b16 %v2959
  %v4114 = vunpack.c.h.b16 %v2959
  %v4115 = vunpack.c.l.b16 %v2960
  %v4116 = vunpack.c.h.b16 %v2960
  %v4117 = vunpack.c.l.b16 %v2961
  %v4118 = vunpack.c.h.b16 %v2961
  %v4119 = vunpack.c.l.b16 %v2962
  %v4120 = vunpack.c.h.b16 %v2962
  %v4121 = vunpack.c.l.b16 %v2963
  %v4122 = vunpack.c.h.b16 %v2963
  %v4123 = vunpack.c.l.b16 %v2964
  %v4124 = vunpack.c.h.b16 %v2964
  %v4125 = vunpack.c.l.b16 %v2965
  %v4126 = vunpack.c.h.b16 %v2965
  %v4127 = vunpack.c.l.b16 %v2966
  %v4128 = vunpack.c.h.b16 %v2966
  %v4129 = vunpack.c.l.b16 %v2967
  %v4130 = vunpack.c.h.b16 %v2967
  %v4131 = vunpack.c.l.b16 %v2968
  %v4132 = vunpack.c.h.b16 %v2968
  %v4133 = vunpack.c.l.b16 %v2969
  %v4134 = vunpack.c.h.b16 %v2969
  %v4135 = vunpack.c.l.b16 %v2970
  %v4136 = vunpack.c.h.b16 %v2970
  %v4137 = vunpack.c.l.b16 %v2971
  %v4138 = vunpack.c.h.b16 %v2971
  %v4139 = vunpack.c.l.b16 %v2972
  %v4140 = vunpack.c.h.b16 %v2972
  %v4141 = vunpack.c.l.b16 %v2973
  %v4142 = vunpack.c.h.b16 %v2973
  %v4143 = vunpack.c.l.b16 %v2974
  %v4144 = vunpack.c.h.b16 %v2974
  %v4145 = vunpack.c.l.b16 %v2975
  %v4146 = vunpack.c.h.b16 %v2975
  %v4147 = vunpack.c.l.b16 %v2976
  %v4148 = vunpack.c.h.b16 %v2976
  %v4149 = vunpack.c.l.b16 %v2977
  %v4150 = vunpack.c.h.b16 %v2977
  %v4151 = vunpack.c.l.b16 %v2978
  %v4152 = vunpack.c.h.b16 %v2978
  %v4153 = vunpack.c.l.b16 %v2979
  %v4154 = vunpack.c.h.b16 %v2979
  %v4155 = vunpack.c.l.b16 %v2980
  %v4156 = vunpack.c.h.b16 %v2980
  %v4157 = vunpack.c.l.b16 %v2981
  %v4158 = vunpack.c.h.b16 %v2981
  %v4159 = vunpack.c.l.b16 %v2982
  %v4160 = vunpack.c.h.b16 %v2982
  %v4161 = vunpack.c.l.b16 %v2983
  %v4162 = vunpack.c.h.b16 %v2983
  %v4163 = vunpack.c.l.b16 %v2984
  %v4164 = vunpack.c.h.b16 %v2984
  %v4165 = vunpack.c.l.b16 %v2985
  %v4166 = vunpack.c.h.b16 %v2985
  %v4167 = vunpack.c.l.b16 %v2986
  %v4168 = vunpack.c.h.b16 %v2986
  %v4169 = vunpack.c.l.b16 %v2987
  %v4170 = vunpack.c.h.b16 %v2987
  %v4171 = vunpack.c.l.b16 %v2988
  %v4172 = vunpack.c.h.b16 %v2988
  %v4173 = vunpack.c.l.b16 %v2989
  %v4174 = vunpack.c.h.b16 %v2989
  %v4175 = vunpack.c.l.b16 %v2990
  %v4176 = vunpack.c.h.b16 %v2990
  %v4177 = vunpack.c.l.b16 %v2991
  %v4178 = vunpack.c.h.b16 %v2991
  %v4179 = vunpack.c.l.b16 %v2992
  %v4180 = vunpack.c.h.b16 %v2992
  %v4181 = vunpack.c.l.b16 %v2993
  %v4182 = vunpack.c.h.b16 %v2993
  %v4183 = vunpack.c.l.b16 %v2994
  %v4184 = vunpack.c.h.b16 %v2994
  %v4185 = vunpack.c.l.b16 %v2995
  %v4186 = vunpack.c.h.b16 %v2995
  %v4187 = vunpack.c.l.b16 %v2996
  %v4188 = vunpack.c.h.b16 %v2996
  %v4189 = vunpack.c.l.b16 %v2997
  %v4190 = vunpack.c.h.b16 %v2997
  %v4191 = vunpack.c.l.b16 %v2998
  %v4192 = vunpack.c.h.b16 %v2998
  %v4193 = vunpack.c.l.b16 %v2999
  %v4194 = vunpack.c.h.b16 %v2999
  %v4195 = vunpack.c.l.b16 %v3000
  %v4196 = vunpack.c.h.b16 %v3000
  %v4197 = vunpack.c.l.b16 %v3001
  %v4198 = vunpack.c.h.b16 %v3001
  %v4199 = vunpack.c.l.b16 %v3002
  %v4200 = vunpack.c.h.b16 %v3002
  %v4201 = vunpack.c.l.b16 %v3003
  %v4202 = vunpack.c.h.b16 %v3003
  %v4203 = vunpack.c.l.b16 %v3004
  %v4204 = vunpack.c.h.b16 %v3004
  %v4205 = vunpack.c.l.b16 %v3005
  %v4206 = vunpack.c.h.b16 %v3005
  %v4207 = vunpack.c.l.b16 %v3006
  %v4208 = vunpack.c.h.b16 %v3006
  %v4209 = vunpack.c.l.b16 %v3007
  %v4210 = vunpack.c.h.b16 %v3007
  %v4211 = vunpack.c.l.b16 %v3008
  %v4212 = vunpack.c.h.b16 %v3008
  %v4213 = vunpack.c.l.b16 %v3009
  %v4214 = vunpack.c.h.b16 %v3009
  %v4215 = vunpack.c.l.b16 %v3010
  %v4216 = vunpack.c.h.b16 %v3010
  %v4217 = vunpack.c.l.b16 %v3011
  %v4218 = vunpack.c.h.b16 %v3011
  %v4219 = vunpack.c.l.b16 %v3012
  %v4220 = vunpack.c.h.b16 %v3012
  %v4221 = vunpack.c.l.b16 %v3013
  %v4222 = vunpack.c.h.b16 %v3013
  %v4223 = vunpack.c.l.b16 %v3014
  %v4224 = vunpack.c.h.b16 %v3014
  %v4225 = vunpack.c.l.b16 %v3015
  %v4226 = vunpack.c.h.b16 %v3015
  %v4227 = vunpack.c.l.b16 %v3016
  %v4228 = vunpack.c.h.b16 %v3016
  %v4229 = vunpack.c.l.b16 %v3017
  %v4230 = vunpack.c.h.b16 %v3017
  %v4231 = vunpack.c.l.b16 %v3018
  %v4232 = vunpack.c.h.b16 %v3018
  %v4233 = vunpack.c.l.b16 %v3019
  %v4234 = vunpack.c.h.b16 %v3019
  %v4235 = vunpack.c.l.b16 %v3020
  %v4236 = vunpack.c.h.b16 %v3020
  %v4237 = vunpack.c.l.b16 %v3021
  %v4238 = vunpack.c.h.b16 %v3021
  %v4239 = vunpack.c.l.b16 %v3022
  %v4240 = vunpack.c.h.b16 %v3022
  %v4241 = vunpack.c.l.b16 %v3023
  %v4242 = vunpack.c.h.b16 %v3023
  %v4243 = vunpack.c.l.b16 %v3024
  %v4244 = vunpack.c.h.b16 %v3024
  %v4245 = vunpack.c.l.b16 %v3025
  %v4246 = vunpack.c.h.b16 %v3025
  %v4247 = vunpack.c.l.b16 %v3026
  %v4248 = vunpack.c.h.b16 %v3026
  %v4249 = vunpack.c.l.b16 %v3027
  %v4250 = vunpack.c.h.b16 %v3027
  %v4251 = vunpack.c.l.b16 %v3028
  %v4252 = vunpack.c.h.b16 %v3028
  %v4253 = vunpack.c.l.b16 %v3029
  %v4254 = vunpack.c.h.b16 %v3029
  %v4255 = vunpack.c.l.b16 %v3030
  %v4256 = vunpack.c.h.b16 %v3030
  %v4257 = vunpack.c.l.b16 %v3031
  %v4258 = vunpack.c.h.b16 %v3031
  %v4259 = vunpack.c.l.b16 %v3032
  %v4260 = vunpack.c.h.b16 %v3032
  %v4261 = vunpack.c.l.b16 %v3033
  %v4262 = vunpack.c.h.b16 %v3033
  %v4263 = vunpack.c.l.b16 %v3034
  %v4264 = vunpack.c.h.b16 %v3034
  %v4265 = vunpack.c.l.b16 %v3035
  %v4266 = vunpack.c.h.b16 %v3035
  %v4267 = vunpack.c.l.b16 %v3036
  %v4268 = vunpack.c.h.b16 %v3036
  %v4269 = vunpack.c.l.b16 %v3037
  %v4270 = vunpack.c.h.b16 %v3037
  %v4271 = vunpack.c.l.b16 %v3038
  %v4272 = vunpack.c.h.b16 %v3038
  %v4273 = vunpack.c.l.b16 %v3039
  %v4274 = vunpack.c.h.b16 %v3039
  %v4275 = vunpack.c.l.b16 %v3040
  %v4276 = vunpack.c.h.b16 %v3040
  %v4277 = vunpack.c.l.b16 %v3041
  %v4278 = vunpack.c.h.b16 %v3041
  %v4279 = vunpack.c.l.b16 %v3042
  %v4280 = vunpack.c.h.b16 %v3042
  %v4281 = vunpack.c.l.b16 %v3043
  %v4282 = vunpack.c.h.b16 %v3043
  %v4283 = vunpack.c.l.b16 %v3044
  %v4284 = vunpack.c.h.b16 %v3044
  %v4285 = vunpack.c.l.b16 %v3045
  %v4286 = vunpack.c.h.b16 %v3045
  %v4287 = vunpack.c.l.b16 %v3046
  %v4288 = vunpack.c.h.b16 %v3046
  %v4289 = vunpack.c.l.b16 %v3047
  %v4290 = vunpack.c.h.b16 %v3047
  %v4291 = vunpack.c.l.b16 %v3048
  %v4292 = vunpack.c.h.b16 %v3048
  %v4293 = vunpack.c.l.b16 %v3049
  %v4294 = vunpack.c.h.b16 %v3049
  %v4295 = vunpack.c.l.b16 %v3050
  %v4296 = vunpack.c.h.b16 %v3050
  %v4297 = vunpack.c.l.b16 %v3051
  %v4298 = vunpack.c.h.b16 %v3051
  %v4299 = vunpack.c.l.b16 %v3052
  %v4300 = vunpack.c.h.b16 %v3052
  %v4301 = vunpack.c.l.b16 %v3053
  %v4302 = vunpack.c.h.b16 %v3053
  %v4303 = vunpack.c.l.b16 %v3054
  %v4304 = vunpack.c.h.b16 %v3054
  %v4305 = vunpack.c.l.b16 %v3055
  %v4306 = vunpack.c.h.b16 %v3055
  %v4307 = vunpack.c.l.b16 %v3056
  %v4308 = vunpack.c.h.b16 %v3056
  %v4309 = vunpack.c.l.b16 %v3057
  %v4310 = vunpack.c.h.b16 %v3057
  %v4311 = vunpack.c.l.b16 %v3058
  %v4312 = vunpack.c.h.b16 %v3058
  %v4313 = vunpack.c.l.b16 %v3059
  %v4314 = vunpack.c.h.b16 %v3059
  %v4315 = vunpack.c.l.b16 %v3060
  %v4316 = vunpack.c.h.b16 %v3060
  %v4317 = vunpack.c.l.b16 %v3061
  %v4318 = vunpack.c.h.b16 %v3061
  %v4319 = vunpack.c.l.b16 %v3062
  %v4320 = vunpack.c.h.b16 %v3062
  %v4321 = vunpack.c.l.b16 %v3063
  %v4322 = vunpack.c.h.b16 %v3063
  %v4323 = vunpack.c.l.b16 %v3064
  %v4324 = vunpack.c.h.b16 %v3064
  %v4325 = vunpack.c.l.b16 %v3065
  %v4326 = vunpack.c.h.b16 %v3065
  %v4327 = vunpack.c.l.b16 %v3066
  %v4328 = vunpack.c.h.b16 %v3066
  %v4329 = vunpack.c.l.b16 %v3067
  %v4330 = vunpack.c.h.b16 %v3067
  %v4331 = vunpack.c.l.b16 %v3068
  %v4332 = vunpack.c.h.b16 %v3068
  %v4333 = vunpack.c.l.b16 %v3069
  %v4334 = vunpack.c.h.b16 %v3069
  %v4335 = vunpack.c.l.b16 %v3070
  %v4336 = vunpack.c.h.b16 %v3070
  %v4337 = vunpack.c.l.b16 %v3071
  %v4338 = vunpack.c.h.b16 %v3071
  %v4339 = vunpack.c.l.b16 %v3072
  %v4340 = vunpack.c.h.b16 %v3072
  %v4341 = vunpack.c.l.b16 %v3073
  %v4342 = vunpack.c.h.b16 %v3073
  %v4343 = vunpack.c.l.b16 %v3074
  %v4344 = vunpack.c.h.b16 %v3074
  %v4345 = vunpack.c.l.b16 %v3075
  %v4346 = vunpack.c.h.b16 %v3075
  %v4347 = vunpack.c.l.b16 %v3076
  %v4348 = vunpack.c.h.b16 %v3076
  %v4349 = vunpack.c.l.b16 %v3077
  %v4350 = vunpack.c.h.b16 %v3077
  %v4351 = vunpack.c.l.b16 %v3078
  %v4352 = vunpack.c.h.b16 %v3078
  %v4353 = vunpack.c.l.b16 %v3079
  %v4354 = vunpack.c.h.b16 %v3079
  %v4355 = vunpack.c.l.b16 %v3080
  %v4356 = vunpack.c.h.b16 %v3080
  %v4357 = vunpack.c.l.b16 %v3081
  %v4358 = vunpack.c.h.b16 %v3081
  %v4359 = vunpack.c.l.b16 %v3082
  %v4360 = vunpack.c.h.b16 %v3082
  %v4361 = vunpack.c.l.b16 %v3083
  %v4362 = vunpack.c.h.b16 %v3083
  %v4363 = vunpack.c.l.b16 %v3084
  %v4364 = vunpack.c.h.b16 %v3084
  %v4365 = vunpack.c.l.b16 %v3085
  %v4366 = vunpack.c.h.b16 %v3085
  %v4367 = vunpack.c.l.b16 %v3086
  %v4368 = vunpack.c.h.b16 %v3086
  %v4369 = vunpack.c.l.b16 %v3087
  %v4370 = vunpack.c.h.b16 %v3087
  %v4371 = vunpack.c.l.b16 %v3088
  %v4372 = vunpack.c.h.b16 %v3088
  %v4373 = vunpack.c.l.b16 %v3089
  %v4374 = vunpack.c.h.b16 %v3089
  %v4375 = vunpack.c.l.b16 %v3090
  %v4376 = vunpack.c.h.b16 %v3090
  %v4377 = vunpack.c.l.b16 %v3091
  %v4378 = vunpack.c.h.b16 %v3091
  %v4379 = vunpack.c.l.b16 %v3092
  %v4380 = vunpack.c.h.b16 %v3092
  %v4381 = vunpack.c.l.b16 %v3093
  %v4382 = vunpack.c.h.b16 %v3093
  %v4383 = vunpack.c.l.b16 %v3094
  %v4384 = vunpack.c.h.b16 %v3094
  %v4385 = vunpack.c.l.b16 %v3095
  %v4386 = vunpack.c.h.b16 %v3095
  %v4387 = vunpack.c.l.b16 %v3096
  %v4388 = vunpack.c.h.b16 %v3096
  %v4389 = vunpack.c.l.b16 %v3097
  %v4390 = vunpack.c.h.b16 %v3097
  %v4391 = vunpack.c.l.b16 %v3098
  %v4392 = vunpack.c.h.b16 %v3098
  %v4393 = vunpack.c.l.b16 %v3099
  %v4394 = vunpack.c.h.b16 %v3099
  %v4395 = vunpack.c.l.b16 %v3100
  %v4396 = vunpack.c.h.b16 %v3100
  %v4397 = vunpack.c.l.b16 %v3101
  %v4398 = vunpack.c.h.b16 %v3101
  %v4399 = vunpack.c.l.b16 %v3102
  %v4400 = vunpack.c.h.b16 %v3102
  %v4401 = vunpack.c.l.b16 %v3103
  %v4402 = vunpack.c.h.b16 %v3103
  %v4403 = vunpack.c.l.b16 %v3104
  %v4404 = vunpack.c.h.b16 %v3104
  %v4405 = vunpack.c.l.b16 %v3105
  %v4406 = vunpack.c.h.b16 %v3105
  %v4407 = vunpack.c.l.b16 %v3106
  %v4408 = vunpack.c.h.b16 %v3106
  %v4409 = vunpack.c.l.b16 %v3107
  %v4410 = vunpack.c.h.b16 %v3107
  %v4411 = vunpack.c.l.b16 %v3108
  %v4412 = vunpack.c.h.b16 %v3108
  %v4413 = vunpack.c.l.b16 %v3109
  %v4414 = vunpack.c.h.b16 %v3109
  %v4415 = vunpack.c.l.b16 %v3110
  %v4416 = vunpack.c.h.b16 %v3110
  %v4417 = vunpack.c.l.b16 %v3111
  %v4418 = vunpack.c.h.b16 %v3111
  %v4419 = vunpack.c.l.b16 %v3112
  %v4420 = vunpack.c.h.b16 %v3112
  %v4421 = vunpack.c.l.b16 %v3113
  %v4422 = vunpack.c.h.b16 %v3113
  %v4423 = vunpack.c.l.b16 %v3114
  %v4424 = vunpack.c.h.b16 %v3114
  %v4425 = vunpack.c.l.b16 %v3115
  %v4426 = vunpack.c.h.b16 %v3115
  %v4427 = vunpack.c.l.b16 %v3116
  %v4428 = vunpack.c.h.b16 %v3116
  %v4429 = vunpack.c.l.b16 %v3117
  %v4430 = vunpack.c.h.b16 %v3117
  %v4431 = vunpack.c.l.b16 %v3118
  %v4432 = vunpack.c.h.b16 %v3118
  %v4433 = vunpack.c.l.b16 %v3119
  %v4434 = vunpack.c.h.b16 %v3119
  %v4435 = vunpack.c.l.b16 %v3120
  %v4436 = vunpack.c.h.b16 %v3120
  %v4437 = vunpack.c.l.b16 %v3121
  %v4438 = vunpack.c.h.b16 %v3121
  %v4439 = vunpack.c.l.b16 %v3122
  %v4440 = vunpack.c.h.b16 %v3122
  %v4441 = vunpack.c.l.b16 %v3123
  %v4442 = vunpack.c.h.b16 %v3123
  %v4443 = vunpack.c.l.b16 %v3124
  %v4444 = vunpack.c.h.b16 %v3124
  %v4445 = vunpack.c.l.b16 %v3125
  %v4446 = vunpack.c.h.b16 %v3125
  %v4447 = vunpack.c.l.b16 %v3126
  %v4448 = vunpack.c.h.b16 %v3126
  %v4449 = vunpack.c.l.b16 %v3127
  %v4450 = vunpack.c.h.b16 %v3127
  %v4451 = vunpack.c.l.b16 %v3128
  %v4452 = vunpack.c.h.b16 %v3128
  %v4453 = vunpack.c.l.b16 %v3129
  %v4454 = vunpack.c.h.b16 %v3129
  %v4455 = vunpack.c.l.b16 %v3130
  %v4456 = vunpack.c.h.b16 %v3130
  %v4457 = vunpack.c.l.b16 %v3131
  %v4458 = vunpack.c.h.b16 %v3131
  %v4459 = vunpack.c.l.b16 %v3132
  %v4460 = vunpack.c.h.b16 %v3132
  %v4461 = vunpack.c.l.b16 %v3133
  %v4462 = vunpack.c.h.b16 %v3133
  %v4463 = vunpack.c.l.b16 %v3134
  %v4464 = vunpack.c.h.b16 %v3134
  %v4465 = vunpack.c.l.b16 %v3135
  %v4466 = vunpack.c.h.b16 %v3135
  %v4467 = vunpack.c.l.b16 %v3136
  %v4468 = vunpack.c.h.b16 %v3136
  %v4469 = vunpack.c.l.b16 %v3137
  %v4470 = vunpack.c.h.b16 %v3137
  %v4471 = vunpack.c.l.b16 %v3138
  %v4472 = vunpack.c.h.b16 %v3138
  %v4473 = vunpack.c.l.b16 %v3139
  %v4474 = vunpack.c.h.b16 %v3139
  %v4475 = vunpack.c.l.b16 %v3140
  %v4476 = vunpack.c.h.b16 %v3140
  %v4477 = vunpack.c.l.b16 %v3141
  %v4478 = vunpack.c.h.b16 %v3141
  %v4479 = vunpack.c.l.b16 %v3142
  %v4480 = vunpack.c.h.b16 %v3142
  %v4481 = vunpack.c.l.b16 %v3143
  %v4482 = vunpack.c.h.b16 %v3143
  %v4483 = vunpack.c.l.b16 %v3144
  %v4484 = vunpack.c.h.b16 %v3144
  %v4485 = vunpack.c.l.b16 %v3145
  %v4486 = vunpack.c.h.b16 %v3145
  %v4487 = vunpack.c.l.b16 %v3146
  %v4488 = vunpack.c.h.b16 %v3146
  %v4489 = vunpack.c.l.b16 %v3147
  %v4490 = vunpack.c.h.b16 %v3147
  %v4491 = vunpack.c.l.b16 %v3148
  %v4492 = vunpack.c.h.b16 %v3148
  %v4493 = vunpack.c.l.b16 %v3149
  %v4494 = vunpack.c.h.b16 %v3149
  %v4495 = vunpack.c.l.b16 %v3150
  %v4496 = vunpack.c.h.b16 %v3150
  %v4497 = vunpack.c.l.b16 %v3151
  %v4498 = vunpack.c.h.b16 %v3151
  %v4499 = vunpack.c.l.b16 %v3152
  %v4500 = vunpack.c.h.b16 %v3152
  %v4501 = vunpack.c.l.b16 %v3153
  %v4502 = vunpack.c.h.b16 %v3153
  %v4503 = vunpack.c.l.b16 %v3154
  %v4504 = vunpack.c.h.b16 %v3154
  %v4505 = vunpack.c.l.b16 %v3155
  %v4506 = vunpack.c.h.b16 %v3155
  %v4507 = vunpack.c.l.b16 %v3156
  %v4508 = vunpack.c.h.b16 %v3156
  %v4509 = vunpack.c.l.b16 %v3157
  %v4510 = vunpack.c.h.b16 %v3157
  %v4511 = vunpack.c.l.b16 %v3158
  %v4512 = vunpack.c.h.b16 %v3158
  %v4513 = vunpack.c.l.b16 %v3159
  %v4514 = vunpack.c.h.b16 %v3159
  %v4515 = vunpack.c.l.b16 %v3160
  %v4516 = vunpack.c.h.b16 %v3160
  %v4517 = vunpack.c.l.b16 %v3161
  %v4518 = vunpack.c.h.b16 %v3161
  %v4519 = vunpack.c.l.b16 %v3162
  %v4520 = vunpack.c.h.b16 %v3162
  %v4521 = vunpack.c.l.b16 %v3163
  %v4522 = vunpack.c.h.b16 %v3163
  %v4523 = vunpack.c.l.b16 %v3164
  %v4524 = vunpack.c.h.b16 %v3164
  %v4525 = vunpack.c.l.b16 %v3165
  %v4526 = vunpack.c.h.b16 %v3165
  %v4527 = vunpack.c.l.b16 %v3166
  %v4528 = vunpack.c.h.b16 %v3166
  %v4529 = vunpack.c.l.b16 %v3167
  %v4530 = vunpack.c.h.b16 %v3167
  %v4531 = vunpack.c.l.b16 %v3168
  %v4532 = vunpack.c.h.b16 %v3168
  %v4533 = vunpack.c.l.b16 %v3169
  %v4534 = vunpack.c.h.b16 %v3169
  %v4535 = vunpack.c.l.b16 %v3170
  %v4536 = vunpack.c.h.b16 %v3170
  %v4537 = vunpack.c.l.b16 %v3171
  %v4538 = vunpack.c.h.b16 %v3171
  %v4539 = vunpack.c.l.b16 %v3172
  %v4540 = vunpack.c.h.b16 %v3172
  %v4541 = vunpack.c.l.b16 %v3173
  %v4542 = vunpack.c.h.b16 %v3173
  %v4543 = vunpack.c.l.b16 %v3174
  %v4544 = vunpack.c.h.b16 %v3174
  %v4545 = vunpack.c.l.b16 %v3175
  %v4546 = vunpack.c.h.b16 %v3175
  %v4547 = vunpack.c.l.b16 %v3176
  %v4548 = vunpack.c.h.b16 %v3176
  %v4549 = vunpack.c.l.b16 %v3177
  %v4550 = vunpack.c.h.b16 %v3177
  %v4551 = vunpack.c.l.b16 %v3178
  %v4552 = vunpack.c.h.b16 %v3178
  %v4553 = vunpack.c.l.b16 %v3179
  %v4554 = vunpack.c.h.b16 %v3179
  %v4555 = vunpack.c.l.b16 %v3180
  %v4556 = vunpack.c.h.b16 %v3180
  %v4557 = vunpack.c.l.b16 %v3181
  %v4558 = vunpack.c.h.b16 %v3181
  %v4559 = vunpack.c.l.b16 %v3182
  %v4560 = vunpack.c.h.b16 %v3182
  %v4561 = vunpack.c.l.b16 %v3183
  %v4562 = vunpack.c.h.b16 %v3183
  %v4563 = vunpack.c.l.b16 %v3184
  %v4564 = vunpack.c.h.b16 %v3184
  %v4565 = vunpack.c.l.b16 %v3185
  %v4566 = vunpack.c.h.b16 %v3185
  %v4567 = vunpack.c.l.b16 %v3186
  %v4568 = vunpack.c.h.b16 %v3186
  %v4569 = vunpack.c.l.b16 %v3187
  %v4570 = vunpack.c.h.b16 %v3187
  %v4571 = vunpack.c.l.b16 %v3188
  %v4572 = vunpack.c.h.b16 %v3188
  %v4573 = vunpack.c.l.b16 %v3189
  %v4574 = vunpack.c.h.b16 %v3189
  %v4575 = vunpack.c.l.b16 %v3190
  %v4576 = vunpack.c.h.b16 %v3190
  %v4577 = vunpack.c.l.b16 %v3191
  %v4578 = vunpack.c.h.b16 %v3191
  %v4579 = vunpack.c.l.b16 %v3192
  %v4580 = vunpack.c.h.b16 %v3192
  %v4581 = vunpack.c.l.b16 %v3193
  %v4582 = vunpack.c.h.b16 %v3193
  %v4583 = vunpack.c.l.b16 %v3194
  %v4584 = vunpack.c.h.b16 %v3194
  %v4585 = vunpack.c.l.b16 %v3195
  %v4586 = vunpack.c.h.b16 %v3195
  %v4587 = vunpack.c.l.b16 %v3196
  %v4588 = vunpack.c.h.b16 %v3196
  %v4589 = vunpack.c.l.b16 %v3197
  %v4590 = vunpack.c.h.b16 %v3197
  %v4591 = vunpack.c.l.b16 %v3198
  %v4592 = vunpack.c.h.b16 %v3198
  %v4593 = vunpack.c.l.b16 %v3199
  %v4594 = vunpack.c.h.b16 %v3199
  %v4595 = vunpack.c.l.b16 %v3200
  %v4596 = vunpack.c.h.b16 %v3200
  %v4597 = vunpack.c.l.b16 %v3201
  %v4598 = vunpack.c.h.b16 %v3201
  %v4599 = vunpack.c.l.b16 %v3202
  %v4600 = vunpack.c.h.b16 %v3202
  %v4601 = vunpack.c.l.b16 %v3203
  %v4602 = vunpack.c.h.b16 %v3203
  %v4603 = vunpack.c.l.b16 %v3204
  %v4604 = vunpack.c.h.b16 %v3204
  %v4605 = vunpack.c.l.b16 %v3205
  %v4606 = vunpack.c.h.b16 %v3205
  %v4607 = vunpack.c.l.b16 %v3206
  %v4608 = vunpack.c.h.b16 %v3206
  %v4609 = vunpack.c.l.b16 %v3207
  %v4610 = vunpack.c.h.b16 %v3207
  %v4611 = vunpack.c.l.b16 %v3208
  %v4612 = vunpack.c.h.b16 %v3208
  %v4613 = vunpack.c.l.b16 %v3209
  %v4614 = vunpack.c.h.b16 %v3209
  %v4615 = vunpack.c.l.b16 %v3210
  %v4616 = vunpack.c.h.b16 %v3210
  %v4617 = vunpack.c.l.b16 %v3211
  %v4618 = vunpack.c.h.b16 %v3211
  %v4619 = vunpack.c.l.b16 %v3212
  %v4620 = vunpack.c.h.b16 %v3212
  %v4621 = vunpack.c.l.b16 %v3213
  %v4622 = vunpack.c.h.b16 %v3213
  %v4623 = vunpack.c.l.b16 %v3214
  %v4624 = vunpack.c.h.b16 %v3214
  %v4625 = vunpack.c.l.b16 %v3215
  %v4626 = vunpack.c.h.b16 %v3215
  %v4627 = vunpack.c.l.b16 %v3216
  %v4628 = vunpack.c.h.b16 %v3216
  %v4629 = vunpack.c.l.b16 %v3217
  %v4630 = vunpack.c.h.b16 %v3217
  %v4631 = vunpack.c.l.b16 %v3218
  %v4632 = vunpack.c.h.b16 %v3218
  %v4633 = vunpack.c.l.b16 %v3219
  %v4634 = vunpack.c.h.b16 %v3219
  %v4635 = vunpack.c.l.b16 %v3220
  %v4636 = vunpack.c.h.b16 %v3220
  %v4637 = vunpack.c.l.b16 %v3221
  %v4638 = vunpack.c.h.b16 %v3221
  %v4639 = vunpack.c.l.b16 %v3222
  %v4640 = vunpack.c.h.b16 %v3222
  %v4641 = vunpack.c.l.b16 %v3223
  %v4642 = vunpack.c.h.b16 %v3223
  %v4643 = vunpack.c.l.b16 %v3224
  %v4644 = vunpack.c.h.b16 %v3224
  %v4645 = vunpack.c.l.b16 %v3225
  %v4646 = vunpack.c.h.b16 %v3225
  %v4647 = vunpack.c.l.b16 %v3226
  %v4648 = vunpack.c.h.b16 %v3226
  %v4649 = vunpack.c.l.b16 %v3227
  %v4650 = vunpack.c.h.b16 %v3227
  %v4651 = vunpack.c.l.b16 %v3228
  %v4652 = vunpack.c.h.b16 %v3228
  %v4653 = vunpack.c.l.b16 %v3229
  %v4654 = vunpack.c.h.b16 %v3229
  %v4655 = vunpack.c.l.b16 %v3230
  %v4656 = vunpack.c.h.b16 %v3230
  %v4657 = vunpack.c.l.b16 %v3231
  %v4658 = vunpack.c.h.b16 %v3231
  %v4659 = vunpack.c.l.b16 %v3232
  %v4660 = vunpack.c.h.b16 %v3232
  %v4661 = vunpack.c.l.b16 %v3233
  %v4662 = vunpack.c.h.b16 %v3233
  %v4663 = vunpack.c.l.b16 %v3234
  %v4664 = vunpack.c.h.b16 %v3234
  %v4665 = vunpack.c.l.b16 %v3235
  %v4666 = vunpack.c.h.b16 %v3235
  %v4667 = vunpack.c.l.b16 %v3236
  %v4668 = vunpack.c.h.b16 %v3236
  %v4669 = vunpack.c.l.b16 %v3237
  %v4670 = vunpack.c.h.b16 %v3237
  %v4671 = vunpack.c.l.b16 %v3238
  %v4672 = vunpack.c.h.b16 %v3238
  %v4673 = vunpack.c.l.b16 %v3239
  %v4674 = vunpack.c.h.b16 %v3239
  %v4675 = vunpack.c.l.b16 %v3240
  %v4676 = vunpack.c.h.b16 %v3240
  %v4677 = vunpack.c.l.b16 %v3241
  %v4678 = vunpack.c.h.b16 %v3241
  %v4679 = vunpack.c.l.b16 %v3242
  %v4680 = vunpack.c.h.b16 %v3242
  %v4681 = vunpack.c.l.b16 %v3243
  %v4682 = vunpack.c.h.b16 %v3243
  %v4683 = vunpack.c.l.b16 %v3244
  %v4684 = vunpack.c.h.b16 %v3244
  %v4685 = vunpack.c.l.b16 %v3245
  %v4686 = vunpack.c.h.b16 %v3245
  %v4687 = vunpack.c.l.b16 %v3246
  %v4688 = vunpack.c.h.b16 %v3246
  %v4689 = vunpack.c.l.b16 %v3247
  %v4690 = vunpack.c.h.b16 %v3247
  %v4691 = vunpack.c.l.b16 %v3248
  %v4692 = vunpack.c.h.b16 %v3248
  %v4693 = vunpack.c.l.b16 %v3249
  %v4694 = vunpack.c.h.b16 %v3249
  %v4695 = vunpack.c.l.b16 %v3250
  %v4696 = vunpack.c.h.b16 %v3250
  %v4697 = vunpack.c.l.b16 %v3251
  %v4698 = vunpack.c.h.b16 %v3251
  %v4699 = vunpack.c.l.b16 %v3252
  %v4700 = vunpack.c.h.b16 %v3252
  %v4701 = vunpack.c.l.b16 %v3253
  %v4702 = vunpack.c.h.b16 %v3253
  %v4703 = vunpack.c.l.b16 %v3254
  %v4704 = vunpack.c.h.b16 %v3254
  %v4705 = vunpack.c.l.b16 %v3255
  %v4706 = vunpack.c.h.b16 %v3255
  %v4707 = vunpack.c.l.b16 %v3256
  %v4708 = vunpack.c.h.b16 %v3256
  %v4709 = vunpack.c.l.b16 %v3257
  %v4710 = vunpack.c.h.b16 %v3257
  %v4711 = vunpack.c.l.b16 %v3258
  %v4712 = vunpack.c.h.b16 %v3258
  %v4713 = vunpack.c.l.b16 %v3259
  %v4714 = vunpack.c.h.b16 %v3259
  %v4715 = vunpack.c.l.b16 %v3260
  %v4716 = vunpack.c.h.b16 %v3260
  %v4717 = vunpack.c.l.b16 %v3261
  %v4718 = vunpack.c.h.b16 %v3261
  %v4719 = vunpack.c.l.b16 %v3262
  %v4720 = vunpack.c.h.b16 %v3262
  %v4721 = vunpack.c.l.b16 %v3263
  %v4722 = vunpack.c.h.b16 %v3263
  %v4723 = vunpack.c.l.b16 %v3264
  %v4724 = vunpack.c.h.b16 %v3264
  %v4725 = vunpack.c.l.b16 %v3265
  %v4726 = vunpack.c.h.b16 %v3265
  %v4727 = vunpack.c.l.b16 %v3266
  %v4728 = vunpack.c.h.b16 %v3266
  %v4729 = vunpack.c.l.b16 %v3267
  %v4730 = vunpack.c.h.b16 %v3267
  %v4731 = vunpack.c.l.b16 %v3268
  %v4732 = vunpack.c.h.b16 %v3268
  %v4733 = vunpack.c.l.b16 %v3269
  %v4734 = vunpack.c.h.b16 %v3269
  %v4735 = vunpack.c.l.b16 %v3270
  %v4736 = vunpack.c.h.b16 %v3270
  %v4737 = vunpack.c.l.b16 %v3271
  %v4738 = vunpack.c.h.b16 %v3271
  %v4739 = vunpack.c.l.b16 %v3272
  %v4740 = vunpack.c.h.b16 %v3272
  %v4741 = vunpack.c.l.b16 %v3273
  %v4742 = vunpack.c.h.b16 %v3273
  %v4743 = vunpack.c.l.b16 %v3274
  %v4744 = vunpack.c.h.b16 %v3274
  %v4745 = vunpack.c.l.b16 %v3275
  %v4746 = vunpack.c.h.b16 %v3275
  %v4747 = vunpack.c.l.b16 %v3276
  %v4748 = vunpack.c.h.b16 %v3276
  %v4749 = vunpack.c.l.b16 %v3277
  %v4750 = vunpack.c.h.b16 %v3277
  %v4751 = vunpack.c.l.b16 %v3278
  %v4752 = vunpack.c.h.b16 %v3278
  %v4753 = vunpack.c.l.b16 %v3279
  %v4754 = vunpack.c.h.b16 %v3279
  %v4755 = vunpack.c.l.b16 %v3280
  %v4756 = vunpack.c.h.b16 %v3280
  %v4757 = vunpack.c.l.b16 %v3281
  %v4758 = vunpack.c.h.b16 %v3281
  %v4759 = vunpack.c.l.b16 %v3282
  %v4760 = vunpack.c.h.b16 %v3282
  %v4761 = vunpack.c.l.b16 %v3283
  %v4762 = vunpack.c.h.b16 %v3283
  %v4763 = vunpack.c.l.b16 %v3284
  %v4764 = vunpack.c.h.b16 %v3284
  %v4765 = vunpack.c.l.b16 %v3285
  %v4766 = vunpack.c.h.b16 %v3285
  %v4767 = vunpack.c.l.b16 %v3286
  %v4768 = vunpack.c.h.b16 %v3286
  %v4769 = vunpack.c.l.b16 %v3287
  %v4770 = vunpack.c.h.b16 %v3287
  %v4771 = vunpack.c.l.b16 %v3288
  %v4772 = vunpack.c.h.b16 %v3288
  %v4773 = vunpack.c.l.b16 %v3289
  %v4774 = vunpack.c.h.b16 %v3289
  %v4775 = vunpack.c.l.b16 %v3290
  %v4776 = vunpack.c.h.b16 %v3290
  %v4777 = vunpack.c.l.b16 %v3291
  %v4778 = vunpack.c.h.b16 %v3291
  %v4779 = vunpack.c.l.b16 %v3292
  %v4780 = vunpack.c.h.b16 %v3292
  %v4781 = vunpack.c.l.b16 %v3293
  %v4782 = vunpack.c.h.b16 %v3293
  %v4783 = vunpack.c.l.b16 %v3294
  %v4784 = vunpack.c.h.b16 %v3294
  %v4785 = vunpack.c.l.b16 %v3295
  %v4786 = vunpack.c.h.b16 %v3295
  %v4787 = vunpack.c.l.b16 %v3296
  %v4788 = vunpack.c.h.b16 %v3296
  %v4789 = vunpack.c.l.b16 %v3297
  %v4790 = vunpack.c.h.b16 %v3297
  %v4791 = vunpack.c.l.b16 %v3298
  %v4792 = vunpack.c.h.b16 %v3298
  %v4793 = vunpack.c.l.b16 %v3299
  %v4794 = vunpack.c.h.b16 %v3299
  %v4795 = vunpack.c.l.b16 %v3300
  %v4796 = vunpack.c.h.b16 %v3300
  %v4797 = vunpack.c.l.b16 %v3301
  %v4798 = vunpack.c.h.b16 %v3301
  %v4799 = vunpack.c.l.b16 %v3302
  %v4800 = vunpack.c.h.b16 %v3302
  %v4801 = vunpack.c.l.b16 %v3303
  %v4802 = vunpack.c.h.b16 %v3303
  %v4803 = vunpack.c.l.b16 %v3304
  %v4804 = vunpack.c.h.b16 %v3304
  %v4805 = vunpack.c.l.b16 %v3305
  %v4806 = vunpack.c.h.b16 %v3305
  %v4807 = vunpack.c.l.b16 %v3306
  %v4808 = vunpack.c.h.b16 %v3306
  %v4809 = vunpack.c.l.b16 %v3307
  %v4810 = vunpack.c.h.b16 %v3307
  %v4811 = vunpack.c.l.b16 %v3308
  %v4812 = vunpack.c.h.b16 %v3308
  %v4813 = vunpack.c.l.b16 %v3309
  %v4814 = vunpack.c.h.b16 %v3309
  %v4815 = vunpack.c.l.b16 %v3310
  %v4816 = vunpack.c.h.b16 %v3310
  %v4817 = vunpack.c.l.b16 %v3311
  %v4818 = vunpack.c.h.b16 %v3311
  %v4819 = vunpack.c.l.b16 %v3312
  %v4820 = vunpack.c.h.b16 %v3312
  %v4821 = vunpack.c.l.b16 %v3313
  %v4822 = vunpack.c.h.b16 %v3313
  %v4823 = vunpack.c.l.b16 %v3314
  %v4824 = vunpack.c.h.b16 %v3314
  %v4825 = vunpack.c.l.b16 %v3315
  %v4826 = vunpack.c.h.b16 %v3315
  %v4827 = vunpack.c.l.b16 %v3316
  %v4828 = vunpack.c.h.b16 %v3316
  %v4829 = vunpack.c.l.b16 %v3317
  %v4830 = vunpack.c.h.b16 %v3317
  %v4831 = vunpack.c.l.b16 %v3318
  %v4832 = vunpack.c.h.b16 %v3318
  %v4833 = vunpack.c.l.b16 %v3319
  %v4834 = vunpack.c.h.b16 %v3319
  %v4835 = vunpack.c.l.b16 %v3320
  %v4836 = vunpack.c.h.b16 %v3320
  %v4837 = vunpack.c.l.b16 %v3321
  %v4838 = vunpack.c.h.b16 %v3321
  %v4839 = vunpack.c.l.b16 %v3322
  %v4840 = vunpack.c.h.b16 %v3322
  %v4841 = vunpack.c.l.b16 %v3323
  %v4842 = vunpack.c.h.b16 %v3323
  %v4843 = vunpack.c.l.b16 %v3324
  %v4844 = vunpack.c.h.b16 %v3324
  %v4845 = vunpack.c.l.b16 %v3325
  %v4846 = vunpack.c.h.b16 %v3325
  %v4847 = vunpack.c.l.b16 %v3326
  %v4848 = vunpack.c.h.b16 %v3326
  %v4849 = vunpack.c.l.b16 %v3327
  %v4850 = vunpack.c.h.b16 %v3327
  %v4851 = vunpack.c.l.b16 %v3328
  %v4852 = vunpack.c.h.b16 %v3328
  %v4853 = vunpack.c.l.b16 %v3329
  %v4854 = vunpack.c.h.b16 %v3329
  %v4855 = vunpack.c.l.b16 %v3330
  %v4856 = vunpack.c.h.b16 %v3330
  %v4857 = vunpack.c.l.b16 %v3331
  %v4858 = vunpack.c.h.b16 %v3331
  %v4859 = vunpack.c.l.b16 %v3332
  %v4860 = vunpack.c.h.b16 %v3332
  %v4861 = vunpack.c.l.b16 %v3333
  %v4862 = vunpack.c.h.b16 %v3333
  %v4863 = vunpack.c.l.b16 %v3334
  %v4864 = vunpack.c.h.b16 %v3334
  %v4865 = vunpack.c.l.b16 %v3335
  %v4866 = vunpack.c.h.b16 %v3335
  %v4867 = vunpack.c.l.b16 %v3336
  %v4868 = vunpack.c.h.b16 %v3336
  %v4869 = vunpack.c.l.b16 %v3337
  %v4870 = vunpack.c.h.b16 %v3337
  %v4871 = vunpack.c.l.b16 %v3338
  %v4872 = vunpack.c.h.b16 %v3338
  %v4873 = vunpack.c.l.b16 %v3339
  %v4874 = vunpack.c.h.b16 %v3339
  %v4875 = vunpack.c.l.b16 %v3340
  %v4876 = vunpack.c.h.b16 %v3340
  %v4877 = vunpack.c.l.b16 %v3341
  %v4878 = vunpack.c.h.b16 %v3341
  %v4879 = vunpack.c.l.b16 %v3342
  %v4880 = vunpack.c.h.b16 %v3342
  %v4881 = vunpack.c.l.b16 %v3343
  %v4882 = vunpack.c.h.b16 %v3343
  %v4883 = vunpack.c.l.b16 %v3344
  %v4884 = vunpack.c.h.b16 %v3344
  %v4885 = vunpack.c.l.b16 %v3345
  %v4886 = vunpack.c.h.b16 %v3345
  %v4887 = vunpack.c.l.b16 %v3346
  %v4888 = vunpack.c.h.b16 %v3346
  %v4889 = vunpack.c.l.b16 %v3347
  %v4890 = vunpack.c.h.b16 %v3347
  %v4891 = vunpack.c.l.b16 %v3348
  %v4892 = vunpack.c.h.b16 %v3348
  %v4893 = vunpack.c.l.b16 %v3349
  %v4894 = vunpack.c.h.b16 %v3349
  %v4895 = vunpack.c.l.b16 %v3350
  %v4896 = vunpack.c.h.b16 %v3350
  %v4897 = vunpack.c.l.b16 %v3351
  %v4898 = vunpack.c.h.b16 %v3351
  %v4899 = vunpack.c.l.b16 %v3352
  %v4900 = vunpack.c.h.b16 %v3352
  %v4901 = vunpack.c.l.b16 %v3353
  %v4902 = vunpack.c.h.b16 %v3353
  %v4903 = vunpack.c.l.b16 %v3354
  %v4904 = vunpack.c.h.b16 %v3354
  %v4905 = vunpack.c.l.b16 %v3355
  %v4906 = vunpack.c.h.b16 %v3355
  %v4907 = vunpack.c.l.b16 %v3356
  %v4908 = vunpack.c.h.b16 %v3356
  %v4909 = vunpack.c.l.b16 %v3357
  %v4910 = vunpack.c.h.b16 %v3357
  %v4911 = vunpack.c.l.b16 %v3358
  %v4912 = vunpack.c.h.b16 %v3358
  %v4913 = vunpack.c.l.b16 %v3359
  %v4914 = vunpack.c.h.b16 %v3359
  %v4915 = vunpack.c.l.b16 %v3360
  %v4916 = vunpack.c.h.b16 %v3360
  %v4917 = vunpack.c.l.b16 %v3361
  %v4918 = vunpack.c.h.b16 %v3361
  %v4919 = vunpack.c.l.b16 %v3362
  %v4920 = vunpack.c.h.b16 %v3362
  %v4921 = vunpack.c.l.b16 %v3363
  %v4922 = vunpack.c.h.b16 %v3363
  %v4923 = vunpack.c.l.b16 %v3364
  %v4924 = vunpack.c.h.b16 %v3364
  %v4925 = vunpack.c.l.b16 %v3365
  %v4926 = vunpack.c.h.b16 %v3365
  %v4927 = vunpack.c.l.b16 %v3366
  %v4928 = vunpack.c.h.b16 %v3366
  %v4929 = vunpack.c.l.b16 %v3367
  %v4930 = vunpack.c.h.b16 %v3367
  %v4931 = vunpack.c.l.b16 %v3368
  %v4932 = vunpack.c.h.b16 %v3368
  %v4933 = vunpack.c.l.b16 %v3369
  %v4934 = vunpack.c.h.b16 %v3369
  %v4935 = vunpack.c.l.b16 %v3370
  %v4936 = vunpack.c.h.b16 %v3370
  %v4937 = vunpack.c.l.b16 %v3371
  %v4938 = vunpack.c.h.b16 %v3371
  %v4939 = vunpack.c.l.b16 %v3372
  %v4940 = vunpack.c.h.b16 %v3372
  %v4941 = vunpack.c.l.b16 %v3373
  %v4942 = vunpack.c.h.b16 %v3373
  %v4943 = vunpack.c.l.b16 %v3374
  %v4944 = vunpack.c.h.b16 %v3374
  %v4945 = vunpack.c.l.b16 %v3375
  %v4946 = vunpack.c.h.b16 %v3375
  %v4947 = vunpack.c.l.b16 %v3376
  %v4948 = vunpack.c.h.b16 %v3376
  %v4949 = vunpack.c.l.b16 %v3377
  %v4950 = vunpack.c.h.b16 %v3377
  %v4951 = vunpack.c.l.b16 %v3378
  %v4952 = vunpack.c.h.b16 %v3378
  %v4953 = vunpack.c.l.b16 %v3379
  %v4954 = vunpack.c.h.b16 %v3379
  %v4955 = vunpack.c.l.b16 %v3380
  %v4956 = vunpack.c.h.b16 %v3380
  %v4957 = vunpack.c.l.b16 %v3381
  %v4958 = vunpack.c.h.b16 %v3381
  %v4959 = vunpack.c.l.b16 %v3382
  %v4960 = vunpack.c.h.b16 %v3382
  %v4961 = vunpack.c.l.b16 %v3383
  %v4962 = vunpack.c.h.b16 %v3383
  %v4963 = vunpack.c.l.b16 %v3384
  %v4964 = vunpack.c.h.b16 %v3384
  %v4965 = vunpack.c.l.b16 %v3385
  %v4966 = vunpack.c.h.b16 %v3385
  %v4967 = vunpack.c.l.b16 %v3386
  %v4968 = vunpack.c.h.b16 %v3386
  %v4969 = vunpack.c.l.b16 %v3387
  %v4970 = vunpack.c.h.b16 %v3387
  %v4971 = vunpack.c.l.b16 %v3388
  %v4972 = vunpack.c.h.b16 %v3388
  %v4973 = vunpack.c.l.b16 %v3389
  %v4974 = vunpack.c.h.b16 %v3389
  %v4975 = vunpack.c.l.b16 %v3390
  %v4976 = vunpack.c.h.b16 %v3390
  %v4977 = vunpack.c.l.b16 %v3391
  %v4978 = vunpack.c.h.b16 %v3391
  %v4979 = vunpack.c.l.b16 %v3392
  %v4980 = vunpack.c.h.b16 %v3392
  %v4981 = vunpack.c.l.b16 %v3393
  %v4982 = vunpack.c.h.b16 %v3393
  %v4983 = vunpack.c.l.b16 %v3394
  %v4984 = vunpack.c.h.b16 %v3394
  %v4985 = vunpack.c.l.b16 %v3395
  %v4986 = vunpack.c.h.b16 %v3395
  %v4987 = vunpack.c.l.b16 %v3396
  %v4988 = vunpack.c.h.b16 %v3396
  %v4989 = vunpack.c.l.b16 %v3397
  %v4990 = vunpack.c.h.b16 %v3397
  %v4991 = vunpack.c.l.b16 %v3398
  %v4992 = vunpack.c.h.b16 %v3398
  %v4993 = vunpack.c.l.b16 %v3399
  %v4994 = vunpack.c.h.b16 %v3399
  %v4995 = vunpack.c.l.b16 %v3400
  %v4996 = vunpack.c.h.b16 %v3400
  %v4997 = vunpack.c.l.b16 %v3401
  %v4998 = vunpack.c.h.b16 %v3401
  %v4999 = vunpack.c.l.b16 %v3402
  %v5000 = vunpack.c.h.b16 %v3402
  %v5001 = vunpack.c.l.b16 %v3403
  %v5002 = vunpack.c.h.b16 %v3403
  %v5003 = vunpack.c.l.b16 %v3404
  %v5004 = vunpack.c.h.b16 %v3404
  %v5005 = vpack.c.b16 %v3989, %v3981
  %v5006 = vpack.c.b16 %v3990, %v3982
  %v5007 = vpack.c.b16 %v3991, %v3983
  %v5008 = vpack.c.b16 %v3992, %v3984
  %v5009 = vpack.c.b16 %v3993, %v3985
  %v5010 = vpack.c.b16 %v3994, %v3986
  %v5011 = vpack.c.b16 %v3995, %v3987
  %v5012 = vpack.c.b16 %v3996, %v3988
  %v5013 = vpack.c.b16 %v4005, %v3997
  %v5014 = vpack.c.b16 %v4006, %v3998
  %v5015 = vpack.c.b16 %v4007, %v3999
  %v5016 = vpack.c.b16 %v4008, %v4000
  %v5017 = vpack.c.b16 %v4009, %v4001
  %v5018 = vpack.c.b16 %v4010, %v4002
  %v5019 = vpack.c.b16 %v4011, %v4003
  %v5020 = vpack.c.b16 %v4012, %v4004
  %v5021 = vpack.c.b16 %v4021, %v4013
  %v5022 = vpack.c.b16 %v4022, %v4014
  %v5023 = vpack.c.b16 %v4023, %v4015
  %v5024 = vpack.c.b16 %v4024, %v4016
  %v5025 = vpack.c.b16 %v4025, %v4017
  %v5026 = vpack.c.b16 %v4026, %v4018
  %v5027 = vpack.c.b16 %v4027, %v4019
  %v5028 = vpack.c.b16 %v4028, %v4020
  %v5029 = vpack.c.b16 %v4037, %v4029
  %v5030 = vpack.c.b16 %v4038, %v4030
  %v5031 = vpack.c.b16 %v4039, %v4031
  %v5032 = vpack.c.b16 %v4040, %v4032
  %v5033 = vpack.c.b16 %v4041, %v4033
  %v5034 = vpack.c.b16 %v4042, %v4034
  %v5035 = vpack.c.b16 %v4043, %v4035
  %v5036 = vpack.c.b16 %v4044, %v4036
  %v5037 = vpack.c.b16 %v4053, %v4045
  %v5038 = vpack.c.b16 %v4054, %v4046
  %v5039 = vpack.c.b16 %v4055, %v4047
  %v5040 = vpack.c.b16 %v4056, %v4048
  %v5041 = vpack.c.b16 %v4057, %v4049
  %v5042 = vpack.c.b16 %v4058, %v4050
  %v5043 = vpack.c.b16 %v4059, %v4051
  %v5044 = vpack.c.b16 %v4060, %v4052
  %v5045 = vpack.c.b16 %v4069, %v4061
  %v5046 = vpack.c.b16 %v4070, %v4062
  %v5047 = vpack.c.b16 %v4071, %v4063
  %v5048 = vpack.c.b16 %v4072, %v4064
  %v5049 = vpack.c.b16 %v4073, %v4065
  %v5050 = vpack.c.b16 %v4074, %v4066
  %v5051 = vpack.c.b16 %v4075, %v4067
  %v5052 = vpack.c.b16 %v4076, %v4068
  %v5053 = vpack.c.b16 %v4085, %v4077
  %v5054 = vpack.c.b16 %v4086, %v4078
  %v5055 = vpack.c.b16 %v4087, %v4079
  %v5056 = vpack.c.b16 %v4088, %v4080
  %v5057 = vpack.c.b16 %v4089, %v4081
  %v5058 = vpack.c.b16 %v4090, %v4082
  %v5059 = vpack.c.b16 %v4091, %v4083
  %v5060 = vpack.c.b16 %v4092, %v4084
  %v5061 = vpack.c.b16 %v4101, %v4093
  %v5062 = vpack.c.b16 %v4102, %v4094
  %v5063 = vpack.c.b16 %v4103, %v4095
  %v5064 = vpack.c.b16 %v4104, %v4096
  %v5065 = vpack.c.b16 %v4105, %v4097
  %v5066 = vpack.c.b16 %v4106, %v4098
  %v5067 = vpack.c.b16 %v4107, %v4099
  %v5068 = vpack.c.b16 %v4108, %v4100
  %v5069 = vpack.c.b16 %v4117, %v4109
  %v5070 = vpack.c.b16 %v4118, %v4110
  %v5071 = vpack.c.b16 %v4119, %v4111
  %v5072 = vpack.c.b16 %v4120, %v4112
  %v5073 = vpack.c.b16 %v4121, %v4113
  %v5074 = vpack.c.b16 %v4122, %v4114
  %v5075 = vpack.c.b16 %v4123, %v4115
  %v5076 = vpack.c.b16 %v4124, %v4116
  %v5077 = vpack.c.b16 %v4133, %v4125
  %v5078 = vpack.c.b16 %v4134, %v4126
  %v5079 = vpack.c.b16 %v4135, %v4127
  %v5080 = vpack.c.b16 %v4136, %v4128
  %v5081 = vpack.c.b16 %v4137, %v4129
  %v5082 = vpack.c.b16 %v4138, %v4130
  %v5083 = vpack.c.b16 %v4139, %v4131
  %v5084 = vpack.c.b16 %v4140, %v4132
  %v5085 = vpack.c.b16 %v4149, %v4141
  %v5086 = vpack.c.b16 %v4150, %v4142
  %v5087 = vpack.c.b16 %v4151, %v4143
  %v5088 = vpack.c.b16 %v4152, %v4144
  %v5089 = vpack.c.b16 %v4153, %v4145
  %v5090 = vpack.c.b16 %v4154, %v4146
  %v5091 = vpack.c.b16 %v4155, %v4147
  %v5092 = vpack.c.b16 %v4156, %v4148
  %v5093 = vpack.c.b16 %v4165, %v4157
  %v5094 = vpack.c.b16 %v4166, %v4158
  %v5095 = vpack.c.b16 %v4167, %v4159
  %v5096 = vpack.c.b16 %v4168, %v4160
  %v5097 = vpack.c.b16 %v4169, %v4161
  %v5098 = vpack.c.b16 %v4170, %v4162
  %v5099 = vpack.c.b16 %v4171, %v4163
  %v5100 = vpack.c.b16 %v4172, %v4164
  %v5101 = vpack.c.b16 %v4181, %v4173
  %v5102 = vpack.c.b16 %v4182, %v4174
  %v5103 = vpack.c.b16 %v4183, %v4175
  %v5104 = vpack.c.b16 %v4184, %v4176
  %v5105 = vpack.c.b16 %v4185, %v4177
  %v5106 = vpack.c.b16 %v4186, %v4178
  %v5107 = vpack.c.b16 %v4187, %v4179
  %v5108 = vpack.c.b16 %v4188, %v4180
  %v5109 = vpack.c.b16 %v4197, %v4189
  %v5110 = vpack.c.b16 %v4198, %v4190
  %v5111 = vpack.c.b16 %v4199, %v4191
  %v5112 = vpack.c.b16 %v4200, %v4192
  %v5113 = vpack.c.b16 %v4201, %v4193
  %v5114 = vpack.c.b16 %v4202, %v4194
  %v5115 = vpack.c.b16 %v4203, %v4195
  %v5116 = vpack.c.b16 %v4204, %v4196
  %v5117 = vpack.c.b16 %v4213, %v4205
  %v5118 = vpack.c.b16 %v4214, %v4206
  %v5119 = vpack.c.b16 %v4215, %v4207
  %v5120 = vpack.c.b16 %v4216, %v4208
  %v5121 = vpack.c.b16 %v4217, %v4209
  %v5122 = vpack.c.b16 %v4218, %v4210
  %v5123 = vpack.c.b16 %v4219, %v4211
  %v5124 = vpack.c.b16 %v4220, %v4212
  %v5125 = vpack.c.b16 %v4229, %v4221
  %v5126 = vpack.c.b16 %v4230, %v4222
  %v5127 = vpack.c.b16 %v4231, %v4223
  %v5128 = vpack.c.b16 %v4232, %v4224
  %v5129 = vpack.c.b16 %v4233, %v4225
  %v5130 = vpack.c.b16 %v4234, %v4226
  %v5131 = vpack.c.b16 %v4235, %v4227
  %v5132 = vpack.c.b16 %v4236, %v4228
  %v5133 = vpack.c.b16 %v4245, %v4237
  %v5134 = vpack.c.b16 %v4246, %v4238
  %v5135 = vpack.c.b16 %v4247, %v4239
  %v5136 = vpack.c.b16 %v4248, %v4240
  %v5137 = vpack.c.b16 %v4249, %v4241
  %v5138 = vpack.c.b16 %v4250, %v4242
  %v5139 = vpack.c.b16 %v4251, %v4243
  %v5140 = vpack.c.b16 %v4252, %v4244
  %v5141 = vpack.c.b16 %v4261, %v4253
  %v5142 = vpack.c.b16 %v4262, %v4254
  %v5143 = vpack.c.b16 %v4263, %v4255
  %v5144 = vpack.c.b16 %v4264, %v4256
  %v5145 = vpack.c.b16 %v4265, %v4257
  %v5146 = vpack.c.b16 %v4266, %v4258
  %v5147 = vpack.c.b16 %v4267, %v4259
  %v5148 = vpack.c.b16 %v4268, %v4260
  %v5149 = vpack.c.b16 %v4277, %v4269
  %v5150 = vpack.c.b16 %v4278, %v4270
  %v5151 = vpack.c.b16 %v4279, %v4271
  %v5152 = vpack.c.b16 %v4280, %v4272
  %v5153 = vpack.c.b16 %v4281, %v4273
  %v5154 = vpack.c.b16 %v4282, %v4274
  %v5155 = vpack.c.b16 %v4283, %v4275
  %v5156 = vpack.c.b16 %v4284, %v4276
  %v5157 = vpack.c.b16 %v4293, %v4285
  %v5158 = vpack.c.b16 %v4294, %v4286
  %v5159 = vpack.c.b16 %v4295, %v4287
  %v5160 = vpack.c.b16 %v4296, %v4288
  %v5161 = vpack.c.b16 %v4297, %v4289
  %v5162 = vpack.c.b16 %v4298, %v4290
  %v5163 = vpack.c.b16 %v4299, %v4291
  %v5164 = vpack.c.b16 %v4300, %v4292
  %v5165 = vpack.c.b16 %v4309, %v4301
  %v5166 = vpack.c.b16 %v4310, %v4302
  %v5167 = vpack.c.b16 %v4311, %v4303
  %v5168 = vpack.c.b16 %v4312, %v4304
  %v5169 = vpack.c.b16 %v4313, %v4305
  %v5170 = vpack.c.b16 %v4314, %v4306
  %v5171 = vpack.c.b16 %v4315, %v4307
  %v5172 = vpack.c.b16 %v4316, %v4308
  %v5173 = vpack.c.b16 %v4325, %v4317
  %v5174 = vpack.c.b16 %v4326, %v4318
  %v5175 = vpack.c.b16 %v4327, %v4319
  %v5176 = vpack.c.b16 %v4328, %v4320
  %v5177 = vpack.c.b16 %v4329, %v4321
  %v5178 = vpack.c.b16 %v4330, %v4322
  %v5179 = vpack.c.b16 %v4331, %v4323
  %v5180 = vpack.c.b16 %v4332, %v4324
  %v5181 = vpack.c.b16 %v4341, %v4333
  %v5182 = vpack.c.b16 %v4342, %v4334
  %v5183 = vpack.c.b16 %v4343, %v4335
  %v5184 = vpack.c.b16 %v4344, %v4336
  %v5185 = vpack.c.b16 %v4345, %v4337
  %v5186 = vpack.c.b16 %v4346, %v4338
  %v5187 = vpack.c.b16 %v4347, %v4339
  %v5188 = vpack.c.b16 %v4348, %v4340
  %v5189 = vpack.c.b16 %v4357, %v4349
  %v5190 = vpack.c.b16 %v4358, %v4350
  %v5191 = vpack.c.b16 %v4359, %v4351
  %v5192 = vpack.c.b16 %v4360, %v4352
  %v5193 = vpack.c.b16 %v4361, %v4353
  %v5194 = vpack.c.b16 %v4362, %v4354
  %v5195 = vpack.c.b16 %v4363, %v4355
  %v5196 = vpack.c.b16 %v4364, %v4356
  %v5197 = vpack.c.b16 %v4373, %v4365
  %v5198 = vpack.c.b16 %v4374, %v4366
  %v5199 = vpack.c.b16 %v4375, %v4367
  %v5200 = vpack.c.b16 %v4376, %v4368
  %v5201 = vpack.c.b16 %v4377, %v4369
  %v5202 = vpack.c.b16 %v4378, %v4370
  %v5203 = vpack.c.b16 %v4379, %v4371
  %v5204 = vpack.c.b16 %v4380, %v4372
  %v5205 = vpack.c.b16 %v4389, %v4381
  %v5206 = vpack.c.b16 %v4390, %v4382
  %v5207 = vpack.c.b16 %v4391, %v4383
  %v5208 = vpack.c.b16 %v4392, %v4384
  %v5209 = vpack.c.b16 %v4393, %v4385
  %v5210 = vpack.c.b16 %v4394, %v4386
  %v5211 = vpack.c.b16 %v4395, %v4387
  %v5212 = vpack.c.b16 %v4396, %v4388
  %v5213 = vpack.c.b16 %v4405, %v4397
  %v5214 = vpack.c.b16 %v4406, %v4398
  %v5215 = vpack.c.b16 %v4407, %v4399
  %v5216 = vpack.c.b16 %v4408, %v4400
  %v5217 = vpack.c.b16 %v4409, %v4401
  %v5218 = vpack.c.b16 %v4410, %v4402
  %v5219 = vpack.c.b16 %v4411, %v4403
  %v5220 = vpack.c.b16 %v4412, %v4404
  %v5221 = vpack.c.b16 %v4421, %v4413
  %v5222 = vpack.c.b16 %v4422, %v4414
  %v5223 = vpack.c.b16 %v4423, %v4415
  %v5224 = vpack.c.b16 %v4424, %v4416
  %v5225 = vpack.c.b16 %v4425, %v4417
  %v5226 = vpack.c.b16 %v4426, %v4418
  %v5227 = vpack.c.b16 %v4427, %v4419
  %v5228 = vpack.c.b16 %v4428, %v4420
  %v5229 = vpack.c.b16 %v4437, %v4429
  %v5230 = vpack.c.b16 %v4438, %v4430
  %v5231 = vpack.c.b16 %v4439, %v4431
  %v5232 = vpack.c.b16 %v4440, %v4432
  %v5233 = vpack.c.b16 %v4441, %v4433
  %v5234 = vpack.c.b16 %v4442, %v4434
  %v5235 = vpack.c.b16 %v4443, %v4435
  %v5236 = vpack.c.b16 %v4444, %v4436
  %v5237 = vpack.c.b16 %v4453, %v4445
  %v5238 = vpack.c.b16 %v4454, %v4446
  %v5239 = vpack.c.b16 %v4455, %v4447
  %v5240 = vpack.c.b16 %v4456, %v4448
  %v5241 = vpack.c.b16 %v4457, %v4449
  %v5242 = vpack.c.b16 %v4458, %v4450
  %v5243 = vpack.c.b16 %v4459, %v4451
  %v5244 = vpack.c.b16 %v4460, %v4452
  %v5245 = vpack.c.b16 %v4469, %v4461
  %v5246 = vpack.c.b16 %v4470, %v4462
  %v5247 = vpack.c.b16 %v4471, %v4463
  %v5248 = vpack.c.b16 %v4472, %v4464
  %v5249 = vpack.c.b16 %v4473, %v4465
  %v5250 = vpack.c.b16 %v4474, %v4466
  %v5251 = vpack.c.b16 %v4475, %v4467
  %v5252 = vpack.c.b16 %v4476, %v4468
  %v5253 = vpack.c.b16 %v4485, %v4477
  %v5254 = vpack.c.b16 %v4486, %v4478
  %v5255 = vpack.c.b16 %v4487, %v4479
  %v5256 = vpack.c.b16 %v4488, %v4480
  %v5257 = vpack.c.b16 %v4489, %v4481
  %v5258 = vpack.c.b16 %v4490, %v4482
  %v5259 = vpack.c.b16 %v4491, %v4483
  %v5260 = vpack.c.b16 %v4492, %v4484
  %v5261 = vpack.c.b16 %v4501, %v4493
  %v5262 = vpack.c.b16 %v4502, %v4494
  %v5263 = vpack.c.b16 %v4503, %v4495
  %v5264 = vpack.c.b16 %v4504, %v4496
  %v5265 = vpack.c.b16 %v4505, %v4497
  %v5266 = vpack.c.b16 %v4506, %v4498
  %v5267 = vpack.c.b16 %v4507, %v4499
  %v5268 = vpack.c.b16 %v4508, %v4500
  %v5269 = vpack.c.b16 %v4517, %v4509
  %v5270 = vpack.c.b16 %v4518, %v4510
  %v5271 = vpack.c.b16 %v4519, %v4511
  %v5272 = vpack.c.b16 %v4520, %v4512
  %v5273 = vpack.c.b16 %v4521, %v4513
  %v5274 = vpack.c.b16 %v4522, %v4514
  %v5275 = vpack.c.b16 %v4523, %v4515
  %v5276 = vpack.c.b16 %v4524, %v4516
  %v5277 = vpack.c.b16 %v4533, %v4525
  %v5278 = vpack.c.b16 %v4534, %v4526
  %v5279 = vpack.c.b16 %v4535, %v4527
  %v5280 = vpack.c.b16 %v4536, %v4528
  %v5281 = vpack.c.b16 %v4537, %v4529
  %v5282 = vpack.c.b16 %v4538, %v4530
  %v5283 = vpack.c.b16 %v4539, %v4531
  %v5284 = vpack.c.b16 %v4540, %v4532
  %v5285 = vpack.c.b16 %v4549, %v4541
  %v5286 = vpack.c.b16 %v4550, %v4542
  %v5287 = vpack.c.b16 %v4551, %v4543
  %v5288 = vpack.c.b16 %v4552, %v4544
  %v5289 = vpack.c.b16 %v4553, %v4545
  %v5290 = vpack.c.b16 %v4554, %v4546
  %v5291 = vpack.c.b16 %v4555, %v4547
  %v5292 = vpack.c.b16 %v4556, %v4548
  %v5293 = vpack.c.b16 %v4565, %v4557
  %v5294 = vpack.c.b16 %v4566, %v4558
  %v5295 = vpack.c.b16 %v4567, %v4559
  %v5296 = vpack.c.b16 %v4568, %v4560
  %v5297 = vpack.c.b16 %v4569, %v4561
  %v5298 = vpack.c.b16 %v4570, %v4562
  %v5299 = vpack.c.b16 %v4571, %v4563
  %v5300 = vpack.c.b16 %v4572, %v4564
  %v5301 = vpack.c.b16 %v4581, %v4573
  %v5302 = vpack.c.b16 %v4582, %v4574
  %v5303 = vpack.c.b16 %v4583, %v4575
  %v5304 = vpack.c.b16 %v4584, %v4576
  %v5305 = vpack.c.b16 %v4585, %v4577
  %v5306 = vpack.c.b16 %v4586, %v4578
  %v5307 = vpack.c.b16 %v4587, %v4579
  %v5308 = vpack.c.b16 %v4588, %v4580
  %v5309 = vpack.c.b16 %v4597, %v4589
  %v5310 = vpack.c.b16 %v4598, %v4590
  %v5311 = vpack.c.b16 %v4599, %v4591
  %v5312 = vpack.c.b16 %v4600, %v4592
  %v5313 = vpack.c.b16 %v4601, %v4593
  %v5314 = vpack.c.b16 %v4602, %v4594
  %v5315 = vpack.c.b16 %v4603, %v4595
  %v5316 = vpack.c.b16 %v4604, %v4596
  %v5317 = vpack.c.b16 %v4613, %v4605
  %v5318 = vpack.c.b16 %v4614, %v4606
  %v5319 = vpack.c.b16 %v4615, %v4607
  %v5320 = vpack.c.b16 %v4616, %v4608
  %v5321 = vpack.c.b16 %v4617, %v4609
  %v5322 = vpack.c.b16 %v4618, %v4610
  %v5323 = vpack.c.b16 %v4619, %v4611
  %v5324 = vpack.c.b16 %v4620, %v4612
  %v5325 = vpack.c.b16 %v4629, %v4621
  %v5326 = vpack.c.b16 %v4630, %v4622
  %v5327 = vpack.c.b16 %v4631, %v4623
  %v5328 = vpack.c.b16 %v4632, %v4624
  %v5329 = vpack.c.b16 %v4633, %v4625
  %v5330 = vpack.c.b16 %v4634, %v4626
  %v5331 = vpack.c.b16 %v4635, %v4627
  %v5332 = vpack.c.b16 %v4636, %v4628
  %v5333 = vpack.c.b16 %v4645, %v4637
  %v5334 = vpack.c.b16 %v4646, %v4638
  %v5335 = vpack.c.b16 %v4647, %v4639
  %v5336 = vpack.c.b16 %v4648, %v4640
  %v5337 = vpack.c.b16 %v4649, %v4641
  %v5338 = vpack.c.b16 %v4650, %v4642
  %v5339 = vpack.c.b16 %v4651, %v4643
  %v5340 = vpack.c.b16 %v4652, %v4644
  %v5341 = vpack.c.b16 %v4661, %v4653
  %v5342 = vpack.c.b16 %v4662, %v4654
  %v5343 = vpack.c.b16 %v4663, %v4655
  %v5344 = vpack.c.b16 %v4664, %v4656
  %v5345 = vpack.c.b16 %v4665, %v4657
  %v5346 = vpack.c.b16 %v4666, %v4658
  %v5347 = vpack.c.b16 %v4667, %v4659
  %v5348 = vpack.c.b16 %v4668, %v4660
  %v5349 = vpack.c.b16 %v4677, %v4669
  %v5350 = vpack.c.b16 %v4678, %v4670
  %v5351 = vpack.c.b16 %v4679, %v4671
  %v5352 = vpack.c.b16 %v4680, %v4672
  %v5353 = vpack.c.b16 %v4681, %v4673
  %v5354 = vpack.c.b16 %v4682, %v4674
  %v5355 = vpack.c.b16 %v4683, %v4675
  %v5356 = vpack.c.b16 %v4684, %v4676
  %v5357 = vpack.c.b16 %v4693, %v4685
  %v5358 = vpack.c.b16 %v4694, %v4686
  %v5359 = vpack.c.b16 %v4695, %v4687
  %v5360 = vpack.c.b16 %v4696, %v4688
  %v5361 = vpack.c.b16 %v4697, %v4689
  %v5362 = vpack.c.b16 %v4698, %v4690
  %v5363 = vpack.c.b16 %v4699, %v4691
  %v5364 = vpack.c.b16 %v4700, %v4692
  %v5365 = vpack.c.b16 %v4709, %v4701
  %v5366 = vpack.c.b16 %v4710, %v4702
  %v5367 = vpack.c.b16 %v4711, %v4703
  %v5368 = vpack.c.b16 %v4712, %v4704
  %v5369 = vpack.c.b16 %v4713, %v4705
  %v5370 = vpack.c.b16 %v4714, %v4706
  %v5371 = vpack.c.b16 %v4715, %v4707
  %v5372 = vpack.c.b16 %v4716, %v4708
  %v5373 = vpack.c.b16 %v4725, %v4717
  %v5374 = vpack.c.b16 %v4726, %v4718
  %v5375 = vpack.c.b16 %v4727, %v4719
  %v5376 = vpack.c.b16 %v4728, %v4720
  %v5377 = vpack.c.b16 %v4729, %v4721
  %v5378 = vpack.c.b16 %v4730, %v4722
  %v5379 = vpack.c.b16 %v4731, %v4723
  %v5380 = vpack.c.b16 %v4732, %v4724
  %v5381 = vpack.c.b16 %v4741, %v4733
  %v5382 = vpack.c.b16 %v4742, %v4734
  %v5383 = vpack.c.b16 %v4743, %v4735
  %v5384 = vpack.c.b16 %v4744, %v4736
  %v5385 = vpack.c.b16 %v4745, %v4737
  %v5386 = vpack.c.b16 %v4746, %v4738
  %v5387 = vpack.c.b16 %v4747, %v4739
  %v5388 = vpack.c.b16 %v4748, %v4740
  %v5389 = vpack.c.b16 %v4757, %v4749
  %v5390 = vpack.c.b16 %v4758, %v4750
  %v5391 = vpack.c.b16 %v4759, %v4751
  %v5392 = vpack.c.b16 %v4760, %v4752
  %v5393 = vpack.c.b16 %v4761, %v4753
  %v5394 = vpack.c.b16 %v4762, %v4754
  %v5395 = vpack.c.b16 %v4763, %v4755
  %v5396 = vpack.c.b16 %v4764, %v4756
  %v5397 = vpack.c.b16 %v4773, %v4765
  %v5398 = vpack.c.b16 %v4774, %v4766
  %v5399 = vpack.c.b16 %v4775, %v4767
  %v5400 = vpack.c.b16 %v4776, %v4768
  %v5401 = vpack.c.b16 %v4777, %v4769
  %v5402 = vpack.c.b16 %v4778, %v4770
  %v5403 = vpack.c.b16 %v4779, %v4771
  %v5404 = vpack.c.b16 %v4780, %v4772
  %v5405 = vpack.c.b16 %v4789, %v4781
  %v5406 = vpack.c.b16 %v4790, %v4782
  %v5407 = vpack.c.b16 %v4791, %v4783
  %v5408 = vpack.c.b16 %v4792, %v4784
  %v5409 = vpack.c.b16 %v4793, %v4785
  %v5410 = vpack.c.b16 %v4794, %v4786
  %v5411 = vpack.c.b16 %v4795, %v4787
  %v5412 = vpack.c.b16 %v4796, %v4788
  %v5413 = vpack.c.b16 %v4805, %v4797
  %v5414 = vpack.c.b16 %v4806, %v4798
  %v5415 = vpack.c.b16 %v4807, %v4799
  %v5416 = vpack.c.b16 %v4808, %v4800
  %v5417 = vpack.c.b16 %v4809, %v4801
  %v5418 = vpack.c.b16 %v4810, %v4802
  %v5419 = vpack.c.b16 %v4811, %v4803
  %v5420 = vpack.c.b16 %v4812, %v4804
  %v5421 = vpack.c.b16 %v4821, %v4813
  %v5422 = vpack.c.b16 %v4822, %v4814
  %v5423 = vpack.c.b16 %v4823, %v4815
  %v5424 = vpack.c.b16 %v4824, %v4816
  %v5425 = vpack.c.b16 %v4825, %v4817
  %v5426 = vpack.c.b16 %v4826, %v4818
  %v5427 = vpack.c.b16 %v4827, %v4819
  %v5428 = vpack.c.b16 %v4828, %v4820
  %v5429 = vpack.c.b16 %v4837, %v4829
  %v5430 = vpack.c.b16 %v4838, %v4830
  %v5431 = vpack.c.b16 %v4839, %v4831
  %v5432 = vpack.c.b16 %v4840, %v4832
  %v5433 = vpack.c.b16 %v4841, %v4833
  %v5434 = vpack.c.b16 %v4842, %v4834
  %v5435 = vpack.c.b16 %v4843, %v4835
  %v5436 = vpack.c.b16 %v4844, %v4836
  %v5437 = vpack.c.b16 %v4853, %v4845
  %v5438 = vpack.c.b16 %v4854, %v4846
  %v5439 = vpack.c.b16 %v4855, %v4847
  %v5440 = vpack.c.b16 %v4856, %v4848
  %v5441 = vpack.c.b16 %v4857, %v4849
  %v5442 = vpack.c.b16 %v4858, %v4850
  %v5443 = vpack.c.b16 %v4859, %v4851
  %v5444 = vpack.c.b16 %v4860, %v4852
  %v5445 = vpack.c.b16 %v4869, %v4861
  %v5446 = vpack.c.b16 %v4870, %v4862
  %v5447 = vpack.c.b16 %v4871, %v4863
  %v5448 = vpack.c.b16 %v4872, %v4864
  %v5449 = vpack.c.b16 %v4873, %v4865
  %v5450 = vpack.c.b16 %v4874, %v4866
  %v5451 = vpack.c.b16 %v4875, %v4867
  %v5452 = vpack.c.b16 %v4876, %v4868
  %v5453 = vpack.c.b16 %v4885, %v4877
  %v5454 = vpack.c.b16 %v4886, %v4878
  %v5455 = vpack.c.b16 %v4887, %v4879
  %v5456 = vpack.c.b16 %v4888, %v4880
  %v5457 = vpack.c.b16 %v4889, %v4881
  %v5458 = vpack.c.b16 %v4890, %v4882
  %v5459 = vpack.c.b16 %v4891, %v4883
  %v5460 = vpack.c.b16 %v4892, %v4884
  %v5461 = vpack.c.b16 %v4901, %v4893
  %v5462 = vpack.c.b16 %v4902, %v4894
  %v5463 = vpack.c.b16 %v4903, %v4895
  %v5464 = vpack.c.b16 %v4904, %v4896
  %v5465 = vpack.c.b16 %v4905, %v4897
  %v5466 = vpack.c.b16 %v4906, %v4898
  %v5467 = vpack.c.b16 %v4907, %v4899
  %v5468 = vpack.c.b16 %v4908, %v4900
  %v5469 = vpack.c.b16 %v4917, %v4909
  %v5470 = vpack.c.b16 %v4918, %v4910
  %v5471 = vpack.c.b16 %v4919, %v4911
  %v5472 = vpack.c.b16 %v4920, %v4912
  %v5473 = vpack.c.b16 %v4921, %v4913
  %v5474 = vpack.c.b16 %v4922, %v4914
  %v5475 = vpack.c.b16 %v4923, %v4915
  %v5476 = vpack.c.b16 %v4924, %v4916
  %v5477 = vpack.c.b16 %v4933, %v4925
  %v5478 = vpack.c.b16 %v4934, %v4926
  %v5479 = vpack.c.b16 %v4935, %v4927
  %v5480 = vpack.c.b16 %v4936, %v4928
  %v5481 = vpack.c.b16 %v4937, %v4929
  %v5482 = vpack.c.b16 %v4938, %v4930
  %v5483 = vpack.c.b16 %v4939, %v4931
  %v5484 = vpack.c.b16 %v4940, %v4932
  %v5485 = vpack.c.b16 %v4949, %v4941
  %v5486 = vpack.c.b16 %v4950, %v4942
  %v5487 = vpack.c.b16 %v4951, %v4943
  %v5488 = vpack.c.b16 %v4952, %v4944
  %v5489 = vpack.c.b16 %v4953, %v4945
  %v5490 = vpack.c.b16 %v4954, %v4946
  %v5491 = vpack.c.b16 %v4955, %v4947
  %v5492 = vpack.c.b16 %v4956, %v4948
  %v5493 = vpack.c.b16 %v4965, %v4957
  %v5494 = vpack.c.b16 %v4966, %v4958
  %v5495 = vpack.c.b16 %v4967, %v4959
  %v5496 = vpack.c.b16 %v4968, %v4960
  %v5497 = vpack.c.b16 %v4969, %v4961
  %v5498 = vpack.c.b16 %v4970, %v4962
  %v5499 = vpack.c.b16 %v4971, %v4963
  %v5500 = vpack.c.b16 %v4972, %v4964
  %v5501 = vpack.c.b16 %v4981, %v4973
  %v5502 = vpack.c.b16 %v4982, %v4974
  %v5503 = vpack.c.b16 %v4983, %v4975
  %v5504 = vpack.c.b16 %v4984, %v4976
  %v5505 = vpack.c.b16 %v4985, %v4977
  %v5506 = vpack.c.b16 %v4986, %v4978
  %v5507 = vpack.c.b16 %v4987, %v4979
  %v5508 = vpack.c.b16 %v4988, %v4980
  %v5509 = vpack.c.b16 %v4997, %v4989
  %v5510 = vpack.c.b16 %v4998, %v4990
  %v5511 = vpack.c.b16 %v4999, %v4991
  %v5512 = vpack.c.b16 %v5000, %v4992
  %v5513 = vpack.c.b16 %v5001, %v4993
  %v5514 = vpack.c.b16 %v5002, %v4994
  %v5515 = vpack.c.b16 %v5003, %v4995
  %v5516 = vpack.c.b16 %v5004, %v4996
  %6029 = vmatprep.subr.bf16.mxu0 %v5006
  %6030 = vmatpush1.bf16.msra.mxu0 %v5005
  %6031 = vmatprep.subr.bf16.mxu0 %v5014
  %6032 = vmatpush1.bf16.msra.mxu0 %v5013
  %6033 = vmatprep.subr.bf16.mxu0 %v5022
  %6034 = vmatpush1.bf16.msra.mxu0 %v5021
  %6035 = vmatprep.subr.bf16.mxu0 %v5030
  %6036 = vmatpush1.bf16.msra.mxu0 %v5029
  %6037 = vmatprep.subr.bf16.mxu0 %v5038
  %6038 = vmatpush1.bf16.msra.mxu0 %v5037
  %6039 = vmatprep.subr.bf16.mxu0 %v5046
  %6040 = vmatpush1.bf16.msra.mxu0 %v5045
  %6041 = vmatprep.subr.bf16.mxu0 %v5054
  %6042 = vmatpush1.bf16.msra.mxu0 %v5053
  %6043 = vmatprep.subr.bf16.mxu0 %v5062
  %6044 = vmatpush1.bf16.msra.mxu0 %v5061
  %6045 = vmatprep.subr.bf16.mxu0 %v5070
  %6046 = vmatpush1.bf16.msra.mxu0 %v5069
  %6047 = vmatprep.subr.bf16.mxu0 %v5078
  %6048 = vmatpush1.bf16.msra.mxu0 %v5077
  %6049 = vmatprep.subr.bf16.mxu0 %v5086
  %6050 = vmatpush1.bf16.msra.mxu0 %v5085
  %6051 = vmatprep.subr.bf16.mxu0 %v5094
  %6052 = vmatpush1.bf16.msra.mxu0 %v5093
  %6053 = vmatprep.subr.bf16.mxu0 %v5102
  %6054 = vmatpush1.bf16.msra.mxu0 %v5101
  %6055 = vmatprep.subr.bf16.mxu0 %v5110
  %6056 = vmatpush1.bf16.msra.mxu0 %v5109
  %6057 = vmatprep.subr.bf16.mxu0 %v5118
  %6058 = vmatpush1.bf16.msra.mxu0 %v5117
  %6059 = vmatprep.subr.bf16.mxu0 %v5126
  %6060 = vmatpush1.bf16.msra.mxu0 %v5125
  %6061 = vmatprep.mubr.bf16.mxu0 %v3438
  %6062 = vmatmul.mubr.bf16.gmra.mrb[0].mxu0 %v3437
  %v6063 = vpop.f32.mrb[0].mxu0
  %v6064 = vadd.f32 0.0, %v6063
  %v6065 = vpop.f32.mrb[0].mxu0
  %v6066 = vadd.f32 0.0, %v6065
  %v6067 = vpop.f32.mrb[0].mxu0
  %v6068 = vadd.f32 0.0, %v6067
  %v6069 = vpop.f32.mrb[0].mxu0
  %v6070 = vadd.f32 0.0, %v6069
  %6071 = vmatprep.mubr.bf16.mxu0 %v3446
  %6072 = vmatmul.mubr.bf16.gmra.mrb[0].mxu0 %v3445
  %v6073 = vpop.f32.mrb[0].mxu0
  %v6074 = vadd.f32 0.0, %v6073
  %v6075 = vpop.f32.mrb[0].mxu0
  %v6076 = vadd.f32 0.0, %v6075
  %v6077 = vpop.f32.mrb[0].mxu0
  %v6078 = vadd.f32 0.0, %v6077
  %v6079 = vpop.f32.mrb[0].mxu0
  %v6080 = vadd.f32 0.0, %v6079
  %6081 = vdwg.mxu0
  %6082 = vmatprep.subr.bf16.mxu0 %v5134
  %6083 = vmatpush1.bf16.msra.mxu0 %v5133
  %6084 = vmatprep.subr.bf16.mxu0 %v5142
  %6085 = vmatpush1.bf16.msra.mxu0 %v5141
  %6086 = vmatprep.subr.bf16.mxu0 %v5150
  %6087 = vmatpush1.bf16.msra.mxu0 %v5149
  %6088 = vmatprep.subr.bf16.mxu0 %v5158
  %6089 = vmatpush1.bf16.msra.mxu0 %v5157
  %6090 = vmatprep.subr.bf16.mxu0 %v5166
  %6091 = vmatpush1.bf16.msra.mxu0 %v5165
  %6092 = vmatprep.subr.bf16.mxu0 %v5174
  %6093 = vmatpush1.bf16.msra.mxu0 %v5173
  %6094 = vmatprep.subr.bf16.mxu0 %v5182
  %6095 = vmatpush1.bf16.msra.mxu0 %v5181
  %6096 = vmatprep.subr.bf16.mxu0 %v5190
  %6097 = vmatpush1.bf16.msra.mxu0 %v5189
  %6098 = vmatprep.subr.bf16.mxu0 %v5198
  %6099 = vmatpush1.bf16.msra.mxu0 %v5197
  %6100 = vmatprep.subr.bf16.mxu0 %v5206
  %6101 = vmatpush1.bf16.msra.mxu0 %v5205
  %6102 = vmatprep.subr.bf16.mxu0 %v5214
  %6103 = vmatpush1.bf16.msra.mxu0 %v5213
  %6104 = vmatprep.subr.bf16.mxu0 %v5222
  %6105 = vmatpush1.bf16.msra.mxu0 %v5221
  %6106 = vmatprep.subr.bf16.mxu0 %v5230
  %6107 = vmatpush1.bf16.msra.mxu0 %v5229
  %6108 = vmatprep.subr.bf16.mxu0 %v5238
  %6109 = vmatpush1.bf16.msra.mxu0 %v5237
  %6110 = vmatprep.subr.bf16.mxu0 %v5246
  %6111 = vmatpush1.bf16.msra.mxu0 %v5245
  %6112 = vmatprep.subr.bf16.mxu0 %v5254
  %6113 = vmatpush1.bf16.msra.mxu0 %v5253
  %6114 = vmatprep.mubr.bf16.mxu0 %v3440
  %6115 = vmatmul.mubr.bf16.gmra.mrb[0].mxu0 %v3439
  %v6116 = vpop.f32.mrb[0].mxu0
  %v6117 = vadd.f32 %v6064, %v6116
  %v6118 = vpop.f32.mrb[0].mxu0
  %v6119 = vadd.f32 %v6066, %v6118
  %v6120 = vpop.f32.mrb[0].mxu0
  %v6121 = vadd.f32 %v6068, %v6120
  %v6122 = vpop.f32.mrb[0].mxu0
  %v6123 = vadd.f32 %v6070, %v6122
  %6124 = vmatprep.mubr.bf16.mxu0 %v3448
  %6125 = vmatmul.mubr.bf16.gmra.mrb[0].mxu0 %v3447
  %v6126 = vpop.f32.mrb[0].mxu0
  %v6127 = vadd.f32 %v6074, %v6126
  %v6128 = vpop.f32.mrb[0].mxu0
  %v6129 = vadd.f32 %v6076, %v6128
  %v6130 = vpop.f32.mrb[0].mxu0
  %v6131 = vadd.f32 %v6078, %v6130
  %v6132 = vpop.f32.mrb[0].mxu0
  %v6133 = vadd.f32 %v6080, %v6132
  %6134 = vdwg.mxu0
  %6135 = vmatprep.subr.bf16.mxu0 %v5262
  %6136 = vmatpush1.bf16.msra.mxu0 %v5261
  %6137 = vmatprep.subr.bf16.mxu0 %v5270
  %6138 = vmatpush1.bf16.msra.mxu0 %v5269
  %6139 = vmatprep.subr.bf16.mxu0 %v5278
  %6140 = vmatpush1.bf16.msra.mxu0 %v5277
  %6141 = vmatprep.subr.bf16.mxu0 %v5286
  %6142 = vmatpush1.bf16.msra.mxu0 %v5285
  %6143 = vmatprep.subr.bf16.mxu0 %v5294
  %6144 = vmatpush1.bf16.msra.mxu0 %v5293
  %6145 = vmatprep.subr.bf16.mxu0 %v5302
  %6146 = vmatpush1.bf16.msra.mxu0 %v5301
  %6147 = vmatprep.subr.bf16.mxu0 %v5310
  %6148 = vmatpush1.bf16.msra.mxu0 %v5309
  %6149 = vmatprep.subr.bf16.mxu0 %v5318
  %6150 = vmatpush1.bf16.msra.mxu0 %v5317
  %6151 = vmatprep.subr.bf16.mxu0 %v5326
  %6152 = vmatpush1.bf16.msra.mxu0 %v5325
  %6153 = vmatprep.subr.bf16.mxu0 %v5334
  %6154 = vmatpush1.bf16.msra.mxu0 %v5333
  %6155 = vmatprep.subr.bf16.mxu0 %v5342
  %6156 = vmatpush1.bf16.msra.mxu0 %v5341
  %6157 = vmatprep.subr.bf16.mxu0 %v5350
  %6158 = vmatpush1.bf16.msra.mxu0 %v5349
  %6159 = vmatprep.subr.bf16.mxu0 %v5358
  %6160 = vmatpush1.bf16.msra.mxu0 %v5357
  %6161 = vmatprep.subr.bf16.mxu0 %v5366
  %6162 = vmatpush1.bf16.msra.mxu0 %v5365
  %6163 = vmatprep.subr.bf16.mxu0 %v5374
  %6164 = vmatpush1.bf16.msra.mxu0 %v5373
  %6165 = vmatprep.subr.bf16.mxu0 %v5382
  %6166 = vmatpush1.bf16.msra.mxu0 %v5381
  %6167 = vmatprep.mubr.bf16.mxu0 %v3442
  %6168 = vmatmul.mubr.bf16.gmra.mrb[0].mxu0 %v3441
  %v6169 = vpop.f32.mrb[0].mxu0
  %v6170 = vadd.f32 %v6117, %v6169
  %v6171 = vpop.f32.mrb[0].mxu0
  %v6172 = vadd.f32 %v6119, %v6171
  %v6173 = vpop.f32.mrb[0].mxu0
  %v6174 = vadd.f32 %v6121, %v6173
  %v6175 = vpop.f32.mrb[0].mxu0
  %v6176 = vadd.f32 %v6123, %v6175
  %6177 = vmatprep.mubr.bf16.mxu0 %v3450
  %6178 = vmatmul.mubr.bf16.gmra.mrb[0].mxu0 %v3449
  %v6179 = vpop.f32.mrb[0].mxu0
  %v6180 = vadd.f32 %v6127, %v6179
  %v6181 = vpop.f32.mrb[0].mxu0
  %v6182 = vadd.f32 %v6129, %v6181
  %v6183 = vpop.f32.mrb[0].mxu0
  %v6184 = vadd.f32 %v6131, %v6183
  %v6185 = vpop.f32.mrb[0].mxu0
  %v6186 = vadd.f32 %v6133, %v6185
  %6187 = vdwg.mxu0
  %6188 = vmatprep.subr.bf16.mxu0 %v5390
  %6189 = vmatpush1.bf16.msra.mxu0 %v5389
  %6190 = vmatprep.subr.bf16.mxu0 %v5398
  %6191 = vmatpush1.bf16.msra.mxu0 %v5397
  %6192 = vmatprep.subr.bf16.mxu0 %v5406
  %6193 = vmatpush1.bf16.msra.mxu0 %v5405
  %6194 = vmatprep.subr.bf16.mxu0 %v5414
  %6195 = vmatpush1.bf16.msra.mxu0 %v5413
  %6196 = vmatprep.subr.bf16.mxu0 %v5422
  %6197 = vmatpush1.bf16.msra.mxu0 %v5421
  %6198 = vmatprep.subr.bf16.mxu0 %v5430
  %6199 = vmatpush1.bf16.msra.mxu0 %v5429
  %6200 = vmatprep.subr.bf16.mxu0 %v5438
  %6201 = vmatpush1.bf16.msra.mxu0 %v5437
  %6202 = vmatprep.subr.bf16.mxu0 %v5446
  %6203 = vmatpush1.bf16.msra.mxu0 %v5445
  %6204 = vmatprep.subr.bf16.mxu0 %v5454
  %6205 = vmatpush1.bf16.msra.mxu0 %v5453
  %6206 = vmatprep.subr.bf16.mxu0 %v5462
  %6207 = vmatpush1.bf16.msra.mxu0 %v5461
  %6208 = vmatprep.subr.bf16.mxu0 %v5470
  %6209 = vmatpush1.bf16.msra.mxu0 %v5469
  %6210 = vmatprep.subr.bf16.mxu0 %v5478
  %6211 = vmatpush1.bf16.msra.mxu0 %v5477
  %6212 = vmatprep.subr.bf16.mxu0 %v5486
  %6213 = vmatpush1.bf16.msra.mxu0 %v5485
  %6214 = vmatprep.subr.bf16.mxu0 %v5494
  %6215 = vmatpush1.bf16.msra.mxu0 %v5493
  %6216 = vmatprep.subr.bf16.mxu0 %v5502
  %6217 = vmatpush1.bf16.msra.mxu0 %v5501
  %6218 = vmatprep.subr.bf16.mxu0 %v5510
  %6219 = vmatpush1.bf16.msra.mxu0 %v5509
  %6220 = vmatprep.mubr.bf16.mxu0 %v3444
  %6221 = vmatmul.mubr.bf16.gmra.mrb[0].mxu0 %v3443
  %v6222 = vpop.f32.mrb[0].mxu0
  %v6223 = vadd.f32 %v6170, %v6222
  %v6224 = vpop.f32.mrb[0].mxu0
  %v6225 = vadd.f32 %v6172, %v6224
  %v6226 = vpop.f32.mrb[0].mxu0
  %v6227 = vadd.f32 %v6174, %v6226
  %v6228 = vpop.f32.mrb[0].mxu0
  %v6229 = vadd.f32 %v6176, %v6228
  %6230 = vmatprep.mubr.bf16.mxu0 %v3452
  %6231 = vmatmul.mubr.bf16.gmra.mrb[0].mxu0 %v3451
  %v6232 = vpop.f32.mrb[0].mxu0
  %v6233 = vadd.f32 %v6180, %v6232
  %v6234 = vpop.f32.mrb[0].mxu0
  %v6235 = vadd.f32 %v6182, %v6234
  %v6236 = vpop.f32.mrb[0].mxu0
  %v6237 = vadd.f32 %v6184, %v6236
  %v6238 = vpop.f32.mrb[0].mxu0
  %v6239 = vadd.f32 %v6186, %v6238
  %6240 = vdwg.mxu0
  %6241 = vmatprep.subr.bf16.mxu0 %v5008
  %6242 = vmatpush1.bf16.msra.mxu0 %v5007
  %6243 = vmatprep.subr.bf16.mxu0 %v5016
  %6244 = vmatpush1.bf16.msra.mxu0 %v5015
  %6245 = vmatprep.subr.bf16.mxu0 %v5024
  %6246 = vmatpush1.bf16.msra.mxu0 %v5023
  %6247 = vmatprep.subr.bf16.mxu0 %v5032
  %6248 = vmatpush1.bf16.msra.mxu0 %v5031
  %6249 = vmatprep.subr.bf16.mxu0 %v5040
  %6250 = vmatpush1.bf16.msra.mxu0 %v5039
  %6251 = vmatprep.subr.bf16.mxu0 %v5048
  %6252 = vmatpush1.bf16.msra.mxu0 %v5047
  %6253 = vmatprep.subr.bf16.mxu0 %v5056
  %6254 = vmatpush1.bf16.msra.mxu0 %v5055
  %6255 = vmatprep.subr.bf16.mxu0 %v5064
  %6256 = vmatpush1.bf16.msra.mxu0 %v5063
  %6257 = vmatprep.subr.bf16.mxu0 %v5072
  %6258 = vmatpush1.bf16.msra.mxu0 %v5071
  %6259 = vmatprep.subr.bf16.mxu0 %v5080
  %6260 = vmatpush1.bf16.msra.mxu0 %v5079
  %6261 = vmatprep.subr.bf16.mxu0 %v5088
  %6262 = vmatpush1.bf16.msra.mxu0 %v5087
  %6263 = vmatprep.subr.bf16.mxu0 %v5096
  %6264 = vmatpush1.bf16.msra.mxu0 %v5095
  %6265 = vmatprep.subr.bf16.mxu0 %v5104
  %6266 = vmatpush1.bf16.msra.mxu0 %v5103
  %6267 = vmatprep.subr.bf16.mxu0 %v5112
  %6268 = vmatpush1.bf16.msra.mxu0 %v5111
  %6269 = vmatprep.subr.bf16.mxu0 %v5120
  %6270 = vmatpush1.bf16.msra.mxu0 %v5119
  %6271 = vmatprep.subr.bf16.mxu0 %v5128
  %6272 = vmatpush1.bf16.msra.mxu0 %v5127
  %6273 = vmatprep.mubr.bf16.mxu0 %v3438
  %6274 = vmatmul.mubr.bf16.gmra.mrb[0].mxu0 %v3437
  %v6275 = vpop.f32.mrb[0].mxu0
  %v6276 = vadd.f32 0.0, %v6275
  %v6277 = vpop.f32.mrb[0].mxu0
  %v6278 = vadd.f32 0.0, %v6277
  %v6279 = vpop.f32.mrb[0].mxu0
  %v6280 = vadd.f32 0.0, %v6279
  %v6281 = vpop.f32.mrb[0].mxu0
  %v6282 = vadd.f32 0.0, %v6281
  %6283 = vmatprep.mubr.bf16.mxu0 %v3446
  %6284 = vmatmul.mubr.bf16.gmra.mrb[0].mxu0 %v3445
  %v6285 = vpop.f32.mrb[0].mxu0
  %v6286 = vadd.f32 0.0, %v6285
  %v6287 = vpop.f32.mrb[0].mxu0
  %v6288 = vadd.f32 0.0, %v6287
  %v6289 = vpop.f32.mrb[0].mxu0
  %v6290 = vadd.f32 0.0, %v6289
  %v6291 = vpop.f32.mrb[0].mxu0
  %v6292 = vadd.f32 0.0, %v6291
  %6293 = vdwg.mxu0
  %6294 = vmatprep.subr.bf16.mxu0 %v5136
  %6295 = vmatpush1.bf16.msra.mxu0 %v5135
  %6296 = vmatprep.subr.bf16.mxu0 %v5144
  %6297 = vmatpush1.bf16.msra.mxu0 %v5143
  %6298 = vmatprep.subr.bf16.mxu0 %v5152
  %6299 = vmatpush1.bf16.msra.mxu0 %v5151
  %6300 = vmatprep.subr.bf16.mxu0 %v5160
  %6301 = vmatpush1.bf16.msra.mxu0 %v5159
  %6302 = vmatprep.subr.bf16.mxu0 %v5168
  %6303 = vmatpush1.bf16.msra.mxu0 %v5167
  %6304 = vmatprep.subr.bf16.mxu0 %v5176
  %6305 = vmatpush1.bf16.msra.mxu0 %v5175
  %6306 = vmatprep.subr.bf16.mxu0 %v5184
  %6307 = vmatpush1.bf16.msra.mxu0 %v5183
  %6308 = vmatprep.subr.bf16.mxu0 %v5192
  %6309 = vmatpush1.bf16.msra.mxu0 %v5191
  %6310 = vmatprep.subr.bf16.mxu0 %v5200
  %6311 = vmatpush1.bf16.msra.mxu0 %v5199
  %6312 = vmatprep.subr.bf16.mxu0 %v5208
  %6313 = vmatpush1.bf16.msra.mxu0 %v5207
  %6314 = vmatprep.subr.bf16.mxu0 %v5216
  %6315 = vmatpush1.bf16.msra.mxu0 %v5215
  %6316 = vmatprep.subr.bf16.mxu0 %v5224
  %6317 = vmatpush1.bf16.msra.mxu0 %v5223
  %6318 = vmatprep.subr.bf16.mxu0 %v5232
  %6319 = vmatpush1.bf16.msra.mxu0 %v5231
  %6320 = vmatprep.subr.bf16.mxu0 %v5240
  %6321 = vmatpush1.bf16.msra.mxu0 %v5239
  %6322 = vmatprep.subr.bf16.mxu0 %v5248
  %6323 = vmatpush1.bf16.msra.mxu0 %v5247
  %6324 = vmatprep.subr.bf16.mxu0 %v5256
  %6325 = vmatpush1.bf16.msra.mxu0 %v5255
  %6326 = vmatprep.mubr.bf16.mxu0 %v3440
  %6327 = vmatmul.mubr.bf16.gmra.mrb[0].mxu0 %v3439
  %v6328 = vpop.f32.mrb[0].mxu0
  %v6329 = vadd.f32 %v6276, %v6328
  %v6330 = vpop.f32.mrb[0].mxu0
  %v6331 = vadd.f32 %v6278, %v6330
  %v6332 = vpop.f32.mrb[0].mxu0
  %v6333 = vadd.f32 %v6280, %v6332
  %v6334 = vpop.f32.mrb[0].mxu0
  %v6335 = vadd.f32 %v6282, %v6334
  %6336 = vmatprep.mubr.bf16.mxu0 %v3448
  %6337 = vmatmul.mubr.bf16.gmra.mrb[0].mxu0 %v3447
  %v6338 = vpop.f32.mrb[0].mxu0
  %v6339 = vadd.f32 %v6286, %v6338
  %v6340 = vpop.f32.mrb[0].mxu0
  %v6341 = vadd.f32 %v6288, %v6340
  %v6342 = vpop.f32.mrb[0].mxu0
  %v6343 = vadd.f32 %v6290, %v6342
  %v6344 = vpop.f32.mrb[0].mxu0
  %v6345 = vadd.f32 %v6292, %v6344
  %6346 = vdwg.mxu0
  %6347 = vmatprep.subr.bf16.mxu0 %v5264
  %6348 = vmatpush1.bf16.msra.mxu0 %v5263
  %6349 = vmatprep.subr.bf16.mxu0 %v5272
  %6350 = vmatpush1.bf16.msra.mxu0 %v5271
  %6351 = vmatprep.subr.bf16.mxu0 %v5280
  %6352 = vmatpush1.bf16.msra.mxu0 %v5279
  %6353 = vmatprep.subr.bf16.mxu0 %v5288
  %6354 = vmatpush1.bf16.msra.mxu0 %v5287
  %6355 = vmatprep.subr.bf16.mxu0 %v5296
  %6356 = vmatpush1.bf16.msra.mxu0 %v5295
  %6357 = vmatprep.subr.bf16.mxu0 %v5304
  %6358 = vmatpush1.bf16.msra.mxu0 %v5303
  %6359 = vmatprep.subr.bf16.mxu0 %v5312
  %6360 = vmatpush1.bf16.msra.mxu0 %v5311
  %6361 = vmatprep.subr.bf16.mxu0 %v5320
  %6362 = vmatpush1.bf16.msra.mxu0 %v5319
  %6363 = vmatprep.subr.bf16.mxu0 %v5328
  %6364 = vmatpush1.bf16.msra.mxu0 %v5327
  %6365 = vmatprep.subr.bf16.mxu0 %v5336
  %6366 = vmatpush1.bf16.msra.mxu0 %v5335
  %6367 = vmatprep.subr.bf16.mxu0 %v5344
  %6368 = vmatpush1.bf16.msra.mxu0 %v5343
  %6369 = vmatprep.subr.bf16.mxu0 %v5352
  %6370 = vmatpush1.bf16.msra.mxu0 %v5351
  %6371 = vmatprep.subr.bf16.mxu0 %v5360
  %6372 = vmatpush1.bf16.msra.mxu0 %v5359
  %6373 = vmatprep.subr.bf16.mxu0 %v5368
  %6374 = vmatpush1.bf16.msra.mxu0 %v5367
  %6375 = vmatprep.subr.bf16.mxu0 %v5376
  %6376 = vmatpush1.bf16.msra.mxu0 %v5375
  %6377 = vmatprep.subr.bf16.mxu0 %v5384
  %6378 = vmatpush1.bf16.msra.mxu0 %v5383
  %6379 = vmatprep.mubr.bf16.mxu0 %v3442
  %6380 = vmatmul.mubr.bf16.gmra.mrb[0].mxu0 %v3441
  %v6381 = vpop.f32.mrb[0].mxu0
  %v6382 = vadd.f32 %v6329, %v6381
  %v6383 = vpop.f32.mrb[0].mxu0
  %v6384 = vadd.f32 %v6331, %v6383
  %v6385 = vpop.f32.mrb[0].mxu0
  %v6386 = vadd.f32 %v6333, %v6385
  %v6387 = vpop.f32.mrb[0].mxu0
  %v6388 = vadd.f32 %v6335, %v6387
  %6389 = vmatprep.mubr.bf16.mxu0 %v3450
  %6390 = vmatmul.mubr.bf16.gmra.mrb[0].mxu0 %v3449
  %v6391 = vpop.f32.mrb[0].mxu0
  %v6392 = vadd.f32 %v6339, %v6391
  %v6393 = vpop.f32.mrb[0].mxu0
  %v6394 = vadd.f32 %v6341, %v6393
  %v6395 = vpop.f32.mrb[0].mxu0
  %v6396 = vadd.f32 %v6343, %v6395
  %v6397 = vpop.f32.mrb[0].mxu0
  %v6398 = vadd.f32 %v6345, %v6397
  %6399 = vdwg.mxu0
  %6400 = vmatprep.subr.bf16.mxu0 %v5392
  %6401 = vmatpush1.bf16.msra.mxu0 %v5391
  %6402 = vmatprep.subr.bf16.mxu0 %v5400
  %6403 = vmatpush1.bf16.msra.mxu0 %v5399
  %6404 = vmatprep.subr.bf16.mxu0 %v5408
  %6405 = vmatpush1.bf16.msra.mxu0 %v5407
  %6406 = vmatprep.subr.bf16.mxu0 %v5416
  %6407 = vmatpush1.bf16.msra.mxu0 %v5415
  %6408 = vmatprep.subr.bf16.mxu0 %v5424
  %6409 = vmatpush1.bf16.msra.mxu0 %v5423
  %6410 = vmatprep.subr.bf16.mxu0 %v5432
  %6411 = vmatpush1.bf16.msra.mxu0 %v5431
  %6412 = vmatprep.subr.bf16.mxu0 %v5440
  %6413 = vmatpush1.bf16.msra.mxu0 %v5439
  %6414 = vmatprep.subr.bf16.mxu0 %v5448
  %6415 = vmatpush1.bf16.msra.mxu0 %v5447
  %6416 = vmatprep.subr.bf16.mxu0 %v5456
  %6417 = vmatpush1.bf16.msra.mxu0 %v5455
  %6418 = vmatprep.subr.bf16.mxu0 %v5464
  %6419 = vmatpush1.bf16.msra.mxu0 %v5463
  %6420 = vmatprep.subr.bf16.mxu0 %v5472
  %6421 = vmatpush1.bf16.msra.mxu0 %v5471
  %6422 = vmatprep.subr.bf16.mxu0 %v5480
  %6423 = vmatpush1.bf16.msra.mxu0 %v5479
  %6424 = vmatprep.subr.bf16.mxu0 %v5488
  %6425 = vmatpush1.bf16.msra.mxu0 %v5487
  %6426 = vmatprep.subr.bf16.mxu0 %v5496
  %6427 = vmatpush1.bf16.msra.mxu0 %v5495
  %6428 = vmatprep.subr.bf16.mxu0 %v5504
  %6429 = vmatpush1.bf16.msra.mxu0 %v5503
  %6430 = vmatprep.subr.bf16.mxu0 %v5512
  %6431 = vmatpush1.bf16.msra.mxu0 %v5511
  %6432 = vmatprep.mubr.bf16.mxu0 %v3444
  %6433 = vmatmul.mubr.bf16.gmra.mrb[0].mxu0 %v3443
  %v6434 = vpop.f32.mrb[0].mxu0
  %v6435 = vadd.f32 %v6382, %v6434
  %v6436 = vpop.f32.mrb[0].mxu0
  %v6437 = vadd.f32 %v6384, %v6436
  %v6438 = vpop.f32.mrb[0].mxu0
  %v6439 = vadd.f32 %v6386, %v6438
  %v6440 = vpop.f32.mrb[0].mxu0
  %v6441 = vadd.f32 %v6388, %v6440
  %6442 = vmatprep.mubr.bf16.mxu0 %v3452
  %6443 = vmatmul.mubr.bf16.gmra.mrb[0].mxu0 %v3451
  %v6444 = vpop.f32.mrb[0].mxu0
  %v6445 = vadd.f32 %v6392, %v6444
  %v6446 = vpop.f32.mrb[0].mxu0
  %v6447 = vadd.f32 %v6394, %v6446
  %v6448 = vpop.f32.mrb[0].mxu0
  %v6449 = vadd.f32 %v6396, %v6448
  %v6450 = vpop.f32.mrb[0].mxu0
  %v6451 = vadd.f32 %v6398, %v6450
  %6452 = vdwg.mxu0
  %6453 = vmatprep.subr.bf16.mxu0 %v5010
  %6454 = vmatpush1.bf16.msra.mxu0 %v5009
  %6455 = vmatprep.subr.bf16.mxu0 %v5018
  %6456 = vmatpush1.bf16.msra.mxu0 %v5017
  %6457 = vmatprep.subr.bf16.mxu0 %v5026
  %6458 = vmatpush1.bf16.msra.mxu0 %v5025
  %6459 = vmatprep.subr.bf16.mxu0 %v5034
  %6460 = vmatpush1.bf16.msra.mxu0 %v5033
  %6461 = vmatprep.subr.bf16.mxu0 %v5042
  %6462 = vmatpush1.bf16.msra.mxu0 %v5041
  %6463 = vmatprep.subr.bf16.mxu0 %v5050
  %6464 = vmatpush1.bf16.msra.mxu0 %v5049
  %6465 = vmatprep.subr.bf16.mxu0 %v5058
  %6466 = vmatpush1.bf16.msra.mxu0 %v5057
  %6467 = vmatprep.subr.bf16.mxu0 %v5066
  %6468 = vmatpush1.bf16.msra.mxu0 %v5065
  %6469 = vmatprep.subr.bf16.mxu0 %v5074
  %6470 = vmatpush1.bf16.msra.mxu0 %v5073
  %6471 = vmatprep.subr.bf16.mxu0 %v5082
  %6472 = vmatpush1.bf16.msra.mxu0 %v5081
  %6473 = vmatprep.subr.bf16.mxu0 %v5090
  %6474 = vmatpush1.bf16.msra.mxu0 %v5089
  %6475 = vmatprep.subr.bf16.mxu0 %v5098
  %6476 = vmatpush1.bf16.msra.mxu0 %v5097
  %6477 = vmatprep.subr.bf16.mxu0 %v5106
  %6478 = vmatpush1.bf16.msra.mxu0 %v5105
  %6479 = vmatprep.subr.bf16.mxu0 %v5114
  %6480 = vmatpush1.bf16.msra.mxu0 %v5113
  %6481 = vmatprep.subr.bf16.mxu0 %v5122
  %6482 = vmatpush1.bf16.msra.mxu0 %v5121
  %6483 = vmatprep.subr.bf16.mxu0 %v5130
  %6484 = vmatpush1.bf16.msra.mxu0 %v5129
  %6485 = vmatprep.mubr.bf16.mxu0 %v3438
  %6486 = vmatmul.mubr.bf16.gmra.mrb[0].mxu0 %v3437
  %v6487 = vpop.f32.mrb[0].mxu0
  %v6488 = vadd.f32 0.0, %v6487
  %v6489 = vpop.f32.mrb[0].mxu0
  %v6490 = vadd.f32 0.0, %v6489
  %v6491 = vpop.f32.mrb[0].mxu0
  %v6492 = vadd.f32 0.0, %v6491
  %v6493 = vpop.f32.mrb[0].mxu0
  %v6494 = vadd.f32 0.0, %v6493
  %6495 = vmatprep.mubr.bf16.mxu0 %v3446
  %6496 = vmatmul.mubr.bf16.gmra.mrb[0].mxu0 %v3445
  %v6497 = vpop.f32.mrb[0].mxu0
  %v6498 = vadd.f32 0.0, %v6497
  %v6499 = vpop.f32.mrb[0].mxu0
  %v6500 = vadd.f32 0.0, %v6499
  %v6501 = vpop.f32.mrb[0].mxu0
  %v6502 = vadd.f32 0.0, %v6501
  %v6503 = vpop.f32.mrb[0].mxu0
  %v6504 = vadd.f32 0.0, %v6503
  %6505 = vdwg.mxu0
  %6506 = vmatprep.subr.bf16.mxu0 %v5138
  %6507 = vmatpush1.bf16.msra.mxu0 %v5137
  %6508 = vmatprep.subr.bf16.mxu0 %v5146
  %6509 = vmatpush1.bf16.msra.mxu0 %v5145
  %6510 = vmatprep.subr.bf16.mxu0 %v5154
  %6511 = vmatpush1.bf16.msra.mxu0 %v5153
  %6512 = vmatprep.subr.bf16.mxu0 %v5162
  %6513 = vmatpush1.bf16.msra.mxu0 %v5161
  %6514 = vmatprep.subr.bf16.mxu0 %v5170
  %6515 = vmatpush1.bf16.msra.mxu0 %v5169
  %6516 = vmatprep.subr.bf16.mxu0 %v5178
  %6517 = vmatpush1.bf16.msra.mxu0 %v5177
  %6518 = vmatprep.subr.bf16.mxu0 %v5186
  %6519 = vmatpush1.bf16.msra.mxu0 %v5185
  %6520 = vmatprep.subr.bf16.mxu0 %v5194
  %6521 = vmatpush1.bf16.msra.mxu0 %v5193
  %6522 = vmatprep.subr.bf16.mxu0 %v5202
  %6523 = vmatpush1.bf16.msra.mxu0 %v5201
  %6524 = vmatprep.subr.bf16.mxu0 %v5210
  %6525 = vmatpush1.bf16.msra.mxu0 %v5209
  %6526 = vmatprep.subr.bf16.mxu0 %v5218
  %6527 = vmatpush1.bf16.msra.mxu0 %v5217
  %6528 = vmatprep.subr.bf16.mxu0 %v5226
  %6529 = vmatpush1.bf16.msra.mxu0 %v5225
  %6530 = vmatprep.subr.bf16.mxu0 %v5234
  %6531 = vmatpush1.bf16.msra.mxu0 %v5233
  %6532 = vmatprep.subr.bf16.mxu0 %v5242
  %6533 = vmatpush1.bf16.msra.mxu0 %v5241
  %6534 = vmatprep.subr.bf16.mxu0 %v5250
  %6535 = vmatpush1.bf16.msra.mxu0 %v5249
  %6536 = vmatprep.subr.bf16.mxu0 %v5258
  %6537 = vmatpush1.bf16.msra.mxu0 %v5257
  %6538 = vmatprep.mubr.bf16.mxu0 %v3440
  %6539 = vmatmul.mubr.bf16.gmra.mrb[0].mxu0 %v3439
  %v6540 = vpop.f32.mrb[0].mxu0
  %v6541 = vadd.f32 %v6488, %v6540
  %v6542 = vpop.f32.mrb[0].mxu0
  %v6543 = vadd.f32 %v6490, %v6542
  %v6544 = vpop.f32.mrb[0].mxu0
  %v6545 = vadd.f32 %v6492, %v6544
  %v6546 = vpop.f32.mrb[0].mxu0
  %v6547 = vadd.f32 %v6494, %v6546
  %6548 = vmatprep.mubr.bf16.mxu0 %v3448
  %6549 = vmatmul.mubr.bf16.gmra.mrb[0].mxu0 %v3447
  %v6550 = vpop.f32.mrb[0].mxu0
  %v6551 = vadd.f32 %v6498, %v6550
  %v6552 = vpop.f32.mrb[0].mxu0
  %v6553 = vadd.f32 %v6500, %v6552
  %v6554 = vpop.f32.mrb[0].mxu0
  %v6555 = vadd.f32 %v6502, %v6554
  %v6556 = vpop.f32.mrb[0].mxu0
  %v6557 = vadd.f32 %v6504, %v6556
  %6558 = vdwg.mxu0
  %6559 = vmatprep.subr.bf16.mxu0 %v5266
  %6560 = vmatpush1.bf16.msra.mxu0 %v5265
  %6561 = vmatprep.subr.bf16.mxu0 %v5274
  %6562 = vmatpush1.bf16.msra.mxu0 %v5273
  %6563 = vmatprep.subr.bf16.mxu0 %v5282
  %6564 = vmatpush1.bf16.msra.mxu0 %v5281
  %6565 = vmatprep.subr.bf16.mxu0 %v5290
  %6566 = vmatpush1.bf16.msra.mxu0 %v5289
  %6567 = vmatprep.subr.bf16.mxu0 %v5298
  %6568 = vmatpush1.bf16.msra.mxu0 %v5297
  %6569 = vmatprep.subr.bf16.mxu0 %v5306
  %6570 = vmatpush1.bf16.msra.mxu0 %v5305
  %6571 = vmatprep.subr.bf16.mxu0 %v5314
  %6572 = vmatpush1.bf16.msra.mxu0 %v5313
  %6573 = vmatprep.subr.bf16.mxu0 %v5322
  %6574 = vmatpush1.bf16.msra.mxu0 %v5321
  %6575 = vmatprep.subr.bf16.mxu0 %v5330
  %6576 = vmatpush1.bf16.msra.mxu0 %v5329
  %6577 = vmatprep.subr.bf16.mxu0 %v5338
  %6578 = vmatpush1.bf16.msra.mxu0 %v5337
  %6579 = vmatprep.subr.bf16.mxu0 %v5346
  %6580 = vmatpush1.bf16.msra.mxu0 %v5345
  %6581 = vmatprep.subr.bf16.mxu0 %v5354
  %6582 = vmatpush1.bf16.msra.mxu0 %v5353
  %6583 = vmatprep.subr.bf16.mxu0 %v5362
  %6584 = vmatpush1.bf16.msra.mxu0 %v5361
  %6585 = vmatprep.subr.bf16.mxu0 %v5370
  %6586 = vmatpush1.bf16.msra.mxu0 %v5369
  %6587 = vmatprep.subr.bf16.mxu0 %v5378
  %6588 = vmatpush1.bf16.msra.mxu0 %v5377
  %6589 = vmatprep.subr.bf16.mxu0 %v5386
  %6590 = vmatpush1.bf16.msra.mxu0 %v5385
  %6591 = vmatprep.mubr.bf16.mxu0 %v3442
  %6592 = vmatmul.mubr.bf16.gmra.mrb[0].mxu0 %v3441
  %v6593 = vpop.f32.mrb[0].mxu0
  %v6594 = vadd.f32 %v6541, %v6593
  %v6595 = vpop.f32.mrb[0].mxu0
  %v6596 = vadd.f32 %v6543, %v6595
  %v6597 = vpop.f32.mrb[0].mxu0
  %v6598 = vadd.f32 %v6545, %v6597
  %v6599 = vpop.f32.mrb[0].mxu0
  %v6600 = vadd.f32 %v6547, %v6599
  %6601 = vmatprep.mubr.bf16.mxu0 %v3450
  %6602 = vmatmul.mubr.bf16.gmra.mrb[0].mxu0 %v3449
  %v6603 = vpop.f32.mrb[0].mxu0
  %v6604 = vadd.f32 %v6551, %v6603
  %v6605 = vpop.f32.mrb[0].mxu0
  %v6606 = vadd.f32 %v6553, %v6605
  %v6607 = vpop.f32.mrb[0].mxu0
  %v6608 = vadd.f32 %v6555, %v6607
  %v6609 = vpop.f32.mrb[0].mxu0
  %v6610 = vadd.f32 %v6557, %v6609
  %6611 = vdwg.mxu0
  %6612 = vmatprep.subr.bf16.mxu0 %v5394
  %6613 = vmatpush1.bf16.msra.mxu0 %v5393
  %6614 = vmatprep.subr.bf16.mxu0 %v5402
  %6615 = vmatpush1.bf16.msra.mxu0 %v5401
  %6616 = vmatprep.subr.bf16.mxu0 %v5410
  %6617 = vmatpush1.bf16.msra.mxu0 %v5409
  %6618 = vmatprep.subr.bf16.mxu0 %v5418
  %6619 = vmatpush1.bf16.msra.mxu0 %v5417
  %6620 = vmatprep.subr.bf16.mxu0 %v5426
  %6621 = vmatpush1.bf16.msra.mxu0 %v5425
  %6622 = vmatprep.subr.bf16.mxu0 %v5434
  %6623 = vmatpush1.bf16.msra.mxu0 %v5433
  %6624 = vmatprep.subr.bf16.mxu0 %v5442
  %6625 = vmatpush1.bf16.msra.mxu0 %v5441
  %6626 = vmatprep.subr.bf16.mxu0 %v5450
  %6627 = vmatpush1.bf16.msra.mxu0 %v5449
  %6628 = vmatprep.subr.bf16.mxu0 %v5458
  %6629 = vmatpush1.bf16.msra.mxu0 %v5457
  %6630 = vmatprep.subr.bf16.mxu0 %v5466
  %6631 = vmatpush1.bf16.msra.mxu0 %v5465
  %6632 = vmatprep.subr.bf16.mxu0 %v5474
  %6633 = vmatpush1.bf16.msra.mxu0 %v5473
  %6634 = vmatprep.subr.bf16.mxu0 %v5482
  %6635 = vmatpush1.bf16.msra.mxu0 %v5481
  %6636 = vmatprep.subr.bf16.mxu0 %v5490
  %6637 = vmatpush1.bf16.msra.mxu0 %v5489
  %6638 = vmatprep.subr.bf16.mxu0 %v5498
  %6639 = vmatpush1.bf16.msra.mxu0 %v5497
  %6640 = vmatprep.subr.bf16.mxu0 %v5506
  %6641 = vmatpush1.bf16.msra.mxu0 %v5505
  %6642 = vmatprep.subr.bf16.mxu0 %v5514
  %6643 = vmatpush1.bf16.msra.mxu0 %v5513
  %6644 = vmatprep.mubr.bf16.mxu0 %v3444
  %6645 = vmatmul.mubr.bf16.gmra.mrb[0].mxu0 %v3443
  %v6646 = vpop.f32.mrb[0].mxu0
  %v6647 = vadd.f32 %v6594, %v6646
  %v6648 = vpop.f32.mrb[0].mxu0
  %v6649 = vadd.f32 %v6596, %v6648
  %v6650 = vpop.f32.mrb[0].mxu0
  %v6651 = vadd.f32 %v6598, %v6650
  %v6652 = vpop.f32.mrb[0].mxu0
  %v6653 = vadd.f32 %v6600, %v6652
  %6654 = vmatprep.mubr.bf16.mxu0 %v3452
  %6655 = vmatmul.mubr.bf16.gmra.mrb[0].mxu0 %v3451
  %v6656 = vpop.f32.mrb[0].mxu0
  %v6657 = vadd.f32 %v6604, %v6656
  %v6658 = vpop.f32.mrb[0].mxu0
  %v6659 = vadd.f32 %v6606, %v6658
  %v6660 = vpop.f32.mrb[0].mxu0
  %v6661 = vadd.f32 %v6608, %v6660
  %v6662 = vpop.f32.mrb[0].mxu0
  %v6663 = vadd.f32 %v6610, %v6662
  %6664 = vdwg.mxu0
  %6665 = vmatprep.subr.bf16.mxu0 %v5012
  %6666 = vmatpush1.bf16.msra.mxu0 %v5011
  %6667 = vmatprep.subr.bf16.mxu0 %v5020
  %6668 = vmatpush1.bf16.msra.mxu0 %v5019
  %6669 = vmatprep.subr.bf16.mxu0 %v5028
  %6670 = vmatpush1.bf16.msra.mxu0 %v5027
  %6671 = vmatprep.subr.bf16.mxu0 %v5036
  %6672 = vmatpush1.bf16.msra.mxu0 %v5035
  %6673 = vmatprep.subr.bf16.mxu0 %v5044
  %6674 = vmatpush1.bf16.msra.mxu0 %v5043
  %6675 = vmatprep.subr.bf16.mxu0 %v5052
  %6676 = vmatpush1.bf16.msra.mxu0 %v5051
  %6677 = vmatprep.subr.bf16.mxu0 %v5060
  %6678 = vmatpush1.bf16.msra.mxu0 %v5059
  %6679 = vmatprep.subr.bf16.mxu0 %v5068
  %6680 = vmatpush1.bf16.msra.mxu0 %v5067
  %6681 = vmatprep.subr.bf16.mxu0 %v5076
  %6682 = vmatpush1.bf16.msra.mxu0 %v5075
  %6683 = vmatprep.subr.bf16.mxu0 %v5084
  %6684 = vmatpush1.bf16.msra.mxu0 %v5083
  %6685 = vmatprep.subr.bf16.mxu0 %v5092
  %6686 = vmatpush1.bf16.msra.mxu0 %v5091
  %6687 = vmatprep.subr.bf16.mxu0 %v5100
  %6688 = vmatpush1.bf16.msra.mxu0 %v5099
  %6689 = vmatprep.subr.bf16.mxu0 %v5108
  %6690 = vmatpush1.bf16.msra.mxu0 %v5107
  %6691 = vmatprep.subr.bf16.mxu0 %v5116
  %6692 = vmatpush1.bf16.msra.mxu0 %v5115
  %6693 = vmatprep.subr.bf16.mxu0 %v5124
  %6694 = vmatpush1.bf16.msra.mxu0 %v5123
  %6695 = vmatprep.subr.bf16.mxu0 %v5132
  %6696 = vmatpush1.bf16.msra.mxu0 %v5131
  %6697 = vmatprep.mubr.bf16.mxu0 %v3438
  %6698 = vmatmul.mubr.bf16.gmra.mrb[0].mxu0 %v3437
  %v6699 = vpop.f32.mrb[0].mxu0
  %v6700 = vadd.f32 0.0, %v6699
  %v6701 = vpop.f32.mrb[0].mxu0
  %v6702 = vadd.f32 0.0, %v6701
  %v6703 = vpop.f32.mrb[0].mxu0
  %v6704 = vadd.f32 0.0, %v6703
  %v6705 = vpop.f32.mrb[0].mxu0
  %v6706 = vadd.f32 0.0, %v6705
  %6707 = vmatprep.mubr.bf16.mxu0 %v3446
  %6708 = vmatmul.mubr.bf16.gmra.mrb[0].mxu0 %v3445
  %v6709 = vpop.f32.mrb[0].mxu0
  %v6710 = vadd.f32 0.0, %v6709
  %v6711 = vpop.f32.mrb[0].mxu0
  %v6712 = vadd.f32 0.0, %v6711
  %v6713 = vpop.f32.mrb[0].mxu0
  %v6714 = vadd.f32 0.0, %v6713
  %v6715 = vpop.f32.mrb[0].mxu0
  %v6716 = vadd.f32 0.0, %v6715
  %6717 = vdwg.mxu0
  %6718 = vmatprep.subr.bf16.mxu0 %v5140
  %6719 = vmatpush1.bf16.msra.mxu0 %v5139
  %6720 = vmatprep.subr.bf16.mxu0 %v5148
  %6721 = vmatpush1.bf16.msra.mxu0 %v5147
  %6722 = vmatprep.subr.bf16.mxu0 %v5156
  %6723 = vmatpush1.bf16.msra.mxu0 %v5155
  %6724 = vmatprep.subr.bf16.mxu0 %v5164
  %6725 = vmatpush1.bf16.msra.mxu0 %v5163
  %6726 = vmatprep.subr.bf16.mxu0 %v5172
  %6727 = vmatpush1.bf16.msra.mxu0 %v5171
  %6728 = vmatprep.subr.bf16.mxu0 %v5180
  %6729 = vmatpush1.bf16.msra.mxu0 %v5179
  %6730 = vmatprep.subr.bf16.mxu0 %v5188
  %6731 = vmatpush1.bf16.msra.mxu0 %v5187
  %6732 = vmatprep.subr.bf16.mxu0 %v5196
  %6733 = vmatpush1.bf16.msra.mxu0 %v5195
  %6734 = vmatprep.subr.bf16.mxu0 %v5204
  %6735 = vmatpush1.bf16.msra.mxu0 %v5203
  %6736 = vmatprep.subr.bf16.mxu0 %v5212
  %6737 = vmatpush1.bf16.msra.mxu0 %v5211
  %6738 = vmatprep.subr.bf16.mxu0 %v5220
  %6739 = vmatpush1.bf16.msra.mxu0 %v5219
  %6740 = vmatprep.subr.bf16.mxu0 %v5228
  %6741 = vmatpush1.bf16.msra.mxu0 %v5227
  %6742 = vmatprep.subr.bf16.mxu0 %v5236
  %6743 = vmatpush1.bf16.msra.mxu0 %v5235
  %6744 = vmatprep.subr.bf16.mxu0 %v5244
  %6745 = vmatpush1.bf16.msra.mxu0 %v5243
  %6746 = vmatprep.subr.bf16.mxu0 %v5252
  %6747 = vmatpush1.bf16.msra.mxu0 %v5251
  %6748 = vmatprep.subr.bf16.mxu0 %v5260
  %6749 = vmatpush1.bf16.msra.mxu0 %v5259
  %6750 = vmatprep.mubr.bf16.mxu0 %v3440
  %6751 = vmatmul.mubr.bf16.gmra.mrb[0].mxu0 %v3439
  %v6752 = vpop.f32.mrb[0].mxu0
  %v6753 = vadd.f32 %v6700, %v6752
  %v6754 = vpop.f32.mrb[0].mxu0
  %v6755 = vadd.f32 %v6702, %v6754
  %v6756 = vpop.f32.mrb[0].mxu0
  %v6757 = vadd.f32 %v6704, %v6756
  %v6758 = vpop.f32.mrb[0].mxu0
  %v6759 = vadd.f32 %v6706, %v6758
  %6760 = vmatprep.mubr.bf16.mxu0 %v3448
  %6761 = vmatmul.mubr.bf16.gmra.mrb[0].mxu0 %v3447
  %v6762 = vpop.f32.mrb[0].mxu0
  %v6763 = vadd.f32 %v6710, %v6762
  %v6764 = vpop.f32.mrb[0].mxu0
  %v6765 = vadd.f32 %v6712, %v6764
  %v6766 = vpop.f32.mrb[0].mxu0
  %v6767 = vadd.f32 %v6714, %v6766
  %v6768 = vpop.f32.mrb[0].mxu0
  %v6769 = vadd.f32 %v6716, %v6768
  %6770 = vdwg.mxu0
  %6771 = vmatprep.subr.bf16.mxu0 %v5268
  %6772 = vmatpush1.bf16.msra.mxu0 %v5267
  %6773 = vmatprep.subr.bf16.mxu0 %v5276
  %6774 = vmatpush1.bf16.msra.mxu0 %v5275
  %6775 = vmatprep.subr.bf16.mxu0 %v5284
  %6776 = vmatpush1.bf16.msra.mxu0 %v5283
  %6777 = vmatprep.subr.bf16.mxu0 %v5292
  %6778 = vmatpush1.bf16.msra.mxu0 %v5291
  %6779 = vmatprep.subr.bf16.mxu0 %v5300
  %6780 = vmatpush1.bf16.msra.mxu0 %v5299
  %6781 = vmatprep.subr.bf16.mxu0 %v5308
  %6782 = vmatpush1.bf16.msra.mxu0 %v5307
  %6783 = vmatprep.subr.bf16.mxu0 %v5316
  %6784 = vmatpush1.bf16.msra.mxu0 %v5315
  %6785 = vmatprep.subr.bf16.mxu0 %v5324
  %6786 = vmatpush1.bf16.msra.mxu0 %v5323
  %6787 = vmatprep.subr.bf16.mxu0 %v5332
  %6788 = vmatpush1.bf16.msra.mxu0 %v5331
  %6789 = vmatprep.subr.bf16.mxu0 %v5340
  %6790 = vmatpush1.bf16.msra.mxu0 %v5339
  %6791 = vmatprep.subr.bf16.mxu0 %v5348
  %6792 = vmatpush1.bf16.msra.mxu0 %v5347
  %6793 = vmatprep.subr.bf16.mxu0 %v5356
  %6794 = vmatpush1.bf16.msra.mxu0 %v5355
  %6795 = vmatprep.subr.bf16.mxu0 %v5364
  %6796 = vmatpush1.bf16.msra.mxu0 %v5363
  %6797 = vmatprep.subr.bf16.mxu0 %v5372
  %6798 = vmatpush1.bf16.msra.mxu0 %v5371
  %6799 = vmatprep.subr.bf16.mxu0 %v5380
  %6800 = vmatpush1.bf16.msra.mxu0 %v5379
  %6801 = vmatprep.subr.bf16.mxu0 %v5388
  %6802 = vmatpush1.bf16.msra.mxu0 %v5387
  %6803 = vmatprep.mubr.bf16.mxu0 %v3442
  %6804 = vmatmul.mubr.bf16.gmra.mrb[0].mxu0 %v3441
  %v6805 = vpop.f32.mrb[0].mxu0
  %v6806 = vadd.f32 %v6753, %v6805
  %v6807 = vpop.f32.mrb[0].mxu0
  %v6808 = vadd.f32 %v6755, %v6807
  %v6809 = vpop.f32.mrb[0].mxu0
  %v6810 = vadd.f32 %v6757, %v6809
  %v6811 = vpop.f32.mrb[0].mxu0
  %v6812 = vadd.f32 %v6759, %v6811
  %6813 = vmatprep.mubr.bf16.mxu0 %v3450
  %6814 = vmatmul.mubr.bf16.gmra.mrb[0].mxu0 %v3449
  %v6815 = vpop.f32.mrb[0].mxu0
  %v6816 = vadd.f32 %v6763, %v6815
  %v6817 = vpop.f32.mrb[0].mxu0
  %v6818 = vadd.f32 %v6765, %v6817
  %v6819 = vpop.f32.mrb[0].mxu0
  %v6820 = vadd.f32 %v6767, %v6819
  %v6821 = vpop.f32.mrb[0].mxu0
  %v6822 = vadd.f32 %v6769, %v6821
  %6823 = vdwg.mxu0
  %6824 = vmatprep.subr.bf16.mxu0 %v5396
  %6825 = vmatpush1.bf16.msra.mxu0 %v5395
  %6826 = vmatprep.subr.bf16.mxu0 %v5404
  %6827 = vmatpush1.bf16.msra.mxu0 %v5403
  %6828 = vmatprep.subr.bf16.mxu0 %v5412
  %6829 = vmatpush1.bf16.msra.mxu0 %v5411
  %6830 = vmatprep.subr.bf16.mxu0 %v5420
  %6831 = vmatpush1.bf16.msra.mxu0 %v5419
  %6832 = vmatprep.subr.bf16.mxu0 %v5428
  %6833 = vmatpush1.bf16.msra.mxu0 %v5427
  %6834 = vmatprep.subr.bf16.mxu0 %v5436
  %6835 = vmatpush1.bf16.msra.mxu0 %v5435
  %6836 = vmatprep.subr.bf16.mxu0 %v5444
  %6837 = vmatpush1.bf16.msra.mxu0 %v5443
  %6838 = vmatprep.subr.bf16.mxu0 %v5452
  %6839 = vmatpush1.bf16.msra.mxu0 %v5451
  %6840 = vmatprep.subr.bf16.mxu0 %v5460
  %6841 = vmatpush1.bf16.msra.mxu0 %v5459
  %6842 = vmatprep.subr.bf16.mxu0 %v5468
  %6843 = vmatpush1.bf16.msra.mxu0 %v5467
  %6844 = vmatprep.subr.bf16.mxu0 %v5476
  %6845 = vmatpush1.bf16.msra.mxu0 %v5475
  %6846 = vmatprep.subr.bf16.mxu0 %v5484
  %6847 = vmatpush1.bf16.msra.mxu0 %v5483
  %6848 = vmatprep.subr.bf16.mxu0 %v5492
  %6849 = vmatpush1.bf16.msra.mxu0 %v5491
  %6850 = vmatprep.subr.bf16.mxu0 %v5500
  %6851 = vmatpush1.bf16.msra.mxu0 %v5499
  %6852 = vmatprep.subr.bf16.mxu0 %v5508
  %6853 = vmatpush1.bf16.msra.mxu0 %v5507
  %6854 = vmatprep.subr.bf16.mxu0 %v5516
  %6855 = vmatpush1.bf16.msra.mxu0 %v5515
  %6856 = vmatprep.mubr.bf16.mxu0 %v3444
  %6857 = vmatmul.mubr.bf16.gmra.mrb[0].mxu0 %v3443
  %v6858 = vpop.f32.mrb[0].mxu0
  %v6859 = vadd.f32 %v6806, %v6858
  %v6860 = vpop.f32.mrb[0].mxu0
  %v6861 = vadd.f32 %v6808, %v6860
  %v6862 = vpop.f32.mrb[0].mxu0
  %v6863 = vadd.f32 %v6810, %v6862
  %v6864 = vpop.f32.mrb[0].mxu0
  %v6865 = vadd.f32 %v6812, %v6864
  %6866 = vmatprep.mubr.bf16.mxu0 %v3452
  %6867 = vmatmul.mubr.bf16.gmra.mrb[0].mxu0 %v3451
  %v6868 = vpop.f32.mrb[0].mxu0
  %v6869 = vadd.f32 %v6816, %v6868
  %v6870 = vpop.f32.mrb[0].mxu0
  %v6871 = vadd.f32 %v6818, %v6870
  %v6872 = vpop.f32.mrb[0].mxu0
  %v6873 = vadd.f32 %v6820, %v6872
  %v6874 = vpop.f32.mrb[0].mxu0
  %v6875 = vadd.f32 %v6822, %v6874
  %6876 = vdwg.mxu0
  %v6893 = vunpack.c.l.b16 %v2164
  %v6894 = vunpack.c.h.b16 %v2164
  %v6895 = vunpack.c.l.b16 %v2165
  %v6896 = vunpack.c.h.b16 %v2165
  %v6897 = vunpack.c.l.b16 %v2166
  %v6898 = vunpack.c.h.b16 %v2166
  %v6899 = vunpack.c.l.b16 %v2167
  %v6900 = vunpack.c.h.b16 %v2167
  %v6901 = vunpack.c.l.b16 %v2168
  %v6902 = vunpack.c.h.b16 %v2168
  %v6903 = vunpack.c.l.b16 %v2169
  %v6904 = vunpack.c.h.b16 %v2169
  %v6905 = vunpack.c.l.b16 %v2170
  %v6906 = vunpack.c.h.b16 %v2170
  %v6907 = vunpack.c.l.b16 %v2171
  %v6908 = vunpack.c.h.b16 %v2171
  %v6909 = vunpack.c.l.b16 %v2172
  %v6910 = vunpack.c.h.b16 %v2172
  %v6911 = vunpack.c.l.b16 %v2173
  %v6912 = vunpack.c.h.b16 %v2173
  %v6913 = vunpack.c.l.b16 %v2174
  %v6914 = vunpack.c.h.b16 %v2174
  %v6915 = vunpack.c.l.b16 %v2175
  %v6916 = vunpack.c.h.b16 %v2175
  %v6917 = vunpack.c.l.b16 %v2176
  %v6918 = vunpack.c.h.b16 %v2176
  %v6919 = vunpack.c.l.b16 %v2177
  %v6920 = vunpack.c.h.b16 %v2177
  %v6921 = vunpack.c.l.b16 %v2178
  %v6922 = vunpack.c.h.b16 %v2178
  %v6923 = vunpack.c.l.b16 %v2179
  %v6924 = vunpack.c.h.b16 %v2179
  %v6925 = vpack.c.b16 %v6901, %v6893
  %v6926 = vpack.c.b16 %v6902, %v6894
  %v6927 = vpack.c.b16 %v6903, %v6895
  %v6928 = vpack.c.b16 %v6904, %v6896
  %v6929 = vpack.c.b16 %v6905, %v6897
  %v6930 = vpack.c.b16 %v6906, %v6898
  %v6931 = vpack.c.b16 %v6907, %v6899
  %v6932 = vpack.c.b16 %v6908, %v6900
  %v6933 = vpack.c.b16 %v6917, %v6909
  %v6934 = vpack.c.b16 %v6918, %v6910
  %v6935 = vpack.c.b16 %v6919, %v6911
  %v6936 = vpack.c.b16 %v6920, %v6912
  %v6937 = vpack.c.b16 %v6921, %v6913
  %v6938 = vpack.c.b16 %v6922, %v6914
  %v6939 = vpack.c.b16 %v6923, %v6915
  %v6940 = vpack.c.b16 %v6924, %v6916
  %v7469 = vunpack.c.l.b16 %v2180
  %v7470 = vunpack.c.h.b16 %v2180
  %v7471 = vunpack.c.l.b16 %v2181
  %v7472 = vunpack.c.h.b16 %v2181
  %v7473 = vunpack.c.l.b16 %v2182
  %v7474 = vunpack.c.h.b16 %v2182
  %v7475 = vunpack.c.l.b16 %v2183
  %v7476 = vunpack.c.h.b16 %v2183
  %v7477 = vunpack.c.l.b16 %v2184
  %v7478 = vunpack.c.h.b16 %v2184
  %v7479 = vunpack.c.l.b16 %v2185
  %v7480 = vunpack.c.h.b16 %v2185
  %v7481 = vunpack.c.l.b16 %v2186
  %v7482 = vunpack.c.h.b16 %v2186
  %v7483 = vunpack.c.l.b16 %v2187
  %v7484 = vunpack.c.h.b16 %v2187
  %v7485 = vunpack.c.l.b16 %v2188
  %v7486 = vunpack.c.h.b16 %v2188
  %v7487 = vunpack.c.l.b16 %v2189
  %v7488 = vunpack.c.h.b16 %v2189
  %v7489 = vunpack.c.l.b16 %v2190
  %v7490 = vunpack.c.h.b16 %v2190
  %v7491 = vunpack.c.l.b16 %v2191
  %v7492 = vunpack.c.h.b16 %v2191
  %v7493 = vunpack.c.l.b16 %v2192
  %v7494 = vunpack.c.h.b16 %v2192
  %v7495 = vunpack.c.l.b16 %v2193
  %v7496 = vunpack.c.h.b16 %v2193
  %v7497 = vunpack.c.l.b16 %v2194
  %v7498 = vunpack.c.h.b16 %v2194
  %v7499 = vunpack.c.l.b16 %v2195
  %v7500 = vunpack.c.h.b16 %v2195
  %v7501 = vunpack.c.l.b16 %v2196
  %v7502 = vunpack.c.h.b16 %v2196
  %v7503 = vunpack.c.l.b16 %v2197
  %v7504 = vunpack.c.h.b16 %v2197
  %v7505 = vunpack.c.l.b16 %v2198
  %v7506 = vunpack.c.h.b16 %v2198
  %v7507 = vunpack.c.l.b16 %v2199
  %v7508 = vunpack.c.h.b16 %v2199
  %v7509 = vunpack.c.l.b16 %v2200
  %v7510 = vunpack.c.h.b16 %v2200
  %v7511 = vunpack.c.l.b16 %v2201
  %v7512 = vunpack.c.h.b16 %v2201
  %v7513 = vunpack.c.l.b16 %v2202
  %v7514 = vunpack.c.h.b16 %v2202
  %v7515 = vunpack.c.l.b16 %v2203
  %v7516 = vunpack.c.h.b16 %v2203
  %v7517 = vunpack.c.l.b16 %v2204
  %v7518 = vunpack.c.h.b16 %v2204
  %v7519 = vunpack.c.l.b16 %v2205
  %v7520 = vunpack.c.h.b16 %v2205
  %v7521 = vunpack.c.l.b16 %v2206
  %v7522 = vunpack.c.h.b16 %v2206
  %v7523 = vunpack.c.l.b16 %v2207
  %v7524 = vunpack.c.h.b16 %v2207
  %v7525 = vunpack.c.l.b16 %v2208
  %v7526 = vunpack.c.h.b16 %v2208
  %v7527 = vunpack.c.l.b16 %v2209
  %v7528 = vunpack.c.h.b16 %v2209
  %v7529 = vunpack.c.l.b16 %v2210
  %v7530 = vunpack.c.h.b16 %v2210
  %v7531 = vunpack.c.l.b16 %v2211
  %v7532 = vunpack.c.h.b16 %v2211
  %v7533 = vunpack.c.l.b16 %v2212
  %v7534 = vunpack.c.h.b16 %v2212
  %v7535 = vunpack.c.l.b16 %v2213
  %v7536 = vunpack.c.h.b16 %v2213
  %v7537 = vunpack.c.l.b16 %v2214
  %v7538 = vunpack.c.h.b16 %v2214
  %v7539 = vunpack.c.l.b16 %v2215
  %v7540 = vunpack.c.h.b16 %v2215
  %v7541 = vunpack.c.l.b16 %v2216
  %v7542 = vunpack.c.h.b16 %v2216
  %v7543 = vunpack.c.l.b16 %v2217
  %v7544 = vunpack.c.h.b16 %v2217
  %v7545 = vunpack.c.l.b16 %v2218
  %v7546 = vunpack.c.h.b16 %v2218
  %v7547 = vunpack.c.l.b16 %v2219
  %v7548 = vunpack.c.h.b16 %v2219
  %v7549 = vunpack.c.l.b16 %v2220
  %v7550 = vunpack.c.h.b16 %v2220
  %v7551 = vunpack.c.l.b16 %v2221
  %v7552 = vunpack.c.h.b16 %v2221
  %v7553 = vunpack.c.l.b16 %v2222
  %v7554 = vunpack.c.h.b16 %v2222
  %v7555 = vunpack.c.l.b16 %v2223
  %v7556 = vunpack.c.h.b16 %v2223
  %v7557 = vunpack.c.l.b16 %v2224
  %v7558 = vunpack.c.h.b16 %v2224
  %v7559 = vunpack.c.l.b16 %v2225
  %v7560 = vunpack.c.h.b16 %v2225
  %v7561 = vunpack.c.l.b16 %v2226
  %v7562 = vunpack.c.h.b16 %v2226
  %v7563 = vunpack.c.l.b16 %v2227
  %v7564 = vunpack.c.h.b16 %v2227
  %v7565 = vunpack.c.l.b16 %v2228
  %v7566 = vunpack.c.h.b16 %v2228
  %v7567 = vunpack.c.l.b16 %v2229
  %v7568 = vunpack.c.h.b16 %v2229
  %v7569 = vunpack.c.l.b16 %v2230
  %v7570 = vunpack.c.h.b16 %v2230
  %v7571 = vunpack.c.l.b16 %v2231
  %v7572 = vunpack.c.h.b16 %v2231
  %v7573 = vunpack.c.l.b16 %v2232
  %v7574 = vunpack.c.h.b16 %v2232
  %v7575 = vunpack.c.l.b16 %v2233
  %v7576 = vunpack.c.h.b16 %v2233
  %v7577 = vunpack.c.l.b16 %v2234
  %v7578 = vunpack.c.h.b16 %v2234
  %v7579 = vunpack.c.l.b16 %v2235
  %v7580 = vunpack.c.h.b16 %v2235
  %v7581 = vunpack.c.l.b16 %v2236
  %v7582 = vunpack.c.h.b16 %v2236
  %v7583 = vunpack.c.l.b16 %v2237
  %v7584 = vunpack.c.h.b16 %v2237
  %v7585 = vunpack.c.l.b16 %v2238
  %v7586 = vunpack.c.h.b16 %v2238
  %v7587 = vunpack.c.l.b16 %v2239
  %v7588 = vunpack.c.h.b16 %v2239
  %v7589 = vunpack.c.l.b16 %v2240
  %v7590 = vunpack.c.h.b16 %v2240
  %v7591 = vunpack.c.l.b16 %v2241
  %v7592 = vunpack.c.h.b16 %v2241
  %v7593 = vunpack.c.l.b16 %v2242
  %v7594 = vunpack.c.h.b16 %v2242
  %v7595 = vunpack.c.l.b16 %v2243
  %v7596 = vunpack.c.h.b16 %v2243
  %v7597 = vunpack.c.l.b16 %v2244
  %v7598 = vunpack.c.h.b16 %v2244
  %v7599 = vunpack.c.l.b16 %v2245
  %v7600 = vunpack.c.h.b16 %v2245
  %v7601 = vunpack.c.l.b16 %v2246
  %v7602 = vunpack.c.h.b16 %v2246
  %v7603 = vunpack.c.l.b16 %v2247
  %v7604 = vunpack.c.h.b16 %v2247
  %v7605 = vunpack.c.l.b16 %v2248
  %v7606 = vunpack.c.h.b16 %v2248
  %v7607 = vunpack.c.l.b16 %v2249
  %v7608 = vunpack.c.h.b16 %v2249
  %v7609 = vunpack.c.l.b16 %v2250
  %v7610 = vunpack.c.h.b16 %v2250
  %v7611 = vunpack.c.l.b16 %v2251
  %v7612 = vunpack.c.h.b16 %v2251
  %v7613 = vunpack.c.l.b16 %v2252
  %v7614 = vunpack.c.h.b16 %v2252
  %v7615 = vunpack.c.l.b16 %v2253
  %v7616 = vunpack.c.h.b16 %v2253
  %v7617 = vunpack.c.l.b16 %v2254
  %v7618 = vunpack.c.h.b16 %v2254
  %v7619 = vunpack.c.l.b16 %v2255
  %v7620 = vunpack.c.h.b16 %v2255
  %v7621 = vunpack.c.l.b16 %v2256
  %v7622 = vunpack.c.h.b16 %v2256
  %v7623 = vunpack.c.l.b16 %v2257
  %v7624 = vunpack.c.h.b16 %v2257
  %v7625 = vunpack.c.l.b16 %v2258
  %v7626 = vunpack.c.h.b16 %v2258
  %v7627 = vunpack.c.l.b16 %v2259
  %v7628 = vunpack.c.h.b16 %v2259
  %v7629 = vunpack.c.l.b16 %v2260
  %v7630 = vunpack.c.h.b16 %v2260
  %v7631 = vunpack.c.l.b16 %v2261
  %v7632 = vunpack.c.h.b16 %v2261
  %v7633 = vunpack.c.l.b16 %v2262
  %v7634 = vunpack.c.h.b16 %v2262
  %v7635 = vunpack.c.l.b16 %v2263
  %v7636 = vunpack.c.h.b16 %v2263
  %v7637 = vunpack.c.l.b16 %v2264
  %v7638 = vunpack.c.h.b16 %v2264
  %v7639 = vunpack.c.l.b16 %v2265
  %v7640 = vunpack.c.h.b16 %v2265
  %v7641 = vunpack.c.l.b16 %v2266
  %v7642 = vunpack.c.h.b16 %v2266
  %v7643 = vunpack.c.l.b16 %v2267
  %v7644 = vunpack.c.h.b16 %v2267
  %v7645 = vunpack.c.l.b16 %v2268
  %v7646 = vunpack.c.h.b16 %v2268
  %v7647 = vunpack.c.l.b16 %v2269
  %v7648 = vunpack.c.h.b16 %v2269
  %v7649 = vunpack.c.l.b16 %v2270
  %v7650 = vunpack.c.h.b16 %v2270
  %v7651 = vunpack.c.l.b16 %v2271
  %v7652 = vunpack.c.h.b16 %v2271
  %v7653 = vunpack.c.l.b16 %v2272
  %v7654 = vunpack.c.h.b16 %v2272
  %v7655 = vunpack.c.l.b16 %v2273
  %v7656 = vunpack.c.h.b16 %v2273
  %v7657 = vunpack.c.l.b16 %v2274
  %v7658 = vunpack.c.h.b16 %v2274
  %v7659 = vunpack.c.l.b16 %v2275
  %v7660 = vunpack.c.h.b16 %v2275
  %v7661 = vunpack.c.l.b16 %v2276
  %v7662 = vunpack.c.h.b16 %v2276
  %v7663 = vunpack.c.l.b16 %v2277
  %v7664 = vunpack.c.h.b16 %v2277
  %v7665 = vunpack.c.l.b16 %v2278
  %v7666 = vunpack.c.h.b16 %v2278
  %v7667 = vunpack.c.l.b16 %v2279
  %v7668 = vunpack.c.h.b16 %v2279
  %v7669 = vunpack.c.l.b16 %v2280
  %v7670 = vunpack.c.h.b16 %v2280
  %v7671 = vunpack.c.l.b16 %v2281
  %v7672 = vunpack.c.h.b16 %v2281
  %v7673 = vunpack.c.l.b16 %v2282
  %v7674 = vunpack.c.h.b16 %v2282
  %v7675 = vunpack.c.l.b16 %v2283
  %v7676 = vunpack.c.h.b16 %v2283
  %v7677 = vunpack.c.l.b16 %v2284
  %v7678 = vunpack.c.h.b16 %v2284
  %v7679 = vunpack.c.l.b16 %v2285
  %v7680 = vunpack.c.h.b16 %v2285
  %v7681 = vunpack.c.l.b16 %v2286
  %v7682 = vunpack.c.h.b16 %v2286
  %v7683 = vunpack.c.l.b16 %v2287
  %v7684 = vunpack.c.h.b16 %v2287
  %v7685 = vunpack.c.l.b16 %v2288
  %v7686 = vunpack.c.h.b16 %v2288
  %v7687 = vunpack.c.l.b16 %v2289
  %v7688 = vunpack.c.h.b16 %v2289
  %v7689 = vunpack.c.l.b16 %v2290
  %v7690 = vunpack.c.h.b16 %v2290
  %v7691 = vunpack.c.l.b16 %v2291
  %v7692 = vunpack.c.h.b16 %v2291
  %v7693 = vunpack.c.l.b16 %v2292
  %v7694 = vunpack.c.h.b16 %v2292
  %v7695 = vunpack.c.l.b16 %v2293
  %v7696 = vunpack.c.h.b16 %v2293
  %v7697 = vunpack.c.l.b16 %v2294
  %v7698 = vunpack.c.h.b16 %v2294
  %v7699 = vunpack.c.l.b16 %v2295
  %v7700 = vunpack.c.h.b16 %v2295
  %v7701 = vunpack.c.l.b16 %v2296
  %v7702 = vunpack.c.h.b16 %v2296
  %v7703 = vunpack.c.l.b16 %v2297
  %v7704 = vunpack.c.h.b16 %v2297
  %v7705 = vunpack.c.l.b16 %v2298
  %v7706 = vunpack.c.h.b16 %v2298
  %v7707 = vunpack.c.l.b16 %v2299
  %v7708 = vunpack.c.h.b16 %v2299
  %v7709 = vunpack.c.l.b16 %v2300
  %v7710 = vunpack.c.h.b16 %v2300
  %v7711 = vunpack.c.l.b16 %v2301
  %v7712 = vunpack.c.h.b16 %v2301
  %v7713 = vunpack.c.l.b16 %v2302
  %v7714 = vunpack.c.h.b16 %v2302
  %v7715 = vunpack.c.l.b16 %v2303
  %v7716 = vunpack.c.h.b16 %v2303
  %v7717 = vunpack.c.l.b16 %v2304
  %v7718 = vunpack.c.h.b16 %v2304
  %v7719 = vunpack.c.l.b16 %v2305
  %v7720 = vunpack.c.h.b16 %v2305
  %v7721 = vunpack.c.l.b16 %v2306
  %v7722 = vunpack.c.h.b16 %v2306
  %v7723 = vunpack.c.l.b16 %v2307
  %v7724 = vunpack.c.h.b16 %v2307
  %v7725 = vunpack.c.l.b16 %v2308
  %v7726 = vunpack.c.h.b16 %v2308
  %v7727 = vunpack.c.l.b16 %v2309
  %v7728 = vunpack.c.h.b16 %v2309
  %v7729 = vunpack.c.l.b16 %v2310
  %v7730 = vunpack.c.h.b16 %v2310
  %v7731 = vunpack.c.l.b16 %v2311
  %v7732 = vunpack.c.h.b16 %v2311
  %v7733 = vunpack.c.l.b16 %v2312
  %v7734 = vunpack.c.h.b16 %v2312
  %v7735 = vunpack.c.l.b16 %v2313
  %v7736 = vunpack.c.h.b16 %v2313
  %v7737 = vunpack.c.l.b16 %v2314
  %v7738 = vunpack.c.h.b16 %v2314
  %v7739 = vunpack.c.l.b16 %v2315
  %v7740 = vunpack.c.h.b16 %v2315
  %v7741 = vunpack.c.l.b16 %v2316
  %v7742 = vunpack.c.h.b16 %v2316
  %v7743 = vunpack.c.l.b16 %v2317
  %v7744 = vunpack.c.h.b16 %v2317
  %v7745 = vunpack.c.l.b16 %v2318
  %v7746 = vunpack.c.h.b16 %v2318
  %v7747 = vunpack.c.l.b16 %v2319
  %v7748 = vunpack.c.h.b16 %v2319
  %v7749 = vunpack.c.l.b16 %v2320
  %v7750 = vunpack.c.h.b16 %v2320
  %v7751 = vunpack.c.l.b16 %v2321
  %v7752 = vunpack.c.h.b16 %v2321
  %v7753 = vunpack.c.l.b16 %v2322
  %v7754 = vunpack.c.h.b16 %v2322
  %v7755 = vunpack.c.l.b16 %v2323
  %v7756 = vunpack.c.h.b16 %v2323
  %v7757 = vunpack.c.l.b16 %v2324
  %v7758 = vunpack.c.h.b16 %v2324
  %v7759 = vunpack.c.l.b16 %v2325
  %v7760 = vunpack.c.h.b16 %v2325
  %v7761 = vunpack.c.l.b16 %v2326
  %v7762 = vunpack.c.h.b16 %v2326
  %v7763 = vunpack.c.l.b16 %v2327
  %v7764 = vunpack.c.h.b16 %v2327
  %v7765 = vunpack.c.l.b16 %v2328
  %v7766 = vunpack.c.h.b16 %v2328
  %v7767 = vunpack.c.l.b16 %v2329
  %v7768 = vunpack.c.h.b16 %v2329
  %v7769 = vunpack.c.l.b16 %v2330
  %v7770 = vunpack.c.h.b16 %v2330
  %v7771 = vunpack.c.l.b16 %v2331
  %v7772 = vunpack.c.h.b16 %v2331
  %v7773 = vunpack.c.l.b16 %v2332
  %v7774 = vunpack.c.h.b16 %v2332
  %v7775 = vunpack.c.l.b16 %v2333
  %v7776 = vunpack.c.h.b16 %v2333
  %v7777 = vunpack.c.l.b16 %v2334
  %v7778 = vunpack.c.h.b16 %v2334
  %v7779 = vunpack.c.l.b16 %v2335
  %v7780 = vunpack.c.h.b16 %v2335
  %v7781 = vunpack.c.l.b16 %v2336
  %v7782 = vunpack.c.h.b16 %v2336
  %v7783 = vunpack.c.l.b16 %v2337
  %v7784 = vunpack.c.h.b16 %v2337
  %v7785 = vunpack.c.l.b16 %v2338
  %v7786 = vunpack.c.h.b16 %v2338
  %v7787 = vunpack.c.l.b16 %v2339
  %v7788 = vunpack.c.h.b16 %v2339
  %v7789 = vunpack.c.l.b16 %v2340
  %v7790 = vunpack.c.h.b16 %v2340
  %v7791 = vunpack.c.l.b16 %v2341
  %v7792 = vunpack.c.h.b16 %v2341
  %v7793 = vunpack.c.l.b16 %v2342
  %v7794 = vunpack.c.h.b16 %v2342
  %v7795 = vunpack.c.l.b16 %v2343
  %v7796 = vunpack.c.h.b16 %v2343
  %v7797 = vunpack.c.l.b16 %v2344
  %v7798 = vunpack.c.h.b16 %v2344
  %v7799 = vunpack.c.l.b16 %v2345
  %v7800 = vunpack.c.h.b16 %v2345
  %v7801 = vunpack.c.l.b16 %v2346
  %v7802 = vunpack.c.h.b16 %v2346
  %v7803 = vunpack.c.l.b16 %v2347
  %v7804 = vunpack.c.h.b16 %v2347
  %v7805 = vunpack.c.l.b16 %v2348
  %v7806 = vunpack.c.h.b16 %v2348
  %v7807 = vunpack.c.l.b16 %v2349
  %v7808 = vunpack.c.h.b16 %v2349
  %v7809 = vunpack.c.l.b16 %v2350
  %v7810 = vunpack.c.h.b16 %v2350
  %v7811 = vunpack.c.l.b16 %v2351
  %v7812 = vunpack.c.h.b16 %v2351
  %v7813 = vunpack.c.l.b16 %v2352
  %v7814 = vunpack.c.h.b16 %v2352
  %v7815 = vunpack.c.l.b16 %v2353
  %v7816 = vunpack.c.h.b16 %v2353
  %v7817 = vunpack.c.l.b16 %v2354
  %v7818 = vunpack.c.h.b16 %v2354
  %v7819 = vunpack.c.l.b16 %v2355
  %v7820 = vunpack.c.h.b16 %v2355
  %v7821 = vunpack.c.l.b16 %v2356
  %v7822 = vunpack.c.h.b16 %v2356
  %v7823 = vunpack.c.l.b16 %v2357
  %v7824 = vunpack.c.h.b16 %v2357
  %v7825 = vunpack.c.l.b16 %v2358
  %v7826 = vunpack.c.h.b16 %v2358
  %v7827 = vunpack.c.l.b16 %v2359
  %v7828 = vunpack.c.h.b16 %v2359
  %v7829 = vunpack.c.l.b16 %v2360
  %v7830 = vunpack.c.h.b16 %v2360
  %v7831 = vunpack.c.l.b16 %v2361
  %v7832 = vunpack.c.h.b16 %v2361
  %v7833 = vunpack.c.l.b16 %v2362
  %v7834 = vunpack.c.h.b16 %v2362
  %v7835 = vunpack.c.l.b16 %v2363
  %v7836 = vunpack.c.h.b16 %v2363
  %v7837 = vunpack.c.l.b16 %v2364
  %v7838 = vunpack.c.h.b16 %v2364
  %v7839 = vunpack.c.l.b16 %v2365
  %v7840 = vunpack.c.h.b16 %v2365
  %v7841 = vunpack.c.l.b16 %v2366
  %v7842 = vunpack.c.h.b16 %v2366
  %v7843 = vunpack.c.l.b16 %v2367
  %v7844 = vunpack.c.h.b16 %v2367
  %v7845 = vunpack.c.l.b16 %v2368
  %v7846 = vunpack.c.h.b16 %v2368
  %v7847 = vunpack.c.l.b16 %v2369
  %v7848 = vunpack.c.h.b16 %v2369
  %v7849 = vunpack.c.l.b16 %v2370
  %v7850 = vunpack.c.h.b16 %v2370
  %v7851 = vunpack.c.l.b16 %v2371
  %v7852 = vunpack.c.h.b16 %v2371
  %v7853 = vunpack.c.l.b16 %v2372
  %v7854 = vunpack.c.h.b16 %v2372
  %v7855 = vunpack.c.l.b16 %v2373
  %v7856 = vunpack.c.h.b16 %v2373
  %v7857 = vunpack.c.l.b16 %v2374
  %v7858 = vunpack.c.h.b16 %v2374
  %v7859 = vunpack.c.l.b16 %v2375
  %v7860 = vunpack.c.h.b16 %v2375
  %v7861 = vunpack.c.l.b16 %v2376
  %v7862 = vunpack.c.h.b16 %v2376
  %v7863 = vunpack.c.l.b16 %v2377
  %v7864 = vunpack.c.h.b16 %v2377
  %v7865 = vunpack.c.l.b16 %v2378
  %v7866 = vunpack.c.h.b16 %v2378
  %v7867 = vunpack.c.l.b16 %v2379
  %v7868 = vunpack.c.h.b16 %v2379
  %v7869 = vunpack.c.l.b16 %v2380
  %v7870 = vunpack.c.h.b16 %v2380
  %v7871 = vunpack.c.l.b16 %v2381
  %v7872 = vunpack.c.h.b16 %v2381
  %v7873 = vunpack.c.l.b16 %v2382
  %v7874 = vunpack.c.h.b16 %v2382
  %v7875 = vunpack.c.l.b16 %v2383
  %v7876 = vunpack.c.h.b16 %v2383
  %v7877 = vunpack.c.l.b16 %v2384
  %v7878 = vunpack.c.h.b16 %v2384
  %v7879 = vunpack.c.l.b16 %v2385
  %v7880 = vunpack.c.h.b16 %v2385
  %v7881 = vunpack.c.l.b16 %v2386
  %v7882 = vunpack.c.h.b16 %v2386
  %v7883 = vunpack.c.l.b16 %v2387
  %v7884 = vunpack.c.h.b16 %v2387
  %v7885 = vunpack.c.l.b16 %v2388
  %v7886 = vunpack.c.h.b16 %v2388
  %v7887 = vunpack.c.l.b16 %v2389
  %v7888 = vunpack.c.h.b16 %v2389
  %v7889 = vunpack.c.l.b16 %v2390
  %v7890 = vunpack.c.h.b16 %v2390
  %v7891 = vunpack.c.l.b16 %v2391
  %v7892 = vunpack.c.h.b16 %v2391
  %v7893 = vunpack.c.l.b16 %v2392
  %v7894 = vunpack.c.h.b16 %v2392
  %v7895 = vunpack.c.l.b16 %v2393
  %v7896 = vunpack.c.h.b16 %v2393
  %v7897 = vunpack.c.l.b16 %v2394
  %v7898 = vunpack.c.h.b16 %v2394
  %v7899 = vunpack.c.l.b16 %v2395
  %v7900 = vunpack.c.h.b16 %v2395
  %v7901 = vunpack.c.l.b16 %v2396
  %v7902 = vunpack.c.h.b16 %v2396
  %v7903 = vunpack.c.l.b16 %v2397
  %v7904 = vunpack.c.h.b16 %v2397
  %v7905 = vunpack.c.l.b16 %v2398
  %v7906 = vunpack.c.h.b16 %v2398
  %v7907 = vunpack.c.l.b16 %v2399
  %v7908 = vunpack.c.h.b16 %v2399
  %v7909 = vunpack.c.l.b16 %v2400
  %v7910 = vunpack.c.h.b16 %v2400
  %v7911 = vunpack.c.l.b16 %v2401
  %v7912 = vunpack.c.h.b16 %v2401
  %v7913 = vunpack.c.l.b16 %v2402
  %v7914 = vunpack.c.h.b16 %v2402
  %v7915 = vunpack.c.l.b16 %v2403
  %v7916 = vunpack.c.h.b16 %v2403
  %v7917 = vunpack.c.l.b16 %v2404
  %v7918 = vunpack.c.h.b16 %v2404
  %v7919 = vunpack.c.l.b16 %v2405
  %v7920 = vunpack.c.h.b16 %v2405
  %v7921 = vunpack.c.l.b16 %v2406
  %v7922 = vunpack.c.h.b16 %v2406
  %v7923 = vunpack.c.l.b16 %v2407
  %v7924 = vunpack.c.h.b16 %v2407
  %v7925 = vunpack.c.l.b16 %v2408
  %v7926 = vunpack.c.h.b16 %v2408
  %v7927 = vunpack.c.l.b16 %v2409
  %v7928 = vunpack.c.h.b16 %v2409
  %v7929 = vunpack.c.l.b16 %v2410
  %v7930 = vunpack.c.h.b16 %v2410
  %v7931 = vunpack.c.l.b16 %v2411
  %v7932 = vunpack.c.h.b16 %v2411
  %v7933 = vunpack.c.l.b16 %v2412
  %v7934 = vunpack.c.h.b16 %v2412
  %v7935 = vunpack.c.l.b16 %v2413
  %v7936 = vunpack.c.h.b16 %v2413
  %v7937 = vunpack.c.l.b16 %v2414
  %v7938 = vunpack.c.h.b16 %v2414
  %v7939 = vunpack.c.l.b16 %v2415
  %v7940 = vunpack.c.h.b16 %v2415
  %v7941 = vunpack.c.l.b16 %v2416
  %v7942 = vunpack.c.h.b16 %v2416
  %v7943 = vunpack.c.l.b16 %v2417
  %v7944 = vunpack.c.h.b16 %v2417
  %v7945 = vunpack.c.l.b16 %v2418
  %v7946 = vunpack.c.h.b16 %v2418
  %v7947 = vunpack.c.l.b16 %v2419
  %v7948 = vunpack.c.h.b16 %v2419
  %v7949 = vunpack.c.l.b16 %v2420
  %v7950 = vunpack.c.h.b16 %v2420
  %v7951 = vunpack.c.l.b16 %v2421
  %v7952 = vunpack.c.h.b16 %v2421
  %v7953 = vunpack.c.l.b16 %v2422
  %v7954 = vunpack.c.h.b16 %v2422
  %v7955 = vunpack.c.l.b16 %v2423
  %v7956 = vunpack.c.h.b16 %v2423
  %v7957 = vunpack.c.l.b16 %v2424
  %v7958 = vunpack.c.h.b16 %v2424
  %v7959 = vunpack.c.l.b16 %v2425
  %v7960 = vunpack.c.h.b16 %v2425
  %v7961 = vunpack.c.l.b16 %v2426
  %v7962 = vunpack.c.h.b16 %v2426
  %v7963 = vunpack.c.l.b16 %v2427
  %v7964 = vunpack.c.h.b16 %v2427
  %v7965 = vunpack.c.l.b16 %v2428
  %v7966 = vunpack.c.h.b16 %v2428
  %v7967 = vunpack.c.l.b16 %v2429
  %v7968 = vunpack.c.h.b16 %v2429
  %v7969 = vunpack.c.l.b16 %v2430
  %v7970 = vunpack.c.h.b16 %v2430
  %v7971 = vunpack.c.l.b16 %v2431
  %v7972 = vunpack.c.h.b16 %v2431
  %v7973 = vunpack.c.l.b16 %v2432
  %v7974 = vunpack.c.h.b16 %v2432
  %v7975 = vunpack.c.l.b16 %v2433
  %v7976 = vunpack.c.h.b16 %v2433
  %v7977 = vunpack.c.l.b16 %v2434
  %v7978 = vunpack.c.h.b16 %v2434
  %v7979 = vunpack.c.l.b16 %v2435
  %v7980 = vunpack.c.h.b16 %v2435
  %v7981 = vunpack.c.l.b16 %v2436
  %v7982 = vunpack.c.h.b16 %v2436
  %v7983 = vunpack.c.l.b16 %v2437
  %v7984 = vunpack.c.h.b16 %v2437
  %v7985 = vunpack.c.l.b16 %v2438
  %v7986 = vunpack.c.h.b16 %v2438
  %v7987 = vunpack.c.l.b16 %v2439
  %v7988 = vunpack.c.h.b16 %v2439
  %v7989 = vunpack.c.l.b16 %v2440
  %v7990 = vunpack.c.h.b16 %v2440
  %v7991 = vunpack.c.l.b16 %v2441
  %v7992 = vunpack.c.h.b16 %v2441
  %v7993 = vunpack.c.l.b16 %v2442
  %v7994 = vunpack.c.h.b16 %v2442
  %v7995 = vunpack.c.l.b16 %v2443
  %v7996 = vunpack.c.h.b16 %v2443
  %v7997 = vunpack.c.l.b16 %v2444
  %v7998 = vunpack.c.h.b16 %v2444
  %v7999 = vunpack.c.l.b16 %v2445
  %v8000 = vunpack.c.h.b16 %v2445
  %v8001 = vunpack.c.l.b16 %v2446
  %v8002 = vunpack.c.h.b16 %v2446
  %v8003 = vunpack.c.l.b16 %v2447
  %v8004 = vunpack.c.h.b16 %v2447
  %v8005 = vunpack.c.l.b16 %v2448
  %v8006 = vunpack.c.h.b16 %v2448
  %v8007 = vunpack.c.l.b16 %v2449
  %v8008 = vunpack.c.h.b16 %v2449
  %v8009 = vunpack.c.l.b16 %v2450
  %v8010 = vunpack.c.h.b16 %v2450
  %v8011 = vunpack.c.l.b16 %v2451
  %v8012 = vunpack.c.h.b16 %v2451
  %v8013 = vunpack.c.l.b16 %v2452
  %v8014 = vunpack.c.h.b16 %v2452
  %v8015 = vunpack.c.l.b16 %v2453
  %v8016 = vunpack.c.h.b16 %v2453
  %v8017 = vunpack.c.l.b16 %v2454
  %v8018 = vunpack.c.h.b16 %v2454
  %v8019 = vunpack.c.l.b16 %v2455
  %v8020 = vunpack.c.h.b16 %v2455
  %v8021 = vunpack.c.l.b16 %v2456
  %v8022 = vunpack.c.h.b16 %v2456
  %v8023 = vunpack.c.l.b16 %v2457
  %v8024 = vunpack.c.h.b16 %v2457
  %v8025 = vunpack.c.l.b16 %v2458
  %v8026 = vunpack.c.h.b16 %v2458
  %v8027 = vunpack.c.l.b16 %v2459
  %v8028 = vunpack.c.h.b16 %v2459
  %v8029 = vunpack.c.l.b16 %v2460
  %v8030 = vunpack.c.h.b16 %v2460
  %v8031 = vunpack.c.l.b16 %v2461
  %v8032 = vunpack.c.h.b16 %v2461
  %v8033 = vunpack.c.l.b16 %v2462
  %v8034 = vunpack.c.h.b16 %v2462
  %v8035 = vunpack.c.l.b16 %v2463
  %v8036 = vunpack.c.h.b16 %v2463
  %v8037 = vunpack.c.l.b16 %v2464
  %v8038 = vunpack.c.h.b16 %v2464
  %v8039 = vunpack.c.l.b16 %v2465
  %v8040 = vunpack.c.h.b16 %v2465
  %v8041 = vunpack.c.l.b16 %v2466
  %v8042 = vunpack.c.h.b16 %v2466
  %v8043 = vunpack.c.l.b16 %v2467
  %v8044 = vunpack.c.h.b16 %v2467
  %v8045 = vunpack.c.l.b16 %v2468
  %v8046 = vunpack.c.h.b16 %v2468
  %v8047 = vunpack.c.l.b16 %v2469
  %v8048 = vunpack.c.h.b16 %v2469
  %v8049 = vunpack.c.l.b16 %v2470
  %v8050 = vunpack.c.h.b16 %v2470
  %v8051 = vunpack.c.l.b16 %v2471
  %v8052 = vunpack.c.h.b16 %v2471
  %v8053 = vunpack.c.l.b16 %v2472
  %v8054 = vunpack.c.h.b16 %v2472
  %v8055 = vunpack.c.l.b16 %v2473
  %v8056 = vunpack.c.h.b16 %v2473
  %v8057 = vunpack.c.l.b16 %v2474
  %v8058 = vunpack.c.h.b16 %v2474
  %v8059 = vunpack.c.l.b16 %v2475
  %v8060 = vunpack.c.h.b16 %v2475
  %v8061 = vunpack.c.l.b16 %v2476
  %v8062 = vunpack.c.h.b16 %v2476
  %v8063 = vunpack.c.l.b16 %v2477
  %v8064 = vunpack.c.h.b16 %v2477
  %v8065 = vunpack.c.l.b16 %v2478
  %v8066 = vunpack.c.h.b16 %v2478
  %v8067 = vunpack.c.l.b16 %v2479
  %v8068 = vunpack.c.h.b16 %v2479
  %v8069 = vunpack.c.l.b16 %v2480
  %v8070 = vunpack.c.h.b16 %v2480
  %v8071 = vunpack.c.l.b16 %v2481
  %v8072 = vunpack.c.h.b16 %v2481
  %v8073 = vunpack.c.l.b16 %v2482
  %v8074 = vunpack.c.h.b16 %v2482
  %v8075 = vunpack.c.l.b16 %v2483
  %v8076 = vunpack.c.h.b16 %v2483
  %v8077 = vunpack.c.l.b16 %v2484
  %v8078 = vunpack.c.h.b16 %v2484
  %v8079 = vunpack.c.l.b16 %v2485
  %v8080 = vunpack.c.h.b16 %v2485
  %v8081 = vunpack.c.l.b16 %v2486
  %v8082 = vunpack.c.h.b16 %v2486
  %v8083 = vunpack.c.l.b16 %v2487
  %v8084 = vunpack.c.h.b16 %v2487
  %v8085 = vunpack.c.l.b16 %v2488
  %v8086 = vunpack.c.h.b16 %v2488
  %v8087 = vunpack.c.l.b16 %v2489
  %v8088 = vunpack.c.h.b16 %v2489
  %v8089 = vunpack.c.l.b16 %v2490
  %v8090 = vunpack.c.h.b16 %v2490
  %v8091 = vunpack.c.l.b16 %v2491
  %v8092 = vunpack.c.h.b16 %v2491
  %v8093 = vunpack.c.l.b16 %v2492
  %v8094 = vunpack.c.h.b16 %v2492
  %v8095 = vunpack.c.l.b16 %v2493
  %v8096 = vunpack.c.h.b16 %v2493
  %v8097 = vunpack.c.l.b16 %v2494
  %v8098 = vunpack.c.h.b16 %v2494
  %v8099 = vunpack.c.l.b16 %v2495
  %v8100 = vunpack.c.h.b16 %v2495
  %v8101 = vunpack.c.l.b16 %v2496
  %v8102 = vunpack.c.h.b16 %v2496
  %v8103 = vunpack.c.l.b16 %v2497
  %v8104 = vunpack.c.h.b16 %v2497
  %v8105 = vunpack.c.l.b16 %v2498
  %v8106 = vunpack.c.h.b16 %v2498
  %v8107 = vunpack.c.l.b16 %v2499
  %v8108 = vunpack.c.h.b16 %v2499
  %v8109 = vunpack.c.l.b16 %v2500
  %v8110 = vunpack.c.h.b16 %v2500
  %v8111 = vunpack.c.l.b16 %v2501
  %v8112 = vunpack.c.h.b16 %v2501
  %v8113 = vunpack.c.l.b16 %v2502
  %v8114 = vunpack.c.h.b16 %v2502
  %v8115 = vunpack.c.l.b16 %v2503
  %v8116 = vunpack.c.h.b16 %v2503
  %v8117 = vunpack.c.l.b16 %v2504
  %v8118 = vunpack.c.h.b16 %v2504
  %v8119 = vunpack.c.l.b16 %v2505
  %v8120 = vunpack.c.h.b16 %v2505
  %v8121 = vunpack.c.l.b16 %v2506
  %v8122 = vunpack.c.h.b16 %v2506
  %v8123 = vunpack.c.l.b16 %v2507
  %v8124 = vunpack.c.h.b16 %v2507
  %v8125 = vunpack.c.l.b16 %v2508
  %v8126 = vunpack.c.h.b16 %v2508
  %v8127 = vunpack.c.l.b16 %v2509
  %v8128 = vunpack.c.h.b16 %v2509
  %v8129 = vunpack.c.l.b16 %v2510
  %v8130 = vunpack.c.h.b16 %v2510
  %v8131 = vunpack.c.l.b16 %v2511
  %v8132 = vunpack.c.h.b16 %v2511
  %v8133 = vunpack.c.l.b16 %v2512
  %v8134 = vunpack.c.h.b16 %v2512
  %v8135 = vunpack.c.l.b16 %v2513
  %v8136 = vunpack.c.h.b16 %v2513
  %v8137 = vunpack.c.l.b16 %v2514
  %v8138 = vunpack.c.h.b16 %v2514
  %v8139 = vunpack.c.l.b16 %v2515
  %v8140 = vunpack.c.h.b16 %v2515
  %v8141 = vunpack.c.l.b16 %v2516
  %v8142 = vunpack.c.h.b16 %v2516
  %v8143 = vunpack.c.l.b16 %v2517
  %v8144 = vunpack.c.h.b16 %v2517
  %v8145 = vunpack.c.l.b16 %v2518
  %v8146 = vunpack.c.h.b16 %v2518
  %v8147 = vunpack.c.l.b16 %v2519
  %v8148 = vunpack.c.h.b16 %v2519
  %v8149 = vunpack.c.l.b16 %v2520
  %v8150 = vunpack.c.h.b16 %v2520
  %v8151 = vunpack.c.l.b16 %v2521
  %v8152 = vunpack.c.h.b16 %v2521
  %v8153 = vunpack.c.l.b16 %v2522
  %v8154 = vunpack.c.h.b16 %v2522
  %v8155 = vunpack.c.l.b16 %v2523
  %v8156 = vunpack.c.h.b16 %v2523
  %v8157 = vunpack.c.l.b16 %v2524
  %v8158 = vunpack.c.h.b16 %v2524
  %v8159 = vunpack.c.l.b16 %v2525
  %v8160 = vunpack.c.h.b16 %v2525
  %v8161 = vunpack.c.l.b16 %v2526
  %v8162 = vunpack.c.h.b16 %v2526
  %v8163 = vunpack.c.l.b16 %v2527
  %v8164 = vunpack.c.h.b16 %v2527
  %v8165 = vunpack.c.l.b16 %v2528
  %v8166 = vunpack.c.h.b16 %v2528
  %v8167 = vunpack.c.l.b16 %v2529
  %v8168 = vunpack.c.h.b16 %v2529
  %v8169 = vunpack.c.l.b16 %v2530
  %v8170 = vunpack.c.h.b16 %v2530
  %v8171 = vunpack.c.l.b16 %v2531
  %v8172 = vunpack.c.h.b16 %v2531
  %v8173 = vunpack.c.l.b16 %v2532
  %v8174 = vunpack.c.h.b16 %v2532
  %v8175 = vunpack.c.l.b16 %v2533
  %v8176 = vunpack.c.h.b16 %v2533
  %v8177 = vunpack.c.l.b16 %v2534
  %v8178 = vunpack.c.h.b16 %v2534
  %v8179 = vunpack.c.l.b16 %v2535
  %v8180 = vunpack.c.h.b16 %v2535
  %v8181 = vunpack.c.l.b16 %v2536
  %v8182 = vunpack.c.h.b16 %v2536
  %v8183 = vunpack.c.l.b16 %v2537
  %v8184 = vunpack.c.h.b16 %v2537
  %v8185 = vunpack.c.l.b16 %v2538
  %v8186 = vunpack.c.h.b16 %v2538
  %v8187 = vunpack.c.l.b16 %v2539
  %v8188 = vunpack.c.h.b16 %v2539
  %v8189 = vunpack.c.l.b16 %v2540
  %v8190 = vunpack.c.h.b16 %v2540
  %v8191 = vunpack.c.l.b16 %v2541
  %v8192 = vunpack.c.h.b16 %v2541
  %v8193 = vunpack.c.l.b16 %v2542
  %v8194 = vunpack.c.h.b16 %v2542
  %v8195 = vunpack.c.l.b16 %v2543
  %v8196 = vunpack.c.h.b16 %v2543
  %v8197 = vunpack.c.l.b16 %v2544
  %v8198 = vunpack.c.h.b16 %v2544
  %v8199 = vunpack.c.l.b16 %v2545
  %v8200 = vunpack.c.h.b16 %v2545
  %v8201 = vunpack.c.l.b16 %v2546
  %v8202 = vunpack.c.h.b16 %v2546
  %v8203 = vunpack.c.l.b16 %v2547
  %v8204 = vunpack.c.h.b16 %v2547
  %v8205 = vunpack.c.l.b16 %v2548
  %v8206 = vunpack.c.h.b16 %v2548
  %v8207 = vunpack.c.l.b16 %v2549
  %v8208 = vunpack.c.h.b16 %v2549
  %v8209 = vunpack.c.l.b16 %v2550
  %v8210 = vunpack.c.h.b16 %v2550
  %v8211 = vunpack.c.l.b16 %v2551
  %v8212 = vunpack.c.h.b16 %v2551
  %v8213 = vunpack.c.l.b16 %v2552
  %v8214 = vunpack.c.h.b16 %v2552
  %v8215 = vunpack.c.l.b16 %v2553
  %v8216 = vunpack.c.h.b16 %v2553
  %v8217 = vunpack.c.l.b16 %v2554
  %v8218 = vunpack.c.h.b16 %v2554
  %v8219 = vunpack.c.l.b16 %v2555
  %v8220 = vunpack.c.h.b16 %v2555
  %v8221 = vunpack.c.l.b16 %v2556
  %v8222 = vunpack.c.h.b16 %v2556
  %v8223 = vunpack.c.l.b16 %v2557
  %v8224 = vunpack.c.h.b16 %v2557
  %v8225 = vunpack.c.l.b16 %v2558
  %v8226 = vunpack.c.h.b16 %v2558
  %v8227 = vunpack.c.l.b16 %v2559
  %v8228 = vunpack.c.h.b16 %v2559
  %v8229 = vunpack.c.l.b16 %v2560
  %v8230 = vunpack.c.h.b16 %v2560
  %v8231 = vunpack.c.l.b16 %v2561
  %v8232 = vunpack.c.h.b16 %v2561
  %v8233 = vunpack.c.l.b16 %v2562
  %v8234 = vunpack.c.h.b16 %v2562
  %v8235 = vunpack.c.l.b16 %v2563
  %v8236 = vunpack.c.h.b16 %v2563
  %v8237 = vunpack.c.l.b16 %v2564
  %v8238 = vunpack.c.h.b16 %v2564
  %v8239 = vunpack.c.l.b16 %v2565
  %v8240 = vunpack.c.h.b16 %v2565
  %v8241 = vunpack.c.l.b16 %v2566
  %v8242 = vunpack.c.h.b16 %v2566
  %v8243 = vunpack.c.l.b16 %v2567
  %v8244 = vunpack.c.h.b16 %v2567
  %v8245 = vunpack.c.l.b16 %v2568
  %v8246 = vunpack.c.h.b16 %v2568
  %v8247 = vunpack.c.l.b16 %v2569
  %v8248 = vunpack.c.h.b16 %v2569
  %v8249 = vunpack.c.l.b16 %v2570
  %v8250 = vunpack.c.h.b16 %v2570
  %v8251 = vunpack.c.l.b16 %v2571
  %v8252 = vunpack.c.h.b16 %v2571
  %v8253 = vunpack.c.l.b16 %v2572
  %v8254 = vunpack.c.h.b16 %v2572
  %v8255 = vunpack.c.l.b16 %v2573
  %v8256 = vunpack.c.h.b16 %v2573
  %v8257 = vunpack.c.l.b16 %v2574
  %v8258 = vunpack.c.h.b16 %v2574
  %v8259 = vunpack.c.l.b16 %v2575
  %v8260 = vunpack.c.h.b16 %v2575
  %v8261 = vunpack.c.l.b16 %v2576
  %v8262 = vunpack.c.h.b16 %v2576
  %v8263 = vunpack.c.l.b16 %v2577
  %v8264 = vunpack.c.h.b16 %v2577
  %v8265 = vunpack.c.l.b16 %v2578
  %v8266 = vunpack.c.h.b16 %v2578
  %v8267 = vunpack.c.l.b16 %v2579
  %v8268 = vunpack.c.h.b16 %v2579
  %v8269 = vunpack.c.l.b16 %v2580
  %v8270 = vunpack.c.h.b16 %v2580
  %v8271 = vunpack.c.l.b16 %v2581
  %v8272 = vunpack.c.h.b16 %v2581
  %v8273 = vunpack.c.l.b16 %v2582
  %v8274 = vunpack.c.h.b16 %v2582
  %v8275 = vunpack.c.l.b16 %v2583
  %v8276 = vunpack.c.h.b16 %v2583
  %v8277 = vunpack.c.l.b16 %v2584
  %v8278 = vunpack.c.h.b16 %v2584
  %v8279 = vunpack.c.l.b16 %v2585
  %v8280 = vunpack.c.h.b16 %v2585
  %v8281 = vunpack.c.l.b16 %v2586
  %v8282 = vunpack.c.h.b16 %v2586
  %v8283 = vunpack.c.l.b16 %v2587
  %v8284 = vunpack.c.h.b16 %v2587
  %v8285 = vunpack.c.l.b16 %v2588
  %v8286 = vunpack.c.h.b16 %v2588
  %v8287 = vunpack.c.l.b16 %v2589
  %v8288 = vunpack.c.h.b16 %v2589
  %v8289 = vunpack.c.l.b16 %v2590
  %v8290 = vunpack.c.h.b16 %v2590
  %v8291 = vunpack.c.l.b16 %v2591
  %v8292 = vunpack.c.h.b16 %v2591
  %v8293 = vunpack.c.l.b16 %v2592
  %v8294 = vunpack.c.h.b16 %v2592
  %v8295 = vunpack.c.l.b16 %v2593
  %v8296 = vunpack.c.h.b16 %v2593
  %v8297 = vunpack.c.l.b16 %v2594
  %v8298 = vunpack.c.h.b16 %v2594
  %v8299 = vunpack.c.l.b16 %v2595
  %v8300 = vunpack.c.h.b16 %v2595
  %v8301 = vunpack.c.l.b16 %v2596
  %v8302 = vunpack.c.h.b16 %v2596
  %v8303 = vunpack.c.l.b16 %v2597
  %v8304 = vunpack.c.h.b16 %v2597
  %v8305 = vunpack.c.l.b16 %v2598
  %v8306 = vunpack.c.h.b16 %v2598
  %v8307 = vunpack.c.l.b16 %v2599
  %v8308 = vunpack.c.h.b16 %v2599
  %v8309 = vunpack.c.l.b16 %v2600
  %v8310 = vunpack.c.h.b16 %v2600
  %v8311 = vunpack.c.l.b16 %v2601
  %v8312 = vunpack.c.h.b16 %v2601
  %v8313 = vunpack.c.l.b16 %v2602
  %v8314 = vunpack.c.h.b16 %v2602
  %v8315 = vunpack.c.l.b16 %v2603
  %v8316 = vunpack.c.h.b16 %v2603
  %v8317 = vunpack.c.l.b16 %v2604
  %v8318 = vunpack.c.h.b16 %v2604
  %v8319 = vunpack.c.l.b16 %v2605
  %v8320 = vunpack.c.h.b16 %v2605
  %v8321 = vunpack.c.l.b16 %v2606
  %v8322 = vunpack.c.h.b16 %v2606
  %v8323 = vunpack.c.l.b16 %v2607
  %v8324 = vunpack.c.h.b16 %v2607
  %v8325 = vunpack.c.l.b16 %v2608
  %v8326 = vunpack.c.h.b16 %v2608
  %v8327 = vunpack.c.l.b16 %v2609
  %v8328 = vunpack.c.h.b16 %v2609
  %v8329 = vunpack.c.l.b16 %v2610
  %v8330 = vunpack.c.h.b16 %v2610
  %v8331 = vunpack.c.l.b16 %v2611
  %v8332 = vunpack.c.h.b16 %v2611
  %v8333 = vunpack.c.l.b16 %v2612
  %v8334 = vunpack.c.h.b16 %v2612
  %v8335 = vunpack.c.l.b16 %v2613
  %v8336 = vunpack.c.h.b16 %v2613
  %v8337 = vunpack.c.l.b16 %v2614
  %v8338 = vunpack.c.h.b16 %v2614
  %v8339 = vunpack.c.l.b16 %v2615
  %v8340 = vunpack.c.h.b16 %v2615
  %v8341 = vunpack.c.l.b16 %v2616
  %v8342 = vunpack.c.h.b16 %v2616
  %v8343 = vunpack.c.l.b16 %v2617
  %v8344 = vunpack.c.h.b16 %v2617
  %v8345 = vunpack.c.l.b16 %v2618
  %v8346 = vunpack.c.h.b16 %v2618
  %v8347 = vunpack.c.l.b16 %v2619
  %v8348 = vunpack.c.h.b16 %v2619
  %v8349 = vunpack.c.l.b16 %v2620
  %v8350 = vunpack.c.h.b16 %v2620
  %v8351 = vunpack.c.l.b16 %v2621
  %v8352 = vunpack.c.h.b16 %v2621
  %v8353 = vunpack.c.l.b16 %v2622
  %v8354 = vunpack.c.h.b16 %v2622
  %v8355 = vunpack.c.l.b16 %v2623
  %v8356 = vunpack.c.h.b16 %v2623
  %v8357 = vunpack.c.l.b16 %v2624
  %v8358 = vunpack.c.h.b16 %v2624
  %v8359 = vunpack.c.l.b16 %v2625
  %v8360 = vunpack.c.h.b16 %v2625
  %v8361 = vunpack.c.l.b16 %v2626
  %v8362 = vunpack.c.h.b16 %v2626
  %v8363 = vunpack.c.l.b16 %v2627
  %v8364 = vunpack.c.h.b16 %v2627
  %v8365 = vunpack.c.l.b16 %v2628
  %v8366 = vunpack.c.h.b16 %v2628
  %v8367 = vunpack.c.l.b16 %v2629
  %v8368 = vunpack.c.h.b16 %v2629
  %v8369 = vunpack.c.l.b16 %v2630
  %v8370 = vunpack.c.h.b16 %v2630
  %v8371 = vunpack.c.l.b16 %v2631
  %v8372 = vunpack.c.h.b16 %v2631
  %v8373 = vunpack.c.l.b16 %v2632
  %v8374 = vunpack.c.h.b16 %v2632
  %v8375 = vunpack.c.l.b16 %v2633
  %v8376 = vunpack.c.h.b16 %v2633
  %v8377 = vunpack.c.l.b16 %v2634
  %v8378 = vunpack.c.h.b16 %v2634
  %v8379 = vunpack.c.l.b16 %v2635
  %v8380 = vunpack.c.h.b16 %v2635
  %v8381 = vunpack.c.l.b16 %v2636
  %v8382 = vunpack.c.h.b16 %v2636
  %v8383 = vunpack.c.l.b16 %v2637
  %v8384 = vunpack.c.h.b16 %v2637
  %v8385 = vunpack.c.l.b16 %v2638
  %v8386 = vunpack.c.h.b16 %v2638
  %v8387 = vunpack.c.l.b16 %v2639
  %v8388 = vunpack.c.h.b16 %v2639
  %v8389 = vunpack.c.l.b16 %v2640
  %v8390 = vunpack.c.h.b16 %v2640
  %v8391 = vunpack.c.l.b16 %v2641
  %v8392 = vunpack.c.h.b16 %v2641
  %v8393 = vunpack.c.l.b16 %v2642
  %v8394 = vunpack.c.h.b16 %v2642
  %v8395 = vunpack.c.l.b16 %v2643
  %v8396 = vunpack.c.h.b16 %v2643
  %v8397 = vunpack.c.l.b16 %v2644
  %v8398 = vunpack.c.h.b16 %v2644
  %v8399 = vunpack.c.l.b16 %v2645
  %v8400 = vunpack.c.h.b16 %v2645
  %v8401 = vunpack.c.l.b16 %v2646
  %v8402 = vunpack.c.h.b16 %v2646
  %v8403 = vunpack.c.l.b16 %v2647
  %v8404 = vunpack.c.h.b16 %v2647
  %v8405 = vunpack.c.l.b16 %v2648
  %v8406 = vunpack.c.h.b16 %v2648
  %v8407 = vunpack.c.l.b16 %v2649
  %v8408 = vunpack.c.h.b16 %v2649
  %v8409 = vunpack.c.l.b16 %v2650
  %v8410 = vunpack.c.h.b16 %v2650
  %v8411 = vunpack.c.l.b16 %v2651
  %v8412 = vunpack.c.h.b16 %v2651
  %v8413 = vunpack.c.l.b16 %v2652
  %v8414 = vunpack.c.h.b16 %v2652
  %v8415 = vunpack.c.l.b16 %v2653
  %v8416 = vunpack.c.h.b16 %v2653
  %v8417 = vunpack.c.l.b16 %v2654
  %v8418 = vunpack.c.h.b16 %v2654
  %v8419 = vunpack.c.l.b16 %v2655
  %v8420 = vunpack.c.h.b16 %v2655
  %v8421 = vunpack.c.l.b16 %v2656
  %v8422 = vunpack.c.h.b16 %v2656
  %v8423 = vunpack.c.l.b16 %v2657
  %v8424 = vunpack.c.h.b16 %v2657
  %v8425 = vunpack.c.l.b16 %v2658
  %v8426 = vunpack.c.h.b16 %v2658
  %v8427 = vunpack.c.l.b16 %v2659
  %v8428 = vunpack.c.h.b16 %v2659
  %v8429 = vunpack.c.l.b16 %v2660
  %v8430 = vunpack.c.h.b16 %v2660
  %v8431 = vunpack.c.l.b16 %v2661
  %v8432 = vunpack.c.h.b16 %v2661
  %v8433 = vunpack.c.l.b16 %v2662
  %v8434 = vunpack.c.h.b16 %v2662
  %v8435 = vunpack.c.l.b16 %v2663
  %v8436 = vunpack.c.h.b16 %v2663
  %v8437 = vunpack.c.l.b16 %v2664
  %v8438 = vunpack.c.h.b16 %v2664
  %v8439 = vunpack.c.l.b16 %v2665
  %v8440 = vunpack.c.h.b16 %v2665
  %v8441 = vunpack.c.l.b16 %v2666
  %v8442 = vunpack.c.h.b16 %v2666
  %v8443 = vunpack.c.l.b16 %v2667
  %v8444 = vunpack.c.h.b16 %v2667
  %v8445 = vunpack.c.l.b16 %v2668
  %v8446 = vunpack.c.h.b16 %v2668
  %v8447 = vunpack.c.l.b16 %v2669
  %v8448 = vunpack.c.h.b16 %v2669
  %v8449 = vunpack.c.l.b16 %v2670
  %v8450 = vunpack.c.h.b16 %v2670
  %v8451 = vunpack.c.l.b16 %v2671
  %v8452 = vunpack.c.h.b16 %v2671
  %v8453 = vunpack.c.l.b16 %v2672
  %v8454 = vunpack.c.h.b16 %v2672
  %v8455 = vunpack.c.l.b16 %v2673
  %v8456 = vunpack.c.h.b16 %v2673
  %v8457 = vunpack.c.l.b16 %v2674
  %v8458 = vunpack.c.h.b16 %v2674
  %v8459 = vunpack.c.l.b16 %v2675
  %v8460 = vunpack.c.h.b16 %v2675
  %v8461 = vunpack.c.l.b16 %v2676
  %v8462 = vunpack.c.h.b16 %v2676
  %v8463 = vunpack.c.l.b16 %v2677
  %v8464 = vunpack.c.h.b16 %v2677
  %v8465 = vunpack.c.l.b16 %v2678
  %v8466 = vunpack.c.h.b16 %v2678
  %v8467 = vunpack.c.l.b16 %v2679
  %v8468 = vunpack.c.h.b16 %v2679
  %v8469 = vunpack.c.l.b16 %v2680
  %v8470 = vunpack.c.h.b16 %v2680
  %v8471 = vunpack.c.l.b16 %v2681
  %v8472 = vunpack.c.h.b16 %v2681
  %v8473 = vunpack.c.l.b16 %v2682
  %v8474 = vunpack.c.h.b16 %v2682
  %v8475 = vunpack.c.l.b16 %v2683
  %v8476 = vunpack.c.h.b16 %v2683
  %v8477 = vunpack.c.l.b16 %v2684
  %v8478 = vunpack.c.h.b16 %v2684
  %v8479 = vunpack.c.l.b16 %v2685
  %v8480 = vunpack.c.h.b16 %v2685
  %v8481 = vunpack.c.l.b16 %v2686
  %v8482 = vunpack.c.h.b16 %v2686
  %v8483 = vunpack.c.l.b16 %v2687
  %v8484 = vunpack.c.h.b16 %v2687
  %v8485 = vunpack.c.l.b16 %v2688
  %v8486 = vunpack.c.h.b16 %v2688
  %v8487 = vunpack.c.l.b16 %v2689
  %v8488 = vunpack.c.h.b16 %v2689
  %v8489 = vunpack.c.l.b16 %v2690
  %v8490 = vunpack.c.h.b16 %v2690
  %v8491 = vunpack.c.l.b16 %v2691
  %v8492 = vunpack.c.h.b16 %v2691
  %v8493 = vpack.c.b16 %v7477, %v7469
  %v8494 = vpack.c.b16 %v7478, %v7470
  %v8495 = vpack.c.b16 %v7479, %v7471
  %v8496 = vpack.c.b16 %v7480, %v7472
  %v8497 = vpack.c.b16 %v7481, %v7473
  %v8498 = vpack.c.b16 %v7482, %v7474
  %v8499 = vpack.c.b16 %v7483, %v7475
  %v8500 = vpack.c.b16 %v7484, %v7476
  %v8501 = vpack.c.b16 %v7493, %v7485
  %v8502 = vpack.c.b16 %v7494, %v7486
  %v8503 = vpack.c.b16 %v7495, %v7487
  %v8504 = vpack.c.b16 %v7496, %v7488
  %v8505 = vpack.c.b16 %v7497, %v7489
  %v8506 = vpack.c.b16 %v7498, %v7490
  %v8507 = vpack.c.b16 %v7499, %v7491
  %v8508 = vpack.c.b16 %v7500, %v7492
  %v8509 = vpack.c.b16 %v7509, %v7501
  %v8510 = vpack.c.b16 %v7510, %v7502
  %v8511 = vpack.c.b16 %v7511, %v7503
  %v8512 = vpack.c.b16 %v7512, %v7504
  %v8513 = vpack.c.b16 %v7513, %v7505
  %v8514 = vpack.c.b16 %v7514, %v7506
  %v8515 = vpack.c.b16 %v7515, %v7507
  %v8516 = vpack.c.b16 %v7516, %v7508
  %v8517 = vpack.c.b16 %v7525, %v7517
  %v8518 = vpack.c.b16 %v7526, %v7518
  %v8519 = vpack.c.b16 %v7527, %v7519
  %v8520 = vpack.c.b16 %v7528, %v7520
  %v8521 = vpack.c.b16 %v7529, %v7521
  %v8522 = vpack.c.b16 %v7530, %v7522
  %v8523 = vpack.c.b16 %v7531, %v7523
  %v8524 = vpack.c.b16 %v7532, %v7524
  %v8525 = vpack.c.b16 %v7541, %v7533
  %v8526 = vpack.c.b16 %v7542, %v7534
  %v8527 = vpack.c.b16 %v7543, %v7535
  %v8528 = vpack.c.b16 %v7544, %v7536
  %v8529 = vpack.c.b16 %v7545, %v7537
  %v8530 = vpack.c.b16 %v7546, %v7538
  %v8531 = vpack.c.b16 %v7547, %v7539
  %v8532 = vpack.c.b16 %v7548, %v7540
  %v8533 = vpack.c.b16 %v7557, %v7549
  %v8534 = vpack.c.b16 %v7558, %v7550
  %v8535 = vpack.c.b16 %v7559, %v7551
  %v8536 = vpack.c.b16 %v7560, %v7552
  %v8537 = vpack.c.b16 %v7561, %v7553
  %v8538 = vpack.c.b16 %v7562, %v7554
  %v8539 = vpack.c.b16 %v7563, %v7555
  %v8540 = vpack.c.b16 %v7564, %v7556
  %v8541 = vpack.c.b16 %v7573, %v7565
  %v8542 = vpack.c.b16 %v7574, %v7566
  %v8543 = vpack.c.b16 %v7575, %v7567
  %v8544 = vpack.c.b16 %v7576, %v7568
  %v8545 = vpack.c.b16 %v7577, %v7569
  %v8546 = vpack.c.b16 %v7578, %v7570
  %v8547 = vpack.c.b16 %v7579, %v7571
  %v8548 = vpack.c.b16 %v7580, %v7572
  %v8549 = vpack.c.b16 %v7589, %v7581
  %v8550 = vpack.c.b16 %v7590, %v7582
  %v8551 = vpack.c.b16 %v7591, %v7583
  %v8552 = vpack.c.b16 %v7592, %v7584
  %v8553 = vpack.c.b16 %v7593, %v7585
  %v8554 = vpack.c.b16 %v7594, %v7586
  %v8555 = vpack.c.b16 %v7595, %v7587
  %v8556 = vpack.c.b16 %v7596, %v7588
  %v8557 = vpack.c.b16 %v7605, %v7597
  %v8558 = vpack.c.b16 %v7606, %v7598
  %v8559 = vpack.c.b16 %v7607, %v7599
  %v8560 = vpack.c.b16 %v7608, %v7600
  %v8561 = vpack.c.b16 %v7609, %v7601
  %v8562 = vpack.c.b16 %v7610, %v7602
  %v8563 = vpack.c.b16 %v7611, %v7603
  %v8564 = vpack.c.b16 %v7612, %v7604
  %v8565 = vpack.c.b16 %v7621, %v7613
  %v8566 = vpack.c.b16 %v7622, %v7614
  %v8567 = vpack.c.b16 %v7623, %v7615
  %v8568 = vpack.c.b16 %v7624, %v7616
  %v8569 = vpack.c.b16 %v7625, %v7617
  %v8570 = vpack.c.b16 %v7626, %v7618
  %v8571 = vpack.c.b16 %v7627, %v7619
  %v8572 = vpack.c.b16 %v7628, %v7620
  %v8573 = vpack.c.b16 %v7637, %v7629
  %v8574 = vpack.c.b16 %v7638, %v7630
  %v8575 = vpack.c.b16 %v7639, %v7631
  %v8576 = vpack.c.b16 %v7640, %v7632
  %v8577 = vpack.c.b16 %v7641, %v7633
  %v8578 = vpack.c.b16 %v7642, %v7634
  %v8579 = vpack.c.b16 %v7643, %v7635
  %v8580 = vpack.c.b16 %v7644, %v7636
  %v8581 = vpack.c.b16 %v7653, %v7645
  %v8582 = vpack.c.b16 %v7654, %v7646
  %v8583 = vpack.c.b16 %v7655, %v7647
  %v8584 = vpack.c.b16 %v7656, %v7648
  %v8585 = vpack.c.b16 %v7657, %v7649
  %v8586 = vpack.c.b16 %v7658, %v7650
  %v8587 = vpack.c.b16 %v7659, %v7651
  %v8588 = vpack.c.b16 %v7660, %v7652
  %v8589 = vpack.c.b16 %v7669, %v7661
  %v8590 = vpack.c.b16 %v7670, %v7662
  %v8591 = vpack.c.b16 %v7671, %v7663
  %v8592 = vpack.c.b16 %v7672, %v7664
  %v8593 = vpack.c.b16 %v7673, %v7665
  %v8594 = vpack.c.b16 %v7674, %v7666
  %v8595 = vpack.c.b16 %v7675, %v7667
  %v8596 = vpack.c.b16 %v7676, %v7668
  %v8597 = vpack.c.b16 %v7685, %v7677
  %v8598 = vpack.c.b16 %v7686, %v7678
  %v8599 = vpack.c.b16 %v7687, %v7679
  %v8600 = vpack.c.b16 %v7688, %v7680
  %v8601 = vpack.c.b16 %v7689, %v7681
  %v8602 = vpack.c.b16 %v7690, %v7682
  %v8603 = vpack.c.b16 %v7691, %v7683
  %v8604 = vpack.c.b16 %v7692, %v7684
  %v8605 = vpack.c.b16 %v7701, %v7693
  %v8606 = vpack.c.b16 %v7702, %v7694
  %v8607 = vpack.c.b16 %v7703, %v7695
  %v8608 = vpack.c.b16 %v7704, %v7696
  %v8609 = vpack.c.b16 %v7705, %v7697
  %v8610 = vpack.c.b16 %v7706, %v7698
  %v8611 = vpack.c.b16 %v7707, %v7699
  %v8612 = vpack.c.b16 %v7708, %v7700
  %v8613 = vpack.c.b16 %v7717, %v7709
  %v8614 = vpack.c.b16 %v7718, %v7710
  %v8615 = vpack.c.b16 %v7719, %v7711
  %v8616 = vpack.c.b16 %v7720, %v7712
  %v8617 = vpack.c.b16 %v7721, %v7713
  %v8618 = vpack.c.b16 %v7722, %v7714
  %v8619 = vpack.c.b16 %v7723, %v7715
  %v8620 = vpack.c.b16 %v7724, %v7716
  %v8621 = vpack.c.b16 %v7733, %v7725
  %v8622 = vpack.c.b16 %v7734, %v7726
  %v8623 = vpack.c.b16 %v7735, %v7727
  %v8624 = vpack.c.b16 %v7736, %v7728
  %v8625 = vpack.c.b16 %v7737, %v7729
  %v8626 = vpack.c.b16 %v7738, %v7730
  %v8627 = vpack.c.b16 %v7739, %v7731
  %v8628 = vpack.c.b16 %v7740, %v7732
  %v8629 = vpack.c.b16 %v7749, %v7741
  %v8630 = vpack.c.b16 %v7750, %v7742
  %v8631 = vpack.c.b16 %v7751, %v7743
  %v8632 = vpack.c.b16 %v7752, %v7744
  %v8633 = vpack.c.b16 %v7753, %v7745
  %v8634 = vpack.c.b16 %v7754, %v7746
  %v8635 = vpack.c.b16 %v7755, %v7747
  %v8636 = vpack.c.b16 %v7756, %v7748
  %v8637 = vpack.c.b16 %v7765, %v7757
  %v8638 = vpack.c.b16 %v7766, %v7758
  %v8639 = vpack.c.b16 %v7767, %v7759
  %v8640 = vpack.c.b16 %v7768, %v7760
  %v8641 = vpack.c.b16 %v7769, %v7761
  %v8642 = vpack.c.b16 %v7770, %v7762
  %v8643 = vpack.c.b16 %v7771, %v7763
  %v8644 = vpack.c.b16 %v7772, %v7764
  %v8645 = vpack.c.b16 %v7781, %v7773
  %v8646 = vpack.c.b16 %v7782, %v7774
  %v8647 = vpack.c.b16 %v7783, %v7775
  %v8648 = vpack.c.b16 %v7784, %v7776
  %v8649 = vpack.c.b16 %v7785, %v7777
  %v8650 = vpack.c.b16 %v7786, %v7778
  %v8651 = vpack.c.b16 %v7787, %v7779
  %v8652 = vpack.c.b16 %v7788, %v7780
  %v8653 = vpack.c.b16 %v7797, %v7789
  %v8654 = vpack.c.b16 %v7798, %v7790
  %v8655 = vpack.c.b16 %v7799, %v7791
  %v8656 = vpack.c.b16 %v7800, %v7792
  %v8657 = vpack.c.b16 %v7801, %v7793
  %v8658 = vpack.c.b16 %v7802, %v7794
  %v8659 = vpack.c.b16 %v7803, %v7795
  %v8660 = vpack.c.b16 %v7804, %v7796
  %v8661 = vpack.c.b16 %v7813, %v7805
  %v8662 = vpack.c.b16 %v7814, %v7806
  %v8663 = vpack.c.b16 %v7815, %v7807
  %v8664 = vpack.c.b16 %v7816, %v7808
  %v8665 = vpack.c.b16 %v7817, %v7809
  %v8666 = vpack.c.b16 %v7818, %v7810
  %v8667 = vpack.c.b16 %v7819, %v7811
  %v8668 = vpack.c.b16 %v7820, %v7812
  %v8669 = vpack.c.b16 %v7829, %v7821
  %v8670 = vpack.c.b16 %v7830, %v7822
  %v8671 = vpack.c.b16 %v7831, %v7823
  %v8672 = vpack.c.b16 %v7832, %v7824
  %v8673 = vpack.c.b16 %v7833, %v7825
  %v8674 = vpack.c.b16 %v7834, %v7826
  %v8675 = vpack.c.b16 %v7835, %v7827
  %v8676 = vpack.c.b16 %v7836, %v7828
  %v8677 = vpack.c.b16 %v7845, %v7837
  %v8678 = vpack.c.b16 %v7846, %v7838
  %v8679 = vpack.c.b16 %v7847, %v7839
  %v8680 = vpack.c.b16 %v7848, %v7840
  %v8681 = vpack.c.b16 %v7849, %v7841
  %v8682 = vpack.c.b16 %v7850, %v7842
  %v8683 = vpack.c.b16 %v7851, %v7843
  %v8684 = vpack.c.b16 %v7852, %v7844
  %v8685 = vpack.c.b16 %v7861, %v7853
  %v8686 = vpack.c.b16 %v7862, %v7854
  %v8687 = vpack.c.b16 %v7863, %v7855
  %v8688 = vpack.c.b16 %v7864, %v7856
  %v8689 = vpack.c.b16 %v7865, %v7857
  %v8690 = vpack.c.b16 %v7866, %v7858
  %v8691 = vpack.c.b16 %v7867, %v7859
  %v8692 = vpack.c.b16 %v7868, %v7860
  %v8693 = vpack.c.b16 %v7877, %v7869
  %v8694 = vpack.c.b16 %v7878, %v7870
  %v8695 = vpack.c.b16 %v7879, %v7871
  %v8696 = vpack.c.b16 %v7880, %v7872
  %v8697 = vpack.c.b16 %v7881, %v7873
  %v8698 = vpack.c.b16 %v7882, %v7874
  %v8699 = vpack.c.b16 %v7883, %v7875
  %v8700 = vpack.c.b16 %v7884, %v7876
  %v8701 = vpack.c.b16 %v7893, %v7885
  %v8702 = vpack.c.b16 %v7894, %v7886
  %v8703 = vpack.c.b16 %v7895, %v7887
  %v8704 = vpack.c.b16 %v7896, %v7888
  %v8705 = vpack.c.b16 %v7897, %v7889
  %v8706 = vpack.c.b16 %v7898, %v7890
  %v8707 = vpack.c.b16 %v7899, %v7891
  %v8708 = vpack.c.b16 %v7900, %v7892
  %v8709 = vpack.c.b16 %v7909, %v7901
  %v8710 = vpack.c.b16 %v7910, %v7902
  %v8711 = vpack.c.b16 %v7911, %v7903
  %v8712 = vpack.c.b16 %v7912, %v7904
  %v8713 = vpack.c.b16 %v7913, %v7905
  %v8714 = vpack.c.b16 %v7914, %v7906
  %v8715 = vpack.c.b16 %v7915, %v7907
  %v8716 = vpack.c.b16 %v7916, %v7908
  %v8717 = vpack.c.b16 %v7925, %v7917
  %v8718 = vpack.c.b16 %v7926, %v7918
  %v8719 = vpack.c.b16 %v7927, %v7919
  %v8720 = vpack.c.b16 %v7928, %v7920
  %v8721 = vpack.c.b16 %v7929, %v7921
  %v8722 = vpack.c.b16 %v7930, %v7922
  %v8723 = vpack.c.b16 %v7931, %v7923
  %v8724 = vpack.c.b16 %v7932, %v7924
  %v8725 = vpack.c.b16 %v7941, %v7933
  %v8726 = vpack.c.b16 %v7942, %v7934
  %v8727 = vpack.c.b16 %v7943, %v7935
  %v8728 = vpack.c.b16 %v7944, %v7936
  %v8729 = vpack.c.b16 %v7945, %v7937
  %v8730 = vpack.c.b16 %v7946, %v7938
  %v8731 = vpack.c.b16 %v7947, %v7939
  %v8732 = vpack.c.b16 %v7948, %v7940
  %v8733 = vpack.c.b16 %v7957, %v7949
  %v8734 = vpack.c.b16 %v7958, %v7950
  %v8735 = vpack.c.b16 %v7959, %v7951
  %v8736 = vpack.c.b16 %v7960, %v7952
  %v8737 = vpack.c.b16 %v7961, %v7953
  %v8738 = vpack.c.b16 %v7962, %v7954
  %v8739 = vpack.c.b16 %v7963, %v7955
  %v8740 = vpack.c.b16 %v7964, %v7956
  %v8741 = vpack.c.b16 %v7973, %v7965
  %v8742 = vpack.c.b16 %v7974, %v7966
  %v8743 = vpack.c.b16 %v7975, %v7967
  %v8744 = vpack.c.b16 %v7976, %v7968
  %v8745 = vpack.c.b16 %v7977, %v7969
  %v8746 = vpack.c.b16 %v7978, %v7970
  %v8747 = vpack.c.b16 %v7979, %v7971
  %v8748 = vpack.c.b16 %v7980, %v7972
  %v8749 = vpack.c.b16 %v7989, %v7981
  %v8750 = vpack.c.b16 %v7990, %v7982
  %v8751 = vpack.c.b16 %v7991, %v7983
  %v8752 = vpack.c.b16 %v7992, %v7984
  %v8753 = vpack.c.b16 %v7993, %v7985
  %v8754 = vpack.c.b16 %v7994, %v7986
  %v8755 = vpack.c.b16 %v7995, %v7987
  %v8756 = vpack.c.b16 %v7996, %v7988
  %v8757 = vpack.c.b16 %v8005, %v7997
  %v8758 = vpack.c.b16 %v8006, %v7998
  %v8759 = vpack.c.b16 %v8007, %v7999
  %v8760 = vpack.c.b16 %v8008, %v8000
  %v8761 = vpack.c.b16 %v8009, %v8001
  %v8762 = vpack.c.b16 %v8010, %v8002
  %v8763 = vpack.c.b16 %v8011, %v8003
  %v8764 = vpack.c.b16 %v8012, %v8004
  %v8765 = vpack.c.b16 %v8021, %v8013
  %v8766 = vpack.c.b16 %v8022, %v8014
  %v8767 = vpack.c.b16 %v8023, %v8015
  %v8768 = vpack.c.b16 %v8024, %v8016
  %v8769 = vpack.c.b16 %v8025, %v8017
  %v8770 = vpack.c.b16 %v8026, %v8018
  %v8771 = vpack.c.b16 %v8027, %v8019
  %v8772 = vpack.c.b16 %v8028, %v8020
  %v8773 = vpack.c.b16 %v8037, %v8029
  %v8774 = vpack.c.b16 %v8038, %v8030
  %v8775 = vpack.c.b16 %v8039, %v8031
  %v8776 = vpack.c.b16 %v8040, %v8032
  %v8777 = vpack.c.b16 %v8041, %v8033
  %v8778 = vpack.c.b16 %v8042, %v8034
  %v8779 = vpack.c.b16 %v8043, %v8035
  %v8780 = vpack.c.b16 %v8044, %v8036
  %v8781 = vpack.c.b16 %v8053, %v8045
  %v8782 = vpack.c.b16 %v8054, %v8046
  %v8783 = vpack.c.b16 %v8055, %v8047
  %v8784 = vpack.c.b16 %v8056, %v8048
  %v8785 = vpack.c.b16 %v8057, %v8049
  %v8786 = vpack.c.b16 %v8058, %v8050
  %v8787 = vpack.c.b16 %v8059, %v8051
  %v8788 = vpack.c.b16 %v8060, %v8052
  %v8789 = vpack.c.b16 %v8069, %v8061
  %v8790 = vpack.c.b16 %v8070, %v8062
  %v8791 = vpack.c.b16 %v8071, %v8063
  %v8792 = vpack.c.b16 %v8072, %v8064
  %v8793 = vpack.c.b16 %v8073, %v8065
  %v8794 = vpack.c.b16 %v8074, %v8066
  %v8795 = vpack.c.b16 %v8075, %v8067
  %v8796 = vpack.c.b16 %v8076, %v8068
  %v8797 = vpack.c.b16 %v8085, %v8077
  %v8798 = vpack.c.b16 %v8086, %v8078
  %v8799 = vpack.c.b16 %v8087, %v8079
  %v8800 = vpack.c.b16 %v8088, %v8080
  %v8801 = vpack.c.b16 %v8089, %v8081
  %v8802 = vpack.c.b16 %v8090, %v8082
  %v8803 = vpack.c.b16 %v8091, %v8083
  %v8804 = vpack.c.b16 %v8092, %v8084
  %v8805 = vpack.c.b16 %v8101, %v8093
  %v8806 = vpack.c.b16 %v8102, %v8094
  %v8807 = vpack.c.b16 %v8103, %v8095
  %v8808 = vpack.c.b16 %v8104, %v8096
  %v8809 = vpack.c.b16 %v8105, %v8097
  %v8810 = vpack.c.b16 %v8106, %v8098
  %v8811 = vpack.c.b16 %v8107, %v8099
  %v8812 = vpack.c.b16 %v8108, %v8100
  %v8813 = vpack.c.b16 %v8117, %v8109
  %v8814 = vpack.c.b16 %v8118, %v8110
  %v8815 = vpack.c.b16 %v8119, %v8111
  %v8816 = vpack.c.b16 %v8120, %v8112
  %v8817 = vpack.c.b16 %v8121, %v8113
  %v8818 = vpack.c.b16 %v8122, %v8114
  %v8819 = vpack.c.b16 %v8123, %v8115
  %v8820 = vpack.c.b16 %v8124, %v8116
  %v8821 = vpack.c.b16 %v8133, %v8125
  %v8822 = vpack.c.b16 %v8134, %v8126
  %v8823 = vpack.c.b16 %v8135, %v8127
  %v8824 = vpack.c.b16 %v8136, %v8128
  %v8825 = vpack.c.b16 %v8137, %v8129
  %v8826 = vpack.c.b16 %v8138, %v8130
  %v8827 = vpack.c.b16 %v8139, %v8131
  %v8828 = vpack.c.b16 %v8140, %v8132
  %v8829 = vpack.c.b16 %v8149, %v8141
  %v8830 = vpack.c.b16 %v8150, %v8142
  %v8831 = vpack.c.b16 %v8151, %v8143
  %v8832 = vpack.c.b16 %v8152, %v8144
  %v8833 = vpack.c.b16 %v8153, %v8145
  %v8834 = vpack.c.b16 %v8154, %v8146
  %v8835 = vpack.c.b16 %v8155, %v8147
  %v8836 = vpack.c.b16 %v8156, %v8148
  %v8837 = vpack.c.b16 %v8165, %v8157
  %v8838 = vpack.c.b16 %v8166, %v8158
  %v8839 = vpack.c.b16 %v8167, %v8159
  %v8840 = vpack.c.b16 %v8168, %v8160
  %v8841 = vpack.c.b16 %v8169, %v8161
  %v8842 = vpack.c.b16 %v8170, %v8162
  %v8843 = vpack.c.b16 %v8171, %v8163
  %v8844 = vpack.c.b16 %v8172, %v8164
  %v8845 = vpack.c.b16 %v8181, %v8173
  %v8846 = vpack.c.b16 %v8182, %v8174
  %v8847 = vpack.c.b16 %v8183, %v8175
  %v8848 = vpack.c.b16 %v8184, %v8176
  %v8849 = vpack.c.b16 %v8185, %v8177
  %v8850 = vpack.c.b16 %v8186, %v8178
  %v8851 = vpack.c.b16 %v8187, %v8179
  %v8852 = vpack.c.b16 %v8188, %v8180
  %v8853 = vpack.c.b16 %v8197, %v8189
  %v8854 = vpack.c.b16 %v8198, %v8190
  %v8855 = vpack.c.b16 %v8199, %v8191
  %v8856 = vpack.c.b16 %v8200, %v8192
  %v8857 = vpack.c.b16 %v8201, %v8193
  %v8858 = vpack.c.b16 %v8202, %v8194
  %v8859 = vpack.c.b16 %v8203, %v8195
  %v8860 = vpack.c.b16 %v8204, %v8196
  %v8861 = vpack.c.b16 %v8213, %v8205
  %v8862 = vpack.c.b16 %v8214, %v8206
  %v8863 = vpack.c.b16 %v8215, %v8207
  %v8864 = vpack.c.b16 %v8216, %v8208
  %v8865 = vpack.c.b16 %v8217, %v8209
  %v8866 = vpack.c.b16 %v8218, %v8210
  %v8867 = vpack.c.b16 %v8219, %v8211
  %v8868 = vpack.c.b16 %v8220, %v8212
  %v8869 = vpack.c.b16 %v8229, %v8221
  %v8870 = vpack.c.b16 %v8230, %v8222
  %v8871 = vpack.c.b16 %v8231, %v8223
  %v8872 = vpack.c.b16 %v8232, %v8224
  %v8873 = vpack.c.b16 %v8233, %v8225
  %v8874 = vpack.c.b16 %v8234, %v8226
  %v8875 = vpack.c.b16 %v8235, %v8227
  %v8876 = vpack.c.b16 %v8236, %v8228
  %v8877 = vpack.c.b16 %v8245, %v8237
  %v8878 = vpack.c.b16 %v8246, %v8238
  %v8879 = vpack.c.b16 %v8247, %v8239
  %v8880 = vpack.c.b16 %v8248, %v8240
  %v8881 = vpack.c.b16 %v8249, %v8241
  %v8882 = vpack.c.b16 %v8250, %v8242
  %v8883 = vpack.c.b16 %v8251, %v8243
  %v8884 = vpack.c.b16 %v8252, %v8244
  %v8885 = vpack.c.b16 %v8261, %v8253
  %v8886 = vpack.c.b16 %v8262, %v8254
  %v8887 = vpack.c.b16 %v8263, %v8255
  %v8888 = vpack.c.b16 %v8264, %v8256
  %v8889 = vpack.c.b16 %v8265, %v8257
  %v8890 = vpack.c.b16 %v8266, %v8258
  %v8891 = vpack.c.b16 %v8267, %v8259
  %v8892 = vpack.c.b16 %v8268, %v8260
  %v8893 = vpack.c.b16 %v8277, %v8269
  %v8894 = vpack.c.b16 %v8278, %v8270
  %v8895 = vpack.c.b16 %v8279, %v8271
  %v8896 = vpack.c.b16 %v8280, %v8272
  %v8897 = vpack.c.b16 %v8281, %v8273
  %v8898 = vpack.c.b16 %v8282, %v8274
  %v8899 = vpack.c.b16 %v8283, %v8275
  %v8900 = vpack.c.b16 %v8284, %v8276
  %v8901 = vpack.c.b16 %v8293, %v8285
  %v8902 = vpack.c.b16 %v8294, %v8286
  %v8903 = vpack.c.b16 %v8295, %v8287
  %v8904 = vpack.c.b16 %v8296, %v8288
  %v8905 = vpack.c.b16 %v8297, %v8289
  %v8906 = vpack.c.b16 %v8298, %v8290
  %v8907 = vpack.c.b16 %v8299, %v8291
  %v8908 = vpack.c.b16 %v8300, %v8292
  %v8909 = vpack.c.b16 %v8309, %v8301
  %v8910 = vpack.c.b16 %v8310, %v8302
  %v8911 = vpack.c.b16 %v8311, %v8303
  %v8912 = vpack.c.b16 %v8312, %v8304
  %v8913 = vpack.c.b16 %v8313, %v8305
  %v8914 = vpack.c.b16 %v8314, %v8306
  %v8915 = vpack.c.b16 %v8315, %v8307
  %v8916 = vpack.c.b16 %v8316, %v8308
  %v8917 = vpack.c.b16 %v8325, %v8317
  %v8918 = vpack.c.b16 %v8326, %v8318
  %v8919 = vpack.c.b16 %v8327, %v8319
  %v8920 = vpack.c.b16 %v8328, %v8320
  %v8921 = vpack.c.b16 %v8329, %v8321
  %v8922 = vpack.c.b16 %v8330, %v8322
  %v8923 = vpack.c.b16 %v8331, %v8323
  %v8924 = vpack.c.b16 %v8332, %v8324
  %v8925 = vpack.c.b16 %v8341, %v8333
  %v8926 = vpack.c.b16 %v8342, %v8334
  %v8927 = vpack.c.b16 %v8343, %v8335
  %v8928 = vpack.c.b16 %v8344, %v8336
  %v8929 = vpack.c.b16 %v8345, %v8337
  %v8930 = vpack.c.b16 %v8346, %v8338
  %v8931 = vpack.c.b16 %v8347, %v8339
  %v8932 = vpack.c.b16 %v8348, %v8340
  %v8933 = vpack.c.b16 %v8357, %v8349
  %v8934 = vpack.c.b16 %v8358, %v8350
  %v8935 = vpack.c.b16 %v8359, %v8351
  %v8936 = vpack.c.b16 %v8360, %v8352
  %v8937 = vpack.c.b16 %v8361, %v8353
  %v8938 = vpack.c.b16 %v8362, %v8354
  %v8939 = vpack.c.b16 %v8363, %v8355
  %v8940 = vpack.c.b16 %v8364, %v8356
  %v8941 = vpack.c.b16 %v8373, %v8365
  %v8942 = vpack.c.b16 %v8374, %v8366
  %v8943 = vpack.c.b16 %v8375, %v8367
  %v8944 = vpack.c.b16 %v8376, %v8368
  %v8945 = vpack.c.b16 %v8377, %v8369
  %v8946 = vpack.c.b16 %v8378, %v8370
  %v8947 = vpack.c.b16 %v8379, %v8371
  %v8948 = vpack.c.b16 %v8380, %v8372
  %v8949 = vpack.c.b16 %v8389, %v8381
  %v8950 = vpack.c.b16 %v8390, %v8382
  %v8951 = vpack.c.b16 %v8391, %v8383
  %v8952 = vpack.c.b16 %v8392, %v8384
  %v8953 = vpack.c.b16 %v8393, %v8385
  %v8954 = vpack.c.b16 %v8394, %v8386
  %v8955 = vpack.c.b16 %v8395, %v8387
  %v8956 = vpack.c.b16 %v8396, %v8388
  %v8957 = vpack.c.b16 %v8405, %v8397
  %v8958 = vpack.c.b16 %v8406, %v8398
  %v8959 = vpack.c.b16 %v8407, %v8399
  %v8960 = vpack.c.b16 %v8408, %v8400
  %v8961 = vpack.c.b16 %v8409, %v8401
  %v8962 = vpack.c.b16 %v8410, %v8402
  %v8963 = vpack.c.b16 %v8411, %v8403
  %v8964 = vpack.c.b16 %v8412, %v8404
  %v8965 = vpack.c.b16 %v8421, %v8413
  %v8966 = vpack.c.b16 %v8422, %v8414
  %v8967 = vpack.c.b16 %v8423, %v8415
  %v8968 = vpack.c.b16 %v8424, %v8416
  %v8969 = vpack.c.b16 %v8425, %v8417
  %v8970 = vpack.c.b16 %v8426, %v8418
  %v8971 = vpack.c.b16 %v8427, %v8419
  %v8972 = vpack.c.b16 %v8428, %v8420
  %v8973 = vpack.c.b16 %v8437, %v8429
  %v8974 = vpack.c.b16 %v8438, %v8430
  %v8975 = vpack.c.b16 %v8439, %v8431
  %v8976 = vpack.c.b16 %v8440, %v8432
  %v8977 = vpack.c.b16 %v8441, %v8433
  %v8978 = vpack.c.b16 %v8442, %v8434
  %v8979 = vpack.c.b16 %v8443, %v8435
  %v8980 = vpack.c.b16 %v8444, %v8436
  %v8981 = vpack.c.b16 %v8453, %v8445
  %v8982 = vpack.c.b16 %v8454, %v8446
  %v8983 = vpack.c.b16 %v8455, %v8447
  %v8984 = vpack.c.b16 %v8456, %v8448
  %v8985 = vpack.c.b16 %v8457, %v8449
  %v8986 = vpack.c.b16 %v8458, %v8450
  %v8987 = vpack.c.b16 %v8459, %v8451
  %v8988 = vpack.c.b16 %v8460, %v8452
  %v8989 = vpack.c.b16 %v8469, %v8461
  %v8990 = vpack.c.b16 %v8470, %v8462
  %v8991 = vpack.c.b16 %v8471, %v8463
  %v8992 = vpack.c.b16 %v8472, %v8464
  %v8993 = vpack.c.b16 %v8473, %v8465
  %v8994 = vpack.c.b16 %v8474, %v8466
  %v8995 = vpack.c.b16 %v8475, %v8467
  %v8996 = vpack.c.b16 %v8476, %v8468
  %v8997 = vpack.c.b16 %v8485, %v8477
  %v8998 = vpack.c.b16 %v8486, %v8478
  %v8999 = vpack.c.b16 %v8487, %v8479
  %v9000 = vpack.c.b16 %v8488, %v8480
  %v9001 = vpack.c.b16 %v8489, %v8481
  %v9002 = vpack.c.b16 %v8490, %v8482
  %v9003 = vpack.c.b16 %v8491, %v8483
  %v9004 = vpack.c.b16 %v8492, %v8484
  %9517 = vmatprep.subr.bf16.mxu0 %v8494
  %9518 = vmatpush1.bf16.msra.mxu0 %v8493
  %9519 = vmatprep.subr.bf16.mxu0 %v8502
  %9520 = vmatpush1.bf16.msra.mxu0 %v8501
  %9521 = vmatprep.subr.bf16.mxu0 %v8510
  %9522 = vmatpush1.bf16.msra.mxu0 %v8509
  %9523 = vmatprep.subr.bf16.mxu0 %v8518
  %9524 = vmatpush1.bf16.msra.mxu0 %v8517
  %9525 = vmatprep.subr.bf16.mxu0 %v8526
  %9526 = vmatpush1.bf16.msra.mxu0 %v8525
  %9527 = vmatprep.subr.bf16.mxu0 %v8534
  %9528 = vmatpush1.bf16.msra.mxu0 %v8533
  %9529 = vmatprep.subr.bf16.mxu0 %v8542
  %9530 = vmatpush1.bf16.msra.mxu0 %v8541
  %9531 = vmatprep.subr.bf16.mxu0 %v8550
  %9532 = vmatpush1.bf16.msra.mxu0 %v8549
  %9533 = vmatprep.subr.bf16.mxu0 %v8558
  %9534 = vmatpush1.bf16.msra.mxu0 %v8557
  %9535 = vmatprep.subr.bf16.mxu0 %v8566
  %9536 = vmatpush1.bf16.msra.mxu0 %v8565
  %9537 = vmatprep.subr.bf16.mxu0 %v8574
  %9538 = vmatpush1.bf16.msra.mxu0 %v8573
  %9539 = vmatprep.subr.bf16.mxu0 %v8582
  %9540 = vmatpush1.bf16.msra.mxu0 %v8581
  %9541 = vmatprep.subr.bf16.mxu0 %v8590
  %9542 = vmatpush1.bf16.msra.mxu0 %v8589
  %9543 = vmatprep.subr.bf16.mxu0 %v8598
  %9544 = vmatpush1.bf16.msra.mxu0 %v8597
  %9545 = vmatprep.subr.bf16.mxu0 %v8606
  %9546 = vmatpush1.bf16.msra.mxu0 %v8605
  %9547 = vmatprep.subr.bf16.mxu0 %v8614
  %9548 = vmatpush1.bf16.msra.mxu0 %v8613
  %9549 = vmatprep.mubr.bf16.mxu0 %v6926
  %9550 = vmatmul.mubr.bf16.gmra.mrb[0].mxu0 %v6925
  %v9551 = vpop.f32.mrb[0].mxu0
  %v9552 = vadd.f32 %v6223, %v9551
  %v9553 = vpop.f32.mrb[0].mxu0
  %v9554 = vadd.f32 %v6225, %v9553
  %v9555 = vpop.f32.mrb[0].mxu0
  %v9556 = vadd.f32 %v6227, %v9555
  %v9557 = vpop.f32.mrb[0].mxu0
  %v9558 = vadd.f32 %v6229, %v9557
  %9559 = vmatprep.mubr.bf16.mxu0 %v6934
  %9560 = vmatmul.mubr.bf16.gmra.mrb[0].mxu0 %v6933
  %v9561 = vpop.f32.mrb[0].mxu0
  %v9562 = vadd.f32 %v6233, %v9561
  %v9563 = vpop.f32.mrb[0].mxu0
  %v9564 = vadd.f32 %v6235, %v9563
  %v9565 = vpop.f32.mrb[0].mxu0
  %v9566 = vadd.f32 %v6237, %v9565
  %v9567 = vpop.f32.mrb[0].mxu0
  %v9568 = vadd.f32 %v6239, %v9567
  %9569 = vdwg.mxu0
  %9570 = vmatprep.subr.bf16.mxu0 %v8622
  %9571 = vmatpush1.bf16.msra.mxu0 %v8621
  %9572 = vmatprep.subr.bf16.mxu0 %v8630
  %9573 = vmatpush1.bf16.msra.mxu0 %v8629
  %9574 = vmatprep.subr.bf16.mxu0 %v8638
  %9575 = vmatpush1.bf16.msra.mxu0 %v8637
  %9576 = vmatprep.subr.bf16.mxu0 %v8646
  %9577 = vmatpush1.bf16.msra.mxu0 %v8645
  %9578 = vmatprep.subr.bf16.mxu0 %v8654
  %9579 = vmatpush1.bf16.msra.mxu0 %v8653
  %9580 = vmatprep.subr.bf16.mxu0 %v8662
  %9581 = vmatpush1.bf16.msra.mxu0 %v8661
  %9582 = vmatprep.subr.bf16.mxu0 %v8670
  %9583 = vmatpush1.bf16.msra.mxu0 %v8669
  %9584 = vmatprep.subr.bf16.mxu0 %v8678
  %9585 = vmatpush1.bf16.msra.mxu0 %v8677
  %9586 = vmatprep.subr.bf16.mxu0 %v8686
  %9587 = vmatpush1.bf16.msra.mxu0 %v8685
  %9588 = vmatprep.subr.bf16.mxu0 %v8694
  %9589 = vmatpush1.bf16.msra.mxu0 %v8693
  %9590 = vmatprep.subr.bf16.mxu0 %v8702
  %9591 = vmatpush1.bf16.msra.mxu0 %v8701
  %9592 = vmatprep.subr.bf16.mxu0 %v8710
  %9593 = vmatpush1.bf16.msra.mxu0 %v8709
  %9594 = vmatprep.subr.bf16.mxu0 %v8718
  %9595 = vmatpush1.bf16.msra.mxu0 %v8717
  %9596 = vmatprep.subr.bf16.mxu0 %v8726
  %9597 = vmatpush1.bf16.msra.mxu0 %v8725
  %9598 = vmatprep.subr.bf16.mxu0 %v8734
  %9599 = vmatpush1.bf16.msra.mxu0 %v8733
  %9600 = vmatprep.subr.bf16.mxu0 %v8742
  %9601 = vmatpush1.bf16.msra.mxu0 %v8741
  %9602 = vmatprep.mubr.bf16.mxu0 %v6928
  %9603 = vmatmul.mubr.bf16.gmra.mrb[0].mxu0 %v6927
  %v9604 = vpop.f32.mrb[0].mxu0
  %v9605 = vadd.f32 %v9552, %v9604
  %v9606 = vpop.f32.mrb[0].mxu0
  %v9607 = vadd.f32 %v9554, %v9606
  %v9608 = vpop.f32.mrb[0].mxu0
  %v9609 = vadd.f32 %v9556, %v9608
  %v9610 = vpop.f32.mrb[0].mxu0
  %v9611 = vadd.f32 %v9558, %v9610
  %9612 = vmatprep.mubr.bf16.mxu0 %v6936
  %9613 = vmatmul.mubr.bf16.gmra.mrb[0].mxu0 %v6935
  %v9614 = vpop.f32.mrb[0].mxu0
  %v9615 = vadd.f32 %v9562, %v9614
  %v9616 = vpop.f32.mrb[0].mxu0
  %v9617 = vadd.f32 %v9564, %v9616
  %v9618 = vpop.f32.mrb[0].mxu0
  %v9619 = vadd.f32 %v9566, %v9618
  %v9620 = vpop.f32.mrb[0].mxu0
  %v9621 = vadd.f32 %v9568, %v9620
  %9622 = vdwg.mxu0
  %9623 = vmatprep.subr.bf16.mxu0 %v8750
  %9624 = vmatpush1.bf16.msra.mxu0 %v8749
  %9625 = vmatprep.subr.bf16.mxu0 %v8758
  %9626 = vmatpush1.bf16.msra.mxu0 %v8757
  %9627 = vmatprep.subr.bf16.mxu0 %v8766
  %9628 = vmatpush1.bf16.msra.mxu0 %v8765
  %9629 = vmatprep.subr.bf16.mxu0 %v8774
  %9630 = vmatpush1.bf16.msra.mxu0 %v8773
  %9631 = vmatprep.subr.bf16.mxu0 %v8782
  %9632 = vmatpush1.bf16.msra.mxu0 %v8781
  %9633 = vmatprep.subr.bf16.mxu0 %v8790
  %9634 = vmatpush1.bf16.msra.mxu0 %v8789
  %9635 = vmatprep.subr.bf16.mxu0 %v8798
  %9636 = vmatpush1.bf16.msra.mxu0 %v8797
  %9637 = vmatprep.subr.bf16.mxu0 %v8806
  %9638 = vmatpush1.bf16.msra.mxu0 %v8805
  %9639 = vmatprep.subr.bf16.mxu0 %v8814
  %9640 = vmatpush1.bf16.msra.mxu0 %v8813
  %9641 = vmatprep.subr.bf16.mxu0 %v8822
  %9642 = vmatpush1.bf16.msra.mxu0 %v8821
  %9643 = vmatprep.subr.bf16.mxu0 %v8830
  %9644 = vmatpush1.bf16.msra.mxu0 %v8829
  %9645 = vmatprep.subr.bf16.mxu0 %v8838
  %9646 = vmatpush1.bf16.msra.mxu0 %v8837
  %9647 = vmatprep.subr.bf16.mxu0 %v8846
  %9648 = vmatpush1.bf16.msra.mxu0 %v8845
  %9649 = vmatprep.subr.bf16.mxu0 %v8854
  %9650 = vmatpush1.bf16.msra.mxu0 %v8853
  %9651 = vmatprep.subr.bf16.mxu0 %v8862
  %9652 = vmatpush1.bf16.msra.mxu0 %v8861
  %9653 = vmatprep.subr.bf16.mxu0 %v8870
  %9654 = vmatpush1.bf16.msra.mxu0 %v8869
  %9655 = vmatprep.mubr.bf16.mxu0 %v6930
  %9656 = vmatmul.mubr.bf16.gmra.mrb[0].mxu0 %v6929
  %v9657 = vpop.f32.mrb[0].mxu0
  %v9658 = vadd.f32 %v9605, %v9657
  %v9659 = vpop.f32.mrb[0].mxu0
  %v9660 = vadd.f32 %v9607, %v9659
  %v9661 = vpop.f32.mrb[0].mxu0
  %v9662 = vadd.f32 %v9609, %v9661
  %v9663 = vpop.f32.mrb[0].mxu0
  %v9664 = vadd.f32 %v9611, %v9663
  %9665 = vmatprep.mubr.bf16.mxu0 %v6938
  %9666 = vmatmul.mubr.bf16.gmra.mrb[0].mxu0 %v6937
  %v9667 = vpop.f32.mrb[0].mxu0
  %v9668 = vadd.f32 %v9615, %v9667
  %v9669 = vpop.f32.mrb[0].mxu0
  %v9670 = vadd.f32 %v9617, %v9669
  %v9671 = vpop.f32.mrb[0].mxu0
  %v9672 = vadd.f32 %v9619, %v9671
  %v9673 = vpop.f32.mrb[0].mxu0
  %v9674 = vadd.f32 %v9621, %v9673
  %9675 = vdwg.mxu0
  %9676 = vmatprep.subr.bf16.mxu0 %v8878
  %9677 = vmatpush1.bf16.msra.mxu0 %v8877
  %9678 = vmatprep.subr.bf16.mxu0 %v8886
  %9679 = vmatpush1.bf16.msra.mxu0 %v8885
  %9680 = vmatprep.subr.bf16.mxu0 %v8894
  %9681 = vmatpush1.bf16.msra.mxu0 %v8893
  %9682 = vmatprep.subr.bf16.mxu0 %v8902
  %9683 = vmatpush1.bf16.msra.mxu0 %v8901
  %9684 = vmatprep.subr.bf16.mxu0 %v8910
  %9685 = vmatpush1.bf16.msra.mxu0 %v8909
  %9686 = vmatprep.subr.bf16.mxu0 %v8918
  %9687 = vmatpush1.bf16.msra.mxu0 %v8917
  %9688 = vmatprep.subr.bf16.mxu0 %v8926
  %9689 = vmatpush1.bf16.msra.mxu0 %v8925
  %9690 = vmatprep.subr.bf16.mxu0 %v8934
  %9691 = vmatpush1.bf16.msra.mxu0 %v8933
  %9692 = vmatprep.subr.bf16.mxu0 %v8942
  %9693 = vmatpush1.bf16.msra.mxu0 %v8941
  %9694 = vmatprep.subr.bf16.mxu0 %v8950
  %9695 = vmatpush1.bf16.msra.mxu0 %v8949
  %9696 = vmatprep.subr.bf16.mxu0 %v8958
  %9697 = vmatpush1.bf16.msra.mxu0 %v8957
  %9698 = vmatprep.subr.bf16.mxu0 %v8966
  %9699 = vmatpush1.bf16.msra.mxu0 %v8965
  %9700 = vmatprep.subr.bf16.mxu0 %v8974
  %9701 = vmatpush1.bf16.msra.mxu0 %v8973
  %9702 = vmatprep.subr.bf16.mxu0 %v8982
  %9703 = vmatpush1.bf16.msra.mxu0 %v8981
  %9704 = vmatprep.subr.bf16.mxu0 %v8990
  %9705 = vmatpush1.bf16.msra.mxu0 %v8989
  %9706 = vmatprep.subr.bf16.mxu0 %v8998
  %9707 = vmatpush1.bf16.msra.mxu0 %v8997
  %9708 = vmatprep.mubr.bf16.mxu0 %v6932
  %9709 = vmatmul.mubr.bf16.gmra.mrb[0].mxu0 %v6931
  %v9710 = vpop.f32.mrb[0].mxu0
  %v9711 = vadd.f32 %v9658, %v9710
  %v9712 = vpop.f32.mrb[0].mxu0
  %v9713 = vadd.f32 %v9660, %v9712
  %v9714 = vpop.f32.mrb[0].mxu0
  %v9715 = vadd.f32 %v9662, %v9714
  %v9716 = vpop.f32.mrb[0].mxu0
  %v9717 = vadd.f32 %v9664, %v9716
  %9718 = vmatprep.mubr.bf16.mxu0 %v6940
  %9719 = vmatmul.mubr.bf16.gmra.mrb[0].mxu0 %v6939
  %v9720 = vpop.f32.mrb[0].mxu0
  %v9721 = vadd.f32 %v9668, %v9720
  %v9722 = vpop.f32.mrb[0].mxu0
  %v9723 = vadd.f32 %v9670, %v9722
  %v9724 = vpop.f32.mrb[0].mxu0
  %v9725 = vadd.f32 %v9672, %v9724
  %v9726 = vpop.f32.mrb[0].mxu0
  %v9727 = vadd.f32 %v9674, %v9726
  %9728 = vdwg.mxu0
  %9729 = vmatprep.subr.bf16.mxu0 %v8496
  %9730 = vmatpush1.bf16.msra.mxu0 %v8495
  %9731 = vmatprep.subr.bf16.mxu0 %v8504
  %9732 = vmatpush1.bf16.msra.mxu0 %v8503
  %9733 = vmatprep.subr.bf16.mxu0 %v8512
  %9734 = vmatpush1.bf16.msra.mxu0 %v8511
  %9735 = vmatprep.subr.bf16.mxu0 %v8520
  %9736 = vmatpush1.bf16.msra.mxu0 %v8519
  %9737 = vmatprep.subr.bf16.mxu0 %v8528
  %9738 = vmatpush1.bf16.msra.mxu0 %v8527
  %9739 = vmatprep.subr.bf16.mxu0 %v8536
  %9740 = vmatpush1.bf16.msra.mxu0 %v8535
  %9741 = vmatprep.subr.bf16.mxu0 %v8544
  %9742 = vmatpush1.bf16.msra.mxu0 %v8543
  %9743 = vmatprep.subr.bf16.mxu0 %v8552
  %9744 = vmatpush1.bf16.msra.mxu0 %v8551
  %9745 = vmatprep.subr.bf16.mxu0 %v8560
  %9746 = vmatpush1.bf16.msra.mxu0 %v8559
  %9747 = vmatprep.subr.bf16.mxu0 %v8568
  %9748 = vmatpush1.bf16.msra.mxu0 %v8567
  %9749 = vmatprep.subr.bf16.mxu0 %v8576
  %9750 = vmatpush1.bf16.msra.mxu0 %v8575
  %9751 = vmatprep.subr.bf16.mxu0 %v8584
  %9752 = vmatpush1.bf16.msra.mxu0 %v8583
  %9753 = vmatprep.subr.bf16.mxu0 %v8592
  %9754 = vmatpush1.bf16.msra.mxu0 %v8591
  %9755 = vmatprep.subr.bf16.mxu0 %v8600
  %9756 = vmatpush1.bf16.msra.mxu0 %v8599
  %9757 = vmatprep.subr.bf16.mxu0 %v8608
  %9758 = vmatpush1.bf16.msra.mxu0 %v8607
  %9759 = vmatprep.subr.bf16.mxu0 %v8616
  %9760 = vmatpush1.bf16.msra.mxu0 %v8615
  %9761 = vmatprep.mubr.bf16.mxu0 %v6926
  %9762 = vmatmul.mubr.bf16.gmra.mrb[0].mxu0 %v6925
  %v9763 = vpop.f32.mrb[0].mxu0
  %v9764 = vadd.f32 %v6435, %v9763
  %v9765 = vpop.f32.mrb[0].mxu0
  %v9766 = vadd.f32 %v6437, %v9765
  %v9767 = vpop.f32.mrb[0].mxu0
  %v9768 = vadd.f32 %v6439, %v9767
  %v9769 = vpop.f32.mrb[0].mxu0
  %v9770 = vadd.f32 %v6441, %v9769
  %9771 = vmatprep.mubr.bf16.mxu0 %v6934
  %9772 = vmatmul.mubr.bf16.gmra.mrb[0].mxu0 %v6933
  %v9773 = vpop.f32.mrb[0].mxu0
  %v9774 = vadd.f32 %v6445, %v9773
  %v9775 = vpop.f32.mrb[0].mxu0
  %v9776 = vadd.f32 %v6447, %v9775
  %v9777 = vpop.f32.mrb[0].mxu0
  %v9778 = vadd.f32 %v6449, %v9777
  %v9779 = vpop.f32.mrb[0].mxu0
  %v9780 = vadd.f32 %v6451, %v9779
  %9781 = vdwg.mxu0
  %9782 = vmatprep.subr.bf16.mxu0 %v8624
  %9783 = vmatpush1.bf16.msra.mxu0 %v8623
  %9784 = vmatprep.subr.bf16.mxu0 %v8632
  %9785 = vmatpush1.bf16.msra.mxu0 %v8631
  %9786 = vmatprep.subr.bf16.mxu0 %v8640
  %9787 = vmatpush1.bf16.msra.mxu0 %v8639
  %9788 = vmatprep.subr.bf16.mxu0 %v8648
  %9789 = vmatpush1.bf16.msra.mxu0 %v8647
  %9790 = vmatprep.subr.bf16.mxu0 %v8656
  %9791 = vmatpush1.bf16.msra.mxu0 %v8655
  %9792 = vmatprep.subr.bf16.mxu0 %v8664
  %9793 = vmatpush1.bf16.msra.mxu0 %v8663
  %9794 = vmatprep.subr.bf16.mxu0 %v8672
  %9795 = vmatpush1.bf16.msra.mxu0 %v8671
  %9796 = vmatprep.subr.bf16.mxu0 %v8680
  %9797 = vmatpush1.bf16.msra.mxu0 %v8679
  %9798 = vmatprep.subr.bf16.mxu0 %v8688
  %9799 = vmatpush1.bf16.msra.mxu0 %v8687
  %9800 = vmatprep.subr.bf16.mxu0 %v8696
  %9801 = vmatpush1.bf16.msra.mxu0 %v8695
  %9802 = vmatprep.subr.bf16.mxu0 %v8704
  %9803 = vmatpush1.bf16.msra.mxu0 %v8703
  %9804 = vmatprep.subr.bf16.mxu0 %v8712
  %9805 = vmatpush1.bf16.msra.mxu0 %v8711
  %9806 = vmatprep.subr.bf16.mxu0 %v8720
  %9807 = vmatpush1.bf16.msra.mxu0 %v8719
  %9808 = vmatprep.subr.bf16.mxu0 %v8728
  %9809 = vmatpush1.bf16.msra.mxu0 %v8727
  %9810 = vmatprep.subr.bf16.mxu0 %v8736
  %9811 = vmatpush1.bf16.msra.mxu0 %v8735
  %9812 = vmatprep.subr.bf16.mxu0 %v8744
  %9813 = vmatpush1.bf16.msra.mxu0 %v8743
  %9814 = vmatprep.mubr.bf16.mxu0 %v6928
  %9815 = vmatmul.mubr.bf16.gmra.mrb[0].mxu0 %v6927
  %v9816 = vpop.f32.mrb[0].mxu0
  %v9817 = vadd.f32 %v9764, %v9816
  %v9818 = vpop.f32.mrb[0].mxu0
  %v9819 = vadd.f32 %v9766, %v9818
  %v9820 = vpop.f32.mrb[0].mxu0
  %v9821 = vadd.f32 %v9768, %v9820
  %v9822 = vpop.f32.mrb[0].mxu0
  %v9823 = vadd.f32 %v9770, %v9822
  %9824 = vmatprep.mubr.bf16.mxu0 %v6936
  %9825 = vmatmul.mubr.bf16.gmra.mrb[0].mxu0 %v6935
  %v9826 = vpop.f32.mrb[0].mxu0
  %v9827 = vadd.f32 %v9774, %v9826
  %v9828 = vpop.f32.mrb[0].mxu0
  %v9829 = vadd.f32 %v9776, %v9828
  %v9830 = vpop.f32.mrb[0].mxu0
  %v9831 = vadd.f32 %v9778, %v9830
  %v9832 = vpop.f32.mrb[0].mxu0
  %v9833 = vadd.f32 %v9780, %v9832
  %9834 = vdwg.mxu0
  %9835 = vmatprep.subr.bf16.mxu0 %v8752
  %9836 = vmatpush1.bf16.msra.mxu0 %v8751
  %9837 = vmatprep.subr.bf16.mxu0 %v8760
  %9838 = vmatpush1.bf16.msra.mxu0 %v8759
  %9839 = vmatprep.subr.bf16.mxu0 %v8768
  %9840 = vmatpush1.bf16.msra.mxu0 %v8767
  %9841 = vmatprep.subr.bf16.mxu0 %v8776
  %9842 = vmatpush1.bf16.msra.mxu0 %v8775
  %9843 = vmatprep.subr.bf16.mxu0 %v8784
  %9844 = vmatpush1.bf16.msra.mxu0 %v8783
  %9845 = vmatprep.subr.bf16.mxu0 %v8792
  %9846 = vmatpush1.bf16.msra.mxu0 %v8791
  %9847 = vmatprep.subr.bf16.mxu0 %v8800
  %9848 = vmatpush1.bf16.msra.mxu0 %v8799
  %9849 = vmatprep.subr.bf16.mxu0 %v8808
  %9850 = vmatpush1.bf16.msra.mxu0 %v8807
  %9851 = vmatprep.subr.bf16.mxu0 %v8816
  %9852 = vmatpush1.bf16.msra.mxu0 %v8815
  %9853 = vmatprep.subr.bf16.mxu0 %v8824
  %9854 = vmatpush1.bf16.msra.mxu0 %v8823
  %9855 = vmatprep.subr.bf16.mxu0 %v8832
  %9856 = vmatpush1.bf16.msra.mxu0 %v8831
  %9857 = vmatprep.subr.bf16.mxu0 %v8840
  %9858 = vmatpush1.bf16.msra.mxu0 %v8839
  %9859 = vmatprep.subr.bf16.mxu0 %v8848
  %9860 = vmatpush1.bf16.msra.mxu0 %v8847
  %9861 = vmatprep.subr.bf16.mxu0 %v8856
  %9862 = vmatpush1.bf16.msra.mxu0 %v8855
  %9863 = vmatprep.subr.bf16.mxu0 %v8864
  %9864 = vmatpush1.bf16.msra.mxu0 %v8863
  %9865 = vmatprep.subr.bf16.mxu0 %v8872
  %9866 = vmatpush1.bf16.msra.mxu0 %v8871
  %9867 = vmatprep.mubr.bf16.mxu0 %v6930
  %9868 = vmatmul.mubr.bf16.gmra.mrb[0].mxu0 %v6929
  %v9869 = vpop.f32.mrb[0].mxu0
  %v9870 = vadd.f32 %v9817, %v9869
  %v9871 = vpop.f32.mrb[0].mxu0
  %v9872 = vadd.f32 %v9819, %v9871
  %v9873 = vpop.f32.mrb[0].mxu0
  %v9874 = vadd.f32 %v9821, %v9873
  %v9875 = vpop.f32.mrb[0].mxu0
  %v9876 = vadd.f32 %v9823, %v9875
  %9877 = vmatprep.mubr.bf16.mxu0 %v6938
  %9878 = vmatmul.mubr.bf16.gmra.mrb[0].mxu0 %v6937
  %v9879 = vpop.f32.mrb[0].mxu0
  %v9880 = vadd.f32 %v9827, %v9879
  %v9881 = vpop.f32.mrb[0].mxu0
  %v9882 = vadd.f32 %v9829, %v9881
  %v9883 = vpop.f32.mrb[0].mxu0
  %v9884 = vadd.f32 %v9831, %v9883
  %v9885 = vpop.f32.mrb[0].mxu0
  %v9886 = vadd.f32 %v9833, %v9885
  %9887 = vdwg.mxu0
  %9888 = vmatprep.subr.bf16.mxu0 %v8880
  %9889 = vmatpush1.bf16.msra.mxu0 %v8879
  %9890 = vmatprep.subr.bf16.mxu0 %v8888
  %9891 = vmatpush1.bf16.msra.mxu0 %v8887
  %9892 = vmatprep.subr.bf16.mxu0 %v8896
  %9893 = vmatpush1.bf16.msra.mxu0 %v8895
  %9894 = vmatprep.subr.bf16.mxu0 %v8904
  %9895 = vmatpush1.bf16.msra.mxu0 %v8903
  %9896 = vmatprep.subr.bf16.mxu0 %v8912
  %9897 = vmatpush1.bf16.msra.mxu0 %v8911
  %9898 = vmatprep.subr.bf16.mxu0 %v8920
  %9899 = vmatpush1.bf16.msra.mxu0 %v8919
  %9900 = vmatprep.subr.bf16.mxu0 %v8928
  %9901 = vmatpush1.bf16.msra.mxu0 %v8927
  %9902 = vmatprep.subr.bf16.mxu0 %v8936
  %9903 = vmatpush1.bf16.msra.mxu0 %v8935
  %9904 = vmatprep.subr.bf16.mxu0 %v8944
  %9905 = vmatpush1.bf16.msra.mxu0 %v8943
  %9906 = vmatprep.subr.bf16.mxu0 %v8952
  %9907 = vmatpush1.bf16.msra.mxu0 %v8951
  %9908 = vmatprep.subr.bf16.mxu0 %v8960
  %9909 = vmatpush1.bf16.msra.mxu0 %v8959
  %9910 = vmatprep.subr.bf16.mxu0 %v8968
  %9911 = vmatpush1.bf16.msra.mxu0 %v8967
  %9912 = vmatprep.subr.bf16.mxu0 %v8976
  %9913 = vmatpush1.bf16.msra.mxu0 %v8975
  %9914 = vmatprep.subr.bf16.mxu0 %v8984
  %9915 = vmatpush1.bf16.msra.mxu0 %v8983
  %9916 = vmatprep.subr.bf16.mxu0 %v8992
  %9917 = vmatpush1.bf16.msra.mxu0 %v8991
  %9918 = vmatprep.subr.bf16.mxu0 %v9000
  %9919 = vmatpush1.bf16.msra.mxu0 %v8999
  %9920 = vmatprep.mubr.bf16.mxu0 %v6932
  %9921 = vmatmul.mubr.bf16.gmra.mrb[0].mxu0 %v6931
  %v9922 = vpop.f32.mrb[0].mxu0
  %v9923 = vadd.f32 %v9870, %v9922
  %v9924 = vpop.f32.mrb[0].mxu0
  %v9925 = vadd.f32 %v9872, %v9924
  %v9926 = vpop.f32.mrb[0].mxu0
  %v9927 = vadd.f32 %v9874, %v9926
  %v9928 = vpop.f32.mrb[0].mxu0
  %v9929 = vadd.f32 %v9876, %v9928
  %9930 = vmatprep.mubr.bf16.mxu0 %v6940
  %9931 = vmatmul.mubr.bf16.gmra.mrb[0].mxu0 %v6939
  %v9932 = vpop.f32.mrb[0].mxu0
  %v9933 = vadd.f32 %v9880, %v9932
  %v9934 = vpop.f32.mrb[0].mxu0
  %v9935 = vadd.f32 %v9882, %v9934
  %v9936 = vpop.f32.mrb[0].mxu0
  %v9937 = vadd.f32 %v9884, %v9936
  %v9938 = vpop.f32.mrb[0].mxu0
  %v9939 = vadd.f32 %v9886, %v9938
  %9940 = vdwg.mxu0
  %9941 = vmatprep.subr.bf16.mxu0 %v8498
  %9942 = vmatpush1.bf16.msra.mxu0 %v8497
  %9943 = vmatprep.subr.bf16.mxu0 %v8506
  %9944 = vmatpush1.bf16.msra.mxu0 %v8505
  %9945 = vmatprep.subr.bf16.mxu0 %v8514
  %9946 = vmatpush1.bf16.msra.mxu0 %v8513
  %9947 = vmatprep.subr.bf16.mxu0 %v8522
  %9948 = vmatpush1.bf16.msra.mxu0 %v8521
  %9949 = vmatprep.subr.bf16.mxu0 %v8530
  %9950 = vmatpush1.bf16.msra.mxu0 %v8529
  %9951 = vmatprep.subr.bf16.mxu0 %v8538
  %9952 = vmatpush1.bf16.msra.mxu0 %v8537
  %9953 = vmatprep.subr.bf16.mxu0 %v8546
  %9954 = vmatpush1.bf16.msra.mxu0 %v8545
  %9955 = vmatprep.subr.bf16.mxu0 %v8554
  %9956 = vmatpush1.bf16.msra.mxu0 %v8553
  %9957 = vmatprep.subr.bf16.mxu0 %v8562
  %9958 = vmatpush1.bf16.msra.mxu0 %v8561
  %9959 = vmatprep.subr.bf16.mxu0 %v8570
  %9960 = vmatpush1.bf16.msra.mxu0 %v8569
  %9961 = vmatprep.subr.bf16.mxu0 %v8578
  %9962 = vmatpush1.bf16.msra.mxu0 %v8577
  %9963 = vmatprep.subr.bf16.mxu0 %v8586
  %9964 = vmatpush1.bf16.msra.mxu0 %v8585
  %9965 = vmatprep.subr.bf16.mxu0 %v8594
  %9966 = vmatpush1.bf16.msra.mxu0 %v8593
  %9967 = vmatprep.subr.bf16.mxu0 %v8602
  %9968 = vmatpush1.bf16.msra.mxu0 %v8601
  %9969 = vmatprep.subr.bf16.mxu0 %v8610
  %9970 = vmatpush1.bf16.msra.mxu0 %v8609
  %9971 = vmatprep.subr.bf16.mxu0 %v8618
  %9972 = vmatpush1.bf16.msra.mxu0 %v8617
  %9973 = vmatprep.mubr.bf16.mxu0 %v6926
  %9974 = vmatmul.mubr.bf16.gmra.mrb[0].mxu0 %v6925
  %v9975 = vpop.f32.mrb[0].mxu0
  %v9976 = vadd.f32 %v6647, %v9975
  %v9977 = vpop.f32.mrb[0].mxu0
  %v9978 = vadd.f32 %v6649, %v9977
  %v9979 = vpop.f32.mrb[0].mxu0
  %v9980 = vadd.f32 %v6651, %v9979
  %v9981 = vpop.f32.mrb[0].mxu0
  %v9982 = vadd.f32 %v6653, %v9981
  %9983 = vmatprep.mubr.bf16.mxu0 %v6934
  %9984 = vmatmul.mubr.bf16.gmra.mrb[0].mxu0 %v6933
  %v9985 = vpop.f32.mrb[0].mxu0
  %v9986 = vadd.f32 %v6657, %v9985
  %v9987 = vpop.f32.mrb[0].mxu0
  %v9988 = vadd.f32 %v6659, %v9987
  %v9989 = vpop.f32.mrb[0].mxu0
  %v9990 = vadd.f32 %v6661, %v9989
  %v9991 = vpop.f32.mrb[0].mxu0
  %v9992 = vadd.f32 %v6663, %v9991
  %9993 = vdwg.mxu0
  %9994 = vmatprep.subr.bf16.mxu0 %v8626
  %9995 = vmatpush1.bf16.msra.mxu0 %v8625
  %9996 = vmatprep.subr.bf16.mxu0 %v8634
  %9997 = vmatpush1.bf16.msra.mxu0 %v8633
  %9998 = vmatprep.subr.bf16.mxu0 %v8642
  %9999 = vmatpush1.bf16.msra.mxu0 %v8641
  %10000 = vmatprep.subr.bf16.mxu0 %v8650
  %10001 = vmatpush1.bf16.msra.mxu0 %v8649
  %10002 = vmatprep.subr.bf16.mxu0 %v8658
  %10003 = vmatpush1.bf16.msra.mxu0 %v8657
  %10004 = vmatprep.subr.bf16.mxu0 %v8666
  %10005 = vmatpush1.bf16.msra.mxu0 %v8665
  %10006 = vmatprep.subr.bf16.mxu0 %v8674
  %10007 = vmatpush1.bf16.msra.mxu0 %v8673
  %10008 = vmatprep.subr.bf16.mxu0 %v8682
  %10009 = vmatpush1.bf16.msra.mxu0 %v8681
  %10010 = vmatprep.subr.bf16.mxu0 %v8690
  %10011 = vmatpush1.bf16.msra.mxu0 %v8689
  %10012 = vmatprep.subr.bf16.mxu0 %v8698
  %10013 = vmatpush1.bf16.msra.mxu0 %v8697
  %10014 = vmatprep.subr.bf16.mxu0 %v8706
  %10015 = vmatpush1.bf16.msra.mxu0 %v8705
  %10016 = vmatprep.subr.bf16.mxu0 %v8714
  %10017 = vmatpush1.bf16.msra.mxu0 %v8713
  %10018 = vmatprep.subr.bf16.mxu0 %v8722
  %10019 = vmatpush1.bf16.msra.mxu0 %v8721
  %10020 = vmatprep.subr.bf16.mxu0 %v8730
  %10021 = vmatpush1.bf16.msra.mxu0 %v8729
  %10022 = vmatprep.subr.bf16.mxu0 %v8738
  %10023 = vmatpush1.bf16.msra.mxu0 %v8737
  %10024 = vmatprep.subr.bf16.mxu0 %v8746
  %10025 = vmatpush1.bf16.msra.mxu0 %v8745
  %10026 = vmatprep.mubr.bf16.mxu0 %v6928
  %10027 = vmatmul.mubr.bf16.gmra.mrb[0].mxu0 %v6927
  %v10028 = vpop.f32.mrb[0].mxu0
  %v10029 = vadd.f32 %v9976, %v10028
  %v10030 = vpop.f32.mrb[0].mxu0
  %v10031 = vadd.f32 %v9978, %v10030
  %v10032 = vpop.f32.mrb[0].mxu0
  %v10033 = vadd.f32 %v9980, %v10032
  %v10034 = vpop.f32.mrb[0].mxu0
  %v10035 = vadd.f32 %v9982, %v10034
  %10036 = vmatprep.mubr.bf16.mxu0 %v6936
  %10037 = vmatmul.mubr.bf16.gmra.mrb[0].mxu0 %v6935
  %v10038 = vpop.f32.mrb[0].mxu0
  %v10039 = vadd.f32 %v9986, %v10038
  %v10040 = vpop.f32.mrb[0].mxu0
  %v10041 = vadd.f32 %v9988, %v10040
  %v10042 = vpop.f32.mrb[0].mxu0
  %v10043 = vadd.f32 %v9990, %v10042
  %v10044 = vpop.f32.mrb[0].mxu0
  %v10045 = vadd.f32 %v9992, %v10044
  %10046 = vdwg.mxu0
  %10047 = vmatprep.subr.bf16.mxu0 %v8754
  %10048 = vmatpush1.bf16.msra.mxu0 %v8753
  %10049 = vmatprep.subr.bf16.mxu0 %v8762
  %10050 = vmatpush1.bf16.msra.mxu0 %v8761
  %10051 = vmatprep.subr.bf16.mxu0 %v8770
  %10052 = vmatpush1.bf16.msra.mxu0 %v8769
  %10053 = vmatprep.subr.bf16.mxu0 %v8778
  %10054 = vmatpush1.bf16.msra.mxu0 %v8777
  %10055 = vmatprep.subr.bf16.mxu0 %v8786
  %10056 = vmatpush1.bf16.msra.mxu0 %v8785
  %10057 = vmatprep.subr.bf16.mxu0 %v8794
  %10058 = vmatpush1.bf16.msra.mxu0 %v8793
  %10059 = vmatprep.subr.bf16.mxu0 %v8802
  %10060 = vmatpush1.bf16.msra.mxu0 %v8801
  %10061 = vmatprep.subr.bf16.mxu0 %v8810
  %10062 = vmatpush1.bf16.msra.mxu0 %v8809
  %10063 = vmatprep.subr.bf16.mxu0 %v8818
  %10064 = vmatpush1.bf16.msra.mxu0 %v8817
  %10065 = vmatprep.subr.bf16.mxu0 %v8826
  %10066 = vmatpush1.bf16.msra.mxu0 %v8825
  %10067 = vmatprep.subr.bf16.mxu0 %v8834
  %10068 = vmatpush1.bf16.msra.mxu0 %v8833
  %10069 = vmatprep.subr.bf16.mxu0 %v8842
  %10070 = vmatpush1.bf16.msra.mxu0 %v8841
  %10071 = vmatprep.subr.bf16.mxu0 %v8850
  %10072 = vmatpush1.bf16.msra.mxu0 %v8849
  %10073 = vmatprep.subr.bf16.mxu0 %v8858
  %10074 = vmatpush1.bf16.msra.mxu0 %v8857
  %10075 = vmatprep.subr.bf16.mxu0 %v8866
  %10076 = vmatpush1.bf16.msra.mxu0 %v8865
  %10077 = vmatprep.subr.bf16.mxu0 %v8874
  %10078 = vmatpush1.bf16.msra.mxu0 %v8873
  %10079 = vmatprep.mubr.bf16.mxu0 %v6930
  %10080 = vmatmul.mubr.bf16.gmra.mrb[0].mxu0 %v6929
  %v10081 = vpop.f32.mrb[0].mxu0
  %v10082 = vadd.f32 %v10029, %v10081
  %v10083 = vpop.f32.mrb[0].mxu0
  %v10084 = vadd.f32 %v10031, %v10083
  %v10085 = vpop.f32.mrb[0].mxu0
  %v10086 = vadd.f32 %v10033, %v10085
  %v10087 = vpop.f32.mrb[0].mxu0
  %v10088 = vadd.f32 %v10035, %v10087
  %10089 = vmatprep.mubr.bf16.mxu0 %v6938
  %10090 = vmatmul.mubr.bf16.gmra.mrb[0].mxu0 %v6937
  %v10091 = vpop.f32.mrb[0].mxu0
  %v10092 = vadd.f32 %v10039, %v10091
  %v10093 = vpop.f32.mrb[0].mxu0
  %v10094 = vadd.f32 %v10041, %v10093
  %v10095 = vpop.f32.mrb[0].mxu0
  %v10096 = vadd.f32 %v10043, %v10095
  %v10097 = vpop.f32.mrb[0].mxu0
  %v10098 = vadd.f32 %v10045, %v10097
  %10099 = vdwg.mxu0
  %10100 = vmatprep.subr.bf16.mxu0 %v8882
  %10101 = vmatpush1.bf16.msra.mxu0 %v8881
  %10102 = vmatprep.subr.bf16.mxu0 %v8890
  %10103 = vmatpush1.bf16.msra.mxu0 %v8889
  %10104 = vmatprep.subr.bf16.mxu0 %v8898
  %10105 = vmatpush1.bf16.msra.mxu0 %v8897
  %10106 = vmatprep.subr.bf16.mxu0 %v8906
  %10107 = vmatpush1.bf16.msra.mxu0 %v8905
  %10108 = vmatprep.subr.bf16.mxu0 %v8914
  %10109 = vmatpush1.bf16.msra.mxu0 %v8913
  %10110 = vmatprep.subr.bf16.mxu0 %v8922
  %10111 = vmatpush1.bf16.msra.mxu0 %v8921
  %10112 = vmatprep.subr.bf16.mxu0 %v8930
  %10113 = vmatpush1.bf16.msra.mxu0 %v8929
  %10114 = vmatprep.subr.bf16.mxu0 %v8938
  %10115 = vmatpush1.bf16.msra.mxu0 %v8937
  %10116 = vmatprep.subr.bf16.mxu0 %v8946
  %10117 = vmatpush1.bf16.msra.mxu0 %v8945
  %10118 = vmatprep.subr.bf16.mxu0 %v8954
  %10119 = vmatpush1.bf16.msra.mxu0 %v8953
  %10120 = vmatprep.subr.bf16.mxu0 %v8962
  %10121 = vmatpush1.bf16.msra.mxu0 %v8961
  %10122 = vmatprep.subr.bf16.mxu0 %v8970
  %10123 = vmatpush1.bf16.msra.mxu0 %v8969
  %10124 = vmatprep.subr.bf16.mxu0 %v8978
  %10125 = vmatpush1.bf16.msra.mxu0 %v8977
  %10126 = vmatprep.subr.bf16.mxu0 %v8986
  %10127 = vmatpush1.bf16.msra.mxu0 %v8985
  %10128 = vmatprep.subr.bf16.mxu0 %v8994
  %10129 = vmatpush1.bf16.msra.mxu0 %v8993
  %10130 = vmatprep.subr.bf16.mxu0 %v9002
  %10131 = vmatpush1.bf16.msra.mxu0 %v9001
  %10132 = vmatprep.mubr.bf16.mxu0 %v6932
  %10133 = vmatmul.mubr.bf16.gmra.mrb[0].mxu0 %v6931
  %v10134 = vpop.f32.mrb[0].mxu0
  %v10135 = vadd.f32 %v10082, %v10134
  %v10136 = vpop.f32.mrb[0].mxu0
  %v10137 = vadd.f32 %v10084, %v10136
  %v10138 = vpop.f32.mrb[0].mxu0
  %v10139 = vadd.f32 %v10086, %v10138
  %v10140 = vpop.f32.mrb[0].mxu0
  %v10141 = vadd.f32 %v10088, %v10140
  %10142 = vmatprep.mubr.bf16.mxu0 %v6940
  %10143 = vmatmul.mubr.bf16.gmra.mrb[0].mxu0 %v6939
  %v10144 = vpop.f32.mrb[0].mxu0
  %v10145 = vadd.f32 %v10092, %v10144
  %v10146 = vpop.f32.mrb[0].mxu0
  %v10147 = vadd.f32 %v10094, %v10146
  %v10148 = vpop.f32.mrb[0].mxu0
  %v10149 = vadd.f32 %v10096, %v10148
  %v10150 = vpop.f32.mrb[0].mxu0
  %v10151 = vadd.f32 %v10098, %v10150
  %10152 = vdwg.mxu0
  %10153 = vmatprep.subr.bf16.mxu0 %v8500
  %10154 = vmatpush1.bf16.msra.mxu0 %v8499
  %10155 = vmatprep.subr.bf16.mxu0 %v8508
  %10156 = vmatpush1.bf16.msra.mxu0 %v8507
  %10157 = vmatprep.subr.bf16.mxu0 %v8516
  %10158 = vmatpush1.bf16.msra.mxu0 %v8515
  %10159 = vmatprep.subr.bf16.mxu0 %v8524
  %10160 = vmatpush1.bf16.msra.mxu0 %v8523
  %10161 = vmatprep.subr.bf16.mxu0 %v8532
  %10162 = vmatpush1.bf16.msra.mxu0 %v8531
  %10163 = vmatprep.subr.bf16.mxu0 %v8540
  %10164 = vmatpush1.bf16.msra.mxu0 %v8539
  %10165 = vmatprep.subr.bf16.mxu0 %v8548
  %10166 = vmatpush1.bf16.msra.mxu0 %v8547
  %10167 = vmatprep.subr.bf16.mxu0 %v8556
  %10168 = vmatpush1.bf16.msra.mxu0 %v8555
  %10169 = vmatprep.subr.bf16.mxu0 %v8564
  %10170 = vmatpush1.bf16.msra.mxu0 %v8563
  %10171 = vmatprep.subr.bf16.mxu0 %v8572
  %10172 = vmatpush1.bf16.msra.mxu0 %v8571
  %10173 = vmatprep.subr.bf16.mxu0 %v8580
  %10174 = vmatpush1.bf16.msra.mxu0 %v8579
  %10175 = vmatprep.subr.bf16.mxu0 %v8588
  %10176 = vmatpush1.bf16.msra.mxu0 %v8587
  %10177 = vmatprep.subr.bf16.mxu0 %v8596
  %10178 = vmatpush1.bf16.msra.mxu0 %v8595
  %10179 = vmatprep.subr.bf16.mxu0 %v8604
  %10180 = vmatpush1.bf16.msra.mxu0 %v8603
  %10181 = vmatprep.subr.bf16.mxu0 %v8612
  %10182 = vmatpush1.bf16.msra.mxu0 %v8611
  %10183 = vmatprep.subr.bf16.mxu0 %v8620
  %10184 = vmatpush1.bf16.msra.mxu0 %v8619
  %10185 = vmatprep.mubr.bf16.mxu0 %v6926
  %10186 = vmatmul.mubr.bf16.gmra.mrb[0].mxu0 %v6925
  %v10187 = vpop.f32.mrb[0].mxu0
  %v10188 = vadd.f32 %v6859, %v10187
  %v10189 = vpop.f32.mrb[0].mxu0
  %v10190 = vadd.f32 %v6861, %v10189
  %v10191 = vpop.f32.mrb[0].mxu0
  %v10192 = vadd.f32 %v6863, %v10191
  %v10193 = vpop.f32.mrb[0].mxu0
  %v10194 = vadd.f32 %v6865, %v10193
  %10195 = vmatprep.mubr.bf16.mxu0 %v6934
  %10196 = vmatmul.mubr.bf16.gmra.mrb[0].mxu0 %v6933
  %v10197 = vpop.f32.mrb[0].mxu0
  %v10198 = vadd.f32 %v6869, %v10197
  %v10199 = vpop.f32.mrb[0].mxu0
  %v10200 = vadd.f32 %v6871, %v10199
  %v10201 = vpop.f32.mrb[0].mxu0
  %v10202 = vadd.f32 %v6873, %v10201
  %v10203 = vpop.f32.mrb[0].mxu0
  %v10204 = vadd.f32 %v6875, %v10203
  %10205 = vdwg.mxu0
  %10206 = vmatprep.subr.bf16.mxu0 %v8628
  %10207 = vmatpush1.bf16.msra.mxu0 %v8627
  %10208 = vmatprep.subr.bf16.mxu0 %v8636
  %10209 = vmatpush1.bf16.msra.mxu0 %v8635
  %10210 = vmatprep.subr.bf16.mxu0 %v8644
  %10211 = vmatpush1.bf16.msra.mxu0 %v8643
  %10212 = vmatprep.subr.bf16.mxu0 %v8652
  %10213 = vmatpush1.bf16.msra.mxu0 %v8651
  %10214 = vmatprep.subr.bf16.mxu0 %v8660
  %10215 = vmatpush1.bf16.msra.mxu0 %v8659
  %10216 = vmatprep.subr.bf16.mxu0 %v8668
  %10217 = vmatpush1.bf16.msra.mxu0 %v8667
  %10218 = vmatprep.subr.bf16.mxu0 %v8676
  %10219 = vmatpush1.bf16.msra.mxu0 %v8675
  %10220 = vmatprep.subr.bf16.mxu0 %v8684
  %10221 = vmatpush1.bf16.msra.mxu0 %v8683
  %10222 = vmatprep.subr.bf16.mxu0 %v8692
  %10223 = vmatpush1.bf16.msra.mxu0 %v8691
  %10224 = vmatprep.subr.bf16.mxu0 %v8700
  %10225 = vmatpush1.bf16.msra.mxu0 %v8699
  %10226 = vmatprep.subr.bf16.mxu0 %v8708
  %10227 = vmatpush1.bf16.msra.mxu0 %v8707
  %10228 = vmatprep.subr.bf16.mxu0 %v8716
  %10229 = vmatpush1.bf16.msra.mxu0 %v8715
  %10230 = vmatprep.subr.bf16.mxu0 %v8724
  %10231 = vmatpush1.bf16.msra.mxu0 %v8723
  %10232 = vmatprep.subr.bf16.mxu0 %v8732
  %10233 = vmatpush1.bf16.msra.mxu0 %v8731
  %10234 = vmatprep.subr.bf16.mxu0 %v8740
  %10235 = vmatpush1.bf16.msra.mxu0 %v8739
  %10236 = vmatprep.subr.bf16.mxu0 %v8748
  %10237 = vmatpush1.bf16.msra.mxu0 %v8747
  %10238 = vmatprep.mubr.bf16.mxu0 %v6928
  %10239 = vmatmul.mubr.bf16.gmra.mrb[0].mxu0 %v6927
  %v10240 = vpop.f32.mrb[0].mxu0
  %v10241 = vadd.f32 %v10188, %v10240
  %v10242 = vpop.f32.mrb[0].mxu0
  %v10243 = vadd.f32 %v10190, %v10242
  %v10244 = vpop.f32.mrb[0].mxu0
  %v10245 = vadd.f32 %v10192, %v10244
  %v10246 = vpop.f32.mrb[0].mxu0
  %v10247 = vadd.f32 %v10194, %v10246
  %10248 = vmatprep.mubr.bf16.mxu0 %v6936
  %10249 = vmatmul.mubr.bf16.gmra.mrb[0].mxu0 %v6935
  %v10250 = vpop.f32.mrb[0].mxu0
  %v10251 = vadd.f32 %v10198, %v10250
  %v10252 = vpop.f32.mrb[0].mxu0
  %v10253 = vadd.f32 %v10200, %v10252
  %v10254 = vpop.f32.mrb[0].mxu0
  %v10255 = vadd.f32 %v10202, %v10254
  %v10256 = vpop.f32.mrb[0].mxu0
  %v10257 = vadd.f32 %v10204, %v10256
  %10258 = vdwg.mxu0
  %10259 = vmatprep.subr.bf16.mxu0 %v8756
  %10260 = vmatpush1.bf16.msra.mxu0 %v8755
  %10261 = vmatprep.subr.bf16.mxu0 %v8764
  %10262 = vmatpush1.bf16.msra.mxu0 %v8763
  %10263 = vmatprep.subr.bf16.mxu0 %v8772
  %10264 = vmatpush1.bf16.msra.mxu0 %v8771
  %10265 = vmatprep.subr.bf16.mxu0 %v8780
  %10266 = vmatpush1.bf16.msra.mxu0 %v8779
  %10267 = vmatprep.subr.bf16.mxu0 %v8788
  %10268 = vmatpush1.bf16.msra.mxu0 %v8787
  %10269 = vmatprep.subr.bf16.mxu0 %v8796
  %10270 = vmatpush1.bf16.msra.mxu0 %v8795
  %10271 = vmatprep.subr.bf16.mxu0 %v8804
  %10272 = vmatpush1.bf16.msra.mxu0 %v8803
  %10273 = vmatprep.subr.bf16.mxu0 %v8812
  %10274 = vmatpush1.bf16.msra.mxu0 %v8811
  %10275 = vmatprep.subr.bf16.mxu0 %v8820
  %10276 = vmatpush1.bf16.msra.mxu0 %v8819
  %10277 = vmatprep.subr.bf16.mxu0 %v8828
  %10278 = vmatpush1.bf16.msra.mxu0 %v8827
  %10279 = vmatprep.subr.bf16.mxu0 %v8836
  %10280 = vmatpush1.bf16.msra.mxu0 %v8835
  %10281 = vmatprep.subr.bf16.mxu0 %v8844
  %10282 = vmatpush1.bf16.msra.mxu0 %v8843
  %10283 = vmatprep.subr.bf16.mxu0 %v8852
  %10284 = vmatpush1.bf16.msra.mxu0 %v8851
  %10285 = vmatprep.subr.bf16.mxu0 %v8860
  %10286 = vmatpush1.bf16.msra.mxu0 %v8859
  %10287 = vmatprep.subr.bf16.mxu0 %v8868
  %10288 = vmatpush1.bf16.msra.mxu0 %v8867
  %10289 = vmatprep.subr.bf16.mxu0 %v8876
  %10290 = vmatpush1.bf16.msra.mxu0 %v8875
  %10291 = vmatprep.mubr.bf16.mxu0 %v6930
  %10292 = vmatmul.mubr.bf16.gmra.mrb[0].mxu0 %v6929
  %v10293 = vpop.f32.mrb[0].mxu0
  %v10294 = vadd.f32 %v10241, %v10293
  %v10295 = vpop.f32.mrb[0].mxu0
  %v10296 = vadd.f32 %v10243, %v10295
  %v10297 = vpop.f32.mrb[0].mxu0
  %v10298 = vadd.f32 %v10245, %v10297
  %v10299 = vpop.f32.mrb[0].mxu0
  %v10300 = vadd.f32 %v10247, %v10299
  %10301 = vmatprep.mubr.bf16.mxu0 %v6938
  %10302 = vmatmul.mubr.bf16.gmra.mrb[0].mxu0 %v6937
  %v10303 = vpop.f32.mrb[0].mxu0
  %v10304 = vadd.f32 %v10251, %v10303
  %v10305 = vpop.f32.mrb[0].mxu0
  %v10306 = vadd.f32 %v10253, %v10305
  %v10307 = vpop.f32.mrb[0].mxu0
  %v10308 = vadd.f32 %v10255, %v10307
  %v10309 = vpop.f32.mrb[0].mxu0
  %v10310 = vadd.f32 %v10257, %v10309
  %10311 = vdwg.mxu0
  %10312 = vmatprep.subr.bf16.mxu0 %v8884
  %10313 = vmatpush1.bf16.msra.mxu0 %v8883
  %10314 = vmatprep.subr.bf16.mxu0 %v8892
  %10315 = vmatpush1.bf16.msra.mxu0 %v8891
  %10316 = vmatprep.subr.bf16.mxu0 %v8900
  %10317 = vmatpush1.bf16.msra.mxu0 %v8899
  %10318 = vmatprep.subr.bf16.mxu0 %v8908
  %10319 = vmatpush1.bf16.msra.mxu0 %v8907
  %10320 = vmatprep.subr.bf16.mxu0 %v8916
  %10321 = vmatpush1.bf16.msra.mxu0 %v8915
  %10322 = vmatprep.subr.bf16.mxu0 %v8924
  %10323 = vmatpush1.bf16.msra.mxu0 %v8923
  %10324 = vmatprep.subr.bf16.mxu0 %v8932
  %10325 = vmatpush1.bf16.msra.mxu0 %v8931
  %10326 = vmatprep.subr.bf16.mxu0 %v8940
  %10327 = vmatpush1.bf16.msra.mxu0 %v8939
  %10328 = vmatprep.subr.bf16.mxu0 %v8948
  %10329 = vmatpush1.bf16.msra.mxu0 %v8947
  %10330 = vmatprep.subr.bf16.mxu0 %v8956
  %10331 = vmatpush1.bf16.msra.mxu0 %v8955
  %10332 = vmatprep.subr.bf16.mxu0 %v8964
  %10333 = vmatpush1.bf16.msra.mxu0 %v8963
  %10334 = vmatprep.subr.bf16.mxu0 %v8972
  %10335 = vmatpush1.bf16.msra.mxu0 %v8971
  %10336 = vmatprep.subr.bf16.mxu0 %v8980
  %10337 = vmatpush1.bf16.msra.mxu0 %v8979
  %10338 = vmatprep.subr.bf16.mxu0 %v8988
  %10339 = vmatpush1.bf16.msra.mxu0 %v8987
  %10340 = vmatprep.subr.bf16.mxu0 %v8996
  %10341 = vmatpush1.bf16.msra.mxu0 %v8995
  %10342 = vmatprep.subr.bf16.mxu0 %v9004
  %10343 = vmatpush1.bf16.msra.mxu0 %v9003
  %10344 = vmatprep.mubr.bf16.mxu0 %v6932
  %10345 = vmatmul.mubr.bf16.gmra.mrb[0].mxu0 %v6931
  %v10346 = vpop.f32.mrb[0].mxu0
  %v10347 = vadd.f32 %v10294, %v10346
  %v10348 = vpop.f32.mrb[0].mxu0
  %v10349 = vadd.f32 %v10296, %v10348
  %v10350 = vpop.f32.mrb[0].mxu0
  %v10351 = vadd.f32 %v10298, %v10350
  %v10352 = vpop.f32.mrb[0].mxu0
  %v10353 = vadd.f32 %v10300, %v10352
  %10354 = vmatprep.mubr.bf16.mxu0 %v6940
  %10355 = vmatmul.mubr.bf16.gmra.mrb[0].mxu0 %v6939
  %v10356 = vpop.f32.mrb[0].mxu0
  %v10357 = vadd.f32 %v10304, %v10356
  %v10358 = vpop.f32.mrb[0].mxu0
  %v10359 = vadd.f32 %v10306, %v10358
  %v10360 = vpop.f32.mrb[0].mxu0
  %v10361 = vadd.f32 %v10308, %v10360
  %v10362 = vpop.f32.mrb[0].mxu0
  %v10363 = vadd.f32 %v10310, %v10362
  %10364 = vdwg.mxu0
  %v10365 = vld [vmem:[#allocation2] sm:$0xee]
  %v10366 = vld [vmem:[#allocation2 + $0x8] sm:$0xee]
  %v10367 = vld [vmem:[#allocation2 + $0x10] sm:$0xee]
  %v10368 = vld [vmem:[#allocation2 + $0x18] sm:$0xee]
  %v10369 = vld [vmem:[#allocation2 + $0x60] sm:$0xee]
  %v10370 = vld [vmem:[#allocation2 + $0x68] sm:$0xee]
  %v10371 = vld [vmem:[#allocation2 + $0x70] sm:$0xee]
  %v10372 = vld [vmem:[#allocation2 + $0x78] sm:$0xee]
  %v10389 = vrot.slane %v10365, 5
  %v10390 = vrot.slane %v10389, 4
  %v10391 = vrot.slane %v2168, 5
  %v10392 = vsel %vm930, %v10390, %v10391
  %v10393 = vrot.slane %v10366, 5
  %v10394 = vrot.slane %v10393, 4
  %v10395 = vrot.slane %v2169, 5
  %v10396 = vsel %vm930, %v10394, %v10395
  %v10397 = vrot.slane %v10367, 5
  %v10398 = vrot.slane %v10397, 4
  %v10399 = vrot.slane %v2170, 5
  %v10400 = vsel %vm930, %v10398, %v10399
  %v10401 = vrot.slane %v10368, 5
  %v10402 = vrot.slane %v10401, 4
  %v10403 = vrot.slane %v2171, 5
  %v10404 = vsel %vm930, %v10402, %v10403
  %v10405 = vrot.slane %v10391, 4
  %v10406 = vrot.slane %v2692, 5
  %v10407 = vsel %vm930, %v10405, %v10406
  %v10408 = vrot.slane %v10395, 4
  %v10409 = vrot.slane %v2693, 5
  %v10410 = vsel %vm930, %v10408, %v10409
  %v10411 = vrot.slane %v10399, 4
  %v10412 = vrot.slane %v2694, 5
  %v10413 = vsel %vm930, %v10411, %v10412
  %v10414 = vrot.slane %v10403, 4
  %v10415 = vrot.slane %v2695, 5
  %v10416 = vsel %vm930, %v10414, %v10415
  %v10417 = vrot.slane %v10369, 5
  %v10418 = vrot.slane %v10417, 4
  %v10419 = vrot.slane %v2176, 5
  %v10420 = vsel %vm930, %v10418, %v10419
  %v10421 = vrot.slane %v10370, 5
  %v10422 = vrot.slane %v10421, 4
  %v10423 = vrot.slane %v2177, 5
  %v10424 = vsel %vm930, %v10422, %v10423
  %v10425 = vrot.slane %v10371, 5
  %v10426 = vrot.slane %v10425, 4
  %v10427 = vrot.slane %v2178, 5
  %v10428 = vsel %vm930, %v10426, %v10427
  %v10429 = vrot.slane %v10372, 5
  %v10430 = vrot.slane %v10429, 4
  %v10431 = vrot.slane %v2179, 5
  %v10432 = vsel %vm930, %v10430, %v10431
  %v10433 = vrot.slane %v10419, 4
  %v10434 = vrot.slane %v2696, 5
  %v10435 = vsel %vm930, %v10433, %v10434
  %v10436 = vrot.slane %v10423, 4
  %v10437 = vrot.slane %v2697, 5
  %v10438 = vsel %vm930, %v10436, %v10437
  %v10439 = vrot.slane %v10427, 4
  %v10440 = vrot.slane %v2698, 5
  %v10441 = vsel %vm930, %v10439, %v10440
  %v10442 = vrot.slane %v10431, 4
  %v10443 = vrot.slane %v2699, 5
  %v10444 = vsel %vm930, %v10442, %v10443
  %s10445 = scalar_lea.vmem %s4, 8192
  %v10446 = vld [vmem:[%s10445] sm:$0xff]
  %v10447 = vld [vmem:[%s10445 + $0x8] sm:$0xff]
  %v10448 = vld [vmem:[%s10445 + $0x10] sm:$0xff]
  %v10449 = vld [vmem:[%s10445 + $0x18] sm:$0xff]
  %v10450 = vld [vmem:[%s10445 + $0x20] sm:$0xff]
  %v10451 = vld [vmem:[%s10445 + $0x28] sm:$0xff]
  %v10452 = vld [vmem:[%s10445 + $0x30] sm:$0xff]
  %v10453 = vld [vmem:[%s10445 + $0x38] sm:$0xff]
  %v10454 = vld [vmem:[%s10445 + $0x40] sm:$0xff]
  %v10455 = vld [vmem:[%s10445 + $0x48] sm:$0xff]
  %v10456 = vld [vmem:[%s10445 + $0x50] sm:$0xff]
  %v10457 = vld [vmem:[%s10445 + $0x58] sm:$0xff]
  %v10458 = vld [vmem:[%s10445 + $0x60] sm:$0xff]
  %v10459 = vld [vmem:[%s10445 + $0x68] sm:$0xff]
  %v10460 = vld [vmem:[%s10445 + $0x70] sm:$0xff]
  %v10461 = vld [vmem:[%s10445 + $0x78] sm:$0xff]
  %v10462 = vld [vmem:[%s10445 + $0x80] sm:$0xff]
  %v10463 = vld [vmem:[%s10445 + $0x88] sm:$0xff]
  %v10464 = vld [vmem:[%s10445 + $0x90] sm:$0xff]
  %v10465 = vld [vmem:[%s10445 + $0x98] sm:$0xff]
  %v10466 = vld [vmem:[%s10445 + $0xa0] sm:$0xff]
  %v10467 = vld [vmem:[%s10445 + $0xa8] sm:$0xff]
  %v10468 = vld [vmem:[%s10445 + $0xb0] sm:$0xff]
  %v10469 = vld [vmem:[%s10445 + $0xb8] sm:$0xff]
  %v10470 = vld [vmem:[%s10445 + $0xc0] sm:$0xff]
  %v10471 = vld [vmem:[%s10445 + $0xc8] sm:$0xff]
  %v10472 = vld [vmem:[%s10445 + $0xd0] sm:$0xff]
  %v10473 = vld [vmem:[%s10445 + $0xd8] sm:$0xff]
  %v10474 = vld [vmem:[%s10445 + $0xe0] sm:$0xff]
  %v10475 = vld [vmem:[%s10445 + $0xe8] sm:$0xff]
  %v10476 = vld [vmem:[%s10445 + $0xf0] sm:$0xff]
  %v10477 = vld [vmem:[%s10445 + $0xf8] sm:$0xff]
  %v10478 = vld [vmem:[%s10445 + $0x100] sm:$0xff]
  %v10479 = vld [vmem:[%s10445 + $0x108] sm:$0xff]
  %v10480 = vld [vmem:[%s10445 + $0x110] sm:$0xff]
  %v10481 = vld [vmem:[%s10445 + $0x118] sm:$0xff]
  %v10482 = vld [vmem:[%s10445 + $0x120] sm:$0xff]
  %v10483 = vld [vmem:[%s10445 + $0x128] sm:$0xff]
  %v10484 = vld [vmem:[%s10445 + $0x130] sm:$0xff]
  %v10485 = vld [vmem:[%s10445 + $0x138] sm:$0xff]
  %v10486 = vld [vmem:[%s10445 + $0x140] sm:$0xff]
  %v10487 = vld [vmem:[%s10445 + $0x148] sm:$0xff]
  %v10488 = vld [vmem:[%s10445 + $0x150] sm:$0xff]
  %v10489 = vld [vmem:[%s10445 + $0x158] sm:$0xff]
  %v10490 = vld [vmem:[%s10445 + $0x160] sm:$0xff]
  %v10491 = vld [vmem:[%s10445 + $0x168] sm:$0xff]
  %v10492 = vld [vmem:[%s10445 + $0x170] sm:$0xff]
  %v10493 = vld [vmem:[%s10445 + $0x178] sm:$0xff]
  %v10494 = vld [vmem:[%s10445 + $0x180] sm:$0xff]
  %v10495 = vld [vmem:[%s10445 + $0x188] sm:$0xff]
  %v10496 = vld [vmem:[%s10445 + $0x190] sm:$0xff]
  %v10497 = vld [vmem:[%s10445 + $0x198] sm:$0xff]
  %v10498 = vld [vmem:[%s10445 + $0x1a0] sm:$0xff]
  %v10499 = vld [vmem:[%s10445 + $0x1a8] sm:$0xff]
  %v10500 = vld [vmem:[%s10445 + $0x1b0] sm:$0xff]
  %v10501 = vld [vmem:[%s10445 + $0x1b8] sm:$0xff]
  %v10502 = vld [vmem:[%s10445 + $0x1c0] sm:$0xff]
  %v10503 = vld [vmem:[%s10445 + $0x1c8] sm:$0xff]
  %v10504 = vld [vmem:[%s10445 + $0x1d0] sm:$0xff]
  %v10505 = vld [vmem:[%s10445 + $0x1d8] sm:$0xff]
  %v10506 = vld [vmem:[%s10445 + $0x1e0] sm:$0xff]
  %v10507 = vld [vmem:[%s10445 + $0x1e8] sm:$0xff]
  %v10508 = vld [vmem:[%s10445 + $0x1f0] sm:$0xff]
  %v10509 = vld [vmem:[%s10445 + $0x1f8] sm:$0xff]
  %v10510 = vld [vmem:[%s10445 + $0x200] sm:$0xff]
  %v10511 = vld [vmem:[%s10445 + $0x208] sm:$0xff]
  %v10512 = vld [vmem:[%s10445 + $0x210] sm:$0xff]
  %v10513 = vld [vmem:[%s10445 + $0x218] sm:$0xff]
  %v10514 = vld [vmem:[%s10445 + $0x220] sm:$0xff]
  %v10515 = vld [vmem:[%s10445 + $0x228] sm:$0xff]
  %v10516 = vld [vmem:[%s10445 + $0x230] sm:$0xff]
  %v10517 = vld [vmem:[%s10445 + $0x238] sm:$0xff]
  %v10518 = vld [vmem:[%s10445 + $0x240] sm:$0xff]
  %v10519 = vld [vmem:[%s10445 + $0x248] sm:$0xff]
  %v10520 = vld [vmem:[%s10445 + $0x250] sm:$0xff]
  %v10521 = vld [vmem:[%s10445 + $0x258] sm:$0xff]
  %v10522 = vld [vmem:[%s10445 + $0x260] sm:$0xff]
  %v10523 = vld [vmem:[%s10445 + $0x268] sm:$0xff]
  %v10524 = vld [vmem:[%s10445 + $0x270] sm:$0xff]
  %v10525 = vld [vmem:[%s10445 + $0x278] sm:$0xff]
  %v10526 = vld [vmem:[%s10445 + $0x280] sm:$0xff]
  %v10527 = vld [vmem:[%s10445 + $0x288] sm:$0xff]
  %v10528 = vld [vmem:[%s10445 + $0x290] sm:$0xff]
  %v10529 = vld [vmem:[%s10445 + $0x298] sm:$0xff]
  %v10530 = vld [vmem:[%s10445 + $0x2a0] sm:$0xff]
  %v10531 = vld [vmem:[%s10445 + $0x2a8] sm:$0xff]
  %v10532 = vld [vmem:[%s10445 + $0x2b0] sm:$0xff]
  %v10533 = vld [vmem:[%s10445 + $0x2b8] sm:$0xff]
  %v10534 = vld [vmem:[%s10445 + $0x2c0] sm:$0xff]
  %v10535 = vld [vmem:[%s10445 + $0x2c8] sm:$0xff]
  %v10536 = vld [vmem:[%s10445 + $0x2d0] sm:$0xff]
  %v10537 = vld [vmem:[%s10445 + $0x2d8] sm:$0xff]
  %v10538 = vld [vmem:[%s10445 + $0x2e0] sm:$0xff]
  %v10539 = vld [vmem:[%s10445 + $0x2e8] sm:$0xff]
  %v10540 = vld [vmem:[%s10445 + $0x2f0] sm:$0xff]
  %v10541 = vld [vmem:[%s10445 + $0x2f8] sm:$0xff]
  %v10542 = vld [vmem:[%s10445 + $0x300] sm:$0xff]
  %v10543 = vld [vmem:[%s10445 + $0x308] sm:$0xff]
  %v10544 = vld [vmem:[%s10445 + $0x310] sm:$0xff]
  %v10545 = vld [vmem:[%s10445 + $0x318] sm:$0xff]
  %v10546 = vld [vmem:[%s10445 + $0x320] sm:$0xff]
  %v10547 = vld [vmem:[%s10445 + $0x328] sm:$0xff]
  %v10548 = vld [vmem:[%s10445 + $0x330] sm:$0xff]
  %v10549 = vld [vmem:[%s10445 + $0x338] sm:$0xff]
  %v10550 = vld [vmem:[%s10445 + $0x340] sm:$0xff]
  %v10551 = vld [vmem:[%s10445 + $0x348] sm:$0xff]
  %v10552 = vld [vmem:[%s10445 + $0x350] sm:$0xff]
  %v10553 = vld [vmem:[%s10445 + $0x358] sm:$0xff]
  %v10554 = vld [vmem:[%s10445 + $0x360] sm:$0xff]
  %v10555 = vld [vmem:[%s10445 + $0x368] sm:$0xff]
  %v10556 = vld [vmem:[%s10445 + $0x370] sm:$0xff]
  %v10557 = vld [vmem:[%s10445 + $0x378] sm:$0xff]
  %v10558 = vld [vmem:[%s10445 + $0x380] sm:$0xff]
  %v10559 = vld [vmem:[%s10445 + $0x388] sm:$0xff]
  %v10560 = vld [vmem:[%s10445 + $0x390] sm:$0xff]
  %v10561 = vld [vmem:[%s10445 + $0x398] sm:$0xff]
  %v10562 = vld [vmem:[%s10445 + $0x3a0] sm:$0xff]
  %v10563 = vld [vmem:[%s10445 + $0x3a8] sm:$0xff]
  %v10564 = vld [vmem:[%s10445 + $0x3b0] sm:$0xff]
  %v10565 = vld [vmem:[%s10445 + $0x3b8] sm:$0xff]
  %v10566 = vld [vmem:[%s10445 + $0x3c0] sm:$0xff]
  %v10567 = vld [vmem:[%s10445 + $0x3c8] sm:$0xff]
  %v10568 = vld [vmem:[%s10445 + $0x3d0] sm:$0xff]
  %v10569 = vld [vmem:[%s10445 + $0x3d8] sm:$0xff]
  %v10570 = vld [vmem:[%s10445 + $0x3e0] sm:$0xff]
  %v10571 = vld [vmem:[%s10445 + $0x3e8] sm:$0xff]
  %v10572 = vld [vmem:[%s10445 + $0x3f0] sm:$0xff]
  %v10573 = vld [vmem:[%s10445 + $0x3f8] sm:$0xff]
  %v10574 = vld [vmem:[%s10445 + $0x400] sm:$0xff]
  %v10575 = vld [vmem:[%s10445 + $0x408] sm:$0xff]
  %v10576 = vld [vmem:[%s10445 + $0x410] sm:$0xff]
  %v10577 = vld [vmem:[%s10445 + $0x418] sm:$0xff]
  %v10578 = vld [vmem:[%s10445 + $0x420] sm:$0xff]
  %v10579 = vld [vmem:[%s10445 + $0x428] sm:$0xff]
  %v10580 = vld [vmem:[%s10445 + $0x430] sm:$0xff]
  %v10581 = vld [vmem:[%s10445 + $0x438] sm:$0xff]
  %v10582 = vld [vmem:[%s10445 + $0x440] sm:$0xff]
  %v10583 = vld [vmem:[%s10445 + $0x448] sm:$0xff]
  %v10584 = vld [vmem:[%s10445 + $0x450] sm:$0xff]
  %v10585 = vld [vmem:[%s10445 + $0x458] sm:$0xff]
  %v10586 = vld [vmem:[%s10445 + $0x460] sm:$0xff]
  %v10587 = vld [vmem:[%s10445 + $0x468] sm:$0xff]
  %v10588 = vld [vmem:[%s10445 + $0x470] sm:$0xff]
  %v10589 = vld [vmem:[%s10445 + $0x478] sm:$0xff]
  %v10590 = vld [vmem:[%s10445 + $0x480] sm:$0xff]
  %v10591 = vld [vmem:[%s10445 + $0x488] sm:$0xff]
  %v10592 = vld [vmem:[%s10445 + $0x490] sm:$0xff]
  %v10593 = vld [vmem:[%s10445 + $0x498] sm:$0xff]
  %v10594 = vld [vmem:[%s10445 + $0x4a0] sm:$0xff]
  %v10595 = vld [vmem:[%s10445 + $0x4a8] sm:$0xff]
  %v10596 = vld [vmem:[%s10445 + $0x4b0] sm:$0xff]
  %v10597 = vld [vmem:[%s10445 + $0x4b8] sm:$0xff]
  %v10598 = vld [vmem:[%s10445 + $0x4c0] sm:$0xff]
  %v10599 = vld [vmem:[%s10445 + $0x4c8] sm:$0xff]
  %v10600 = vld [vmem:[%s10445 + $0x4d0] sm:$0xff]
  %v10601 = vld [vmem:[%s10445 + $0x4d8] sm:$0xff]
  %v10602 = vld [vmem:[%s10445 + $0x4e0] sm:$0xff]
  %v10603 = vld [vmem:[%s10445 + $0x4e8] sm:$0xff]
  %v10604 = vld [vmem:[%s10445 + $0x4f0] sm:$0xff]
  %v10605 = vld [vmem:[%s10445 + $0x4f8] sm:$0xff]
  %v10606 = vld [vmem:[%s10445 + $0x500] sm:$0xff]
  %v10607 = vld [vmem:[%s10445 + $0x508] sm:$0xff]
  %v10608 = vld [vmem:[%s10445 + $0x510] sm:$0xff]
  %v10609 = vld [vmem:[%s10445 + $0x518] sm:$0xff]
  %v10610 = vld [vmem:[%s10445 + $0x520] sm:$0xff]
  %v10611 = vld [vmem:[%s10445 + $0x528] sm:$0xff]
  %v10612 = vld [vmem:[%s10445 + $0x530] sm:$0xff]
  %v10613 = vld [vmem:[%s10445 + $0x538] sm:$0xff]
  %v10614 = vld [vmem:[%s10445 + $0x540] sm:$0xff]
  %v10615 = vld [vmem:[%s10445 + $0x548] sm:$0xff]
  %v10616 = vld [vmem:[%s10445 + $0x550] sm:$0xff]
  %v10617 = vld [vmem:[%s10445 + $0x558] sm:$0xff]
  %v10618 = vld [vmem:[%s10445 + $0x560] sm:$0xff]
  %v10619 = vld [vmem:[%s10445 + $0x568] sm:$0xff]
  %v10620 = vld [vmem:[%s10445 + $0x570] sm:$0xff]
  %v10621 = vld [vmem:[%s10445 + $0x578] sm:$0xff]
  %v10622 = vld [vmem:[%s10445 + $0x580] sm:$0xff]
  %v10623 = vld [vmem:[%s10445 + $0x588] sm:$0xff]
  %v10624 = vld [vmem:[%s10445 + $0x590] sm:$0xff]
  %v10625 = vld [vmem:[%s10445 + $0x598] sm:$0xff]
  %v10626 = vld [vmem:[%s10445 + $0x5a0] sm:$0xff]
  %v10627 = vld [vmem:[%s10445 + $0x5a8] sm:$0xff]
  %v10628 = vld [vmem:[%s10445 + $0x5b0] sm:$0xff]
  %v10629 = vld [vmem:[%s10445 + $0x5b8] sm:$0xff]
  %v10630 = vld [vmem:[%s10445 + $0x5c0] sm:$0xff]
  %v10631 = vld [vmem:[%s10445 + $0x5c8] sm:$0xff]
  %v10632 = vld [vmem:[%s10445 + $0x5d0] sm:$0xff]
  %v10633 = vld [vmem:[%s10445 + $0x5d8] sm:$0xff]
  %v10634 = vld [vmem:[%s10445 + $0x5e0] sm:$0xff]
  %v10635 = vld [vmem:[%s10445 + $0x5e8] sm:$0xff]
  %v10636 = vld [vmem:[%s10445 + $0x5f0] sm:$0xff]
  %v10637 = vld [vmem:[%s10445 + $0x5f8] sm:$0xff]
  %v10638 = vld [vmem:[%s10445 + $0x600] sm:$0xff]
  %v10639 = vld [vmem:[%s10445 + $0x608] sm:$0xff]
  %v10640 = vld [vmem:[%s10445 + $0x610] sm:$0xff]
  %v10641 = vld [vmem:[%s10445 + $0x618] sm:$0xff]
  %v10642 = vld [vmem:[%s10445 + $0x620] sm:$0xff]
  %v10643 = vld [vmem:[%s10445 + $0x628] sm:$0xff]
  %v10644 = vld [vmem:[%s10445 + $0x630] sm:$0xff]
  %v10645 = vld [vmem:[%s10445 + $0x638] sm:$0xff]
  %v10646 = vld [vmem:[%s10445 + $0x640] sm:$0xff]
  %v10647 = vld [vmem:[%s10445 + $0x648] sm:$0xff]
  %v10648 = vld [vmem:[%s10445 + $0x650] sm:$0xff]
  %v10649 = vld [vmem:[%s10445 + $0x658] sm:$0xff]
  %v10650 = vld [vmem:[%s10445 + $0x660] sm:$0xff]
  %v10651 = vld [vmem:[%s10445 + $0x668] sm:$0xff]
  %v10652 = vld [vmem:[%s10445 + $0x670] sm:$0xff]
  %v10653 = vld [vmem:[%s10445 + $0x678] sm:$0xff]
  %v10654 = vld [vmem:[%s10445 + $0x680] sm:$0xff]
  %v10655 = vld [vmem:[%s10445 + $0x688] sm:$0xff]
  %v10656 = vld [vmem:[%s10445 + $0x690] sm:$0xff]
  %v10657 = vld [vmem:[%s10445 + $0x698] sm:$0xff]
  %v10658 = vld [vmem:[%s10445 + $0x6a0] sm:$0xff]
  %v10659 = vld [vmem:[%s10445 + $0x6a8] sm:$0xff]
  %v10660 = vld [vmem:[%s10445 + $0x6b0] sm:$0xff]
  %v10661 = vld [vmem:[%s10445 + $0x6b8] sm:$0xff]
  %v10662 = vld [vmem:[%s10445 + $0x6c0] sm:$0xff]
  %v10663 = vld [vmem:[%s10445 + $0x6c8] sm:$0xff]
  %v10664 = vld [vmem:[%s10445 + $0x6d0] sm:$0xff]
  %v10665 = vld [vmem:[%s10445 + $0x6d8] sm:$0xff]
  %v10666 = vld [vmem:[%s10445 + $0x6e0] sm:$0xff]
  %v10667 = vld [vmem:[%s10445 + $0x6e8] sm:$0xff]
  %v10668 = vld [vmem:[%s10445 + $0x6f0] sm:$0xff]
  %v10669 = vld [vmem:[%s10445 + $0x6f8] sm:$0xff]
  %v10670 = vld [vmem:[%s10445 + $0x700] sm:$0xff]
  %v10671 = vld [vmem:[%s10445 + $0x708] sm:$0xff]
  %v10672 = vld [vmem:[%s10445 + $0x710] sm:$0xff]
  %v10673 = vld [vmem:[%s10445 + $0x718] sm:$0xff]
  %v10674 = vld [vmem:[%s10445 + $0x720] sm:$0xff]
  %v10675 = vld [vmem:[%s10445 + $0x728] sm:$0xff]
  %v10676 = vld [vmem:[%s10445 + $0x730] sm:$0xff]
  %v10677 = vld [vmem:[%s10445 + $0x738] sm:$0xff]
  %v10678 = vld [vmem:[%s10445 + $0x740] sm:$0xff]
  %v10679 = vld [vmem:[%s10445 + $0x748] sm:$0xff]
  %v10680 = vld [vmem:[%s10445 + $0x750] sm:$0xff]
  %v10681 = vld [vmem:[%s10445 + $0x758] sm:$0xff]
  %v10682 = vld [vmem:[%s10445 + $0x760] sm:$0xff]
  %v10683 = vld [vmem:[%s10445 + $0x768] sm:$0xff]
  %v10684 = vld [vmem:[%s10445 + $0x770] sm:$0xff]
  %v10685 = vld [vmem:[%s10445 + $0x778] sm:$0xff]
  %v10686 = vld [vmem:[%s10445 + $0x780] sm:$0xff]
  %v10687 = vld [vmem:[%s10445 + $0x788] sm:$0xff]
  %v10688 = vld [vmem:[%s10445 + $0x790] sm:$0xff]
  %v10689 = vld [vmem:[%s10445 + $0x798] sm:$0xff]
  %v10690 = vld [vmem:[%s10445 + $0x7a0] sm:$0xff]
  %v10691 = vld [vmem:[%s10445 + $0x7a8] sm:$0xff]
  %v10692 = vld [vmem:[%s10445 + $0x7b0] sm:$0xff]
  %v10693 = vld [vmem:[%s10445 + $0x7b8] sm:$0xff]
  %v10694 = vld [vmem:[%s10445 + $0x7c0] sm:$0xff]
  %v10695 = vld [vmem:[%s10445 + $0x7c8] sm:$0xff]
  %v10696 = vld [vmem:[%s10445 + $0x7d0] sm:$0xff]
  %v10697 = vld [vmem:[%s10445 + $0x7d8] sm:$0xff]
  %v10698 = vld [vmem:[%s10445 + $0x7e0] sm:$0xff]
  %v10699 = vld [vmem:[%s10445 + $0x7e8] sm:$0xff]
  %v10700 = vld [vmem:[%s10445 + $0x7f0] sm:$0xff]
  %v10701 = vld [vmem:[%s10445 + $0x7f8] sm:$0xff]
  %v10702 = vld [vmem:[%s10445 + $0x800] sm:$0xff]
  %v10703 = vld [vmem:[%s10445 + $0x808] sm:$0xff]
  %v10704 = vld [vmem:[%s10445 + $0x810] sm:$0xff]
  %v10705 = vld [vmem:[%s10445 + $0x818] sm:$0xff]
  %v10706 = vld [vmem:[%s10445 + $0x820] sm:$0xff]
  %v10707 = vld [vmem:[%s10445 + $0x828] sm:$0xff]
  %v10708 = vld [vmem:[%s10445 + $0x830] sm:$0xff]
  %v10709 = vld [vmem:[%s10445 + $0x838] sm:$0xff]
  %v10710 = vld [vmem:[%s10445 + $0x840] sm:$0xff]
  %v10711 = vld [vmem:[%s10445 + $0x848] sm:$0xff]
  %v10712 = vld [vmem:[%s10445 + $0x850] sm:$0xff]
  %v10713 = vld [vmem:[%s10445 + $0x858] sm:$0xff]
  %v10714 = vld [vmem:[%s10445 + $0x860] sm:$0xff]
  %v10715 = vld [vmem:[%s10445 + $0x868] sm:$0xff]
  %v10716 = vld [vmem:[%s10445 + $0x870] sm:$0xff]
  %v10717 = vld [vmem:[%s10445 + $0x878] sm:$0xff]
  %v10718 = vld [vmem:[%s10445 + $0x880] sm:$0xff]
  %v10719 = vld [vmem:[%s10445 + $0x888] sm:$0xff]
  %v10720 = vld [vmem:[%s10445 + $0x890] sm:$0xff]
  %v10721 = vld [vmem:[%s10445 + $0x898] sm:$0xff]
  %v10722 = vld [vmem:[%s10445 + $0x8a0] sm:$0xff]
  %v10723 = vld [vmem:[%s10445 + $0x8a8] sm:$0xff]
  %v10724 = vld [vmem:[%s10445 + $0x8b0] sm:$0xff]
  %v10725 = vld [vmem:[%s10445 + $0x8b8] sm:$0xff]
  %v10726 = vld [vmem:[%s10445 + $0x8c0] sm:$0xff]
  %v10727 = vld [vmem:[%s10445 + $0x8c8] sm:$0xff]
  %v10728 = vld [vmem:[%s10445 + $0x8d0] sm:$0xff]
  %v10729 = vld [vmem:[%s10445 + $0x8d8] sm:$0xff]
  %v10730 = vld [vmem:[%s10445 + $0x8e0] sm:$0xff]
  %v10731 = vld [vmem:[%s10445 + $0x8e8] sm:$0xff]
  %v10732 = vld [vmem:[%s10445 + $0x8f0] sm:$0xff]
  %v10733 = vld [vmem:[%s10445 + $0x8f8] sm:$0xff]
  %v10734 = vld [vmem:[%s10445 + $0x900] sm:$0xff]
  %v10735 = vld [vmem:[%s10445 + $0x908] sm:$0xff]
  %v10736 = vld [vmem:[%s10445 + $0x910] sm:$0xff]
  %v10737 = vld [vmem:[%s10445 + $0x918] sm:$0xff]
  %v10738 = vld [vmem:[%s10445 + $0x920] sm:$0xff]
  %v10739 = vld [vmem:[%s10445 + $0x928] sm:$0xff]
  %v10740 = vld [vmem:[%s10445 + $0x930] sm:$0xff]
  %v10741 = vld [vmem:[%s10445 + $0x938] sm:$0xff]
  %v10742 = vld [vmem:[%s10445 + $0x940] sm:$0xff]
  %v10743 = vld [vmem:[%s10445 + $0x948] sm:$0xff]
  %v10744 = vld [vmem:[%s10445 + $0x950] sm:$0xff]
  %v10745 = vld [vmem:[%s10445 + $0x958] sm:$0xff]
  %v10746 = vld [vmem:[%s10445 + $0x960] sm:$0xff]
  %v10747 = vld [vmem:[%s10445 + $0x968] sm:$0xff]
  %v10748 = vld [vmem:[%s10445 + $0x970] sm:$0xff]
  %v10749 = vld [vmem:[%s10445 + $0x978] sm:$0xff]
  %v10750 = vld [vmem:[%s10445 + $0x980] sm:$0xff]
  %v10751 = vld [vmem:[%s10445 + $0x988] sm:$0xff]
  %v10752 = vld [vmem:[%s10445 + $0x990] sm:$0xff]
  %v10753 = vld [vmem:[%s10445 + $0x998] sm:$0xff]
  %v10754 = vld [vmem:[%s10445 + $0x9a0] sm:$0xff]
  %v10755 = vld [vmem:[%s10445 + $0x9a8] sm:$0xff]
  %v10756 = vld [vmem:[%s10445 + $0x9b0] sm:$0xff]
  %v10757 = vld [vmem:[%s10445 + $0x9b8] sm:$0xff]
  %v10758 = vld [vmem:[%s10445 + $0x9c0] sm:$0xff]
  %v10759 = vld [vmem:[%s10445 + $0x9c8] sm:$0xff]
  %v10760 = vld [vmem:[%s10445 + $0x9d0] sm:$0xff]
  %v10761 = vld [vmem:[%s10445 + $0x9d8] sm:$0xff]
  %v10762 = vld [vmem:[%s10445 + $0x9e0] sm:$0xff]
  %v10763 = vld [vmem:[%s10445 + $0x9e8] sm:$0xff]
  %v10764 = vld [vmem:[%s10445 + $0x9f0] sm:$0xff]
  %v10765 = vld [vmem:[%s10445 + $0x9f8] sm:$0xff]
  %v10766 = vld [vmem:[%s10445 + $0xa00] sm:$0xff]
  %v10767 = vld [vmem:[%s10445 + $0xa08] sm:$0xff]
  %v10768 = vld [vmem:[%s10445 + $0xa10] sm:$0xff]
  %v10769 = vld [vmem:[%s10445 + $0xa18] sm:$0xff]
  %v10770 = vld [vmem:[%s10445 + $0xa20] sm:$0xff]
  %v10771 = vld [vmem:[%s10445 + $0xa28] sm:$0xff]
  %v10772 = vld [vmem:[%s10445 + $0xa30] sm:$0xff]
  %v10773 = vld [vmem:[%s10445 + $0xa38] sm:$0xff]
  %v10774 = vld [vmem:[%s10445 + $0xa40] sm:$0xff]
  %v10775 = vld [vmem:[%s10445 + $0xa48] sm:$0xff]
  %v10776 = vld [vmem:[%s10445 + $0xa50] sm:$0xff]
  %v10777 = vld [vmem:[%s10445 + $0xa58] sm:$0xff]
  %v10778 = vld [vmem:[%s10445 + $0xa60] sm:$0xff]
  %v10779 = vld [vmem:[%s10445 + $0xa68] sm:$0xff]
  %v10780 = vld [vmem:[%s10445 + $0xa70] sm:$0xff]
  %v10781 = vld [vmem:[%s10445 + $0xa78] sm:$0xff]
  %v10782 = vld [vmem:[%s10445 + $0xa80] sm:$0xff]
  %v10783 = vld [vmem:[%s10445 + $0xa88] sm:$0xff]
  %v10784 = vld [vmem:[%s10445 + $0xa90] sm:$0xff]
  %v10785 = vld [vmem:[%s10445 + $0xa98] sm:$0xff]
  %v10786 = vld [vmem:[%s10445 + $0xaa0] sm:$0xff]
  %v10787 = vld [vmem:[%s10445 + $0xaa8] sm:$0xff]
  %v10788 = vld [vmem:[%s10445 + $0xab0] sm:$0xff]
  %v10789 = vld [vmem:[%s10445 + $0xab8] sm:$0xff]
  %v10790 = vld [vmem:[%s10445 + $0xac0] sm:$0xff]
  %v10791 = vld [vmem:[%s10445 + $0xac8] sm:$0xff]
  %v10792 = vld [vmem:[%s10445 + $0xad0] sm:$0xff]
  %v10793 = vld [vmem:[%s10445 + $0xad8] sm:$0xff]
  %v10794 = vld [vmem:[%s10445 + $0xae0] sm:$0xff]
  %v10795 = vld [vmem:[%s10445 + $0xae8] sm:$0xff]
  %v10796 = vld [vmem:[%s10445 + $0xaf0] sm:$0xff]
  %v10797 = vld [vmem:[%s10445 + $0xaf8] sm:$0xff]
  %v10798 = vld [vmem:[%s10445 + $0xb00] sm:$0xff]
  %v10799 = vld [vmem:[%s10445 + $0xb08] sm:$0xff]
  %v10800 = vld [vmem:[%s10445 + $0xb10] sm:$0xff]
  %v10801 = vld [vmem:[%s10445 + $0xb18] sm:$0xff]
  %v10802 = vld [vmem:[%s10445 + $0xb20] sm:$0xff]
  %v10803 = vld [vmem:[%s10445 + $0xb28] sm:$0xff]
  %v10804 = vld [vmem:[%s10445 + $0xb30] sm:$0xff]
  %v10805 = vld [vmem:[%s10445 + $0xb38] sm:$0xff]
  %v10806 = vld [vmem:[%s10445 + $0xb40] sm:$0xff]
  %v10807 = vld [vmem:[%s10445 + $0xb48] sm:$0xff]
  %v10808 = vld [vmem:[%s10445 + $0xb50] sm:$0xff]
  %v10809 = vld [vmem:[%s10445 + $0xb58] sm:$0xff]
  %v10810 = vld [vmem:[%s10445 + $0xb60] sm:$0xff]
  %v10811 = vld [vmem:[%s10445 + $0xb68] sm:$0xff]
  %v10812 = vld [vmem:[%s10445 + $0xb70] sm:$0xff]
  %v10813 = vld [vmem:[%s10445 + $0xb78] sm:$0xff]
  %v10814 = vld [vmem:[%s10445 + $0xb80] sm:$0xff]
  %v10815 = vld [vmem:[%s10445 + $0xb88] sm:$0xff]
  %v10816 = vld [vmem:[%s10445 + $0xb90] sm:$0xff]
  %v10817 = vld [vmem:[%s10445 + $0xb98] sm:$0xff]
  %v10818 = vld [vmem:[%s10445 + $0xba0] sm:$0xff]
  %v10819 = vld [vmem:[%s10445 + $0xba8] sm:$0xff]
  %v10820 = vld [vmem:[%s10445 + $0xbb0] sm:$0xff]
  %v10821 = vld [vmem:[%s10445 + $0xbb8] sm:$0xff]
  %v10822 = vld [vmem:[%s10445 + $0xbc0] sm:$0xff]
  %v10823 = vld [vmem:[%s10445 + $0xbc8] sm:$0xff]
  %v10824 = vld [vmem:[%s10445 + $0xbd0] sm:$0xff]
  %v10825 = vld [vmem:[%s10445 + $0xbd8] sm:$0xff]
  %v10826 = vld [vmem:[%s10445 + $0xbe0] sm:$0xff]
  %v10827 = vld [vmem:[%s10445 + $0xbe8] sm:$0xff]
  %v10828 = vld [vmem:[%s10445 + $0xbf0] sm:$0xff]
  %v10829 = vld [vmem:[%s10445 + $0xbf8] sm:$0xff]
  %v10830 = vld [vmem:[%s10445 + $0xc00] sm:$0xff]
  %v10831 = vld [vmem:[%s10445 + $0xc08] sm:$0xff]
  %v10832 = vld [vmem:[%s10445 + $0xc10] sm:$0xff]
  %v10833 = vld [vmem:[%s10445 + $0xc18] sm:$0xff]
  %v10834 = vld [vmem:[%s10445 + $0xc20] sm:$0xff]
  %v10835 = vld [vmem:[%s10445 + $0xc28] sm:$0xff]
  %v10836 = vld [vmem:[%s10445 + $0xc30] sm:$0xff]
  %v10837 = vld [vmem:[%s10445 + $0xc38] sm:$0xff]
  %v10838 = vld [vmem:[%s10445 + $0xc40] sm:$0xff]
  %v10839 = vld [vmem:[%s10445 + $0xc48] sm:$0xff]
  %v10840 = vld [vmem:[%s10445 + $0xc50] sm:$0xff]
  %v10841 = vld [vmem:[%s10445 + $0xc58] sm:$0xff]
  %v10842 = vld [vmem:[%s10445 + $0xc60] sm:$0xff]
  %v10843 = vld [vmem:[%s10445 + $0xc68] sm:$0xff]
  %v10844 = vld [vmem:[%s10445 + $0xc70] sm:$0xff]
  %v10845 = vld [vmem:[%s10445 + $0xc78] sm:$0xff]
  %v10846 = vld [vmem:[%s10445 + $0xc80] sm:$0xff]
  %v10847 = vld [vmem:[%s10445 + $0xc88] sm:$0xff]
  %v10848 = vld [vmem:[%s10445 + $0xc90] sm:$0xff]
  %v10849 = vld [vmem:[%s10445 + $0xc98] sm:$0xff]
  %v10850 = vld [vmem:[%s10445 + $0xca0] sm:$0xff]
  %v10851 = vld [vmem:[%s10445 + $0xca8] sm:$0xff]
  %v10852 = vld [vmem:[%s10445 + $0xcb0] sm:$0xff]
  %v10853 = vld [vmem:[%s10445 + $0xcb8] sm:$0xff]
  %v10854 = vld [vmem:[%s10445 + $0xcc0] sm:$0xff]
  %v10855 = vld [vmem:[%s10445 + $0xcc8] sm:$0xff]
  %v10856 = vld [vmem:[%s10445 + $0xcd0] sm:$0xff]
  %v10857 = vld [vmem:[%s10445 + $0xcd8] sm:$0xff]
  %v10858 = vld [vmem:[%s10445 + $0xce0] sm:$0xff]
  %v10859 = vld [vmem:[%s10445 + $0xce8] sm:$0xff]
  %v10860 = vld [vmem:[%s10445 + $0xcf0] sm:$0xff]
  %v10861 = vld [vmem:[%s10445 + $0xcf8] sm:$0xff]
  %v10862 = vld [vmem:[%s10445 + $0xd00] sm:$0xff]
  %v10863 = vld [vmem:[%s10445 + $0xd08] sm:$0xff]
  %v10864 = vld [vmem:[%s10445 + $0xd10] sm:$0xff]
  %v10865 = vld [vmem:[%s10445 + $0xd18] sm:$0xff]
  %v10866 = vld [vmem:[%s10445 + $0xd20] sm:$0xff]
  %v10867 = vld [vmem:[%s10445 + $0xd28] sm:$0xff]
  %v10868 = vld [vmem:[%s10445 + $0xd30] sm:$0xff]
  %v10869 = vld [vmem:[%s10445 + $0xd38] sm:$0xff]
  %v10870 = vld [vmem:[%s10445 + $0xd40] sm:$0xff]
  %v10871 = vld [vmem:[%s10445 + $0xd48] sm:$0xff]
  %v10872 = vld [vmem:[%s10445 + $0xd50] sm:$0xff]
  %v10873 = vld [vmem:[%s10445 + $0xd58] sm:$0xff]
  %v10874 = vld [vmem:[%s10445 + $0xd60] sm:$0xff]
  %v10875 = vld [vmem:[%s10445 + $0xd68] sm:$0xff]
  %v10876 = vld [vmem:[%s10445 + $0xd70] sm:$0xff]
  %v10877 = vld [vmem:[%s10445 + $0xd78] sm:$0xff]
  %v10878 = vld [vmem:[%s10445 + $0xd80] sm:$0xff]
  %v10879 = vld [vmem:[%s10445 + $0xd88] sm:$0xff]
  %v10880 = vld [vmem:[%s10445 + $0xd90] sm:$0xff]
  %v10881 = vld [vmem:[%s10445 + $0xd98] sm:$0xff]
  %v10882 = vld [vmem:[%s10445 + $0xda0] sm:$0xff]
  %v10883 = vld [vmem:[%s10445 + $0xda8] sm:$0xff]
  %v10884 = vld [vmem:[%s10445 + $0xdb0] sm:$0xff]
  %v10885 = vld [vmem:[%s10445 + $0xdb8] sm:$0xff]
  %v10886 = vld [vmem:[%s10445 + $0xdc0] sm:$0xff]
  %v10887 = vld [vmem:[%s10445 + $0xdc8] sm:$0xff]
  %v10888 = vld [vmem:[%s10445 + $0xdd0] sm:$0xff]
  %v10889 = vld [vmem:[%s10445 + $0xdd8] sm:$0xff]
  %v10890 = vld [vmem:[%s10445 + $0xde0] sm:$0xff]
  %v10891 = vld [vmem:[%s10445 + $0xde8] sm:$0xff]
  %v10892 = vld [vmem:[%s10445 + $0xdf0] sm:$0xff]
  %v10893 = vld [vmem:[%s10445 + $0xdf8] sm:$0xff]
  %v10894 = vld [vmem:[%s10445 + $0xe00] sm:$0xff]
  %v10895 = vld [vmem:[%s10445 + $0xe08] sm:$0xff]
  %v10896 = vld [vmem:[%s10445 + $0xe10] sm:$0xff]
  %v10897 = vld [vmem:[%s10445 + $0xe18] sm:$0xff]
  %v10898 = vld [vmem:[%s10445 + $0xe20] sm:$0xff]
  %v10899 = vld [vmem:[%s10445 + $0xe28] sm:$0xff]
  %v10900 = vld [vmem:[%s10445 + $0xe30] sm:$0xff]
  %v10901 = vld [vmem:[%s10445 + $0xe38] sm:$0xff]
  %v10902 = vld [vmem:[%s10445 + $0xe40] sm:$0xff]
  %v10903 = vld [vmem:[%s10445 + $0xe48] sm:$0xff]
  %v10904 = vld [vmem:[%s10445 + $0xe50] sm:$0xff]
  %v10905 = vld [vmem:[%s10445 + $0xe58] sm:$0xff]
  %v10906 = vld [vmem:[%s10445 + $0xe60] sm:$0xff]
  %v10907 = vld [vmem:[%s10445 + $0xe68] sm:$0xff]
  %v10908 = vld [vmem:[%s10445 + $0xe70] sm:$0xff]
  %v10909 = vld [vmem:[%s10445 + $0xe78] sm:$0xff]
  %v10910 = vld [vmem:[%s10445 + $0xe80] sm:$0xff]
  %v10911 = vld [vmem:[%s10445 + $0xe88] sm:$0xff]
  %v10912 = vld [vmem:[%s10445 + $0xe90] sm:$0xff]
  %v10913 = vld [vmem:[%s10445 + $0xe98] sm:$0xff]
  %v10914 = vld [vmem:[%s10445 + $0xea0] sm:$0xff]
  %v10915 = vld [vmem:[%s10445 + $0xea8] sm:$0xff]
  %v10916 = vld [vmem:[%s10445 + $0xeb0] sm:$0xff]
  %v10917 = vld [vmem:[%s10445 + $0xeb8] sm:$0xff]
  %v10918 = vld [vmem:[%s10445 + $0xec0] sm:$0xff]
  %v10919 = vld [vmem:[%s10445 + $0xec8] sm:$0xff]
  %v10920 = vld [vmem:[%s10445 + $0xed0] sm:$0xff]
  %v10921 = vld [vmem:[%s10445 + $0xed8] sm:$0xff]
  %v10922 = vld [vmem:[%s10445 + $0xee0] sm:$0xff]
  %v10923 = vld [vmem:[%s10445 + $0xee8] sm:$0xff]
  %v10924 = vld [vmem:[%s10445 + $0xef0] sm:$0xff]
  %v10925 = vld [vmem:[%s10445 + $0xef8] sm:$0xff]
  %v10926 = vld [vmem:[%s10445 + $0xf00] sm:$0xff]
  %v10927 = vld [vmem:[%s10445 + $0xf08] sm:$0xff]
  %v10928 = vld [vmem:[%s10445 + $0xf10] sm:$0xff]
  %v10929 = vld [vmem:[%s10445 + $0xf18] sm:$0xff]
  %v10930 = vld [vmem:[%s10445 + $0xf20] sm:$0xff]
  %v10931 = vld [vmem:[%s10445 + $0xf28] sm:$0xff]
  %v10932 = vld [vmem:[%s10445 + $0xf30] sm:$0xff]
  %v10933 = vld [vmem:[%s10445 + $0xf38] sm:$0xff]
  %v10934 = vld [vmem:[%s10445 + $0xf40] sm:$0xff]
  %v10935 = vld [vmem:[%s10445 + $0xf48] sm:$0xff]
  %v10936 = vld [vmem:[%s10445 + $0xf50] sm:$0xff]
  %v10937 = vld [vmem:[%s10445 + $0xf58] sm:$0xff]
  %v10938 = vld [vmem:[%s10445 + $0xf60] sm:$0xff]
  %v10939 = vld [vmem:[%s10445 + $0xf68] sm:$0xff]
  %v10940 = vld [vmem:[%s10445 + $0xf70] sm:$0xff]
  %v10941 = vld [vmem:[%s10445 + $0xf78] sm:$0xff]
  %v10942 = vld [vmem:[%s10445 + $0xf80] sm:$0xff]
  %v10943 = vld [vmem:[%s10445 + $0xf88] sm:$0xff]
  %v10944 = vld [vmem:[%s10445 + $0xf90] sm:$0xff]
  %v10945 = vld [vmem:[%s10445 + $0xf98] sm:$0xff]
  %v10946 = vld [vmem:[%s10445 + $0xfa0] sm:$0xff]
  %v10947 = vld [vmem:[%s10445 + $0xfa8] sm:$0xff]
  %v10948 = vld [vmem:[%s10445 + $0xfb0] sm:$0xff]
  %v10949 = vld [vmem:[%s10445 + $0xfb8] sm:$0xff]
  %v10950 = vld [vmem:[%s10445 + $0xfc0] sm:$0xff]
  %v10951 = vld [vmem:[%s10445 + $0xfc8] sm:$0xff]
  %v10952 = vld [vmem:[%s10445 + $0xfd0] sm:$0xff]
  %v10953 = vld [vmem:[%s10445 + $0xfd8] sm:$0xff]
  %v10954 = vld [vmem:[%s10445 + $0xfe0] sm:$0xff]
  %v10955 = vld [vmem:[%s10445 + $0xfe8] sm:$0xff]
  %v10956 = vld [vmem:[%s10445 + $0xff0] sm:$0xff]
  %v10957 = vld [vmem:[%s10445 + $0xff8] sm:$0xff]
  %v10958 = vunpack.c.l.b16 %v10392
  %v10959 = vunpack.c.h.b16 %v10392
  %v10960 = vunpack.c.l.b16 %v10396
  %v10961 = vunpack.c.h.b16 %v10396
  %v10962 = vunpack.c.l.b16 %v10400
  %v10963 = vunpack.c.h.b16 %v10400
  %v10964 = vunpack.c.l.b16 %v10404
  %v10965 = vunpack.c.h.b16 %v10404
  %v10966 = vunpack.c.l.b16 %v10407
  %v10967 = vunpack.c.h.b16 %v10407
  %v10968 = vunpack.c.l.b16 %v10410
  %v10969 = vunpack.c.h.b16 %v10410
  %v10970 = vunpack.c.l.b16 %v10413
  %v10971 = vunpack.c.h.b16 %v10413
  %v10972 = vunpack.c.l.b16 %v10416
  %v10973 = vunpack.c.h.b16 %v10416
  %v10974 = vunpack.c.l.b16 %v10420
  %v10975 = vunpack.c.h.b16 %v10420
  %v10976 = vunpack.c.l.b16 %v10424
  %v10977 = vunpack.c.h.b16 %v10424
  %v10978 = vunpack.c.l.b16 %v10428
  %v10979 = vunpack.c.h.b16 %v10428
  %v10980 = vunpack.c.l.b16 %v10432
  %v10981 = vunpack.c.h.b16 %v10432
  %v10982 = vunpack.c.l.b16 %v10435
  %v10983 = vunpack.c.h.b16 %v10435
  %v10984 = vunpack.c.l.b16 %v10438
  %v10985 = vunpack.c.h.b16 %v10438
  %v10986 = vunpack.c.l.b16 %v10441
  %v10987 = vunpack.c.h.b16 %v10441
  %v10988 = vunpack.c.l.b16 %v10444
  %v10989 = vunpack.c.h.b16 %v10444
  %v10990 = vpack.c.b16 %v10966, %v10958
  %v10991 = vpack.c.b16 %v10967, %v10959
  %v10992 = vpack.c.b16 %v10968, %v10960
  %v10993 = vpack.c.b16 %v10969, %v10961
  %v10994 = vpack.c.b16 %v10970, %v10962
  %v10995 = vpack.c.b16 %v10971, %v10963
  %v10996 = vpack.c.b16 %v10972, %v10964
  %v10997 = vpack.c.b16 %v10973, %v10965
  %v10998 = vpack.c.b16 %v10982, %v10974
  %v10999 = vpack.c.b16 %v10983, %v10975
  %v11000 = vpack.c.b16 %v10984, %v10976
  %v11001 = vpack.c.b16 %v10985, %v10977
  %v11002 = vpack.c.b16 %v10986, %v10978
  %v11003 = vpack.c.b16 %v10987, %v10979
  %v11004 = vpack.c.b16 %v10988, %v10980
  %v11005 = vpack.c.b16 %v10989, %v10981
  %v11534 = vunpack.c.l.b16 %v10446
  %v11535 = vunpack.c.h.b16 %v10446
  %v11536 = vunpack.c.l.b16 %v10447
  %v11537 = vunpack.c.h.b16 %v10447
  %v11538 = vunpack.c.l.b16 %v10448
  %v11539 = vunpack.c.h.b16 %v10448
  %v11540 = vunpack.c.l.b16 %v10449
  %v11541 = vunpack.c.h.b16 %v10449
  %v11542 = vunpack.c.l.b16 %v10450
  %v11543 = vunpack.c.h.b16 %v10450
  %v11544 = vunpack.c.l.b16 %v10451
  %v11545 = vunpack.c.h.b16 %v10451
  %v11546 = vunpack.c.l.b16 %v10452
  %v11547 = vunpack.c.h.b16 %v10452
  %v11548 = vunpack.c.l.b16 %v10453
  %v11549 = vunpack.c.h.b16 %v10453
  %v11550 = vunpack.c.l.b16 %v10454
  %v11551 = vunpack.c.h.b16 %v10454
  %v11552 = vunpack.c.l.b16 %v10455
  %v11553 = vunpack.c.h.b16 %v10455
  %v11554 = vunpack.c.l.b16 %v10456
  %v11555 = vunpack.c.h.b16 %v10456
  %v11556 = vunpack.c.l.b16 %v10457
  %v11557 = vunpack.c.h.b16 %v10457
  %v11558 = vunpack.c.l.b16 %v10458
  %v11559 = vunpack.c.h.b16 %v10458
  %v11560 = vunpack.c.l.b16 %v10459
  %v11561 = vunpack.c.h.b16 %v10459
  %v11562 = vunpack.c.l.b16 %v10460
  %v11563 = vunpack.c.h.b16 %v10460
  %v11564 = vunpack.c.l.b16 %v10461
  %v11565 = vunpack.c.h.b16 %v10461
  %v11566 = vunpack.c.l.b16 %v10462
  %v11567 = vunpack.c.h.b16 %v10462
  %v11568 = vunpack.c.l.b16 %v10463
  %v11569 = vunpack.c.h.b16 %v10463
  %v11570 = vunpack.c.l.b16 %v10464
  %v11571 = vunpack.c.h.b16 %v10464
  %v11572 = vunpack.c.l.b16 %v10465
  %v11573 = vunpack.c.h.b16 %v10465
  %v11574 = vunpack.c.l.b16 %v10466
  %v11575 = vunpack.c.h.b16 %v10466
  %v11576 = vunpack.c.l.b16 %v10467
  %v11577 = vunpack.c.h.b16 %v10467
  %v11578 = vunpack.c.l.b16 %v10468
  %v11579 = vunpack.c.h.b16 %v10468
  %v11580 = vunpack.c.l.b16 %v10469
  %v11581 = vunpack.c.h.b16 %v10469
  %v11582 = vunpack.c.l.b16 %v10470
  %v11583 = vunpack.c.h.b16 %v10470
  %v11584 = vunpack.c.l.b16 %v10471
  %v11585 = vunpack.c.h.b16 %v10471
  %v11586 = vunpack.c.l.b16 %v10472
  %v11587 = vunpack.c.h.b16 %v10472
  %v11588 = vunpack.c.l.b16 %v10473
  %v11589 = vunpack.c.h.b16 %v10473
  %v11590 = vunpack.c.l.b16 %v10474
  %v11591 = vunpack.c.h.b16 %v10474
  %v11592 = vunpack.c.l.b16 %v10475
  %v11593 = vunpack.c.h.b16 %v10475
  %v11594 = vunpack.c.l.b16 %v10476
  %v11595 = vunpack.c.h.b16 %v10476
  %v11596 = vunpack.c.l.b16 %v10477
  %v11597 = vunpack.c.h.b16 %v10477
  %v11598 = vunpack.c.l.b16 %v10478
  %v11599 = vunpack.c.h.b16 %v10478
  %v11600 = vunpack.c.l.b16 %v10479
  %v11601 = vunpack.c.h.b16 %v10479
  %v11602 = vunpack.c.l.b16 %v10480
  %v11603 = vunpack.c.h.b16 %v10480
  %v11604 = vunpack.c.l.b16 %v10481
  %v11605 = vunpack.c.h.b16 %v10481
  %v11606 = vunpack.c.l.b16 %v10482
  %v11607 = vunpack.c.h.b16 %v10482
  %v11608 = vunpack.c.l.b16 %v10483
  %v11609 = vunpack.c.h.b16 %v10483
  %v11610 = vunpack.c.l.b16 %v10484
  %v11611 = vunpack.c.h.b16 %v10484
  %v11612 = vunpack.c.l.b16 %v10485
  %v11613 = vunpack.c.h.b16 %v10485
  %v11614 = vunpack.c.l.b16 %v10486
  %v11615 = vunpack.c.h.b16 %v10486
  %v11616 = vunpack.c.l.b16 %v10487
  %v11617 = vunpack.c.h.b16 %v10487
  %v11618 = vunpack.c.l.b16 %v10488
  %v11619 = vunpack.c.h.b16 %v10488
  %v11620 = vunpack.c.l.b16 %v10489
  %v11621 = vunpack.c.h.b16 %v10489
  %v11622 = vunpack.c.l.b16 %v10490
  %v11623 = vunpack.c.h.b16 %v10490
  %v11624 = vunpack.c.l.b16 %v10491
  %v11625 = vunpack.c.h.b16 %v10491
  %v11626 = vunpack.c.l.b16 %v10492
  %v11627 = vunpack.c.h.b16 %v10492
  %v11628 = vunpack.c.l.b16 %v10493
  %v11629 = vunpack.c.h.b16 %v10493
  %v11630 = vunpack.c.l.b16 %v10494
  %v11631 = vunpack.c.h.b16 %v10494
  %v11632 = vunpack.c.l.b16 %v10495
  %v11633 = vunpack.c.h.b16 %v10495
  %v11634 = vunpack.c.l.b16 %v10496
  %v11635 = vunpack.c.h.b16 %v10496
  %v11636 = vunpack.c.l.b16 %v10497
  %v11637 = vunpack.c.h.b16 %v10497
  %v11638 = vunpack.c.l.b16 %v10498
  %v11639 = vunpack.c.h.b16 %v10498
  %v11640 = vunpack.c.l.b16 %v10499
  %v11641 = vunpack.c.h.b16 %v10499
  %v11642 = vunpack.c.l.b16 %v10500
  %v11643 = vunpack.c.h.b16 %v10500
  %v11644 = vunpack.c.l.b16 %v10501
  %v11645 = vunpack.c.h.b16 %v10501
  %v11646 = vunpack.c.l.b16 %v10502
  %v11647 = vunpack.c.h.b16 %v10502
  %v11648 = vunpack.c.l.b16 %v10503
  %v11649 = vunpack.c.h.b16 %v10503
  %v11650 = vunpack.c.l.b16 %v10504
  %v11651 = vunpack.c.h.b16 %v10504
  %v11652 = vunpack.c.l.b16 %v10505
  %v11653 = vunpack.c.h.b16 %v10505
  %v11654 = vunpack.c.l.b16 %v10506
  %v11655 = vunpack.c.h.b16 %v10506
  %v11656 = vunpack.c.l.b16 %v10507
  %v11657 = vunpack.c.h.b16 %v10507
  %v11658 = vunpack.c.l.b16 %v10508
  %v11659 = vunpack.c.h.b16 %v10508
  %v11660 = vunpack.c.l.b16 %v10509
  %v11661 = vunpack.c.h.b16 %v10509
  %v11662 = vunpack.c.l.b16 %v10510
  %v11663 = vunpack.c.h.b16 %v10510
  %v11664 = vunpack.c.l.b16 %v10511
  %v11665 = vunpack.c.h.b16 %v10511
  %v11666 = vunpack.c.l.b16 %v10512
  %v11667 = vunpack.c.h.b16 %v10512
  %v11668 = vunpack.c.l.b16 %v10513
  %v11669 = vunpack.c.h.b16 %v10513
  %v11670 = vunpack.c.l.b16 %v10514
  %v11671 = vunpack.c.h.b16 %v10514
  %v11672 = vunpack.c.l.b16 %v10515
  %v11673 = vunpack.c.h.b16 %v10515
  %v11674 = vunpack.c.l.b16 %v10516
  %v11675 = vunpack.c.h.b16 %v10516
  %v11676 = vunpack.c.l.b16 %v10517
  %v11677 = vunpack.c.h.b16 %v10517
  %v11678 = vunpack.c.l.b16 %v10518
  %v11679 = vunpack.c.h.b16 %v10518
  %v11680 = vunpack.c.l.b16 %v10519
  %v11681 = vunpack.c.h.b16 %v10519
  %v11682 = vunpack.c.l.b16 %v10520
  %v11683 = vunpack.c.h.b16 %v10520
  %v11684 = vunpack.c.l.b16 %v10521
  %v11685 = vunpack.c.h.b16 %v10521
  %v11686 = vunpack.c.l.b16 %v10522
  %v11687 = vunpack.c.h.b16 %v10522
  %v11688 = vunpack.c.l.b16 %v10523
  %v11689 = vunpack.c.h.b16 %v10523
  %v11690 = vunpack.c.l.b16 %v10524
  %v11691 = vunpack.c.h.b16 %v10524
  %v11692 = vunpack.c.l.b16 %v10525
  %v11693 = vunpack.c.h.b16 %v10525
  %v11694 = vunpack.c.l.b16 %v10526
  %v11695 = vunpack.c.h.b16 %v10526
  %v11696 = vunpack.c.l.b16 %v10527
  %v11697 = vunpack.c.h.b16 %v10527
  %v11698 = vunpack.c.l.b16 %v10528
  %v11699 = vunpack.c.h.b16 %v10528
  %v11700 = vunpack.c.l.b16 %v10529
  %v11701 = vunpack.c.h.b16 %v10529
  %v11702 = vunpack.c.l.b16 %v10530
  %v11703 = vunpack.c.h.b16 %v10530
  %v11704 = vunpack.c.l.b16 %v10531
  %v11705 = vunpack.c.h.b16 %v10531
  %v11706 = vunpack.c.l.b16 %v10532
  %v11707 = vunpack.c.h.b16 %v10532
  %v11708 = vunpack.c.l.b16 %v10533
  %v11709 = vunpack.c.h.b16 %v10533
  %v11710 = vunpack.c.l.b16 %v10534
  %v11711 = vunpack.c.h.b16 %v10534
  %v11712 = vunpack.c.l.b16 %v10535
  %v11713 = vunpack.c.h.b16 %v10535
  %v11714 = vunpack.c.l.b16 %v10536
  %v11715 = vunpack.c.h.b16 %v10536
  %v11716 = vunpack.c.l.b16 %v10537
  %v11717 = vunpack.c.h.b16 %v10537
  %v11718 = vunpack.c.l.b16 %v10538
  %v11719 = vunpack.c.h.b16 %v10538
  %v11720 = vunpack.c.l.b16 %v10539
  %v11721 = vunpack.c.h.b16 %v10539
  %v11722 = vunpack.c.l.b16 %v10540
  %v11723 = vunpack.c.h.b16 %v10540
  %v11724 = vunpack.c.l.b16 %v10541
  %v11725 = vunpack.c.h.b16 %v10541
  %v11726 = vunpack.c.l.b16 %v10542
  %v11727 = vunpack.c.h.b16 %v10542
  %v11728 = vunpack.c.l.b16 %v10543
  %v11729 = vunpack.c.h.b16 %v10543
  %v11730 = vunpack.c.l.b16 %v10544
  %v11731 = vunpack.c.h.b16 %v10544
  %v11732 = vunpack.c.l.b16 %v10545
  %v11733 = vunpack.c.h.b16 %v10545
  %v11734 = vunpack.c.l.b16 %v10546
  %v11735 = vunpack.c.h.b16 %v10546
  %v11736 = vunpack.c.l.b16 %v10547
  %v11737 = vunpack.c.h.b16 %v10547
  %v11738 = vunpack.c.l.b16 %v10548
  %v11739 = vunpack.c.h.b16 %v10548
  %v11740 = vunpack.c.l.b16 %v10549
  %v11741 = vunpack.c.h.b16 %v10549
  %v11742 = vunpack.c.l.b16 %v10550
  %v11743 = vunpack.c.h.b16 %v10550
  %v11744 = vunpack.c.l.b16 %v10551
  %v11745 = vunpack.c.h.b16 %v10551
  %v11746 = vunpack.c.l.b16 %v10552
  %v11747 = vunpack.c.h.b16 %v10552
  %v11748 = vunpack.c.l.b16 %v10553
  %v11749 = vunpack.c.h.b16 %v10553
  %v11750 = vunpack.c.l.b16 %v10554
  %v11751 = vunpack.c.h.b16 %v10554
  %v11752 = vunpack.c.l.b16 %v10555
  %v11753 = vunpack.c.h.b16 %v10555
  %v11754 = vunpack.c.l.b16 %v10556
  %v11755 = vunpack.c.h.b16 %v10556
  %v11756 = vunpack.c.l.b16 %v10557
  %v11757 = vunpack.c.h.b16 %v10557
  %v11758 = vunpack.c.l.b16 %v10558
  %v11759 = vunpack.c.h.b16 %v10558
  %v11760 = vunpack.c.l.b16 %v10559
  %v11761 = vunpack.c.h.b16 %v10559
  %v11762 = vunpack.c.l.b16 %v10560
  %v11763 = vunpack.c.h.b16 %v10560
  %v11764 = vunpack.c.l.b16 %v10561
  %v11765 = vunpack.c.h.b16 %v10561
  %v11766 = vunpack.c.l.b16 %v10562
  %v11767 = vunpack.c.h.b16 %v10562
  %v11768 = vunpack.c.l.b16 %v10563
  %v11769 = vunpack.c.h.b16 %v10563
  %v11770 = vunpack.c.l.b16 %v10564
  %v11771 = vunpack.c.h.b16 %v10564
  %v11772 = vunpack.c.l.b16 %v10565
  %v11773 = vunpack.c.h.b16 %v10565
  %v11774 = vunpack.c.l.b16 %v10566
  %v11775 = vunpack.c.h.b16 %v10566
  %v11776 = vunpack.c.l.b16 %v10567
  %v11777 = vunpack.c.h.b16 %v10567
  %v11778 = vunpack.c.l.b16 %v10568
  %v11779 = vunpack.c.h.b16 %v10568
  %v11780 = vunpack.c.l.b16 %v10569
  %v11781 = vunpack.c.h.b16 %v10569
  %v11782 = vunpack.c.l.b16 %v10570
  %v11783 = vunpack.c.h.b16 %v10570
  %v11784 = vunpack.c.l.b16 %v10571
  %v11785 = vunpack.c.h.b16 %v10571
  %v11786 = vunpack.c.l.b16 %v10572
  %v11787 = vunpack.c.h.b16 %v10572
  %v11788 = vunpack.c.l.b16 %v10573
  %v11789 = vunpack.c.h.b16 %v10573
  %v11790 = vunpack.c.l.b16 %v10574
  %v11791 = vunpack.c.h.b16 %v10574
  %v11792 = vunpack.c.l.b16 %v10575
  %v11793 = vunpack.c.h.b16 %v10575
  %v11794 = vunpack.c.l.b16 %v10576
  %v11795 = vunpack.c.h.b16 %v10576
  %v11796 = vunpack.c.l.b16 %v10577
  %v11797 = vunpack.c.h.b16 %v10577
  %v11798 = vunpack.c.l.b16 %v10578
  %v11799 = vunpack.c.h.b16 %v10578
  %v11800 = vunpack.c.l.b16 %v10579
  %v11801 = vunpack.c.h.b16 %v10579
  %v11802 = vunpack.c.l.b16 %v10580
  %v11803 = vunpack.c.h.b16 %v10580
  %v11804 = vunpack.c.l.b16 %v10581
  %v11805 = vunpack.c.h.b16 %v10581
  %v11806 = vunpack.c.l.b16 %v10582
  %v11807 = vunpack.c.h.b16 %v10582
  %v11808 = vunpack.c.l.b16 %v10583
  %v11809 = vunpack.c.h.b16 %v10583
  %v11810 = vunpack.c.l.b16 %v10584
  %v11811 = vunpack.c.h.b16 %v10584
  %v11812 = vunpack.c.l.b16 %v10585
  %v11813 = vunpack.c.h.b16 %v10585
  %v11814 = vunpack.c.l.b16 %v10586
  %v11815 = vunpack.c.h.b16 %v10586
  %v11816 = vunpack.c.l.b16 %v10587
  %v11817 = vunpack.c.h.b16 %v10587
  %v11818 = vunpack.c.l.b16 %v10588
  %v11819 = vunpack.c.h.b16 %v10588
  %v11820 = vunpack.c.l.b16 %v10589
  %v11821 = vunpack.c.h.b16 %v10589
  %v11822 = vunpack.c.l.b16 %v10590
  %v11823 = vunpack.c.h.b16 %v10590
  %v11824 = vunpack.c.l.b16 %v10591
  %v11825 = vunpack.c.h.b16 %v10591
  %v11826 = vunpack.c.l.b16 %v10592
  %v11827 = vunpack.c.h.b16 %v10592
  %v11828 = vunpack.c.l.b16 %v10593
  %v11829 = vunpack.c.h.b16 %v10593
  %v11830 = vunpack.c.l.b16 %v10594
  %v11831 = vunpack.c.h.b16 %v10594
  %v11832 = vunpack.c.l.b16 %v10595
  %v11833 = vunpack.c.h.b16 %v10595
  %v11834 = vunpack.c.l.b16 %v10596
  %v11835 = vunpack.c.h.b16 %v10596
  %v11836 = vunpack.c.l.b16 %v10597
  %v11837 = vunpack.c.h.b16 %v10597
  %v11838 = vunpack.c.l.b16 %v10598
  %v11839 = vunpack.c.h.b16 %v10598
  %v11840 = vunpack.c.l.b16 %v10599
  %v11841 = vunpack.c.h.b16 %v10599
  %v11842 = vunpack.c.l.b16 %v10600
  %v11843 = vunpack.c.h.b16 %v10600
  %v11844 = vunpack.c.l.b16 %v10601
  %v11845 = vunpack.c.h.b16 %v10601
  %v11846 = vunpack.c.l.b16 %v10602
  %v11847 = vunpack.c.h.b16 %v10602
  %v11848 = vunpack.c.l.b16 %v10603
  %v11849 = vunpack.c.h.b16 %v10603
  %v11850 = vunpack.c.l.b16 %v10604
  %v11851 = vunpack.c.h.b16 %v10604
  %v11852 = vunpack.c.l.b16 %v10605
  %v11853 = vunpack.c.h.b16 %v10605
  %v11854 = vunpack.c.l.b16 %v10606
  %v11855 = vunpack.c.h.b16 %v10606
  %v11856 = vunpack.c.l.b16 %v10607
  %v11857 = vunpack.c.h.b16 %v10607
  %v11858 = vunpack.c.l.b16 %v10608
  %v11859 = vunpack.c.h.b16 %v10608
  %v11860 = vunpack.c.l.b16 %v10609
  %v11861 = vunpack.c.h.b16 %v10609
  %v11862 = vunpack.c.l.b16 %v10610
  %v11863 = vunpack.c.h.b16 %v10610
  %v11864 = vunpack.c.l.b16 %v10611
  %v11865 = vunpack.c.h.b16 %v10611
  %v11866 = vunpack.c.l.b16 %v10612
  %v11867 = vunpack.c.h.b16 %v10612
  %v11868 = vunpack.c.l.b16 %v10613
  %v11869 = vunpack.c.h.b16 %v10613
  %v11870 = vunpack.c.l.b16 %v10614
  %v11871 = vunpack.c.h.b16 %v10614
  %v11872 = vunpack.c.l.b16 %v10615
  %v11873 = vunpack.c.h.b16 %v10615
  %v11874 = vunpack.c.l.b16 %v10616
  %v11875 = vunpack.c.h.b16 %v10616
  %v11876 = vunpack.c.l.b16 %v10617
  %v11877 = vunpack.c.h.b16 %v10617
  %v11878 = vunpack.c.l.b16 %v10618
  %v11879 = vunpack.c.h.b16 %v10618
  %v11880 = vunpack.c.l.b16 %v10619
  %v11881 = vunpack.c.h.b16 %v10619
  %v11882 = vunpack.c.l.b16 %v10620
  %v11883 = vunpack.c.h.b16 %v10620
  %v11884 = vunpack.c.l.b16 %v10621
  %v11885 = vunpack.c.h.b16 %v10621
  %v11886 = vunpack.c.l.b16 %v10622
  %v11887 = vunpack.c.h.b16 %v10622
  %v11888 = vunpack.c.l.b16 %v10623
  %v11889 = vunpack.c.h.b16 %v10623
  %v11890 = vunpack.c.l.b16 %v10624
  %v11891 = vunpack.c.h.b16 %v10624
  %v11892 = vunpack.c.l.b16 %v10625
  %v11893 = vunpack.c.h.b16 %v10625
  %v11894 = vunpack.c.l.b16 %v10626
  %v11895 = vunpack.c.h.b16 %v10626
  %v11896 = vunpack.c.l.b16 %v10627
  %v11897 = vunpack.c.h.b16 %v10627
  %v11898 = vunpack.c.l.b16 %v10628
  %v11899 = vunpack.c.h.b16 %v10628
  %v11900 = vunpack.c.l.b16 %v10629
  %v11901 = vunpack.c.h.b16 %v10629
  %v11902 = vunpack.c.l.b16 %v10630
  %v11903 = vunpack.c.h.b16 %v10630
  %v11904 = vunpack.c.l.b16 %v10631
  %v11905 = vunpack.c.h.b16 %v10631
  %v11906 = vunpack.c.l.b16 %v10632
  %v11907 = vunpack.c.h.b16 %v10632
  %v11908 = vunpack.c.l.b16 %v10633
  %v11909 = vunpack.c.h.b16 %v10633
  %v11910 = vunpack.c.l.b16 %v10634
  %v11911 = vunpack.c.h.b16 %v10634
  %v11912 = vunpack.c.l.b16 %v10635
  %v11913 = vunpack.c.h.b16 %v10635
  %v11914 = vunpack.c.l.b16 %v10636
  %v11915 = vunpack.c.h.b16 %v10636
  %v11916 = vunpack.c.l.b16 %v10637
  %v11917 = vunpack.c.h.b16 %v10637
  %v11918 = vunpack.c.l.b16 %v10638
  %v11919 = vunpack.c.h.b16 %v10638
  %v11920 = vunpack.c.l.b16 %v10639
  %v11921 = vunpack.c.h.b16 %v10639
  %v11922 = vunpack.c.l.b16 %v10640
  %v11923 = vunpack.c.h.b16 %v10640
  %v11924 = vunpack.c.l.b16 %v10641
  %v11925 = vunpack.c.h.b16 %v10641
  %v11926 = vunpack.c.l.b16 %v10642
  %v11927 = vunpack.c.h.b16 %v10642
  %v11928 = vunpack.c.l.b16 %v10643
  %v11929 = vunpack.c.h.b16 %v10643
  %v11930 = vunpack.c.l.b16 %v10644
  %v11931 = vunpack.c.h.b16 %v10644
  %v11932 = vunpack.c.l.b16 %v10645
  %v11933 = vunpack.c.h.b16 %v10645
  %v11934 = vunpack.c.l.b16 %v10646
  %v11935 = vunpack.c.h.b16 %v10646
  %v11936 = vunpack.c.l.b16 %v10647
  %v11937 = vunpack.c.h.b16 %v10647
  %v11938 = vunpack.c.l.b16 %v10648
  %v11939 = vunpack.c.h.b16 %v10648
  %v11940 = vunpack.c.l.b16 %v10649
  %v11941 = vunpack.c.h.b16 %v10649
  %v11942 = vunpack.c.l.b16 %v10650
  %v11943 = vunpack.c.h.b16 %v10650
  %v11944 = vunpack.c.l.b16 %v10651
  %v11945 = vunpack.c.h.b16 %v10651
  %v11946 = vunpack.c.l.b16 %v10652
  %v11947 = vunpack.c.h.b16 %v10652
  %v11948 = vunpack.c.l.b16 %v10653
  %v11949 = vunpack.c.h.b16 %v10653
  %v11950 = vunpack.c.l.b16 %v10654
  %v11951 = vunpack.c.h.b16 %v10654
  %v11952 = vunpack.c.l.b16 %v10655
  %v11953 = vunpack.c.h.b16 %v10655
  %v11954 = vunpack.c.l.b16 %v10656
  %v11955 = vunpack.c.h.b16 %v10656
  %v11956 = vunpack.c.l.b16 %v10657
  %v11957 = vunpack.c.h.b16 %v10657
  %v11958 = vunpack.c.l.b16 %v10658
  %v11959 = vunpack.c.h.b16 %v10658
  %v11960 = vunpack.c.l.b16 %v10659
  %v11961 = vunpack.c.h.b16 %v10659
  %v11962 = vunpack.c.l.b16 %v10660
  %v11963 = vunpack.c.h.b16 %v10660
  %v11964 = vunpack.c.l.b16 %v10661
  %v11965 = vunpack.c.h.b16 %v10661
  %v11966 = vunpack.c.l.b16 %v10662
  %v11967 = vunpack.c.h.b16 %v10662
  %v11968 = vunpack.c.l.b16 %v10663
  %v11969 = vunpack.c.h.b16 %v10663
  %v11970 = vunpack.c.l.b16 %v10664
  %v11971 = vunpack.c.h.b16 %v10664
  %v11972 = vunpack.c.l.b16 %v10665
  %v11973 = vunpack.c.h.b16 %v10665
  %v11974 = vunpack.c.l.b16 %v10666
  %v11975 = vunpack.c.h.b16 %v10666
  %v11976 = vunpack.c.l.b16 %v10667
  %v11977 = vunpack.c.h.b16 %v10667
  %v11978 = vunpack.c.l.b16 %v10668
  %v11979 = vunpack.c.h.b16 %v10668
  %v11980 = vunpack.c.l.b16 %v10669
  %v11981 = vunpack.c.h.b16 %v10669
  %v11982 = vunpack.c.l.b16 %v10670
  %v11983 = vunpack.c.h.b16 %v10670
  %v11984 = vunpack.c.l.b16 %v10671
  %v11985 = vunpack.c.h.b16 %v10671
  %v11986 = vunpack.c.l.b16 %v10672
  %v11987 = vunpack.c.h.b16 %v10672
  %v11988 = vunpack.c.l.b16 %v10673
  %v11989 = vunpack.c.h.b16 %v10673
  %v11990 = vunpack.c.l.b16 %v10674
  %v11991 = vunpack.c.h.b16 %v10674
  %v11992 = vunpack.c.l.b16 %v10675
  %v11993 = vunpack.c.h.b16 %v10675
  %v11994 = vunpack.c.l.b16 %v10676
  %v11995 = vunpack.c.h.b16 %v10676
  %v11996 = vunpack.c.l.b16 %v10677
  %v11997 = vunpack.c.h.b16 %v10677
  %v11998 = vunpack.c.l.b16 %v10678
  %v11999 = vunpack.c.h.b16 %v10678
  %v12000 = vunpack.c.l.b16 %v10679
  %v12001 = vunpack.c.h.b16 %v10679
  %v12002 = vunpack.c.l.b16 %v10680
  %v12003 = vunpack.c.h.b16 %v10680
  %v12004 = vunpack.c.l.b16 %v10681
  %v12005 = vunpack.c.h.b16 %v10681
  %v12006 = vunpack.c.l.b16 %v10682
  %v12007 = vunpack.c.h.b16 %v10682
  %v12008 = vunpack.c.l.b16 %v10683
  %v12009 = vunpack.c.h.b16 %v10683
  %v12010 = vunpack.c.l.b16 %v10684
  %v12011 = vunpack.c.h.b16 %v10684
  %v12012 = vunpack.c.l.b16 %v10685
  %v12013 = vunpack.c.h.b16 %v10685
  %v12014 = vunpack.c.l.b16 %v10686
  %v12015 = vunpack.c.h.b16 %v10686
  %v12016 = vunpack.c.l.b16 %v10687
  %v12017 = vunpack.c.h.b16 %v10687
  %v12018 = vunpack.c.l.b16 %v10688
  %v12019 = vunpack.c.h.b16 %v10688
  %v12020 = vunpack.c.l.b16 %v10689
  %v12021 = vunpack.c.h.b16 %v10689
  %v12022 = vunpack.c.l.b16 %v10690
  %v12023 = vunpack.c.h.b16 %v10690
  %v12024 = vunpack.c.l.b16 %v10691
  %v12025 = vunpack.c.h.b16 %v10691
  %v12026 = vunpack.c.l.b16 %v10692
  %v12027 = vunpack.c.h.b16 %v10692
  %v12028 = vunpack.c.l.b16 %v10693
  %v12029 = vunpack.c.h.b16 %v10693
  %v12030 = vunpack.c.l.b16 %v10694
  %v12031 = vunpack.c.h.b16 %v10694
  %v12032 = vunpack.c.l.b16 %v10695
  %v12033 = vunpack.c.h.b16 %v10695
  %v12034 = vunpack.c.l.b16 %v10696
  %v12035 = vunpack.c.h.b16 %v10696
  %v12036 = vunpack.c.l.b16 %v10697
  %v12037 = vunpack.c.h.b16 %v10697
  %v12038 = vunpack.c.l.b16 %v10698
  %v12039 = vunpack.c.h.b16 %v10698
  %v12040 = vunpack.c.l.b16 %v10699
  %v12041 = vunpack.c.h.b16 %v10699
  %v12042 = vunpack.c.l.b16 %v10700
  %v12043 = vunpack.c.h.b16 %v10700
  %v12044 = vunpack.c.l.b16 %v10701
  %v12045 = vunpack.c.h.b16 %v10701
  %v12046 = vunpack.c.l.b16 %v10702
  %v12047 = vunpack.c.h.b16 %v10702
  %v12048 = vunpack.c.l.b16 %v10703
  %v12049 = vunpack.c.h.b16 %v10703
  %v12050 = vunpack.c.l.b16 %v10704
  %v12051 = vunpack.c.h.b16 %v10704
  %v12052 = vunpack.c.l.b16 %v10705
  %v12053 = vunpack.c.h.b16 %v10705
  %v12054 = vunpack.c.l.b16 %v10706
  %v12055 = vunpack.c.h.b16 %v10706
  %v12056 = vunpack.c.l.b16 %v10707
  %v12057 = vunpack.c.h.b16 %v10707
  %v12058 = vunpack.c.l.b16 %v10708
  %v12059 = vunpack.c.h.b16 %v10708
  %v12060 = vunpack.c.l.b16 %v10709
  %v12061 = vunpack.c.h.b16 %v10709
  %v12062 = vunpack.c.l.b16 %v10710
  %v12063 = vunpack.c.h.b16 %v10710
  %v12064 = vunpack.c.l.b16 %v10711
  %v12065 = vunpack.c.h.b16 %v10711
  %v12066 = vunpack.c.l.b16 %v10712
  %v12067 = vunpack.c.h.b16 %v10712
  %v12068 = vunpack.c.l.b16 %v10713
  %v12069 = vunpack.c.h.b16 %v10713
  %v12070 = vunpack.c.l.b16 %v10714
  %v12071 = vunpack.c.h.b16 %v10714
  %v12072 = vunpack.c.l.b16 %v10715
  %v12073 = vunpack.c.h.b16 %v10715
  %v12074 = vunpack.c.l.b16 %v10716
  %v12075 = vunpack.c.h.b16 %v10716
  %v12076 = vunpack.c.l.b16 %v10717
  %v12077 = vunpack.c.h.b16 %v10717
  %v12078 = vunpack.c.l.b16 %v10718
  %v12079 = vunpack.c.h.b16 %v10718
  %v12080 = vunpack.c.l.b16 %v10719
  %v12081 = vunpack.c.h.b16 %v10719
  %v12082 = vunpack.c.l.b16 %v10720
  %v12083 = vunpack.c.h.b16 %v10720
  %v12084 = vunpack.c.l.b16 %v10721
  %v12085 = vunpack.c.h.b16 %v10721
  %v12086 = vunpack.c.l.b16 %v10722
  %v12087 = vunpack.c.h.b16 %v10722
  %v12088 = vunpack.c.l.b16 %v10723
  %v12089 = vunpack.c.h.b16 %v10723
  %v12090 = vunpack.c.l.b16 %v10724
  %v12091 = vunpack.c.h.b16 %v10724
  %v12092 = vunpack.c.l.b16 %v10725
  %v12093 = vunpack.c.h.b16 %v10725
  %v12094 = vunpack.c.l.b16 %v10726
  %v12095 = vunpack.c.h.b16 %v10726
  %v12096 = vunpack.c.l.b16 %v10727
  %v12097 = vunpack.c.h.b16 %v10727
  %v12098 = vunpack.c.l.b16 %v10728
  %v12099 = vunpack.c.h.b16 %v10728
  %v12100 = vunpack.c.l.b16 %v10729
  %v12101 = vunpack.c.h.b16 %v10729
  %v12102 = vunpack.c.l.b16 %v10730
  %v12103 = vunpack.c.h.b16 %v10730
  %v12104 = vunpack.c.l.b16 %v10731
  %v12105 = vunpack.c.h.b16 %v10731
  %v12106 = vunpack.c.l.b16 %v10732
  %v12107 = vunpack.c.h.b16 %v10732
  %v12108 = vunpack.c.l.b16 %v10733
  %v12109 = vunpack.c.h.b16 %v10733
  %v12110 = vunpack.c.l.b16 %v10734
  %v12111 = vunpack.c.h.b16 %v10734
  %v12112 = vunpack.c.l.b16 %v10735
  %v12113 = vunpack.c.h.b16 %v10735
  %v12114 = vunpack.c.l.b16 %v10736
  %v12115 = vunpack.c.h.b16 %v10736
  %v12116 = vunpack.c.l.b16 %v10737
  %v12117 = vunpack.c.h.b16 %v10737
  %v12118 = vunpack.c.l.b16 %v10738
  %v12119 = vunpack.c.h.b16 %v10738
  %v12120 = vunpack.c.l.b16 %v10739
  %v12121 = vunpack.c.h.b16 %v10739
  %v12122 = vunpack.c.l.b16 %v10740
  %v12123 = vunpack.c.h.b16 %v10740
  %v12124 = vunpack.c.l.b16 %v10741
  %v12125 = vunpack.c.h.b16 %v10741
  %v12126 = vunpack.c.l.b16 %v10742
  %v12127 = vunpack.c.h.b16 %v10742
  %v12128 = vunpack.c.l.b16 %v10743
  %v12129 = vunpack.c.h.b16 %v10743
  %v12130 = vunpack.c.l.b16 %v10744
  %v12131 = vunpack.c.h.b16 %v10744
  %v12132 = vunpack.c.l.b16 %v10745
  %v12133 = vunpack.c.h.b16 %v10745
  %v12134 = vunpack.c.l.b16 %v10746
  %v12135 = vunpack.c.h.b16 %v10746
  %v12136 = vunpack.c.l.b16 %v10747
  %v12137 = vunpack.c.h.b16 %v10747
  %v12138 = vunpack.c.l.b16 %v10748
  %v12139 = vunpack.c.h.b16 %v10748
  %v12140 = vunpack.c.l.b16 %v10749
  %v12141 = vunpack.c.h.b16 %v10749
  %v12142 = vunpack.c.l.b16 %v10750
  %v12143 = vunpack.c.h.b16 %v10750
  %v12144 = vunpack.c.l.b16 %v10751
  %v12145 = vunpack.c.h.b16 %v10751
  %v12146 = vunpack.c.l.b16 %v10752
  %v12147 = vunpack.c.h.b16 %v10752
  %v12148 = vunpack.c.l.b16 %v10753
  %v12149 = vunpack.c.h.b16 %v10753
  %v12150 = vunpack.c.l.b16 %v10754
  %v12151 = vunpack.c.h.b16 %v10754
  %v12152 = vunpack.c.l.b16 %v10755
  %v12153 = vunpack.c.h.b16 %v10755
  %v12154 = vunpack.c.l.b16 %v10756
  %v12155 = vunpack.c.h.b16 %v10756
  %v12156 = vunpack.c.l.b16 %v10757
  %v12157 = vunpack.c.h.b16 %v10757
  %v12158 = vunpack.c.l.b16 %v10758
  %v12159 = vunpack.c.h.b16 %v10758
  %v12160 = vunpack.c.l.b16 %v10759
  %v12161 = vunpack.c.h.b16 %v10759
  %v12162 = vunpack.c.l.b16 %v10760
  %v12163 = vunpack.c.h.b16 %v10760
  %v12164 = vunpack.c.l.b16 %v10761
  %v12165 = vunpack.c.h.b16 %v10761
  %v12166 = vunpack.c.l.b16 %v10762
  %v12167 = vunpack.c.h.b16 %v10762
  %v12168 = vunpack.c.l.b16 %v10763
  %v12169 = vunpack.c.h.b16 %v10763
  %v12170 = vunpack.c.l.b16 %v10764
  %v12171 = vunpack.c.h.b16 %v10764
  %v12172 = vunpack.c.l.b16 %v10765
  %v12173 = vunpack.c.h.b16 %v10765
  %v12174 = vunpack.c.l.b16 %v10766
  %v12175 = vunpack.c.h.b16 %v10766
  %v12176 = vunpack.c.l.b16 %v10767
  %v12177 = vunpack.c.h.b16 %v10767
  %v12178 = vunpack.c.l.b16 %v10768
  %v12179 = vunpack.c.h.b16 %v10768
  %v12180 = vunpack.c.l.b16 %v10769
  %v12181 = vunpack.c.h.b16 %v10769
  %v12182 = vunpack.c.l.b16 %v10770
  %v12183 = vunpack.c.h.b16 %v10770
  %v12184 = vunpack.c.l.b16 %v10771
  %v12185 = vunpack.c.h.b16 %v10771
  %v12186 = vunpack.c.l.b16 %v10772
  %v12187 = vunpack.c.h.b16 %v10772
  %v12188 = vunpack.c.l.b16 %v10773
  %v12189 = vunpack.c.h.b16 %v10773
  %v12190 = vunpack.c.l.b16 %v10774
  %v12191 = vunpack.c.h.b16 %v10774
  %v12192 = vunpack.c.l.b16 %v10775
  %v12193 = vunpack.c.h.b16 %v10775
  %v12194 = vunpack.c.l.b16 %v10776
  %v12195 = vunpack.c.h.b16 %v10776
  %v12196 = vunpack.c.l.b16 %v10777
  %v12197 = vunpack.c.h.b16 %v10777
  %v12198 = vunpack.c.l.b16 %v10778
  %v12199 = vunpack.c.h.b16 %v10778
  %v12200 = vunpack.c.l.b16 %v10779
  %v12201 = vunpack.c.h.b16 %v10779
  %v12202 = vunpack.c.l.b16 %v10780
  %v12203 = vunpack.c.h.b16 %v10780
  %v12204 = vunpack.c.l.b16 %v10781
  %v12205 = vunpack.c.h.b16 %v10781
  %v12206 = vunpack.c.l.b16 %v10782
  %v12207 = vunpack.c.h.b16 %v10782
  %v12208 = vunpack.c.l.b16 %v10783
  %v12209 = vunpack.c.h.b16 %v10783
  %v12210 = vunpack.c.l.b16 %v10784
  %v12211 = vunpack.c.h.b16 %v10784
  %v12212 = vunpack.c.l.b16 %v10785
  %v12213 = vunpack.c.h.b16 %v10785
  %v12214 = vunpack.c.l.b16 %v10786
  %v12215 = vunpack.c.h.b16 %v10786
  %v12216 = vunpack.c.l.b16 %v10787
  %v12217 = vunpack.c.h.b16 %v10787
  %v12218 = vunpack.c.l.b16 %v10788
  %v12219 = vunpack.c.h.b16 %v10788
  %v12220 = vunpack.c.l.b16 %v10789
  %v12221 = vunpack.c.h.b16 %v10789
  %v12222 = vunpack.c.l.b16 %v10790
  %v12223 = vunpack.c.h.b16 %v10790
  %v12224 = vunpack.c.l.b16 %v10791
  %v12225 = vunpack.c.h.b16 %v10791
  %v12226 = vunpack.c.l.b16 %v10792
  %v12227 = vunpack.c.h.b16 %v10792
  %v12228 = vunpack.c.l.b16 %v10793
  %v12229 = vunpack.c.h.b16 %v10793
  %v12230 = vunpack.c.l.b16 %v10794
  %v12231 = vunpack.c.h.b16 %v10794
  %v12232 = vunpack.c.l.b16 %v10795
  %v12233 = vunpack.c.h.b16 %v10795
  %v12234 = vunpack.c.l.b16 %v10796
  %v12235 = vunpack.c.h.b16 %v10796
  %v12236 = vunpack.c.l.b16 %v10797
  %v12237 = vunpack.c.h.b16 %v10797
  %v12238 = vunpack.c.l.b16 %v10798
  %v12239 = vunpack.c.h.b16 %v10798
  %v12240 = vunpack.c.l.b16 %v10799
  %v12241 = vunpack.c.h.b16 %v10799
  %v12242 = vunpack.c.l.b16 %v10800
  %v12243 = vunpack.c.h.b16 %v10800
  %v12244 = vunpack.c.l.b16 %v10801
  %v12245 = vunpack.c.h.b16 %v10801
  %v12246 = vunpack.c.l.b16 %v10802
  %v12247 = vunpack.c.h.b16 %v10802
  %v12248 = vunpack.c.l.b16 %v10803
  %v12249 = vunpack.c.h.b16 %v10803
  %v12250 = vunpack.c.l.b16 %v10804
  %v12251 = vunpack.c.h.b16 %v10804
  %v12252 = vunpack.c.l.b16 %v10805
  %v12253 = vunpack.c.h.b16 %v10805
  %v12254 = vunpack.c.l.b16 %v10806
  %v12255 = vunpack.c.h.b16 %v10806
  %v12256 = vunpack.c.l.b16 %v10807
  %v12257 = vunpack.c.h.b16 %v10807
  %v12258 = vunpack.c.l.b16 %v10808
  %v12259 = vunpack.c.h.b16 %v10808
  %v12260 = vunpack.c.l.b16 %v10809
  %v12261 = vunpack.c.h.b16 %v10809
  %v12262 = vunpack.c.l.b16 %v10810
  %v12263 = vunpack.c.h.b16 %v10810
  %v12264 = vunpack.c.l.b16 %v10811
  %v12265 = vunpack.c.h.b16 %v10811
  %v12266 = vunpack.c.l.b16 %v10812
  %v12267 = vunpack.c.h.b16 %v10812
  %v12268 = vunpack.c.l.b16 %v10813
  %v12269 = vunpack.c.h.b16 %v10813
  %v12270 = vunpack.c.l.b16 %v10814
  %v12271 = vunpack.c.h.b16 %v10814
  %v12272 = vunpack.c.l.b16 %v10815
  %v12273 = vunpack.c.h.b16 %v10815
  %v12274 = vunpack.c.l.b16 %v10816
  %v12275 = vunpack.c.h.b16 %v10816
  %v12276 = vunpack.c.l.b16 %v10817
  %v12277 = vunpack.c.h.b16 %v10817
  %v12278 = vunpack.c.l.b16 %v10818
  %v12279 = vunpack.c.h.b16 %v10818
  %v12280 = vunpack.c.l.b16 %v10819
  %v12281 = vunpack.c.h.b16 %v10819
  %v12282 = vunpack.c.l.b16 %v10820
  %v12283 = vunpack.c.h.b16 %v10820
  %v12284 = vunpack.c.l.b16 %v10821
  %v12285 = vunpack.c.h.b16 %v10821
  %v12286 = vunpack.c.l.b16 %v10822
  %v12287 = vunpack.c.h.b16 %v10822
  %v12288 = vunpack.c.l.b16 %v10823
  %v12289 = vunpack.c.h.b16 %v10823
  %v12290 = vunpack.c.l.b16 %v10824
  %v12291 = vunpack.c.h.b16 %v10824
  %v12292 = vunpack.c.l.b16 %v10825
  %v12293 = vunpack.c.h.b16 %v10825
  %v12294 = vunpack.c.l.b16 %v10826
  %v12295 = vunpack.c.h.b16 %v10826
  %v12296 = vunpack.c.l.b16 %v10827
  %v12297 = vunpack.c.h.b16 %v10827
  %v12298 = vunpack.c.l.b16 %v10828
  %v12299 = vunpack.c.h.b16 %v10828
  %v12300 = vunpack.c.l.b16 %v10829
  %v12301 = vunpack.c.h.b16 %v10829
  %v12302 = vunpack.c.l.b16 %v10830
  %v12303 = vunpack.c.h.b16 %v10830
  %v12304 = vunpack.c.l.b16 %v10831
  %v12305 = vunpack.c.h.b16 %v10831
  %v12306 = vunpack.c.l.b16 %v10832
  %v12307 = vunpack.c.h.b16 %v10832
  %v12308 = vunpack.c.l.b16 %v10833
  %v12309 = vunpack.c.h.b16 %v10833
  %v12310 = vunpack.c.l.b16 %v10834
  %v12311 = vunpack.c.h.b16 %v10834
  %v12312 = vunpack.c.l.b16 %v10835
  %v12313 = vunpack.c.h.b16 %v10835
  %v12314 = vunpack.c.l.b16 %v10836
  %v12315 = vunpack.c.h.b16 %v10836
  %v12316 = vunpack.c.l.b16 %v10837
  %v12317 = vunpack.c.h.b16 %v10837
  %v12318 = vunpack.c.l.b16 %v10838
  %v12319 = vunpack.c.h.b16 %v10838
  %v12320 = vunpack.c.l.b16 %v10839
  %v12321 = vunpack.c.h.b16 %v10839
  %v12322 = vunpack.c.l.b16 %v10840
  %v12323 = vunpack.c.h.b16 %v10840
  %v12324 = vunpack.c.l.b16 %v10841
  %v12325 = vunpack.c.h.b16 %v10841
  %v12326 = vunpack.c.l.b16 %v10842
  %v12327 = vunpack.c.h.b16 %v10842
  %v12328 = vunpack.c.l.b16 %v10843
  %v12329 = vunpack.c.h.b16 %v10843
  %v12330 = vunpack.c.l.b16 %v10844
  %v12331 = vunpack.c.h.b16 %v10844
  %v12332 = vunpack.c.l.b16 %v10845
  %v12333 = vunpack.c.h.b16 %v10845
  %v12334 = vunpack.c.l.b16 %v10846
  %v12335 = vunpack.c.h.b16 %v10846
  %v12336 = vunpack.c.l.b16 %v10847
  %v12337 = vunpack.c.h.b16 %v10847
  %v12338 = vunpack.c.l.b16 %v10848
  %v12339 = vunpack.c.h.b16 %v10848
  %v12340 = vunpack.c.l.b16 %v10849
  %v12341 = vunpack.c.h.b16 %v10849
  %v12342 = vunpack.c.l.b16 %v10850
  %v12343 = vunpack.c.h.b16 %v10850
  %v12344 = vunpack.c.l.b16 %v10851
  %v12345 = vunpack.c.h.b16 %v10851
  %v12346 = vunpack.c.l.b16 %v10852
  %v12347 = vunpack.c.h.b16 %v10852
  %v12348 = vunpack.c.l.b16 %v10853
  %v12349 = vunpack.c.h.b16 %v10853
  %v12350 = vunpack.c.l.b16 %v10854
  %v12351 = vunpack.c.h.b16 %v10854
  %v12352 = vunpack.c.l.b16 %v10855
  %v12353 = vunpack.c.h.b16 %v10855
  %v12354 = vunpack.c.l.b16 %v10856
  %v12355 = vunpack.c.h.b16 %v10856
  %v12356 = vunpack.c.l.b16 %v10857
  %v12357 = vunpack.c.h.b16 %v10857
  %v12358 = vunpack.c.l.b16 %v10858
  %v12359 = vunpack.c.h.b16 %v10858
  %v12360 = vunpack.c.l.b16 %v10859
  %v12361 = vunpack.c.h.b16 %v10859
  %v12362 = vunpack.c.l.b16 %v10860
  %v12363 = vunpack.c.h.b16 %v10860
  %v12364 = vunpack.c.l.b16 %v10861
  %v12365 = vunpack.c.h.b16 %v10861
  %v12366 = vunpack.c.l.b16 %v10862
  %v12367 = vunpack.c.h.b16 %v10862
  %v12368 = vunpack.c.l.b16 %v10863
  %v12369 = vunpack.c.h.b16 %v10863
  %v12370 = vunpack.c.l.b16 %v10864
  %v12371 = vunpack.c.h.b16 %v10864
  %v12372 = vunpack.c.l.b16 %v10865
  %v12373 = vunpack.c.h.b16 %v10865
  %v12374 = vunpack.c.l.b16 %v10866
  %v12375 = vunpack.c.h.b16 %v10866
  %v12376 = vunpack.c.l.b16 %v10867
  %v12377 = vunpack.c.h.b16 %v10867
  %v12378 = vunpack.c.l.b16 %v10868
  %v12379 = vunpack.c.h.b16 %v10868
  %v12380 = vunpack.c.l.b16 %v10869
  %v12381 = vunpack.c.h.b16 %v10869
  %v12382 = vunpack.c.l.b16 %v10870
  %v12383 = vunpack.c.h.b16 %v10870
  %v12384 = vunpack.c.l.b16 %v10871
  %v12385 = vunpack.c.h.b16 %v10871
  %v12386 = vunpack.c.l.b16 %v10872
  %v12387 = vunpack.c.h.b16 %v10872
  %v12388 = vunpack.c.l.b16 %v10873
  %v12389 = vunpack.c.h.b16 %v10873
  %v12390 = vunpack.c.l.b16 %v10874
  %v12391 = vunpack.c.h.b16 %v10874
  %v12392 = vunpack.c.l.b16 %v10875
  %v12393 = vunpack.c.h.b16 %v10875
  %v12394 = vunpack.c.l.b16 %v10876
  %v12395 = vunpack.c.h.b16 %v10876
  %v12396 = vunpack.c.l.b16 %v10877
  %v12397 = vunpack.c.h.b16 %v10877
  %v12398 = vunpack.c.l.b16 %v10878
  %v12399 = vunpack.c.h.b16 %v10878
  %v12400 = vunpack.c.l.b16 %v10879
  %v12401 = vunpack.c.h.b16 %v10879
  %v12402 = vunpack.c.l.b16 %v10880
  %v12403 = vunpack.c.h.b16 %v10880
  %v12404 = vunpack.c.l.b16 %v10881
  %v12405 = vunpack.c.h.b16 %v10881
  %v12406 = vunpack.c.l.b16 %v10882
  %v12407 = vunpack.c.h.b16 %v10882
  %v12408 = vunpack.c.l.b16 %v10883
  %v12409 = vunpack.c.h.b16 %v10883
  %v12410 = vunpack.c.l.b16 %v10884
  %v12411 = vunpack.c.h.b16 %v10884
  %v12412 = vunpack.c.l.b16 %v10885
  %v12413 = vunpack.c.h.b16 %v10885
  %v12414 = vunpack.c.l.b16 %v10886
  %v12415 = vunpack.c.h.b16 %v10886
  %v12416 = vunpack.c.l.b16 %v10887
  %v12417 = vunpack.c.h.b16 %v10887
  %v12418 = vunpack.c.l.b16 %v10888
  %v12419 = vunpack.c.h.b16 %v10888
  %v12420 = vunpack.c.l.b16 %v10889
  %v12421 = vunpack.c.h.b16 %v10889
  %v12422 = vunpack.c.l.b16 %v10890
  %v12423 = vunpack.c.h.b16 %v10890
  %v12424 = vunpack.c.l.b16 %v10891
  %v12425 = vunpack.c.h.b16 %v10891
  %v12426 = vunpack.c.l.b16 %v10892
  %v12427 = vunpack.c.h.b16 %v10892
  %v12428 = vunpack.c.l.b16 %v10893
  %v12429 = vunpack.c.h.b16 %v10893
  %v12430 = vunpack.c.l.b16 %v10894
  %v12431 = vunpack.c.h.b16 %v10894
  %v12432 = vunpack.c.l.b16 %v10895
  %v12433 = vunpack.c.h.b16 %v10895
  %v12434 = vunpack.c.l.b16 %v10896
  %v12435 = vunpack.c.h.b16 %v10896
  %v12436 = vunpack.c.l.b16 %v10897
  %v12437 = vunpack.c.h.b16 %v10897
  %v12438 = vunpack.c.l.b16 %v10898
  %v12439 = vunpack.c.h.b16 %v10898
  %v12440 = vunpack.c.l.b16 %v10899
  %v12441 = vunpack.c.h.b16 %v10899
  %v12442 = vunpack.c.l.b16 %v10900
  %v12443 = vunpack.c.h.b16 %v10900
  %v12444 = vunpack.c.l.b16 %v10901
  %v12445 = vunpack.c.h.b16 %v10901
  %v12446 = vunpack.c.l.b16 %v10902
  %v12447 = vunpack.c.h.b16 %v10902
  %v12448 = vunpack.c.l.b16 %v10903
  %v12449 = vunpack.c.h.b16 %v10903
  %v12450 = vunpack.c.l.b16 %v10904
  %v12451 = vunpack.c.h.b16 %v10904
  %v12452 = vunpack.c.l.b16 %v10905
  %v12453 = vunpack.c.h.b16 %v10905
  %v12454 = vunpack.c.l.b16 %v10906
  %v12455 = vunpack.c.h.b16 %v10906
  %v12456 = vunpack.c.l.b16 %v10907
  %v12457 = vunpack.c.h.b16 %v10907
  %v12458 = vunpack.c.l.b16 %v10908
  %v12459 = vunpack.c.h.b16 %v10908
  %v12460 = vunpack.c.l.b16 %v10909
  %v12461 = vunpack.c.h.b16 %v10909
  %v12462 = vunpack.c.l.b16 %v10910
  %v12463 = vunpack.c.h.b16 %v10910
  %v12464 = vunpack.c.l.b16 %v10911
  %v12465 = vunpack.c.h.b16 %v10911
  %v12466 = vunpack.c.l.b16 %v10912
  %v12467 = vunpack.c.h.b16 %v10912
  %v12468 = vunpack.c.l.b16 %v10913
  %v12469 = vunpack.c.h.b16 %v10913
  %v12470 = vunpack.c.l.b16 %v10914
  %v12471 = vunpack.c.h.b16 %v10914
  %v12472 = vunpack.c.l.b16 %v10915
  %v12473 = vunpack.c.h.b16 %v10915
  %v12474 = vunpack.c.l.b16 %v10916
  %v12475 = vunpack.c.h.b16 %v10916
  %v12476 = vunpack.c.l.b16 %v10917
  %v12477 = vunpack.c.h.b16 %v10917
  %v12478 = vunpack.c.l.b16 %v10918
  %v12479 = vunpack.c.h.b16 %v10918
  %v12480 = vunpack.c.l.b16 %v10919
  %v12481 = vunpack.c.h.b16 %v10919
  %v12482 = vunpack.c.l.b16 %v10920
  %v12483 = vunpack.c.h.b16 %v10920
  %v12484 = vunpack.c.l.b16 %v10921
  %v12485 = vunpack.c.h.b16 %v10921
  %v12486 = vunpack.c.l.b16 %v10922
  %v12487 = vunpack.c.h.b16 %v10922
  %v12488 = vunpack.c.l.b16 %v10923
  %v12489 = vunpack.c.h.b16 %v10923
  %v12490 = vunpack.c.l.b16 %v10924
  %v12491 = vunpack.c.h.b16 %v10924
  %v12492 = vunpack.c.l.b16 %v10925
  %v12493 = vunpack.c.h.b16 %v10925
  %v12494 = vunpack.c.l.b16 %v10926
  %v12495 = vunpack.c.h.b16 %v10926
  %v12496 = vunpack.c.l.b16 %v10927
  %v12497 = vunpack.c.h.b16 %v10927
  %v12498 = vunpack.c.l.b16 %v10928
  %v12499 = vunpack.c.h.b16 %v10928
  %v12500 = vunpack.c.l.b16 %v10929
  %v12501 = vunpack.c.h.b16 %v10929
  %v12502 = vunpack.c.l.b16 %v10930
  %v12503 = vunpack.c.h.b16 %v10930
  %v12504 = vunpack.c.l.b16 %v10931
  %v12505 = vunpack.c.h.b16 %v10931
  %v12506 = vunpack.c.l.b16 %v10932
  %v12507 = vunpack.c.h.b16 %v10932
  %v12508 = vunpack.c.l.b16 %v10933
  %v12509 = vunpack.c.h.b16 %v10933
  %v12510 = vunpack.c.l.b16 %v10934
  %v12511 = vunpack.c.h.b16 %v10934
  %v12512 = vunpack.c.l.b16 %v10935
  %v12513 = vunpack.c.h.b16 %v10935
  %v12514 = vunpack.c.l.b16 %v10936
  %v12515 = vunpack.c.h.b16 %v10936
  %v12516 = vunpack.c.l.b16 %v10937
  %v12517 = vunpack.c.h.b16 %v10937
  %v12518 = vunpack.c.l.b16 %v10938
  %v12519 = vunpack.c.h.b16 %v10938
  %v12520 = vunpack.c.l.b16 %v10939
  %v12521 = vunpack.c.h.b16 %v10939
  %v12522 = vunpack.c.l.b16 %v10940
  %v12523 = vunpack.c.h.b16 %v10940
  %v12524 = vunpack.c.l.b16 %v10941
  %v12525 = vunpack.c.h.b16 %v10941
  %v12526 = vunpack.c.l.b16 %v10942
  %v12527 = vunpack.c.h.b16 %v10942
  %v12528 = vunpack.c.l.b16 %v10943
  %v12529 = vunpack.c.h.b16 %v10943
  %v12530 = vunpack.c.l.b16 %v10944
  %v12531 = vunpack.c.h.b16 %v10944
  %v12532 = vunpack.c.l.b16 %v10945
  %v12533 = vunpack.c.h.b16 %v10945
  %v12534 = vunpack.c.l.b16 %v10946
  %v12535 = vunpack.c.h.b16 %v10946
  %v12536 = vunpack.c.l.b16 %v10947
  %v12537 = vunpack.c.h.b16 %v10947
  %v12538 = vunpack.c.l.b16 %v10948
  %v12539 = vunpack.c.h.b16 %v10948
  %v12540 = vunpack.c.l.b16 %v10949
  %v12541 = vunpack.c.h.b16 %v10949
  %v12542 = vunpack.c.l.b16 %v10950
  %v12543 = vunpack.c.h.b16 %v10950
  %v12544 = vunpack.c.l.b16 %v10951
  %v12545 = vunpack.c.h.b16 %v10951
  %v12546 = vunpack.c.l.b16 %v10952
  %v12547 = vunpack.c.h.b16 %v10952
  %v12548 = vunpack.c.l.b16 %v10953
  %v12549 = vunpack.c.h.b16 %v10953
  %v12550 = vunpack.c.l.b16 %v10954
  %v12551 = vunpack.c.h.b16 %v10954
  %v12552 = vunpack.c.l.b16 %v10955
  %v12553 = vunpack.c.h.b16 %v10955
  %v12554 = vunpack.c.l.b16 %v10956
  %v12555 = vunpack.c.h.b16 %v10956
  %v12556 = vunpack.c.l.b16 %v10957
  %v12557 = vunpack.c.h.b16 %v10957
  %v12558 = vpack.c.b16 %v11542, %v11534
  %v12559 = vpack.c.b16 %v11543, %v11535
  %v12560 = vpack.c.b16 %v11544, %v11536
  %v12561 = vpack.c.b16 %v11545, %v11537
  %v12562 = vpack.c.b16 %v11546, %v11538
  %v12563 = vpack.c.b16 %v11547, %v11539
  %v12564 = vpack.c.b16 %v11548, %v11540
  %v12565 = vpack.c.b16 %v11549, %v11541
  %v12566 = vpack.c.b16 %v11558, %v11550
  %v12567 = vpack.c.b16 %v11559, %v11551
  %v12568 = vpack.c.b16 %v11560, %v11552
  %v12569 = vpack.c.b16 %v11561, %v11553
  %v12570 = vpack.c.b16 %v11562, %v11554
  %v12571 = vpack.c.b16 %v11563, %v11555
  %v12572 = vpack.c.b16 %v11564, %v11556
  %v12573 = vpack.c.b16 %v11565, %v11557
  %v12574 = vpack.c.b16 %v11574, %v11566
  %v12575 = vpack.c.b16 %v11575, %v11567
  %v12576 = vpack.c.b16 %v11576, %v11568
  %v12577 = vpack.c.b16 %v11577, %v11569
  %v12578 = vpack.c.b16 %v11578, %v11570
  %v12579 = vpack.c.b16 %v11579, %v11571
  %v12580 = vpack.c.b16 %v11580, %v11572
  %v12581 = vpack.c.b16 %v11581, %v11573
  %v12582 = vpack.c.b16 %v11590, %v11582
  %v12583 = vpack.c.b16 %v11591, %v11583
  %v12584 = vpack.c.b16 %v11592, %v11584
  %v12585 = vpack.c.b16 %v11593, %v11585
  %v12586 = vpack.c.b16 %v11594, %v11586
  %v12587 = vpack.c.b16 %v11595, %v11587
  %v12588 = vpack.c.b16 %v11596, %v11588
  %v12589 = vpack.c.b16 %v11597, %v11589
  %v12590 = vpack.c.b16 %v11606, %v11598
  %v12591 = vpack.c.b16 %v11607, %v11599
  %v12592 = vpack.c.b16 %v11608, %v11600
  %v12593 = vpack.c.b16 %v11609, %v11601
  %v12594 = vpack.c.b16 %v11610, %v11602
  %v12595 = vpack.c.b16 %v11611, %v11603
  %v12596 = vpack.c.b16 %v11612, %v11604
  %v12597 = vpack.c.b16 %v11613, %v11605
  %v12598 = vpack.c.b16 %v11622, %v11614
  %v12599 = vpack.c.b16 %v11623, %v11615
  %v12600 = vpack.c.b16 %v11624, %v11616
  %v12601 = vpack.c.b16 %v11625, %v11617
  %v12602 = vpack.c.b16 %v11626, %v11618
  %v12603 = vpack.c.b16 %v11627, %v11619
  %v12604 = vpack.c.b16 %v11628, %v11620
  %v12605 = vpack.c.b16 %v11629, %v11621
  %v12606 = vpack.c.b16 %v11638, %v11630
  %v12607 = vpack.c.b16 %v11639, %v11631
  %v12608 = vpack.c.b16 %v11640, %v11632
  %v12609 = vpack.c.b16 %v11641, %v11633
  %v12610 = vpack.c.b16 %v11642, %v11634
  %v12611 = vpack.c.b16 %v11643, %v11635
  %v12612 = vpack.c.b16 %v11644, %v11636
  %v12613 = vpack.c.b16 %v11645, %v11637
  %v12614 = vpack.c.b16 %v11654, %v11646
  %v12615 = vpack.c.b16 %v11655, %v11647
  %v12616 = vpack.c.b16 %v11656, %v11648
  %v12617 = vpack.c.b16 %v11657, %v11649
  %v12618 = vpack.c.b16 %v11658, %v11650
  %v12619 = vpack.c.b16 %v11659, %v11651
  %v12620 = vpack.c.b16 %v11660, %v11652
  %v12621 = vpack.c.b16 %v11661, %v11653
  %v12622 = vpack.c.b16 %v11670, %v11662
  %v12623 = vpack.c.b16 %v11671, %v11663
  %v12624 = vpack.c.b16 %v11672, %v11664
  %v12625 = vpack.c.b16 %v11673, %v11665
  %v12626 = vpack.c.b16 %v11674, %v11666
  %v12627 = vpack.c.b16 %v11675, %v11667
  %v12628 = vpack.c.b16 %v11676, %v11668
  %v12629 = vpack.c.b16 %v11677, %v11669
  %v12630 = vpack.c.b16 %v11686, %v11678
  %v12631 = vpack.c.b16 %v11687, %v11679
  %v12632 = vpack.c.b16 %v11688, %v11680
  %v12633 = vpack.c.b16 %v11689, %v11681
  %v12634 = vpack.c.b16 %v11690, %v11682
  %v12635 = vpack.c.b16 %v11691, %v11683
  %v12636 = vpack.c.b16 %v11692, %v11684
  %v12637 = vpack.c.b16 %v11693, %v11685
  %v12638 = vpack.c.b16 %v11702, %v11694
  %v12639 = vpack.c.b16 %v11703, %v11695
  %v12640 = vpack.c.b16 %v11704, %v11696
  %v12641 = vpack.c.b16 %v11705, %v11697
  %v12642 = vpack.c.b16 %v11706, %v11698
  %v12643 = vpack.c.b16 %v11707, %v11699
  %v12644 = vpack.c.b16 %v11708, %v11700
  %v12645 = vpack.c.b16 %v11709, %v11701
  %v12646 = vpack.c.b16 %v11718, %v11710
  %v12647 = vpack.c.b16 %v11719, %v11711
  %v12648 = vpack.c.b16 %v11720, %v11712
  %v12649 = vpack.c.b16 %v11721, %v11713
  %v12650 = vpack.c.b16 %v11722, %v11714
  %v12651 = vpack.c.b16 %v11723, %v11715
  %v12652 = vpack.c.b16 %v11724, %v11716
  %v12653 = vpack.c.b16 %v11725, %v11717
  %v12654 = vpack.c.b16 %v11734, %v11726
  %v12655 = vpack.c.b16 %v11735, %v11727
  %v12656 = vpack.c.b16 %v11736, %v11728
  %v12657 = vpack.c.b16 %v11737, %v11729
  %v12658 = vpack.c.b16 %v11738, %v11730
  %v12659 = vpack.c.b16 %v11739, %v11731
  %v12660 = vpack.c.b16 %v11740, %v11732
  %v12661 = vpack.c.b16 %v11741, %v11733
  %v12662 = vpack.c.b16 %v11750, %v11742
  %v12663 = vpack.c.b16 %v11751, %v11743
  %v12664 = vpack.c.b16 %v11752, %v11744
  %v12665 = vpack.c.b16 %v11753, %v11745
  %v12666 = vpack.c.b16 %v11754, %v11746
  %v12667 = vpack.c.b16 %v11755, %v11747
  %v12668 = vpack.c.b16 %v11756, %v11748
  %v12669 = vpack.c.b16 %v11757, %v11749
  %v12670 = vpack.c.b16 %v11766, %v11758
  %v12671 = vpack.c.b16 %v11767, %v11759
  %v12672 = vpack.c.b16 %v11768, %v11760
  %v12673 = vpack.c.b16 %v11769, %v11761
  %v12674 = vpack.c.b16 %v11770, %v11762
  %v12675 = vpack.c.b16 %v11771, %v11763
  %v12676 = vpack.c.b16 %v11772, %v11764
  %v12677 = vpack.c.b16 %v11773, %v11765
  %v12678 = vpack.c.b16 %v11782, %v11774
  %v12679 = vpack.c.b16 %v11783, %v11775
  %v12680 = vpack.c.b16 %v11784, %v11776
  %v12681 = vpack.c.b16 %v11785, %v11777
  %v12682 = vpack.c.b16 %v11786, %v11778
  %v12683 = vpack.c.b16 %v11787, %v11779
  %v12684 = vpack.c.b16 %v11788, %v11780
  %v12685 = vpack.c.b16 %v11789, %v11781
  %v12686 = vpack.c.b16 %v11798, %v11790
  %v12687 = vpack.c.b16 %v11799, %v11791
  %v12688 = vpack.c.b16 %v11800, %v11792
  %v12689 = vpack.c.b16 %v11801, %v11793
  %v12690 = vpack.c.b16 %v11802, %v11794
  %v12691 = vpack.c.b16 %v11803, %v11795
  %v12692 = vpack.c.b16 %v11804, %v11796
  %v12693 = vpack.c.b16 %v11805, %v11797
  %v12694 = vpack.c.b16 %v11814, %v11806
  %v12695 = vpack.c.b16 %v11815, %v11807
  %v12696 = vpack.c.b16 %v11816, %v11808
  %v12697 = vpack.c.b16 %v11817, %v11809
  %v12698 = vpack.c.b16 %v11818, %v11810
  %v12699 = vpack.c.b16 %v11819, %v11811
  %v12700 = vpack.c.b16 %v11820, %v11812
  %v12701 = vpack.c.b16 %v11821, %v11813
  %v12702 = vpack.c.b16 %v11830, %v11822
  %v12703 = vpack.c.b16 %v11831, %v11823
  %v12704 = vpack.c.b16 %v11832, %v11824
  %v12705 = vpack.c.b16 %v11833, %v11825
  %v12706 = vpack.c.b16 %v11834, %v11826
  %v12707 = vpack.c.b16 %v11835, %v11827
  %v12708 = vpack.c.b16 %v11836, %v11828
  %v12709 = vpack.c.b16 %v11837, %v11829
  %v12710 = vpack.c.b16 %v11846, %v11838
  %v12711 = vpack.c.b16 %v11847, %v11839
  %v12712 = vpack.c.b16 %v11848, %v11840
  %v12713 = vpack.c.b16 %v11849, %v11841
  %v12714 = vpack.c.b16 %v11850, %v11842
  %v12715 = vpack.c.b16 %v11851, %v11843
  %v12716 = vpack.c.b16 %v11852, %v11844
  %v12717 = vpack.c.b16 %v11853, %v11845
  %v12718 = vpack.c.b16 %v11862, %v11854
  %v12719 = vpack.c.b16 %v11863, %v11855
  %v12720 = vpack.c.b16 %v11864, %v11856
  %v12721 = vpack.c.b16 %v11865, %v11857
  %v12722 = vpack.c.b16 %v11866, %v11858
  %v12723 = vpack.c.b16 %v11867, %v11859
  %v12724 = vpack.c.b16 %v11868, %v11860
  %v12725 = vpack.c.b16 %v11869, %v11861
  %v12726 = vpack.c.b16 %v11878, %v11870
  %v12727 = vpack.c.b16 %v11879, %v11871
  %v12728 = vpack.c.b16 %v11880, %v11872
  %v12729 = vpack.c.b16 %v11881, %v11873
  %v12730 = vpack.c.b16 %v11882, %v11874
  %v12731 = vpack.c.b16 %v11883, %v11875
  %v12732 = vpack.c.b16 %v11884, %v11876
  %v12733 = vpack.c.b16 %v11885, %v11877
  %v12734 = vpack.c.b16 %v11894, %v11886
  %v12735 = vpack.c.b16 %v11895, %v11887
  %v12736 = vpack.c.b16 %v11896, %v11888
  %v12737 = vpack.c.b16 %v11897, %v11889
  %v12738 = vpack.c.b16 %v11898, %v11890
  %v12739 = vpack.c.b16 %v11899, %v11891
  %v12740 = vpack.c.b16 %v11900, %v11892
  %v12741 = vpack.c.b16 %v11901, %v11893
  %v12742 = vpack.c.b16 %v11910, %v11902
  %v12743 = vpack.c.b16 %v11911, %v11903
  %v12744 = vpack.c.b16 %v11912, %v11904
  %v12745 = vpack.c.b16 %v11913, %v11905
  %v12746 = vpack.c.b16 %v11914, %v11906
  %v12747 = vpack.c.b16 %v11915, %v11907
  %v12748 = vpack.c.b16 %v11916, %v11908
  %v12749 = vpack.c.b16 %v11917, %v11909
  %v12750 = vpack.c.b16 %v11926, %v11918
  %v12751 = vpack.c.b16 %v11927, %v11919
  %v12752 = vpack.c.b16 %v11928, %v11920
  %v12753 = vpack.c.b16 %v11929, %v11921
  %v12754 = vpack.c.b16 %v11930, %v11922
  %v12755 = vpack.c.b16 %v11931, %v11923
  %v12756 = vpack.c.b16 %v11932, %v11924
  %v12757 = vpack.c.b16 %v11933, %v11925
  %v12758 = vpack.c.b16 %v11942, %v11934
  %v12759 = vpack.c.b16 %v11943, %v11935
  %v12760 = vpack.c.b16 %v11944, %v11936
  %v12761 = vpack.c.b16 %v11945, %v11937
  %v12762 = vpack.c.b16 %v11946, %v11938
  %v12763 = vpack.c.b16 %v11947, %v11939
  %v12764 = vpack.c.b16 %v11948, %v11940
  %v12765 = vpack.c.b16 %v11949, %v11941
  %v12766 = vpack.c.b16 %v11958, %v11950
  %v12767 = vpack.c.b16 %v11959, %v11951
  %v12768 = vpack.c.b16 %v11960, %v11952
  %v12769 = vpack.c.b16 %v11961, %v11953
  %v12770 = vpack.c.b16 %v11962, %v11954
  %v12771 = vpack.c.b16 %v11963, %v11955
  %v12772 = vpack.c.b16 %v11964, %v11956
  %v12773 = vpack.c.b16 %v11965, %v11957
  %v12774 = vpack.c.b16 %v11974, %v11966
  %v12775 = vpack.c.b16 %v11975, %v11967
  %v12776 = vpack.c.b16 %v11976, %v11968
  %v12777 = vpack.c.b16 %v11977, %v11969
  %v12778 = vpack.c.b16 %v11978, %v11970
  %v12779 = vpack.c.b16 %v11979, %v11971
  %v12780 = vpack.c.b16 %v11980, %v11972
  %v12781 = vpack.c.b16 %v11981, %v11973
  %v12782 = vpack.c.b16 %v11990, %v11982
  %v12783 = vpack.c.b16 %v11991, %v11983
  %v12784 = vpack.c.b16 %v11992, %v11984
  %v12785 = vpack.c.b16 %v11993, %v11985
  %v12786 = vpack.c.b16 %v11994, %v11986
  %v12787 = vpack.c.b16 %v11995, %v11987
  %v12788 = vpack.c.b16 %v11996, %v11988
  %v12789 = vpack.c.b16 %v11997, %v11989
  %v12790 = vpack.c.b16 %v12006, %v11998
  %v12791 = vpack.c.b16 %v12007, %v11999
  %v12792 = vpack.c.b16 %v12008, %v12000
  %v12793 = vpack.c.b16 %v12009, %v12001
  %v12794 = vpack.c.b16 %v12010, %v12002
  %v12795 = vpack.c.b16 %v12011, %v12003
  %v12796 = vpack.c.b16 %v12012, %v12004
  %v12797 = vpack.c.b16 %v12013, %v12005
  %v12798 = vpack.c.b16 %v12022, %v12014
  %v12799 = vpack.c.b16 %v12023, %v12015
  %v12800 = vpack.c.b16 %v12024, %v12016
  %v12801 = vpack.c.b16 %v12025, %v12017
  %v12802 = vpack.c.b16 %v12026, %v12018
  %v12803 = vpack.c.b16 %v12027, %v12019
  %v12804 = vpack.c.b16 %v12028, %v12020
  %v12805 = vpack.c.b16 %v12029, %v12021
  %v12806 = vpack.c.b16 %v12038, %v12030
  %v12807 = vpack.c.b16 %v12039, %v12031
  %v12808 = vpack.c.b16 %v12040, %v12032
  %v12809 = vpack.c.b16 %v12041, %v12033
  %v12810 = vpack.c.b16 %v12042, %v12034
  %v12811 = vpack.c.b16 %v12043, %v12035
  %v12812 = vpack.c.b16 %v12044, %v12036
  %v12813 = vpack.c.b16 %v12045, %v12037
  %v12814 = vpack.c.b16 %v12054, %v12046
  %v12815 = vpack.c.b16 %v12055, %v12047
  %v12816 = vpack.c.b16 %v12056, %v12048
  %v12817 = vpack.c.b16 %v12057, %v12049
  %v12818 = vpack.c.b16 %v12058, %v12050
  %v12819 = vpack.c.b16 %v12059, %v12051
  %v12820 = vpack.c.b16 %v12060, %v12052
  %v12821 = vpack.c.b16 %v12061, %v12053
  %v12822 = vpack.c.b16 %v12070, %v12062
  %v12823 = vpack.c.b16 %v12071, %v12063
  %v12824 = vpack.c.b16 %v12072, %v12064
  %v12825 = vpack.c.b16 %v12073, %v12065
  %v12826 = vpack.c.b16 %v12074, %v12066
  %v12827 = vpack.c.b16 %v12075, %v12067
  %v12828 = vpack.c.b16 %v12076, %v12068
  %v12829 = vpack.c.b16 %v12077, %v12069
  %v12830 = vpack.c.b16 %v12086, %v12078
  %v12831 = vpack.c.b16 %v12087, %v12079
  %v12832 = vpack.c.b16 %v12088, %v12080
  %v12833 = vpack.c.b16 %v12089, %v12081
  %v12834 = vpack.c.b16 %v12090, %v12082
  %v12835 = vpack.c.b16 %v12091, %v12083
  %v12836 = vpack.c.b16 %v12092, %v12084
  %v12837 = vpack.c.b16 %v12093, %v12085
  %v12838 = vpack.c.b16 %v12102, %v12094
  %v12839 = vpack.c.b16 %v12103, %v12095
  %v12840 = vpack.c.b16 %v12104, %v12096
  %v12841 = vpack.c.b16 %v12105, %v12097
  %v12842 = vpack.c.b16 %v12106, %v12098
  %v12843 = vpack.c.b16 %v12107, %v12099
  %v12844 = vpack.c.b16 %v12108, %v12100
  %v12845 = vpack.c.b16 %v12109, %v12101
  %v12846 = vpack.c.b16 %v12118, %v12110
  %v12847 = vpack.c.b16 %v12119, %v12111
  %v12848 = vpack.c.b16 %v12120, %v12112
  %v12849 = vpack.c.b16 %v12121, %v12113
  %v12850 = vpack.c.b16 %v12122, %v12114
  %v12851 = vpack.c.b16 %v12123, %v12115
  %v12852 = vpack.c.b16 %v12124, %v12116
  %v12853 = vpack.c.b16 %v12125, %v12117
  %v12854 = vpack.c.b16 %v12134, %v12126
  %v12855 = vpack.c.b16 %v12135, %v12127
  %v12856 = vpack.c.b16 %v12136, %v12128
  %v12857 = vpack.c.b16 %v12137, %v12129
  %v12858 = vpack.c.b16 %v12138, %v12130
  %v12859 = vpack.c.b16 %v12139, %v12131
  %v12860 = vpack.c.b16 %v12140, %v12132
  %v12861 = vpack.c.b16 %v12141, %v12133
  %v12862 = vpack.c.b16 %v12150, %v12142
  %v12863 = vpack.c.b16 %v12151, %v12143
  %v12864 = vpack.c.b16 %v12152, %v12144
  %v12865 = vpack.c.b16 %v12153, %v12145
  %v12866 = vpack.c.b16 %v12154, %v12146
  %v12867 = vpack.c.b16 %v12155, %v12147
  %v12868 = vpack.c.b16 %v12156, %v12148
  %v12869 = vpack.c.b16 %v12157, %v12149
  %v12870 = vpack.c.b16 %v12166, %v12158
  %v12871 = vpack.c.b16 %v12167, %v12159
  %v12872 = vpack.c.b16 %v12168, %v12160
  %v12873 = vpack.c.b16 %v12169, %v12161
  %v12874 = vpack.c.b16 %v12170, %v12162
  %v12875 = vpack.c.b16 %v12171, %v12163
  %v12876 = vpack.c.b16 %v12172, %v12164
  %v12877 = vpack.c.b16 %v12173, %v12165
  %v12878 = vpack.c.b16 %v12182, %v12174
  %v12879 = vpack.c.b16 %v12183, %v12175
  %v12880 = vpack.c.b16 %v12184, %v12176
  %v12881 = vpack.c.b16 %v12185, %v12177
  %v12882 = vpack.c.b16 %v12186, %v12178
  %v12883 = vpack.c.b16 %v12187, %v12179
  %v12884 = vpack.c.b16 %v12188, %v12180
  %v12885 = vpack.c.b16 %v12189, %v12181
  %v12886 = vpack.c.b16 %v12198, %v12190
  %v12887 = vpack.c.b16 %v12199, %v12191
  %v12888 = vpack.c.b16 %v12200, %v12192
  %v12889 = vpack.c.b16 %v12201, %v12193
  %v12890 = vpack.c.b16 %v12202, %v12194
  %v12891 = vpack.c.b16 %v12203, %v12195
  %v12892 = vpack.c.b16 %v12204, %v12196
  %v12893 = vpack.c.b16 %v12205, %v12197
  %v12894 = vpack.c.b16 %v12214, %v12206
  %v12895 = vpack.c.b16 %v12215, %v12207
  %v12896 = vpack.c.b16 %v12216, %v12208
  %v12897 = vpack.c.b16 %v12217, %v12209
  %v12898 = vpack.c.b16 %v12218, %v12210
  %v12899 = vpack.c.b16 %v12219, %v12211
  %v12900 = vpack.c.b16 %v12220, %v12212
  %v12901 = vpack.c.b16 %v12221, %v12213
  %v12902 = vpack.c.b16 %v12230, %v12222
  %v12903 = vpack.c.b16 %v12231, %v12223
  %v12904 = vpack.c.b16 %v12232, %v12224
  %v12905 = vpack.c.b16 %v12233, %v12225
  %v12906 = vpack.c.b16 %v12234, %v12226
  %v12907 = vpack.c.b16 %v12235, %v12227
  %v12908 = vpack.c.b16 %v12236, %v12228
  %v12909 = vpack.c.b16 %v12237, %v12229
  %v12910 = vpack.c.b16 %v12246, %v12238
  %v12911 = vpack.c.b16 %v12247, %v12239
  %v12912 = vpack.c.b16 %v12248, %v12240
  %v12913 = vpack.c.b16 %v12249, %v12241
  %v12914 = vpack.c.b16 %v12250, %v12242
  %v12915 = vpack.c.b16 %v12251, %v12243
  %v12916 = vpack.c.b16 %v12252, %v12244
  %v12917 = vpack.c.b16 %v12253, %v12245
  %v12918 = vpack.c.b16 %v12262, %v12254
  %v12919 = vpack.c.b16 %v12263, %v12255
  %v12920 = vpack.c.b16 %v12264, %v12256
  %v12921 = vpack.c.b16 %v12265, %v12257
  %v12922 = vpack.c.b16 %v12266, %v12258
  %v12923 = vpack.c.b16 %v12267, %v12259
  %v12924 = vpack.c.b16 %v12268, %v12260
  %v12925 = vpack.c.b16 %v12269, %v12261
  %v12926 = vpack.c.b16 %v12278, %v12270
  %v12927 = vpack.c.b16 %v12279, %v12271
  %v12928 = vpack.c.b16 %v12280, %v12272
  %v12929 = vpack.c.b16 %v12281, %v12273
  %v12930 = vpack.c.b16 %v12282, %v12274
  %v12931 = vpack.c.b16 %v12283, %v12275
  %v12932 = vpack.c.b16 %v12284, %v12276
  %v12933 = vpack.c.b16 %v12285, %v12277
  %v12934 = vpack.c.b16 %v12294, %v12286
  %v12935 = vpack.c.b16 %v12295, %v12287
  %v12936 = vpack.c.b16 %v12296, %v12288
  %v12937 = vpack.c.b16 %v12297, %v12289
  %v12938 = vpack.c.b16 %v12298, %v12290
  %v12939 = vpack.c.b16 %v12299, %v12291
  %v12940 = vpack.c.b16 %v12300, %v12292
  %v12941 = vpack.c.b16 %v12301, %v12293
  %v12942 = vpack.c.b16 %v12310, %v12302
  %v12943 = vpack.c.b16 %v12311, %v12303
  %v12944 = vpack.c.b16 %v12312, %v12304
  %v12945 = vpack.c.b16 %v12313, %v12305
  %v12946 = vpack.c.b16 %v12314, %v12306
  %v12947 = vpack.c.b16 %v12315, %v12307
  %v12948 = vpack.c.b16 %v12316, %v12308
  %v12949 = vpack.c.b16 %v12317, %v12309
  %v12950 = vpack.c.b16 %v12326, %v12318
  %v12951 = vpack.c.b16 %v12327, %v12319
  %v12952 = vpack.c.b16 %v12328, %v12320
  %v12953 = vpack.c.b16 %v12329, %v12321
  %v12954 = vpack.c.b16 %v12330, %v12322
  %v12955 = vpack.c.b16 %v12331, %v12323
  %v12956 = vpack.c.b16 %v12332, %v12324
  %v12957 = vpack.c.b16 %v12333, %v12325
  %v12958 = vpack.c.b16 %v12342, %v12334
  %v12959 = vpack.c.b16 %v12343, %v12335
  %v12960 = vpack.c.b16 %v12344, %v12336
  %v12961 = vpack.c.b16 %v12345, %v12337
  %v12962 = vpack.c.b16 %v12346, %v12338
  %v12963 = vpack.c.b16 %v12347, %v12339
  %v12964 = vpack.c.b16 %v12348, %v12340
  %v12965 = vpack.c.b16 %v12349, %v12341
  %v12966 = vpack.c.b16 %v12358, %v12350
  %v12967 = vpack.c.b16 %v12359, %v12351
  %v12968 = vpack.c.b16 %v12360, %v12352
  %v12969 = vpack.c.b16 %v12361, %v12353
  %v12970 = vpack.c.b16 %v12362, %v12354
  %v12971 = vpack.c.b16 %v12363, %v12355
  %v12972 = vpack.c.b16 %v12364, %v12356
  %v12973 = vpack.c.b16 %v12365, %v12357
  %v12974 = vpack.c.b16 %v12374, %v12366
  %v12975 = vpack.c.b16 %v12375, %v12367
  %v12976 = vpack.c.b16 %v12376, %v12368
  %v12977 = vpack.c.b16 %v12377, %v12369
  %v12978 = vpack.c.b16 %v12378, %v12370
  %v12979 = vpack.c.b16 %v12379, %v12371
  %v12980 = vpack.c.b16 %v12380, %v12372
  %v12981 = vpack.c.b16 %v12381, %v12373
  %v12982 = vpack.c.b16 %v12390, %v12382
  %v12983 = vpack.c.b16 %v12391, %v12383
  %v12984 = vpack.c.b16 %v12392, %v12384
  %v12985 = vpack.c.b16 %v12393, %v12385
  %v12986 = vpack.c.b16 %v12394, %v12386
  %v12987 = vpack.c.b16 %v12395, %v12387
  %v12988 = vpack.c.b16 %v12396, %v12388
  %v12989 = vpack.c.b16 %v12397, %v12389
  %v12990 = vpack.c.b16 %v12406, %v12398
  %v12991 = vpack.c.b16 %v12407, %v12399
  %v12992 = vpack.c.b16 %v12408, %v12400
  %v12993 = vpack.c.b16 %v12409, %v12401
  %v12994 = vpack.c.b16 %v12410, %v12402
  %v12995 = vpack.c.b16 %v12411, %v12403
  %v12996 = vpack.c.b16 %v12412, %v12404
  %v12997 = vpack.c.b16 %v12413, %v12405
  %v12998 = vpack.c.b16 %v12422, %v12414
  %v12999 = vpack.c.b16 %v12423, %v12415
  %v13000 = vpack.c.b16 %v12424, %v12416
  %v13001 = vpack.c.b16 %v12425, %v12417
  %v13002 = vpack.c.b16 %v12426, %v12418
  %v13003 = vpack.c.b16 %v12427, %v12419
  %v13004 = vpack.c.b16 %v12428, %v12420
  %v13005 = vpack.c.b16 %v12429, %v12421
  %v13006 = vpack.c.b16 %v12438, %v12430
  %v13007 = vpack.c.b16 %v12439, %v12431
  %v13008 = vpack.c.b16 %v12440, %v12432
  %v13009 = vpack.c.b16 %v12441, %v12433
  %v13010 = vpack.c.b16 %v12442, %v12434
  %v13011 = vpack.c.b16 %v12443, %v12435
  %v13012 = vpack.c.b16 %v12444, %v12436
  %v13013 = vpack.c.b16 %v12445, %v12437
  %v13014 = vpack.c.b16 %v12454, %v12446
  %v13015 = vpack.c.b16 %v12455, %v12447
  %v13016 = vpack.c.b16 %v12456, %v12448
  %v13017 = vpack.c.b16 %v12457, %v12449
  %v13018 = vpack.c.b16 %v12458, %v12450
  %v13019 = vpack.c.b16 %v12459, %v12451
  %v13020 = vpack.c.b16 %v12460, %v12452
  %v13021 = vpack.c.b16 %v12461, %v12453
  %v13022 = vpack.c.b16 %v12470, %v12462
  %v13023 = vpack.c.b16 %v12471, %v12463
  %v13024 = vpack.c.b16 %v12472, %v12464
  %v13025 = vpack.c.b16 %v12473, %v12465
  %v13026 = vpack.c.b16 %v12474, %v12466
  %v13027 = vpack.c.b16 %v12475, %v12467
  %v13028 = vpack.c.b16 %v12476, %v12468
  %v13029 = vpack.c.b16 %v12477, %v12469
  %v13030 = vpack.c.b16 %v12486, %v12478
  %v13031 = vpack.c.b16 %v12487, %v12479
  %v13032 = vpack.c.b16 %v12488, %v12480
  %v13033 = vpack.c.b16 %v12489, %v12481
  %v13034 = vpack.c.b16 %v12490, %v12482
  %v13035 = vpack.c.b16 %v12491, %v12483
  %v13036 = vpack.c.b16 %v12492, %v12484
  %v13037 = vpack.c.b16 %v12493, %v12485
  %v13038 = vpack.c.b16 %v12502, %v12494
  %v13039 = vpack.c.b16 %v12503, %v12495
  %v13040 = vpack.c.b16 %v12504, %v12496
  %v13041 = vpack.c.b16 %v12505, %v12497
  %v13042 = vpack.c.b16 %v12506, %v12498
  %v13043 = vpack.c.b16 %v12507, %v12499
  %v13044 = vpack.c.b16 %v12508, %v12500
  %v13045 = vpack.c.b16 %v12509, %v12501
  %v13046 = vpack.c.b16 %v12518, %v12510
  %v13047 = vpack.c.b16 %v12519, %v12511
  %v13048 = vpack.c.b16 %v12520, %v12512
  %v13049 = vpack.c.b16 %v12521, %v12513
  %v13050 = vpack.c.b16 %v12522, %v12514
  %v13051 = vpack.c.b16 %v12523, %v12515
  %v13052 = vpack.c.b16 %v12524, %v12516
  %v13053 = vpack.c.b16 %v12525, %v12517
  %v13054 = vpack.c.b16 %v12534, %v12526
  %v13055 = vpack.c.b16 %v12535, %v12527
  %v13056 = vpack.c.b16 %v12536, %v12528
  %v13057 = vpack.c.b16 %v12537, %v12529
  %v13058 = vpack.c.b16 %v12538, %v12530
  %v13059 = vpack.c.b16 %v12539, %v12531
  %v13060 = vpack.c.b16 %v12540, %v12532
  %v13061 = vpack.c.b16 %v12541, %v12533
  %v13062 = vpack.c.b16 %v12550, %v12542
  %v13063 = vpack.c.b16 %v12551, %v12543
  %v13064 = vpack.c.b16 %v12552, %v12544
  %v13065 = vpack.c.b16 %v12553, %v12545
  %v13066 = vpack.c.b16 %v12554, %v12546
  %v13067 = vpack.c.b16 %v12555, %v12547
  %v13068 = vpack.c.b16 %v12556, %v12548
  %v13069 = vpack.c.b16 %v12557, %v12549
  %13582 = vmatprep.subr.bf16.mxu0 %v12559
  %13583 = vmatpush1.bf16.msra.mxu0 %v12558
  %13584 = vmatprep.subr.bf16.mxu0 %v12567
  %13585 = vmatpush1.bf16.msra.mxu0 %v12566
  %13586 = vmatprep.subr.bf16.mxu0 %v12575
  %13587 = vmatpush1.bf16.msra.mxu0 %v12574
  %13588 = vmatprep.subr.bf16.mxu0 %v12583
  %13589 = vmatpush1.bf16.msra.mxu0 %v12582
  %13590 = vmatprep.subr.bf16.mxu0 %v12591
  %13591 = vmatpush1.bf16.msra.mxu0 %v12590
  %13592 = vmatprep.subr.bf16.mxu0 %v12599
  %13593 = vmatpush1.bf16.msra.mxu0 %v12598
  %13594 = vmatprep.subr.bf16.mxu0 %v12607
  %13595 = vmatpush1.bf16.msra.mxu0 %v12606
  %13596 = vmatprep.subr.bf16.mxu0 %v12615
  %13597 = vmatpush1.bf16.msra.mxu0 %v12614
  %13598 = vmatprep.subr.bf16.mxu0 %v12623
  %13599 = vmatpush1.bf16.msra.mxu0 %v12622
  %13600 = vmatprep.subr.bf16.mxu0 %v12631
  %13601 = vmatpush1.bf16.msra.mxu0 %v12630
  %13602 = vmatprep.subr.bf16.mxu0 %v12639
  %13603 = vmatpush1.bf16.msra.mxu0 %v12638
  %13604 = vmatprep.subr.bf16.mxu0 %v12647
  %13605 = vmatpush1.bf16.msra.mxu0 %v12646
  %13606 = vmatprep.subr.bf16.mxu0 %v12655
  %13607 = vmatpush1.bf16.msra.mxu0 %v12654
  %13608 = vmatprep.subr.bf16.mxu0 %v12663
  %13609 = vmatpush1.bf16.msra.mxu0 %v12662
  %13610 = vmatprep.subr.bf16.mxu0 %v12671
  %13611 = vmatpush1.bf16.msra.mxu0 %v12670
  %13612 = vmatprep.subr.bf16.mxu0 %v12679
  %13613 = vmatpush1.bf16.msra.mxu0 %v12678
  %13614 = vmatprep.mubr.bf16.mxu0 %v10991
  %13615 = vmatmul.mubr.bf16.gmra.mrb[0].mxu0 %v10990
  %v13616 = vpop.f32.mrb[0].mxu0
  %v13617 = vadd.f32 0.0, %v13616
  %v13618 = vpop.f32.mrb[0].mxu0
  %v13619 = vadd.f32 0.0, %v13618
  %v13620 = vpop.f32.mrb[0].mxu0
  %v13621 = vadd.f32 0.0, %v13620
  %v13622 = vpop.f32.mrb[0].mxu0
  %v13623 = vadd.f32 0.0, %v13622
  %13624 = vmatprep.mubr.bf16.mxu0 %v10999
  %13625 = vmatmul.mubr.bf16.gmra.mrb[0].mxu0 %v10998
  %v13626 = vpop.f32.mrb[0].mxu0
  %v13627 = vadd.f32 0.0, %v13626
  %v13628 = vpop.f32.mrb[0].mxu0
  %v13629 = vadd.f32 0.0, %v13628
  %v13630 = vpop.f32.mrb[0].mxu0
  %v13631 = vadd.f32 0.0, %v13630
  %v13632 = vpop.f32.mrb[0].mxu0
  %v13633 = vadd.f32 0.0, %v13632
  %13634 = vdwg.mxu0
  %13635 = vmatprep.subr.bf16.mxu0 %v12687
  %13636 = vmatpush1.bf16.msra.mxu0 %v12686
  %13637 = vmatprep.subr.bf16.mxu0 %v12695
  %13638 = vmatpush1.bf16.msra.mxu0 %v12694
  %13639 = vmatprep.subr.bf16.mxu0 %v12703
  %13640 = vmatpush1.bf16.msra.mxu0 %v12702
  %13641 = vmatprep.subr.bf16.mxu0 %v12711
  %13642 = vmatpush1.bf16.msra.mxu0 %v12710
  %13643 = vmatprep.subr.bf16.mxu0 %v12719
  %13644 = vmatpush1.bf16.msra.mxu0 %v12718
  %13645 = vmatprep.subr.bf16.mxu0 %v12727
  %13646 = vmatpush1.bf16.msra.mxu0 %v12726
  %13647 = vmatprep.subr.bf16.mxu0 %v12735
  %13648 = vmatpush1.bf16.msra.mxu0 %v12734
  %13649 = vmatprep.subr.bf16.mxu0 %v12743
  %13650 = vmatpush1.bf16.msra.mxu0 %v12742
  %13651 = vmatprep.subr.bf16.mxu0 %v12751
  %13652 = vmatpush1.bf16.msra.mxu0 %v12750
  %13653 = vmatprep.subr.bf16.mxu0 %v12759
  %13654 = vmatpush1.bf16.msra.mxu0 %v12758
  %13655 = vmatprep.subr.bf16.mxu0 %v12767
  %13656 = vmatpush1.bf16.msra.mxu0 %v12766
  %13657 = vmatprep.subr.bf16.mxu0 %v12775
  %13658 = vmatpush1.bf16.msra.mxu0 %v12774
  %13659 = vmatprep.subr.bf16.mxu0 %v12783
  %13660 = vmatpush1.bf16.msra.mxu0 %v12782
  %13661 = vmatprep.subr.bf16.mxu0 %v12791
  %13662 = vmatpush1.bf16.msra.mxu0 %v12790
  %13663 = vmatprep.subr.bf16.mxu0 %v12799
  %13664 = vmatpush1.bf16.msra.mxu0 %v12798
  %13665 = vmatprep.subr.bf16.mxu0 %v12807
  %13666 = vmatpush1.bf16.msra.mxu0 %v12806
  %13667 = vmatprep.mubr.bf16.mxu0 %v10993
  %13668 = vmatmul.mubr.bf16.gmra.mrb[0].mxu0 %v10992
  %v13669 = vpop.f32.mrb[0].mxu0
  %v13670 = vadd.f32 %v13617, %v13669
  %v13671 = vpop.f32.mrb[0].mxu0
  %v13672 = vadd.f32 %v13619, %v13671
  %v13673 = vpop.f32.mrb[0].mxu0
  %v13674 = vadd.f32 %v13621, %v13673
  %v13675 = vpop.f32.mrb[0].mxu0
  %v13676 = vadd.f32 %v13623, %v13675
  %13677 = vmatprep.mubr.bf16.mxu0 %v11001
  %13678 = vmatmul.mubr.bf16.gmra.mrb[0].mxu0 %v11000
  %v13679 = vpop.f32.mrb[0].mxu0
  %v13680 = vadd.f32 %v13627, %v13679
  %v13681 = vpop.f32.mrb[0].mxu0
  %v13682 = vadd.f32 %v13629, %v13681
  %v13683 = vpop.f32.mrb[0].mxu0
  %v13684 = vadd.f32 %v13631, %v13683
  %v13685 = vpop.f32.mrb[0].mxu0
  %v13686 = vadd.f32 %v13633, %v13685
  %13687 = vdwg.mxu0
  %13688 = vmatprep.subr.bf16.mxu0 %v12815
  %13689 = vmatpush1.bf16.msra.mxu0 %v12814
  %13690 = vmatprep.subr.bf16.mxu0 %v12823
  %13691 = vmatpush1.bf16.msra.mxu0 %v12822
  %13692 = vmatprep.subr.bf16.mxu0 %v12831
  %13693 = vmatpush1.bf16.msra.mxu0 %v12830
  %13694 = vmatprep.subr.bf16.mxu0 %v12839
  %13695 = vmatpush1.bf16.msra.mxu0 %v12838
  %13696 = vmatprep.subr.bf16.mxu0 %v12847
  %13697 = vmatpush1.bf16.msra.mxu0 %v12846
  %13698 = vmatprep.subr.bf16.mxu0 %v12855
  %13699 = vmatpush1.bf16.msra.mxu0 %v12854
  %13700 = vmatprep.subr.bf16.mxu0 %v12863
  %13701 = vmatpush1.bf16.msra.mxu0 %v12862
  %13702 = vmatprep.subr.bf16.mxu0 %v12871
  %13703 = vmatpush1.bf16.msra.mxu0 %v12870
  %13704 = vmatprep.subr.bf16.mxu0 %v12879
  %13705 = vmatpush1.bf16.msra.mxu0 %v12878
  %13706 = vmatprep.subr.bf16.mxu0 %v12887
  %13707 = vmatpush1.bf16.msra.mxu0 %v12886
  %13708 = vmatprep.subr.bf16.mxu0 %v12895
  %13709 = vmatpush1.bf16.msra.mxu0 %v12894
  %13710 = vmatprep.subr.bf16.mxu0 %v12903
  %13711 = vmatpush1.bf16.msra.mxu0 %v12902
  %13712 = vmatprep.subr.bf16.mxu0 %v12911
  %13713 = vmatpush1.bf16.msra.mxu0 %v12910
  %13714 = vmatprep.subr.bf16.mxu0 %v12919
  %13715 = vmatpush1.bf16.msra.mxu0 %v12918
  %13716 = vmatprep.subr.bf16.mxu0 %v12927
  %13717 = vmatpush1.bf16.msra.mxu0 %v12926
  %13718 = vmatprep.subr.bf16.mxu0 %v12935
  %13719 = vmatpush1.bf16.msra.mxu0 %v12934
  %13720 = vmatprep.mubr.bf16.mxu0 %v10995
  %13721 = vmatmul.mubr.bf16.gmra.mrb[0].mxu0 %v10994
  %v13722 = vpop.f32.mrb[0].mxu0
  %v13723 = vadd.f32 %v13670, %v13722
  %v13724 = vpop.f32.mrb[0].mxu0
  %v13725 = vadd.f32 %v13672, %v13724
  %v13726 = vpop.f32.mrb[0].mxu0
  %v13727 = vadd.f32 %v13674, %v13726
  %v13728 = vpop.f32.mrb[0].mxu0
  %v13729 = vadd.f32 %v13676, %v13728
  %13730 = vmatprep.mubr.bf16.mxu0 %v11003
  %13731 = vmatmul.mubr.bf16.gmra.mrb[0].mxu0 %v11002
  %v13732 = vpop.f32.mrb[0].mxu0
  %v13733 = vadd.f32 %v13680, %v13732
  %v13734 = vpop.f32.mrb[0].mxu0
  %v13735 = vadd.f32 %v13682, %v13734
  %v13736 = vpop.f32.mrb[0].mxu0
  %v13737 = vadd.f32 %v13684, %v13736
  %v13738 = vpop.f32.mrb[0].mxu0
  %v13739 = vadd.f32 %v13686, %v13738
  %13740 = vdwg.mxu0
  %13741 = vmatprep.subr.bf16.mxu0 %v12943
  %13742 = vmatpush1.bf16.msra.mxu0 %v12942
  %13743 = vmatprep.subr.bf16.mxu0 %v12951
  %13744 = vmatpush1.bf16.msra.mxu0 %v12950
  %13745 = vmatprep.subr.bf16.mxu0 %v12959
  %13746 = vmatpush1.bf16.msra.mxu0 %v12958
  %13747 = vmatprep.subr.bf16.mxu0 %v12967
  %13748 = vmatpush1.bf16.msra.mxu0 %v12966
  %13749 = vmatprep.subr.bf16.mxu0 %v12975
  %13750 = vmatpush1.bf16.msra.mxu0 %v12974
  %13751 = vmatprep.subr.bf16.mxu0 %v12983
  %13752 = vmatpush1.bf16.msra.mxu0 %v12982
  %13753 = vmatprep.subr.bf16.mxu0 %v12991
  %13754 = vmatpush1.bf16.msra.mxu0 %v12990
  %13755 = vmatprep.subr.bf16.mxu0 %v12999
  %13756 = vmatpush1.bf16.msra.mxu0 %v12998
  %13757 = vmatprep.subr.bf16.mxu0 %v13007
  %13758 = vmatpush1.bf16.msra.mxu0 %v13006
  %13759 = vmatprep.subr.bf16.mxu0 %v13015
  %13760 = vmatpush1.bf16.msra.mxu0 %v13014
  %13761 = vmatprep.subr.bf16.mxu0 %v13023
  %13762 = vmatpush1.bf16.msra.mxu0 %v13022
  %13763 = vmatprep.subr.bf16.mxu0 %v13031
  %13764 = vmatpush1.bf16.msra.mxu0 %v13030
  %13765 = vmatprep.subr.bf16.mxu0 %v13039
  %13766 = vmatpush1.bf16.msra.mxu0 %v13038
  %13767 = vmatprep.subr.bf16.mxu0 %v13047
  %13768 = vmatpush1.bf16.msra.mxu0 %v13046
  %13769 = vmatprep.subr.bf16.mxu0 %v13055
  %13770 = vmatpush1.bf16.msra.mxu0 %v13054
  %13771 = vmatprep.subr.bf16.mxu0 %v13063
  %13772 = vmatpush1.bf16.msra.mxu0 %v13062
  %13773 = vmatprep.mubr.bf16.mxu0 %v10997
  %13774 = vmatmul.mubr.bf16.gmra.mrb[0].mxu0 %v10996
  %v13775 = vpop.f32.mrb[0].mxu0
  %v13776 = vadd.f32 %v13723, %v13775
  %v13777 = vpop.f32.mrb[0].mxu0
  %v13778 = vadd.f32 %v13725, %v13777
  %v13779 = vpop.f32.mrb[0].mxu0
  %v13780 = vadd.f32 %v13727, %v13779
  %v13781 = vpop.f32.mrb[0].mxu0
  %v13782 = vadd.f32 %v13729, %v13781
  %13783 = vmatprep.mubr.bf16.mxu0 %v11005
  %13784 = vmatmul.mubr.bf16.gmra.mrb[0].mxu0 %v11004
  %v13785 = vpop.f32.mrb[0].mxu0
  %v13786 = vadd.f32 %v13733, %v13785
  %v13787 = vpop.f32.mrb[0].mxu0
  %v13788 = vadd.f32 %v13735, %v13787
  %v13789 = vpop.f32.mrb[0].mxu0
  %v13790 = vadd.f32 %v13737, %v13789
  %v13791 = vpop.f32.mrb[0].mxu0
  %v13792 = vadd.f32 %v13739, %v13791
  %13793 = vdwg.mxu0
  %13794 = vmatprep.subr.bf16.mxu0 %v12561
  %13795 = vmatpush1.bf16.msra.mxu0 %v12560
  %13796 = vmatprep.subr.bf16.mxu0 %v12569
  %13797 = vmatpush1.bf16.msra.mxu0 %v12568
  %13798 = vmatprep.subr.bf16.mxu0 %v12577
  %13799 = vmatpush1.bf16.msra.mxu0 %v12576
  %13800 = vmatprep.subr.bf16.mxu0 %v12585
  %13801 = vmatpush1.bf16.msra.mxu0 %v12584
  %13802 = vmatprep.subr.bf16.mxu0 %v12593
  %13803 = vmatpush1.bf16.msra.mxu0 %v12592
  %13804 = vmatprep.subr.bf16.mxu0 %v12601
  %13805 = vmatpush1.bf16.msra.mxu0 %v12600
  %13806 = vmatprep.subr.bf16.mxu0 %v12609
  %13807 = vmatpush1.bf16.msra.mxu0 %v12608
  %13808 = vmatprep.subr.bf16.mxu0 %v12617
  %13809 = vmatpush1.bf16.msra.mxu0 %v12616
  %13810 = vmatprep.subr.bf16.mxu0 %v12625
  %13811 = vmatpush1.bf16.msra.mxu0 %v12624
  %13812 = vmatprep.subr.bf16.mxu0 %v12633
  %13813 = vmatpush1.bf16.msra.mxu0 %v12632
  %13814 = vmatprep.subr.bf16.mxu0 %v12641
  %13815 = vmatpush1.bf16.msra.mxu0 %v12640
  %13816 = vmatprep.subr.bf16.mxu0 %v12649
  %13817 = vmatpush1.bf16.msra.mxu0 %v12648
  %13818 = vmatprep.subr.bf16.mxu0 %v12657
  %13819 = vmatpush1.bf16.msra.mxu0 %v12656
  %13820 = vmatprep.subr.bf16.mxu0 %v12665
  %13821 = vmatpush1.bf16.msra.mxu0 %v12664
  %13822 = vmatprep.subr.bf16.mxu0 %v12673
  %13823 = vmatpush1.bf16.msra.mxu0 %v12672
  %13824 = vmatprep.subr.bf16.mxu0 %v12681
  %13825 = vmatpush1.bf16.msra.mxu0 %v12680
  %13826 = vmatprep.mubr.bf16.mxu0 %v10991
  %13827 = vmatmul.mubr.bf16.gmra.mrb[0].mxu0 %v10990
  %v13828 = vpop.f32.mrb[0].mxu0
  %v13829 = vadd.f32 0.0, %v13828
  %v13830 = vpop.f32.mrb[0].mxu0
  %v13831 = vadd.f32 0.0, %v13830
  %v13832 = vpop.f32.mrb[0].mxu0
  %v13833 = vadd.f32 0.0, %v13832
  %v13834 = vpop.f32.mrb[0].mxu0
  %v13835 = vadd.f32 0.0, %v13834
  %13836 = vmatprep.mubr.bf16.mxu0 %v10999
  %13837 = vmatmul.mubr.bf16.gmra.mrb[0].mxu0 %v10998
  %v13838 = vpop.f32.mrb[0].mxu0
  %v13839 = vadd.f32 0.0, %v13838
  %v13840 = vpop.f32.mrb[0].mxu0
  %v13841 = vadd.f32 0.0, %v13840
  %v13842 = vpop.f32.mrb[0].mxu0
  %v13843 = vadd.f32 0.0, %v13842
  %v13844 = vpop.f32.mrb[0].mxu0
  %v13845 = vadd.f32 0.0, %v13844
  %13846 = vdwg.mxu0
  %13847 = vmatprep.subr.bf16.mxu0 %v12689
  %13848 = vmatpush1.bf16.msra.mxu0 %v12688
  %13849 = vmatprep.subr.bf16.mxu0 %v12697
  %13850 = vmatpush1.bf16.msra.mxu0 %v12696
  %13851 = vmatprep.subr.bf16.mxu0 %v12705
  %13852 = vmatpush1.bf16.msra.mxu0 %v12704
  %13853 = vmatprep.subr.bf16.mxu0 %v12713
  %13854 = vmatpush1.bf16.msra.mxu0 %v12712
  %13855 = vmatprep.subr.bf16.mxu0 %v12721
  %13856 = vmatpush1.bf16.msra.mxu0 %v12720
  %13857 = vmatprep.subr.bf16.mxu0 %v12729
  %13858 = vmatpush1.bf16.msra.mxu0 %v12728
  %13859 = vmatprep.subr.bf16.mxu0 %v12737
  %13860 = vmatpush1.bf16.msra.mxu0 %v12736
  %13861 = vmatprep.subr.bf16.mxu0 %v12745
  %13862 = vmatpush1.bf16.msra.mxu0 %v12744
  %13863 = vmatprep.subr.bf16.mxu0 %v12753
  %13864 = vmatpush1.bf16.msra.mxu0 %v12752
  %13865 = vmatprep.subr.bf16.mxu0 %v12761
  %13866 = vmatpush1.bf16.msra.mxu0 %v12760
  %13867 = vmatprep.subr.bf16.mxu0 %v12769
  %13868 = vmatpush1.bf16.msra.mxu0 %v12768
  %13869 = vmatprep.subr.bf16.mxu0 %v12777
  %13870 = vmatpush1.bf16.msra.mxu0 %v12776
  %13871 = vmatprep.subr.bf16.mxu0 %v12785
  %13872 = vmatpush1.bf16.msra.mxu0 %v12784
  %13873 = vmatprep.subr.bf16.mxu0 %v12793
  %13874 = vmatpush1.bf16.msra.mxu0 %v12792
  %13875 = vmatprep.subr.bf16.mxu0 %v12801
  %13876 = vmatpush1.bf16.msra.mxu0 %v12800
  %13877 = vmatprep.subr.bf16.mxu0 %v12809
  %13878 = vmatpush1.bf16.msra.mxu0 %v12808
  %13879 = vmatprep.mubr.bf16.mxu0 %v10993
  %13880 = vmatmul.mubr.bf16.gmra.mrb[0].mxu0 %v10992
  %v13881 = vpop.f32.mrb[0].mxu0
  %v13882 = vadd.f32 %v13829, %v13881
  %v13883 = vpop.f32.mrb[0].mxu0
  %v13884 = vadd.f32 %v13831, %v13883
  %v13885 = vpop.f32.mrb[0].mxu0
  %v13886 = vadd.f32 %v13833, %v13885
  %v13887 = vpop.f32.mrb[0].mxu0
  %v13888 = vadd.f32 %v13835, %v13887
  %13889 = vmatprep.mubr.bf16.mxu0 %v11001
  %13890 = vmatmul.mubr.bf16.gmra.mrb[0].mxu0 %v11000
  %v13891 = vpop.f32.mrb[0].mxu0
  %v13892 = vadd.f32 %v13839, %v13891
  %v13893 = vpop.f32.mrb[0].mxu0
  %v13894 = vadd.f32 %v13841, %v13893
  %v13895 = vpop.f32.mrb[0].mxu0
  %v13896 = vadd.f32 %v13843, %v13895
  %v13897 = vpop.f32.mrb[0].mxu0
  %v13898 = vadd.f32 %v13845, %v13897
  %13899 = vdwg.mxu0
  %13900 = vmatprep.subr.bf16.mxu0 %v12817
  %13901 = vmatpush1.bf16.msra.mxu0 %v12816
  %13902 = vmatprep.subr.bf16.mxu0 %v12825
  %13903 = vmatpush1.bf16.msra.mxu0 %v12824
  %13904 = vmatprep.subr.bf16.mxu0 %v12833
  %13905 = vmatpush1.bf16.msra.mxu0 %v12832
  %13906 = vmatprep.subr.bf16.mxu0 %v12841
  %13907 = vmatpush1.bf16.msra.mxu0 %v12840
  %13908 = vmatprep.subr.bf16.mxu0 %v12849
  %13909 = vmatpush1.bf16.msra.mxu0 %v12848
  %13910 = vmatprep.subr.bf16.mxu0 %v12857
  %13911 = vmatpush1.bf16.msra.mxu0 %v12856
  %13912 = vmatprep.subr.bf16.mxu0 %v12865
  %13913 = vmatpush1.bf16.msra.mxu0 %v12864
  %13914 = vmatprep.subr.bf16.mxu0 %v12873
  %13915 = vmatpush1.bf16.msra.mxu0 %v12872
  %13916 = vmatprep.subr.bf16.mxu0 %v12881
  %13917 = vmatpush1.bf16.msra.mxu0 %v12880
  %13918 = vmatprep.subr.bf16.mxu0 %v12889
  %13919 = vmatpush1.bf16.msra.mxu0 %v12888
  %13920 = vmatprep.subr.bf16.mxu0 %v12897
  %13921 = vmatpush1.bf16.msra.mxu0 %v12896
  %13922 = vmatprep.subr.bf16.mxu0 %v12905
  %13923 = vmatpush1.bf16.msra.mxu0 %v12904
  %13924 = vmatprep.subr.bf16.mxu0 %v12913
  %13925 = vmatpush1.bf16.msra.mxu0 %v12912
  %13926 = vmatprep.subr.bf16.mxu0 %v12921
  %13927 = vmatpush1.bf16.msra.mxu0 %v12920
  %13928 = vmatprep.subr.bf16.mxu0 %v12929
  %13929 = vmatpush1.bf16.msra.mxu0 %v12928
  %13930 = vmatprep.subr.bf16.mxu0 %v12937
  %13931 = vmatpush1.bf16.msra.mxu0 %v12936
  %13932 = vmatprep.mubr.bf16.mxu0 %v10995
  %13933 = vmatmul.mubr.bf16.gmra.mrb[0].mxu0 %v10994
  %v13934 = vpop.f32.mrb[0].mxu0
  %v13935 = vadd.f32 %v13882, %v13934
  %v13936 = vpop.f32.mrb[0].mxu0
  %v13937 = vadd.f32 %v13884, %v13936
  %v13938 = vpop.f32.mrb[0].mxu0
  %v13939 = vadd.f32 %v13886, %v13938
  %v13940 = vpop.f32.mrb[0].mxu0
  %v13941 = vadd.f32 %v13888, %v13940
  %13942 = vmatprep.mubr.bf16.mxu0 %v11003
  %13943 = vmatmul.mubr.bf16.gmra.mrb[0].mxu0 %v11002
  %v13944 = vpop.f32.mrb[0].mxu0
  %v13945 = vadd.f32 %v13892, %v13944
  %v13946 = vpop.f32.mrb[0].mxu0
  %v13947 = vadd.f32 %v13894, %v13946
  %v13948 = vpop.f32.mrb[0].mxu0
  %v13949 = vadd.f32 %v13896, %v13948
  %v13950 = vpop.f32.mrb[0].mxu0
  %v13951 = vadd.f32 %v13898, %v13950
  %13952 = vdwg.mxu0
  %13953 = vmatprep.subr.bf16.mxu0 %v12945
  %13954 = vmatpush1.bf16.msra.mxu0 %v12944
  %13955 = vmatprep.subr.bf16.mxu0 %v12953
  %13956 = vmatpush1.bf16.msra.mxu0 %v12952
  %13957 = vmatprep.subr.bf16.mxu0 %v12961
  %13958 = vmatpush1.bf16.msra.mxu0 %v12960
  %13959 = vmatprep.subr.bf16.mxu0 %v12969
  %13960 = vmatpush1.bf16.msra.mxu0 %v12968
  %13961 = vmatprep.subr.bf16.mxu0 %v12977
  %13962 = vmatpush1.bf16.msra.mxu0 %v12976
  %13963 = vmatprep.subr.bf16.mxu0 %v12985
  %13964 = vmatpush1.bf16.msra.mxu0 %v12984
  %13965 = vmatprep.subr.bf16.mxu0 %v12993
  %13966 = vmatpush1.bf16.msra.mxu0 %v12992
  %13967 = vmatprep.subr.bf16.mxu0 %v13001
  %13968 = vmatpush1.bf16.msra.mxu0 %v13000
  %13969 = vmatprep.subr.bf16.mxu0 %v13009
  %13970 = vmatpush1.bf16.msra.mxu0 %v13008
  %13971 = vmatprep.subr.bf16.mxu0 %v13017
  %13972 = vmatpush1.bf16.msra.mxu0 %v13016
  %13973 = vmatprep.subr.bf16.mxu0 %v13025
  %13974 = vmatpush1.bf16.msra.mxu0 %v13024
  %13975 = vmatprep.subr.bf16.mxu0 %v13033
  %13976 = vmatpush1.bf16.msra.mxu0 %v13032
  %13977 = vmatprep.subr.bf16.mxu0 %v13041
  %13978 = vmatpush1.bf16.msra.mxu0 %v13040
  %13979 = vmatprep.subr.bf16.mxu0 %v13049
  %13980 = vmatpush1.bf16.msra.mxu0 %v13048
  %13981 = vmatprep.subr.bf16.mxu0 %v13057
  %13982 = vmatpush1.bf16.msra.mxu0 %v13056
  %13983 = vmatprep.subr.bf16.mxu0 %v13065
  %13984 = vmatpush1.bf16.msra.mxu0 %v13064
  %13985 = vmatprep.mubr.bf16.mxu0 %v10997
  %13986 = vmatmul.mubr.bf16.gmra.mrb[0].mxu0 %v10996
  %v13987 = vpop.f32.mrb[0].mxu0
  %v13988 = vadd.f32 %v13935, %v13987
  %v13989 = vpop.f32.mrb[0].mxu0
  %v13990 = vadd.f32 %v13937, %v13989
  %v13991 = vpop.f32.mrb[0].mxu0
  %v13992 = vadd.f32 %v13939, %v13991
  %v13993 = vpop.f32.mrb[0].mxu0
  %v13994 = vadd.f32 %v13941, %v13993
  %13995 = vmatprep.mubr.bf16.mxu0 %v11005
  %13996 = vmatmul.mubr.bf16.gmra.mrb[0].mxu0 %v11004
  %v13997 = vpop.f32.mrb[0].mxu0
  %v13998 = vadd.f32 %v13945, %v13997
  %v13999 = vpop.f32.mrb[0].mxu0
  %v14000 = vadd.f32 %v13947, %v13999
  %v14001 = vpop.f32.mrb[0].mxu0
  %v14002 = vadd.f32 %v13949, %v14001
  %v14003 = vpop.f32.mrb[0].mxu0
  %v14004 = vadd.f32 %v13951, %v14003
  %14005 = vdwg.mxu0
  %14006 = vmatprep.subr.bf16.mxu0 %v12563
  %14007 = vmatpush1.bf16.msra.mxu0 %v12562
  %14008 = vmatprep.subr.bf16.mxu0 %v12571
  %14009 = vmatpush1.bf16.msra.mxu0 %v12570
  %14010 = vmatprep.subr.bf16.mxu0 %v12579
  %14011 = vmatpush1.bf16.msra.mxu0 %v12578
  %14012 = vmatprep.subr.bf16.mxu0 %v12587
  %14013 = vmatpush1.bf16.msra.mxu0 %v12586
  %14014 = vmatprep.subr.bf16.mxu0 %v12595
  %14015 = vmatpush1.bf16.msra.mxu0 %v12594
  %14016 = vmatprep.subr.bf16.mxu0 %v12603
  %14017 = vmatpush1.bf16.msra.mxu0 %v12602
  %14018 = vmatprep.subr.bf16.mxu0 %v12611
  %14019 = vmatpush1.bf16.msra.mxu0 %v12610
  %14020 = vmatprep.subr.bf16.mxu0 %v12619
  %14021 = vmatpush1.bf16.msra.mxu0 %v12618
  %14022 = vmatprep.subr.bf16.mxu0 %v12627
  %14023 = vmatpush1.bf16.msra.mxu0 %v12626
  %14024 = vmatprep.subr.bf16.mxu0 %v12635
  %14025 = vmatpush1.bf16.msra.mxu0 %v12634
  %14026 = vmatprep.subr.bf16.mxu0 %v12643
  %14027 = vmatpush1.bf16.msra.mxu0 %v12642
  %14028 = vmatprep.subr.bf16.mxu0 %v12651
  %14029 = vmatpush1.bf16.msra.mxu0 %v12650
  %14030 = vmatprep.subr.bf16.mxu0 %v12659
  %14031 = vmatpush1.bf16.msra.mxu0 %v12658
  %14032 = vmatprep.subr.bf16.mxu0 %v12667
  %14033 = vmatpush1.bf16.msra.mxu0 %v12666
  %14034 = vmatprep.subr.bf16.mxu0 %v12675
  %14035 = vmatpush1.bf16.msra.mxu0 %v12674
  %14036 = vmatprep.subr.bf16.mxu0 %v12683
  %14037 = vmatpush1.bf16.msra.mxu0 %v12682
  %14038 = vmatprep.mubr.bf16.mxu0 %v10991
  %14039 = vmatmul.mubr.bf16.gmra.mrb[0].mxu0 %v10990
  %v14040 = vpop.f32.mrb[0].mxu0
  %v14041 = vadd.f32 0.0, %v14040
  %v14042 = vpop.f32.mrb[0].mxu0
  %v14043 = vadd.f32 0.0, %v14042
  %v14044 = vpop.f32.mrb[0].mxu0
  %v14045 = vadd.f32 0.0, %v14044
  %v14046 = vpop.f32.mrb[0].mxu0
  %v14047 = vadd.f32 0.0, %v14046
  %14048 = vmatprep.mubr.bf16.mxu0 %v10999
  %14049 = vmatmul.mubr.bf16.gmra.mrb[0].mxu0 %v10998
  %v14050 = vpop.f32.mrb[0].mxu0
  %v14051 = vadd.f32 0.0, %v14050
  %v14052 = vpop.f32.mrb[0].mxu0
  %v14053 = vadd.f32 0.0, %v14052
  %v14054 = vpop.f32.mrb[0].mxu0
  %v14055 = vadd.f32 0.0, %v14054
  %v14056 = vpop.f32.mrb[0].mxu0
  %v14057 = vadd.f32 0.0, %v14056
  %14058 = vdwg.mxu0
  %14059 = vmatprep.subr.bf16.mxu0 %v12691
  %14060 = vmatpush1.bf16.msra.mxu0 %v12690
  %14061 = vmatprep.subr.bf16.mxu0 %v12699
  %14062 = vmatpush1.bf16.msra.mxu0 %v12698
  %14063 = vmatprep.subr.bf16.mxu0 %v12707
  %14064 = vmatpush1.bf16.msra.mxu0 %v12706
  %14065 = vmatprep.subr.bf16.mxu0 %v12715
  %14066 = vmatpush1.bf16.msra.mxu0 %v12714
  %14067 = vmatprep.subr.bf16.mxu0 %v12723
  %14068 = vmatpush1.bf16.msra.mxu0 %v12722
  %14069 = vmatprep.subr.bf16.mxu0 %v12731
  %14070 = vmatpush1.bf16.msra.mxu0 %v12730
  %14071 = vmatprep.subr.bf16.mxu0 %v12739
  %14072 = vmatpush1.bf16.msra.mxu0 %v12738
  %14073 = vmatprep.subr.bf16.mxu0 %v12747
  %14074 = vmatpush1.bf16.msra.mxu0 %v12746
  %14075 = vmatprep.subr.bf16.mxu0 %v12755
  %14076 = vmatpush1.bf16.msra.mxu0 %v12754
  %14077 = vmatprep.subr.bf16.mxu0 %v12763
  %14078 = vmatpush1.bf16.msra.mxu0 %v12762
  %14079 = vmatprep.subr.bf16.mxu0 %v12771
  %14080 = vmatpush1.bf16.msra.mxu0 %v12770
  %14081 = vmatprep.subr.bf16.mxu0 %v12779
  %14082 = vmatpush1.bf16.msra.mxu0 %v12778
  %14083 = vmatprep.subr.bf16.mxu0 %v12787
  %14084 = vmatpush1.bf16.msra.mxu0 %v12786
  %14085 = vmatprep.subr.bf16.mxu0 %v12795
  %14086 = vmatpush1.bf16.msra.mxu0 %v12794
  %14087 = vmatprep.subr.bf16.mxu0 %v12803
  %14088 = vmatpush1.bf16.msra.mxu0 %v12802
  %14089 = vmatprep.subr.bf16.mxu0 %v12811
  %14090 = vmatpush1.bf16.msra.mxu0 %v12810
  %14091 = vmatprep.mubr.bf16.mxu0 %v10993
  %14092 = vmatmul.mubr.bf16.gmra.mrb[0].mxu0 %v10992
  %v14093 = vpop.f32.mrb[0].mxu0
  %v14094 = vadd.f32 %v14041, %v14093
  %v14095 = vpop.f32.mrb[0].mxu0
  %v14096 = vadd.f32 %v14043, %v14095
  %v14097 = vpop.f32.mrb[0].mxu0
  %v14098 = vadd.f32 %v14045, %v14097
  %v14099 = vpop.f32.mrb[0].mxu0
  %v14100 = vadd.f32 %v14047, %v14099
  %14101 = vmatprep.mubr.bf16.mxu0 %v11001
  %14102 = vmatmul.mubr.bf16.gmra.mrb[0].mxu0 %v11000
  %v14103 = vpop.f32.mrb[0].mxu0
  %v14104 = vadd.f32 %v14051, %v14103
  %v14105 = vpop.f32.mrb[0].mxu0
  %v14106 = vadd.f32 %v14053, %v14105
  %v14107 = vpop.f32.mrb[0].mxu0
  %v14108 = vadd.f32 %v14055, %v14107
  %v14109 = vpop.f32.mrb[0].mxu0
  %v14110 = vadd.f32 %v14057, %v14109
  %14111 = vdwg.mxu0
  %14112 = vmatprep.subr.bf16.mxu0 %v12819
  %14113 = vmatpush1.bf16.msra.mxu0 %v12818
  %14114 = vmatprep.subr.bf16.mxu0 %v12827
  %14115 = vmatpush1.bf16.msra.mxu0 %v12826
  %14116 = vmatprep.subr.bf16.mxu0 %v12835
  %14117 = vmatpush1.bf16.msra.mxu0 %v12834
  %14118 = vmatprep.subr.bf16.mxu0 %v12843
  %14119 = vmatpush1.bf16.msra.mxu0 %v12842
  %14120 = vmatprep.subr.bf16.mxu0 %v12851
  %14121 = vmatpush1.bf16.msra.mxu0 %v12850
  %14122 = vmatprep.subr.bf16.mxu0 %v12859
  %14123 = vmatpush1.bf16.msra.mxu0 %v12858
  %14124 = vmatprep.subr.bf16.mxu0 %v12867
  %14125 = vmatpush1.bf16.msra.mxu0 %v12866
  %14126 = vmatprep.subr.bf16.mxu0 %v12875
  %14127 = vmatpush1.bf16.msra.mxu0 %v12874
  %14128 = vmatprep.subr.bf16.mxu0 %v12883
  %14129 = vmatpush1.bf16.msra.mxu0 %v12882
  %14130 = vmatprep.subr.bf16.mxu0 %v12891
  %14131 = vmatpush1.bf16.msra.mxu0 %v12890
  %14132 = vmatprep.subr.bf16.mxu0 %v12899
  %14133 = vmatpush1.bf16.msra.mxu0 %v12898
  %14134 = vmatprep.subr.bf16.mxu0 %v12907
  %14135 = vmatpush1.bf16.msra.mxu0 %v12906
  %14136 = vmatprep.subr.bf16.mxu0 %v12915
  %14137 = vmatpush1.bf16.msra.mxu0 %v12914
  %14138 = vmatprep.subr.bf16.mxu0 %v12923
  %14139 = vmatpush1.bf16.msra.mxu0 %v12922
  %14140 = vmatprep.subr.bf16.mxu0 %v12931
  %14141 = vmatpush1.bf16.msra.mxu0 %v12930
  %14142 = vmatprep.subr.bf16.mxu0 %v12939
  %14143 = vmatpush1.bf16.msra.mxu0 %v12938
  %14144 = vmatprep.mubr.bf16.mxu0 %v10995
  %14145 = vmatmul.mubr.bf16.gmra.mrb[0].mxu0 %v10994
  %v14146 = vpop.f32.mrb[0].mxu0
  %v14147 = vadd.f32 %v14094, %v14146
  %v14148 = vpop.f32.mrb[0].mxu0
  %v14149 = vadd.f32 %v14096, %v14148
  %v14150 = vpop.f32.mrb[0].mxu0
  %v14151 = vadd.f32 %v14098, %v14150
  %v14152 = vpop.f32.mrb[0].mxu0
  %v14153 = vadd.f32 %v14100, %v14152
  %14154 = vmatprep.mubr.bf16.mxu0 %v11003
  %14155 = vmatmul.mubr.bf16.gmra.mrb[0].mxu0 %v11002
  %v14156 = vpop.f32.mrb[0].mxu0
  %v14157 = vadd.f32 %v14104, %v14156
  %v14158 = vpop.f32.mrb[0].mxu0
  %v14159 = vadd.f32 %v14106, %v14158
  %v14160 = vpop.f32.mrb[0].mxu0
  %v14161 = vadd.f32 %v14108, %v14160
  %v14162 = vpop.f32.mrb[0].mxu0
  %v14163 = vadd.f32 %v14110, %v14162
  %14164 = vdwg.mxu0
  %14165 = vmatprep.subr.bf16.mxu0 %v12947
  %14166 = vmatpush1.bf16.msra.mxu0 %v12946
  %14167 = vmatprep.subr.bf16.mxu0 %v12955
  %14168 = vmatpush1.bf16.msra.mxu0 %v12954
  %14169 = vmatprep.subr.bf16.mxu0 %v12963
  %14170 = vmatpush1.bf16.msra.mxu0 %v12962
  %14171 = vmatprep.subr.bf16.mxu0 %v12971
  %14172 = vmatpush1.bf16.msra.mxu0 %v12970
  %14173 = vmatprep.subr.bf16.mxu0 %v12979
  %14174 = vmatpush1.bf16.msra.mxu0 %v12978
  %14175 = vmatprep.subr.bf16.mxu0 %v12987
  %14176 = vmatpush1.bf16.msra.mxu0 %v12986
  %14177 = vmatprep.subr.bf16.mxu0 %v12995
  %14178 = vmatpush1.bf16.msra.mxu0 %v12994
  %14179 = vmatprep.subr.bf16.mxu0 %v13003
  %14180 = vmatpush1.bf16.msra.mxu0 %v13002
  %14181 = vmatprep.subr.bf16.mxu0 %v13011
  %14182 = vmatpush1.bf16.msra.mxu0 %v13010
  %14183 = vmatprep.subr.bf16.mxu0 %v13019
  %14184 = vmatpush1.bf16.msra.mxu0 %v13018
  %14185 = vmatprep.subr.bf16.mxu0 %v13027
  %14186 = vmatpush1.bf16.msra.mxu0 %v13026
  %14187 = vmatprep.subr.bf16.mxu0 %v13035
  %14188 = vmatpush1.bf16.msra.mxu0 %v13034
  %14189 = vmatprep.subr.bf16.mxu0 %v13043
  %14190 = vmatpush1.bf16.msra.mxu0 %v13042
  %14191 = vmatprep.subr.bf16.mxu0 %v13051
  %14192 = vmatpush1.bf16.msra.mxu0 %v13050
  %14193 = vmatprep.subr.bf16.mxu0 %v13059
  %14194 = vmatpush1.bf16.msra.mxu0 %v13058
  %14195 = vmatprep.subr.bf16.mxu0 %v13067
  %14196 = vmatpush1.bf16.msra.mxu0 %v13066
  %14197 = vmatprep.mubr.bf16.mxu0 %v10997
  %14198 = vmatmul.mubr.bf16.gmra.mrb[0].mxu0 %v10996
  %v14199 = vpop.f32.mrb[0].mxu0
  %v14200 = vadd.f32 %v14147, %v14199
  %v14201 = vpop.f32.mrb[0].mxu0
  %v14202 = vadd.f32 %v14149, %v14201
  %v14203 = vpop.f32.mrb[0].mxu0
  %v14204 = vadd.f32 %v14151, %v14203
  %v14205 = vpop.f32.mrb[0].mxu0
  %v14206 = vadd.f32 %v14153, %v14205
  %14207 = vmatprep.mubr.bf16.mxu0 %v11005
  %14208 = vmatmul.mubr.bf16.gmra.mrb[0].mxu0 %v11004
  %v14209 = vpop.f32.mrb[0].mxu0
  %v14210 = vadd.f32 %v14157, %v14209
  %v14211 = vpop.f32.mrb[0].mxu0
  %v14212 = vadd.f32 %v14159, %v14211
  %v14213 = vpop.f32.mrb[0].mxu0
  %v14214 = vadd.f32 %v14161, %v14213
  %v14215 = vpop.f32.mrb[0].mxu0
  %v14216 = vadd.f32 %v14163, %v14215
  %14217 = vdwg.mxu0
  %14218 = vmatprep.subr.bf16.mxu0 %v12565
  %14219 = vmatpush1.bf16.msra.mxu0 %v12564
  %14220 = vmatprep.subr.bf16.mxu0 %v12573
  %14221 = vmatpush1.bf16.msra.mxu0 %v12572
  %14222 = vmatprep.subr.bf16.mxu0 %v12581
  %14223 = vmatpush1.bf16.msra.mxu0 %v12580
  %14224 = vmatprep.subr.bf16.mxu0 %v12589
  %14225 = vmatpush1.bf16.msra.mxu0 %v12588
  %14226 = vmatprep.subr.bf16.mxu0 %v12597
  %14227 = vmatpush1.bf16.msra.mxu0 %v12596
  %14228 = vmatprep.subr.bf16.mxu0 %v12605
  %14229 = vmatpush1.bf16.msra.mxu0 %v12604
  %14230 = vmatprep.subr.bf16.mxu0 %v12613
  %14231 = vmatpush1.bf16.msra.mxu0 %v12612
  %14232 = vmatprep.subr.bf16.mxu0 %v12621
  %14233 = vmatpush1.bf16.msra.mxu0 %v12620
  %14234 = vmatprep.subr.bf16.mxu0 %v12629
  %14235 = vmatpush1.bf16.msra.mxu0 %v12628
  %14236 = vmatprep.subr.bf16.mxu0 %v12637
  %14237 = vmatpush1.bf16.msra.mxu0 %v12636
  %14238 = vmatprep.subr.bf16.mxu0 %v12645
  %14239 = vmatpush1.bf16.msra.mxu0 %v12644
  %14240 = vmatprep.subr.bf16.mxu0 %v12653
  %14241 = vmatpush1.bf16.msra.mxu0 %v12652
  %14242 = vmatprep.subr.bf16.mxu0 %v12661
  %14243 = vmatpush1.bf16.msra.mxu0 %v12660
  %14244 = vmatprep.subr.bf16.mxu0 %v12669
  %14245 = vmatpush1.bf16.msra.mxu0 %v12668
  %14246 = vmatprep.subr.bf16.mxu0 %v12677
  %14247 = vmatpush1.bf16.msra.mxu0 %v12676
  %14248 = vmatprep.subr.bf16.mxu0 %v12685
  %14249 = vmatpush1.bf16.msra.mxu0 %v12684
  %14250 = vmatprep.mubr.bf16.mxu0 %v10991
  %14251 = vmatmul.mubr.bf16.gmra.mrb[0].mxu0 %v10990
  %v14252 = vpop.f32.mrb[0].mxu0
  %v14253 = vadd.f32 0.0, %v14252
  %v14254 = vpop.f32.mrb[0].mxu0
  %v14255 = vadd.f32 0.0, %v14254
  %v14256 = vpop.f32.mrb[0].mxu0
  %v14257 = vadd.f32 0.0, %v14256
  %v14258 = vpop.f32.mrb[0].mxu0
  %v14259 = vadd.f32 0.0, %v14258
  %14260 = vmatprep.mubr.bf16.mxu0 %v10999
  %14261 = vmatmul.mubr.bf16.gmra.mrb[0].mxu0 %v10998
  %v14262 = vpop.f32.mrb[0].mxu0
  %v14263 = vadd.f32 0.0, %v14262
  %v14264 = vpop.f32.mrb[0].mxu0
  %v14265 = vadd.f32 0.0, %v14264
  %v14266 = vpop.f32.mrb[0].mxu0
  %v14267 = vadd.f32 0.0, %v14266
  %v14268 = vpop.f32.mrb[0].mxu0
  %v14269 = vadd.f32 0.0, %v14268
  %14270 = vdwg.mxu0
  %14271 = vmatprep.subr.bf16.mxu0 %v12693
  %14272 = vmatpush1.bf16.msra.mxu0 %v12692
  %14273 = vmatprep.subr.bf16.mxu0 %v12701
  %14274 = vmatpush1.bf16.msra.mxu0 %v12700
  %14275 = vmatprep.subr.bf16.mxu0 %v12709
  %14276 = vmatpush1.bf16.msra.mxu0 %v12708
  %14277 = vmatprep.subr.bf16.mxu0 %v12717
  %14278 = vmatpush1.bf16.msra.mxu0 %v12716
  %14279 = vmatprep.subr.bf16.mxu0 %v12725
  %14280 = vmatpush1.bf16.msra.mxu0 %v12724
  %14281 = vmatprep.subr.bf16.mxu0 %v12733
  %14282 = vmatpush1.bf16.msra.mxu0 %v12732
  %14283 = vmatprep.subr.bf16.mxu0 %v12741
  %14284 = vmatpush1.bf16.msra.mxu0 %v12740
  %14285 = vmatprep.subr.bf16.mxu0 %v12749
  %14286 = vmatpush1.bf16.msra.mxu0 %v12748
  %14287 = vmatprep.subr.bf16.mxu0 %v12757
  %14288 = vmatpush1.bf16.msra.mxu0 %v12756
  %14289 = vmatprep.subr.bf16.mxu0 %v12765
  %14290 = vmatpush1.bf16.msra.mxu0 %v12764
  %14291 = vmatprep.subr.bf16.mxu0 %v12773
  %14292 = vmatpush1.bf16.msra.mxu0 %v12772
  %14293 = vmatprep.subr.bf16.mxu0 %v12781
  %14294 = vmatpush1.bf16.msra.mxu0 %v12780
  %14295 = vmatprep.subr.bf16.mxu0 %v12789
  %14296 = vmatpush1.bf16.msra.mxu0 %v12788
  %14297 = vmatprep.subr.bf16.mxu0 %v12797
  %14298 = vmatpush1.bf16.msra.mxu0 %v12796
  %14299 = vmatprep.subr.bf16.mxu0 %v12805
  %14300 = vmatpush1.bf16.msra.mxu0 %v12804
  %14301 = vmatprep.subr.bf16.mxu0 %v12813
  %14302 = vmatpush1.bf16.msra.mxu0 %v12812
  %14303 = vmatprep.mubr.bf16.mxu0 %v10993
  %14304 = vmatmul.mubr.bf16.gmra.mrb[0].mxu0 %v10992
  %v14305 = vpop.f32.mrb[0].mxu0
  %v14306 = vadd.f32 %v14253, %v14305
  %v14307 = vpop.f32.mrb[0].mxu0
  %v14308 = vadd.f32 %v14255, %v14307
  %v14309 = vpop.f32.mrb[0].mxu0
  %v14310 = vadd.f32 %v14257, %v14309
  %v14311 = vpop.f32.mrb[0].mxu0
  %v14312 = vadd.f32 %v14259, %v14311
  %14313 = vmatprep.mubr.bf16.mxu0 %v11001
  %14314 = vmatmul.mubr.bf16.gmra.mrb[0].mxu0 %v11000
  %v14315 = vpop.f32.mrb[0].mxu0
  %v14316 = vadd.f32 %v14263, %v14315
  %v14317 = vpop.f32.mrb[0].mxu0
  %v14318 = vadd.f32 %v14265, %v14317
  %v14319 = vpop.f32.mrb[0].mxu0
  %v14320 = vadd.f32 %v14267, %v14319
  %v14321 = vpop.f32.mrb[0].mxu0
  %v14322 = vadd.f32 %v14269, %v14321
  %14323 = vdwg.mxu0
  %14324 = vmatprep.subr.bf16.mxu0 %v12821
  %14325 = vmatpush1.bf16.msra.mxu0 %v12820
  %14326 = vmatprep.subr.bf16.mxu0 %v12829
  %14327 = vmatpush1.bf16.msra.mxu0 %v12828
  %14328 = vmatprep.subr.bf16.mxu0 %v12837
  %14329 = vmatpush1.bf16.msra.mxu0 %v12836
  %14330 = vmatprep.subr.bf16.mxu0 %v12845
  %14331 = vmatpush1.bf16.msra.mxu0 %v12844
  %14332 = vmatprep.subr.bf16.mxu0 %v12853
  %14333 = vmatpush1.bf16.msra.mxu0 %v12852
  %14334 = vmatprep.subr.bf16.mxu0 %v12861
  %14335 = vmatpush1.bf16.msra.mxu0 %v12860
  %14336 = vmatprep.subr.bf16.mxu0 %v12869
  %14337 = vmatpush1.bf16.msra.mxu0 %v12868
  %14338 = vmatprep.subr.bf16.mxu0 %v12877
  %14339 = vmatpush1.bf16.msra.mxu0 %v12876
  %14340 = vmatprep.subr.bf16.mxu0 %v12885
  %14341 = vmatpush1.bf16.msra.mxu0 %v12884
  %14342 = vmatprep.subr.bf16.mxu0 %v12893
  %14343 = vmatpush1.bf16.msra.mxu0 %v12892
  %14344 = vmatprep.subr.bf16.mxu0 %v12901
  %14345 = vmatpush1.bf16.msra.mxu0 %v12900
  %14346 = vmatprep.subr.bf16.mxu0 %v12909
  %14347 = vmatpush1.bf16.msra.mxu0 %v12908
  %14348 = vmatprep.subr.bf16.mxu0 %v12917
  %14349 = vmatpush1.bf16.msra.mxu0 %v12916
  %14350 = vmatprep.subr.bf16.mxu0 %v12925
  %14351 = vmatpush1.bf16.msra.mxu0 %v12924
  %14352 = vmatprep.subr.bf16.mxu0 %v12933
  %14353 = vmatpush1.bf16.msra.mxu0 %v12932
  %14354 = vmatprep.subr.bf16.mxu0 %v12941
  %14355 = vmatpush1.bf16.msra.mxu0 %v12940
  %14356 = vmatprep.mubr.bf16.mxu0 %v10995
  %14357 = vmatmul.mubr.bf16.gmra.mrb[0].mxu0 %v10994
  %v14358 = vpop.f32.mrb[0].mxu0
  %v14359 = vadd.f32 %v14306, %v14358
  %v14360 = vpop.f32.mrb[0].mxu0
  %v14361 = vadd.f32 %v14308, %v14360
  %v14362 = vpop.f32.mrb[0].mxu0
  %v14363 = vadd.f32 %v14310, %v14362
  %v14364 = vpop.f32.mrb[0].mxu0
  %v14365 = vadd.f32 %v14312, %v14364
  %14366 = vmatprep.mubr.bf16.mxu0 %v11003
  %14367 = vmatmul.mubr.bf16.gmra.mrb[0].mxu0 %v11002
  %v14368 = vpop.f32.mrb[0].mxu0
  %v14369 = vadd.f32 %v14316, %v14368
  %v14370 = vpop.f32.mrb[0].mxu0
  %v14371 = vadd.f32 %v14318, %v14370
  %v14372 = vpop.f32.mrb[0].mxu0
  %v14373 = vadd.f32 %v14320, %v14372
  %v14374 = vpop.f32.mrb[0].mxu0
  %v14375 = vadd.f32 %v14322, %v14374
  %14376 = vdwg.mxu0
  %14377 = vmatprep.subr.bf16.mxu0 %v12949
  %14378 = vmatpush1.bf16.msra.mxu0 %v12948
  %14379 = vmatprep.subr.bf16.mxu0 %v12957
  %14380 = vmatpush1.bf16.msra.mxu0 %v12956
  %14381 = vmatprep.subr.bf16.mxu0 %v12965
  %14382 = vmatpush1.bf16.msra.mxu0 %v12964
  %14383 = vmatprep.subr.bf16.mxu0 %v12973
  %14384 = vmatpush1.bf16.msra.mxu0 %v12972
  %14385 = vmatprep.subr.bf16.mxu0 %v12981
  %14386 = vmatpush1.bf16.msra.mxu0 %v12980
  %14387 = vmatprep.subr.bf16.mxu0 %v12989
  %14388 = vmatpush1.bf16.msra.mxu0 %v12988
  %14389 = vmatprep.subr.bf16.mxu0 %v12997
  %14390 = vmatpush1.bf16.msra.mxu0 %v12996
  %14391 = vmatprep.subr.bf16.mxu0 %v13005
  %14392 = vmatpush1.bf16.msra.mxu0 %v13004
  %14393 = vmatprep.subr.bf16.mxu0 %v13013
  %14394 = vmatpush1.bf16.msra.mxu0 %v13012
  %14395 = vmatprep.subr.bf16.mxu0 %v13021
  %14396 = vmatpush1.bf16.msra.mxu0 %v13020
  %14397 = vmatprep.subr.bf16.mxu0 %v13029
  %14398 = vmatpush1.bf16.msra.mxu0 %v13028
  %14399 = vmatprep.subr.bf16.mxu0 %v13037
  %14400 = vmatpush1.bf16.msra.mxu0 %v13036
  %14401 = vmatprep.subr.bf16.mxu0 %v13045
  %14402 = vmatpush1.bf16.msra.mxu0 %v13044
  %14403 = vmatprep.subr.bf16.mxu0 %v13053
  %14404 = vmatpush1.bf16.msra.mxu0 %v13052
  %14405 = vmatprep.subr.bf16.mxu0 %v13061
  %14406 = vmatpush1.bf16.msra.mxu0 %v13060
  %14407 = vmatprep.subr.bf16.mxu0 %v13069
  %14408 = vmatpush1.bf16.msra.mxu0 %v13068
  %14409 = vmatprep.mubr.bf16.mxu0 %v10997
  %14410 = vmatmul.mubr.bf16.gmra.mrb[0].mxu0 %v10996
  %v14411 = vpop.f32.mrb[0].mxu0
  %v14412 = vadd.f32 %v14359, %v14411
  %v14413 = vpop.f32.mrb[0].mxu0
  %v14414 = vadd.f32 %v14361, %v14413
  %v14415 = vpop.f32.mrb[0].mxu0
  %v14416 = vadd.f32 %v14363, %v14415
  %v14417 = vpop.f32.mrb[0].mxu0
  %v14418 = vadd.f32 %v14365, %v14417
  %14419 = vmatprep.mubr.bf16.mxu0 %v11005
  %14420 = vmatmul.mubr.bf16.gmra.mrb[0].mxu0 %v11004
  %v14421 = vpop.f32.mrb[0].mxu0
  %v14422 = vadd.f32 %v14369, %v14421
  %v14423 = vpop.f32.mrb[0].mxu0
  %v14424 = vadd.f32 %v14371, %v14423
  %v14425 = vpop.f32.mrb[0].mxu0
  %v14426 = vadd.f32 %v14373, %v14425
  %v14427 = vpop.f32.mrb[0].mxu0
  %v14428 = vadd.f32 %v14375, %v14427
  %14429 = vdwg.mxu0
  %v14430 = vadd.f32 %v9711, %v13776
  %v14431 = vadd.f32 %v9713, %v13778
  %v14432 = vadd.f32 %v9923, %v13988
  %v14433 = vadd.f32 %v9925, %v13990
  %v14434 = vadd.f32 %v10135, %v14200
  %v14435 = vadd.f32 %v10137, %v14202
  %v14436 = vadd.f32 %v10347, %v14412
  %v14437 = vadd.f32 %v10349, %v14414
  %v14438 = vadd.f32 %v9715, %v13780
  %v14439 = vadd.f32 %v9717, %v13782
  %v14440 = vadd.f32 %v9927, %v13992
  %v14441 = vadd.f32 %v9929, %v13994
  %v14442 = vadd.f32 %v10139, %v14204
  %v14443 = vadd.f32 %v10141, %v14206
  %v14444 = vadd.f32 %v10351, %v14416
  %v14445 = vadd.f32 %v10353, %v14418
  %v14446 = vadd.f32 %v9721, %v13786
  %v14447 = vadd.f32 %v9723, %v13788
  %v14448 = vadd.f32 %v9933, %v13998
  %v14449 = vadd.f32 %v9935, %v14000
  %v14450 = vadd.f32 %v10145, %v14210
  %v14451 = vadd.f32 %v10147, %v14212
  %v14452 = vadd.f32 %v10357, %v14422
  %v14453 = vadd.f32 %v10359, %v14424
  %v14454 = vadd.f32 %v9725, %v13790
  %v14455 = vadd.f32 %v9727, %v13792
  %v14456 = vadd.f32 %v9937, %v14002
  %v14457 = vadd.f32 %v9939, %v14004
  %v14458 = vadd.f32 %v10149, %v14214
  %v14459 = vadd.f32 %v10151, %v14216
  %v14460 = vadd.f32 %v10361, %v14426
  %v14461 = vadd.f32 %v10363, %v14428
  %v14462 = vld [vmem:[%s5] sm:$0x1]
  %v14463 = vld [vmem:[%s6] sm:$0x1]
  %v14464 = vadd.f32 %v14430, %v14438
  %v14465 = vadd.f32 %v14464, %v14446
  %v14466 = vadd.f32 %v14465, %v14454
  %v14467 = vrot.slane %v14466, 4
  %v14468 = vadd.f32 %v14466, %v14467
  %v14469 = vrot.slane %v14468, 2
  %v14470 = vadd.f32 %v14468, %v14469
  %v14471 = vrot.slane %v14470, 1
  %v14472 = vadd.f32 %v14470, %v14471
  %v14473 = vadd.f32 %v14431, %v14439
  %v14474 = vadd.f32 %v14473, %v14447
  %v14475 = vadd.f32 %v14474, %v14455
  %v14476 = vrot.slane %v14475, 4
  %v14477 = vadd.f32 %v14475, %v14476
  %v14478 = vrot.slane %v14477, 2
  %v14479 = vadd.f32 %v14477, %v14478
  %v14480 = vrot.slane %v14479, 1
  %v14481 = vadd.f32 %v14479, %v14480
  %v14482 = vadd.f32 %v14432, %v14440
  %v14483 = vadd.f32 %v14482, %v14448
  %v14484 = vadd.f32 %v14483, %v14456
  %v14485 = vrot.slane %v14484, 4
  %v14486 = vadd.f32 %v14484, %v14485
  %v14487 = vrot.slane %v14486, 2
  %v14488 = vadd.f32 %v14486, %v14487
  %v14489 = vrot.slane %v14488, 1
  %v14490 = vadd.f32 %v14488, %v14489
  %v14491 = vadd.f32 %v14433, %v14441
  %v14492 = vadd.f32 %v14491, %v14449
  %v14493 = vadd.f32 %v14492, %v14457
  %v14494 = vrot.slane %v14493, 4
  %v14495 = vadd.f32 %v14493, %v14494
  %v14496 = vrot.slane %v14495, 2
  %v14497 = vadd.f32 %v14495, %v14496
  %v14498 = vrot.slane %v14497, 1
  %v14499 = vadd.f32 %v14497, %v14498
  %v14500 = vadd.f32 %v14434, %v14442
  %v14501 = vadd.f32 %v14500, %v14450
  %v14502 = vadd.f32 %v14501, %v14458
  %v14503 = vrot.slane %v14502, 4
  %v14504 = vadd.f32 %v14502, %v14503
  %v14505 = vrot.slane %v14504, 2
  %v14506 = vadd.f32 %v14504, %v14505
  %v14507 = vrot.slane %v14506, 1
  %v14508 = vadd.f32 %v14506, %v14507
  %v14509 = vadd.f32 %v14435, %v14443
  %v14510 = vadd.f32 %v14509, %v14451
  %v14511 = vadd.f32 %v14510, %v14459
  %v14512 = vrot.slane %v14511, 4
  %v14513 = vadd.f32 %v14511, %v14512
  %v14514 = vrot.slane %v14513, 2
  %v14515 = vadd.f32 %v14513, %v14514
  %v14516 = vrot.slane %v14515, 1
  %v14517 = vadd.f32 %v14515, %v14516
  %v14518 = vadd.f32 %v14436, %v14444
  %v14519 = vadd.f32 %v14518, %v14452
  %v14520 = vadd.f32 %v14519, %v14460
  %v14521 = vrot.slane %v14520, 4
  %v14522 = vadd.f32 %v14520, %v14521
  %v14523 = vrot.slane %v14522, 2
  %v14524 = vadd.f32 %v14522, %v14523
  %v14525 = vrot.slane %v14524, 1
  %v14526 = vadd.f32 %v14524, %v14525
  %v14527 = vadd.f32 %v14437, %v14445
  %v14528 = vadd.f32 %v14527, %v14453
  %v14529 = vadd.f32 %v14528, %v14461
  %v14530 = vrot.slane %v14529, 4
  %v14531 = vadd.f32 %v14529, %v14530
  %v14532 = vrot.slane %v14531, 2
  %v14533 = vadd.f32 %v14531, %v14532
  %v14534 = vrot.slane %v14533, 1
  %v14535 = vadd.f32 %v14533, %v14534
  %v14536 = vmul.f32 %v14430, %v14430
  %v14537 = vmul.f32 %v14431, %v14431
  %v14538 = vmul.f32 %v14432, %v14432
  %v14539 = vmul.f32 %v14433, %v14433
  %v14540 = vmul.f32 %v14434, %v14434
  %v14541 = vmul.f32 %v14435, %v14435
  %v14542 = vmul.f32 %v14436, %v14436
  %v14543 = vmul.f32 %v14437, %v14437
  %v14544 = vmul.f32 %v14438, %v14438
  %v14545 = vmul.f32 %v14439, %v14439
  %v14546 = vmul.f32 %v14440, %v14440
  %v14547 = vmul.f32 %v14441, %v14441
  %v14548 = vmul.f32 %v14442, %v14442
  %v14549 = vmul.f32 %v14443, %v14443
  %v14550 = vmul.f32 %v14444, %v14444
  %v14551 = vmul.f32 %v14445, %v14445
  %v14552 = vmul.f32 %v14446, %v14446
  %v14553 = vmul.f32 %v14447, %v14447
  %v14554 = vmul.f32 %v14448, %v14448
  %v14555 = vmul.f32 %v14449, %v14449
  %v14556 = vmul.f32 %v14450, %v14450
  %v14557 = vmul.f32 %v14451, %v14451
  %v14558 = vmul.f32 %v14452, %v14452
  %v14559 = vmul.f32 %v14453, %v14453
  %v14560 = vmul.f32 %v14454, %v14454
  %v14561 = vmul.f32 %v14455, %v14455
  %v14562 = vmul.f32 %v14456, %v14456
  %v14563 = vmul.f32 %v14457, %v14457
  %v14564 = vmul.f32 %v14458, %v14458
  %v14565 = vmul.f32 %v14459, %v14459
  %v14566 = vmul.f32 %v14460, %v14460
  %v14567 = vmul.f32 %v14461, %v14461
  %v14568 = vadd.f32 %v14536, %v14544
  %v14569 = vadd.f32 %v14568, %v14552
  %v14570 = vadd.f32 %v14569, %v14560
  %v14571 = vrot.slane %v14570, 4
  %v14572 = vadd.f32 %v14570, %v14571
  %v14573 = vrot.slane %v14572, 2
  %v14574 = vadd.f32 %v14572, %v14573
  %v14575 = vrot.slane %v14574, 1
  %v14576 = vadd.f32 %v14574, %v14575
  %v14577 = vadd.f32 %v14537, %v14545
  %v14578 = vadd.f32 %v14577, %v14553
  %v14579 = vadd.f32 %v14578, %v14561
  %v14580 = vrot.slane %v14579, 4
  %v14581 = vadd.f32 %v14579, %v14580
  %v14582 = vrot.slane %v14581, 2
  %v14583 = vadd.f32 %v14581, %v14582
  %v14584 = vrot.slane %v14583, 1
  %v14585 = vadd.f32 %v14583, %v14584
  %v14586 = vadd.f32 %v14538, %v14546
  %v14587 = vadd.f32 %v14586, %v14554
  %v14588 = vadd.f32 %v14587, %v14562
  %v14589 = vrot.slane %v14588, 4
  %v14590 = vadd.f32 %v14588, %v14589
  %v14591 = vrot.slane %v14590, 2
  %v14592 = vadd.f32 %v14590, %v14591
  %v14593 = vrot.slane %v14592, 1
  %v14594 = vadd.f32 %v14592, %v14593
  %v14595 = vadd.f32 %v14539, %v14547
  %v14596 = vadd.f32 %v14595, %v14555
  %v14597 = vadd.f32 %v14596, %v14563
  %v14598 = vrot.slane %v14597, 4
  %v14599 = vadd.f32 %v14597, %v14598
  %v14600 = vrot.slane %v14599, 2
  %v14601 = vadd.f32 %v14599, %v14600
  %v14602 = vrot.slane %v14601, 1
  %v14603 = vadd.f32 %v14601, %v14602
  %v14604 = vadd.f32 %v14540, %v14548
  %v14605 = vadd.f32 %v14604, %v14556
  %v14606 = vadd.f32 %v14605, %v14564
  %v14607 = vrot.slane %v14606, 4
  %v14608 = vadd.f32 %v14606, %v14607
  %v14609 = vrot.slane %v14608, 2
  %v14610 = vadd.f32 %v14608, %v14609
  %v14611 = vrot.slane %v14610, 1
  %v14612 = vadd.f32 %v14610, %v14611
  %v14613 = vadd.f32 %v14541, %v14549
  %v14614 = vadd.f32 %v14613, %v14557
  %v14615 = vadd.f32 %v14614, %v14565
  %v14616 = vrot.slane %v14615, 4
  %v14617 = vadd.f32 %v14615, %v14616
  %v14618 = vrot.slane %v14617, 2
  %v14619 = vadd.f32 %v14617, %v14618
  %v14620 = vrot.slane %v14619, 1
  %v14621 = vadd.f32 %v14619, %v14620
  %v14622 = vadd.f32 %v14542, %v14550
  %v14623 = vadd.f32 %v14622, %v14558
  %v14624 = vadd.f32 %v14623, %v14566
  %v14625 = vrot.slane %v14624, 4
  %v14626 = vadd.f32 %v14624, %v14625
  %v14627 = vrot.slane %v14626, 2
  %v14628 = vadd.f32 %v14626, %v14627
  %v14629 = vrot.slane %v14628, 1
  %v14630 = vadd.f32 %v14628, %v14629
  %v14631 = vadd.f32 %v14543, %v14551
  %v14632 = vadd.f32 %v14631, %v14559
  %v14633 = vadd.f32 %v14632, %v14567
  %v14634 = vrot.slane %v14633, 4
  %v14635 = vadd.f32 %v14633, %v14634
  %v14636 = vrot.slane %v14635, 2
  %v14637 = vadd.f32 %v14635, %v14636
  %v14638 = vrot.slane %v14637, 1
  %v14639 = vadd.f32 %v14637, %v14638
  %v14640 = vadd.f32 %v14472, 0.0
  %v14641 = vadd.f32 %v14576, 0.0
  %14643 = vrot.lane.b32.xlu0 %v14472, 64
  %v14644 = vpop.permute.xlu0 %14643
  %v14646 = vadd.f32 %v14640, %v14644
  %14648 = vrot.lane.b32.xlu0 %v14576, 64
  %v14649 = vpop.permute.xlu0 %14648
  %v14651 = vadd.f32 %v14641, %v14649
  %v14652 = vadd.f32 %v14646, %v14481
  %v14653 = vadd.f32 %v14651, %v14585
  %14655 = vrot.lane.b32.xlu0 %v14481, 64
  %v14656 = vpop.permute.xlu0 %14655
  %v14658 = vadd.f32 %v14652, %v14656
  %14660 = vrot.lane.b32.xlu0 %v14585, 64
  %v14661 = vpop.permute.xlu0 %14660
  %v14663 = vadd.f32 %v14653, %v14661
  %v14664 = vadd.f32 %v14658, %v14490
  %v14665 = vadd.f32 %v14663, %v14594
  %14667 = vrot.lane.b32.xlu0 %v14490, 64
  %v14668 = vpop.permute.xlu0 %14667
  %v14670 = vadd.f32 %v14664, %v14668
  %14672 = vrot.lane.b32.xlu0 %v14594, 64
  %v14673 = vpop.permute.xlu0 %14672
  %v14675 = vadd.f32 %v14665, %v14673
  %v14676 = vadd.f32 %v14670, %v14499
  %v14677 = vadd.f32 %v14675, %v14603
  %14679 = vrot.lane.b32.xlu0 %v14499, 64
  %v14680 = vpop.permute.xlu0 %14679
  %v14682 = vadd.f32 %v14676, %v14680
  %14684 = vrot.lane.b32.xlu0 %v14603, 64
  %v14685 = vpop.permute.xlu0 %14684
  %v14687 = vadd.f32 %v14677, %v14685
  %v14688 = vadd.f32 %v14682, %v14508
  %v14689 = vadd.f32 %v14687, %v14612
  %14691 = vrot.lane.b32.xlu0 %v14508, 64
  %v14692 = vpop.permute.xlu0 %14691
  %v14694 = vadd.f32 %v14688, %v14692
  %14696 = vrot.lane.b32.xlu0 %v14612, 64
  %v14697 = vpop.permute.xlu0 %14696
  %v14699 = vadd.f32 %v14689, %v14697
  %v14700 = vadd.f32 %v14694, %v14517
  %v14701 = vadd.f32 %v14699, %v14621
  %14703 = vrot.lane.b32.xlu0 %v14517, 64
  %v14704 = vpop.permute.xlu0 %14703
  %v14706 = vadd.f32 %v14700, %v14704
  %14708 = vrot.lane.b32.xlu0 %v14621, 64
  %v14709 = vpop.permute.xlu0 %14708
  %v14711 = vadd.f32 %v14701, %v14709
  %v14712 = vadd.f32 %v14706, %v14526
  %v14713 = vadd.f32 %v14711, %v14630
  %14715 = vrot.lane.b32.xlu0 %v14526, 64
  %v14716 = vpop.permute.xlu0 %14715
  %v14718 = vadd.f32 %v14712, %v14716
  %14720 = vrot.lane.b32.xlu0 %v14630, 64
  %v14721 = vpop.permute.xlu0 %14720
  %v14723 = vadd.f32 %v14713, %v14721
  %v14724 = vadd.f32 %v14718, %v14535
  %v14725 = vadd.f32 %v14723, %v14639
  %14727 = vrot.lane.b32.xlu0 %v14535, 64
  %v14728 = vpop.permute.xlu0 %14727
  %v14730 = vadd.f32 %v14724, %v14728
  %14732 = vrot.lane.b32.xlu0 %v14639, 64
  %v14733 = vpop.permute.xlu0 %14732
  %v14735 = vadd.f32 %v14725, %v14733
  %v14736 = vmul.f32 %v14730, %v1668
  %v14737 = vmul.f32 %v14735, %v1668
  %v14738 = vmul.f32 %v14736, %v14736
  %v14739 = vsub.f32 %v14737, %v14738
  %v14740 = vmax.f32 %v14739, 0.0
  %v14741 = vadd.f32 %v14740, 1e-05
  %v14742 = vrsqrt.pop %v14741
  %v14743 = vmul.f32 %v14462, %v14742
  %v14744 = vmul.f32 %v14736, %v14743
  %v14745 = vsub.f32 %v14463, %v14744
  %v14747 = vlaneseq
  %v14748 = vshrl.u32 %v14747, 7
  %v14749 = vsub.s32 0, %v14748
  %v14750 = vrot.slane %v14743, %v14749
  %14751 = vrot.lane.b32.xlu0 %v14750, 64
  %v14752 = vpop.permute.xlu0 %14751
  %v14754 = vsel %vm315, %v14743, %v14752
  %v14756 = vlaneseq
  %v14757 = vshrl.u32 %v14756, 7
  %v14758 = vsub.s32 0, %v14757
  %v14759 = vrot.slane %v14745, %v14758
  %14760 = vrot.lane.b32.xlu0 %v14759, 64
  %v14761 = vpop.permute.xlu0 %14760
  %v14763 = vsel %vm315, %v14745, %v14761
  %v14764 = vlaneseq
  %v14765 = vshrl.u32 %v14764, 7
  %v14766 = vsub.s32 0, %v14765
  %v14767 = vrot.slane %v14754, %v14766
  %v14768 = vmul.f32 %v14430, %v14767
  %v14769 = vmul.f32 %v14431, %v14767
  %v14770 = vmul.f32 %v14432, %v14767
  %v14771 = vmul.f32 %v14433, %v14767
  %v14772 = vmul.f32 %v14434, %v14767
  %v14773 = vmul.f32 %v14435, %v14767
  %v14774 = vmul.f32 %v14436, %v14767
  %v14775 = vmul.f32 %v14437, %v14767
  %v14776 = vmul.f32 %v14438, %v14767
  %v14777 = vmul.f32 %v14439, %v14767
  %v14778 = vmul.f32 %v14440, %v14767
  %v14779 = vmul.f32 %v14441, %v14767
  %v14780 = vmul.f32 %v14442, %v14767
  %v14781 = vmul.f32 %v14443, %v14767
  %v14782 = vmul.f32 %v14444, %v14767
  %v14783 = vmul.f32 %v14445, %v14767
  %v14784 = vmul.f32 %v14446, %v14767
  %v14785 = vmul.f32 %v14447, %v14767
  %v14786 = vmul.f32 %v14448, %v14767
  %v14787 = vmul.f32 %v14449, %v14767
  %v14788 = vmul.f32 %v14450, %v14767
  %v14789 = vmul.f32 %v14451, %v14767
  %v14790 = vmul.f32 %v14452, %v14767
  %v14791 = vmul.f32 %v14453, %v14767
  %v14792 = vmul.f32 %v14454, %v14767
  %v14793 = vmul.f32 %v14455, %v14767
  %v14794 = vmul.f32 %v14456, %v14767
  %v14795 = vmul.f32 %v14457, %v14767
  %v14796 = vmul.f32 %v14458, %v14767
  %v14797 = vmul.f32 %v14459, %v14767
  %v14798 = vmul.f32 %v14460, %v14767
  %v14799 = vmul.f32 %v14461, %v14767
  %v14800 = vlaneseq
  %v14801 = vshrl.u32 %v14800, 7
  %v14802 = vsub.s32 0, %v14801
  %v14803 = vrot.slane %v14763, %v14802
  %v14804 = vadd.f32 %v14768, %v14803
  %v14805 = vadd.f32 %v14769, %v14803
  %v14806 = vadd.f32 %v14770, %v14803
  %v14807 = vadd.f32 %v14771, %v14803
  %v14808 = vadd.f32 %v14772, %v14803
  %v14809 = vadd.f32 %v14773, %v14803
  %v14810 = vadd.f32 %v14774, %v14803
  %v14811 = vadd.f32 %v14775, %v14803
  %v14812 = vadd.f32 %v14776, %v14803
  %v14813 = vadd.f32 %v14777, %v14803
  %v14814 = vadd.f32 %v14778, %v14803
  %v14815 = vadd.f32 %v14779, %v14803
  %v14816 = vadd.f32 %v14780, %v14803
  %v14817 = vadd.f32 %v14781, %v14803
  %v14818 = vadd.f32 %v14782, %v14803
  %v14819 = vadd.f32 %v14783, %v14803
  %v14820 = vadd.f32 %v14784, %v14803
  %v14821 = vadd.f32 %v14785, %v14803
  %v14822 = vadd.f32 %v14786, %v14803
  %v14823 = vadd.f32 %v14787, %v14803
  %v14824 = vadd.f32 %v14788, %v14803
  %v14825 = vadd.f32 %v14789, %v14803
  %v14826 = vadd.f32 %v14790, %v14803
  %v14827 = vadd.f32 %v14791, %v14803
  %v14828 = vadd.f32 %v14792, %v14803
  %v14829 = vadd.f32 %v14793, %v14803
  %v14830 = vadd.f32 %v14794, %v14803
  %v14831 = vadd.f32 %v14795, %v14803
  %v14832 = vadd.f32 %v14796, %v14803
  %v14833 = vadd.f32 %v14797, %v14803
  %v14834 = vadd.f32 %v14798, %v14803
  %v14835 = vadd.f32 %v14799, %v14803
  %v14836 = vmax.f32 %v14804, 0.0
  %v14837 = vmax.f32 %v14805, 0.0
  %v14838 = vmax.f32 %v14806, 0.0
  %v14839 = vmax.f32 %v14807, 0.0
  %v14840 = vmax.f32 %v14808, 0.0
  %v14841 = vmax.f32 %v14809, 0.0
  %v14842 = vmax.f32 %v14810, 0.0
  %v14843 = vmax.f32 %v14811, 0.0
  %v14844 = vmax.f32 %v14812, 0.0
  %v14845 = vmax.f32 %v14813, 0.0
  %v14846 = vmax.f32 %v14814, 0.0
  %v14847 = vmax.f32 %v14815, 0.0
  %v14848 = vmax.f32 %v14816, 0.0
  %v14849 = vmax.f32 %v14817, 0.0
  %v14850 = vmax.f32 %v14818, 0.0
  %v14851 = vmax.f32 %v14819, 0.0
  %v14852 = vmax.f32 %v14820, 0.0
  %v14853 = vmax.f32 %v14821, 0.0
  %v14854 = vmax.f32 %v14822, 0.0
  %v14855 = vmax.f32 %v14823, 0.0
  %v14856 = vmax.f32 %v14824, 0.0
  %v14857 = vmax.f32 %v14825, 0.0
  %v14858 = vmax.f32 %v14826, 0.0
  %v14859 = vmax.f32 %v14827, 0.0
  %v14860 = vmax.f32 %v14828, 0.0
  %v14861 = vmax.f32 %v14829, 0.0
  %v14862 = vmax.f32 %v14830, 0.0
  %v14863 = vmax.f32 %v14831, 0.0
  %v14864 = vmax.f32 %v14832, 0.0
  %v14865 = vmax.f32 %v14833, 0.0
  %v14866 = vmax.f32 %v14834, 0.0
  %v14867 = vmax.f32 %v14835, 0.0
  %14868 = vst [vmem:[%s7] sm:$0xff] %v14836
  %14869 = vst [vmem:[%s7 + $0x8] sm:$0xff] %v14837
  %14870 = vst [vmem:[%s7 + $0x10] sm:$0xff] %v14838
  %14871 = vst [vmem:[%s7 + $0x18] sm:$0xff] %v14839
  %14872 = vst [vmem:[%s7 + $0x20] sm:$0xff] %v14840
  %14873 = vst [vmem:[%s7 + $0x28] sm:$0xff] %v14841
  %14874 = vst [vmem:[%s7 + $0x30] sm:$0xff] %v14842
  %14875 = vst [vmem:[%s7 + $0x38] sm:$0xff] %v14843
  %14876 = vst [vmem:[%s7 + $0x40] sm:$0xff] %v14844
  %14877 = vst [vmem:[%s7 + $0x48] sm:$0xff] %v14845
  %14878 = vst [vmem:[%s7 + $0x50] sm:$0xff] %v14846
  %14879 = vst [vmem:[%s7 + $0x58] sm:$0xff] %v14847
  %14880 = vst [vmem:[%s7 + $0x60] sm:$0xff] %v14848
  %14881 = vst [vmem:[%s7 + $0x68] sm:$0xff] %v14849
  %14882 = vst [vmem:[%s7 + $0x70] sm:$0xff] %v14850
  %14883 = vst [vmem:[%s7 + $0x78] sm:$0xff] %v14851
  %14884 = vst [vmem:[%s7 + $0x80] sm:$0xff] %v14852
  %14885 = vst [vmem:[%s7 + $0x88] sm:$0xff] %v14853
  %14886 = vst [vmem:[%s7 + $0x90] sm:$0xff] %v14854
  %14887 = vst [vmem:[%s7 + $0x98] sm:$0xff] %v14855
  %14888 = vst [vmem:[%s7 + $0xa0] sm:$0xff] %v14856
  %14889 = vst [vmem:[%s7 + $0xa8] sm:$0xff] %v14857
  %14890 = vst [vmem:[%s7 + $0xb0] sm:$0xff] %v14858
  %14891 = vst [vmem:[%s7 + $0xb8] sm:$0xff] %v14859
  %14892 = vst [vmem:[%s7 + $0xc0] sm:$0xff] %v14860
  %14893 = vst [vmem:[%s7 + $0xc8] sm:$0xff] %v14861
  %14894 = vst [vmem:[%s7 + $0xd0] sm:$0xff] %v14862
  %14895 = vst [vmem:[%s7 + $0xd8] sm:$0xff] %v14863
  %14896 = vst [vmem:[%s7 + $0xe0] sm:$0xff] %v14864
  %14897 = vst [vmem:[%s7 + $0xe8] sm:$0xff] %v14865
  %14898 = vst [vmem:[%s7 + $0xf0] sm:$0xff] %v14866
  %14899 = vst [vmem:[%s7 + $0xf8] sm:$0xff] %v14867
  // Predicated region
  $region30: #{early_feature_extractor.1} parent=0 // pred_check
    _
  $region31: #{early_feature_extractor.1} parent=0 // pred_check_branch
    %14901 = sbr.rel (0) target = $region33
  $region32: #{early_feature_extractor.1} parent=0 // pred_region
    _
  $region33: #{early_feature_extractor.1} parent=0 // pred_fallthru
    _
  // Predicated region
  $region34: #{early_feature_extractor.1} parent=0 // pred_check
    _
  $region35: #{early_feature_extractor.1} parent=0 // pred_check_branch
    %14903 = sbr.rel (0) target = $region37
  $region36: #{early_feature_extractor.1} parent=0 // pred_region
    _
  $region37: #{early_feature_extractor.1} parent=0 // pred_fallthru
    _

</llo_original>
